<compile_context>
chip_gen: v6e
topology: v6e:2x2x1
jax: 0.10.0
libtpu: 0.0.40
codegen_flags: <defaults>
</compile_context>

<pallas_src>
import functools

import jax
import jax.numpy as jnp
from jax.experimental import pallas as pl
from jax.experimental.pallas import tpu as pltpu


def _round_up(v, m):
    return ((v + m - 1) // m) * m


def _pick_tm(M):
    """Adaptive row tile: avoid padding tiny M to 128 rows and give >=2 grid steps
    (megacore / 2-TC) whenever M is large enough."""
    if M <= 8:
        return _round_up(M, 8)
    return min(128, _round_up((M + 1) // 2, 8))


# ------------------------------------------------------- fused matmul(+bias+ReLU+LRN) kernel
def _matmul_fused_kernel(*refs, relu, lrn, alpha, beta, local_size):
    if lrn:
        x_ref, w_ref, b_ref, band_ref, o_ref = refs
    else:
        x_ref, w_ref, b_ref, o_ref = refs
    acc = jnp.dot(x_ref[...], w_ref[...], preferred_element_type=jnp.float32)
    acc = acc + b_ref[...]                       # (1, N) f32 bias broadcasts over rows
    if relu:
        acc = jnp.maximum(acc, 0.0)
    if lrn:
        # Cross-channel LRN fused into the epilogue.  All N output channels of this
        # conv live in the (tm, N) tile, so the 5-tap channel window-sum is a small
        # banded matmul (MXU); AvgPool3d(count_include_pad=True) => divisor local_size.
        x2 = acc * acc
        s = jnp.dot(x2, band_ref[...], preferred_element_type=jnp.float32)
        div = s * (alpha / local_size) + 1.0     # div >= 1, log is safe
        acc = acc * jnp.exp(-beta * jnp.log(div))  # == acc / div**beta, no divide
    o_ref[...] = acc.astype(o_ref.dtype)


def matmul_fused(x, w, b, *, relu=False, lrn_band=None,
                 alpha=1e-4, beta=0.75, local_size=5,
                 compute_dtype=jnp.bfloat16):
    """y = act(x @ w + b), optionally followed by fused cross-channel LRN.
    x:(M,K) w:(K,N) b:(N,) -> (M,N) f32.  bf16 MXU inputs, f32 accumulation/epilogue."""
    M, K = x.shape
    K2, N = w.shape
    assert K == K2
    tm = _pick_tm(M)
    Mp = _round_up(M, tm)
    xp = jnp.pad(x, ((0, Mp - M), (0, 0))).astype(compute_dtype)
    wc = w.astype(compute_dtype)
    b2 = b.reshape(1, N).astype(jnp.float32)
    args = [xp, wc, b2]
    in_specs = [
        pl.BlockSpec((tm, K), lambda i: (i, 0)),
        pl.BlockSpec((K, N), lambda i: (0, 0)),
        pl.BlockSpec((1, N), lambda i: (0, 0)),
    ]
    if lrn_band is not None:
        args.append(lrn_band.astype(jnp.float32))
        in_specs.append(pl.BlockSpec((N, N), lambda i: (0, 0)))
    out = pl.pallas_call(
        functools.partial(_matmul_fused_kernel, relu=relu,
                          lrn=lrn_band is not None, alpha=alpha, beta=beta,
                          local_size=local_size),
        out_shape=jax.ShapeDtypeStruct((Mp, N), jnp.float32),
        grid=(Mp // tm,),
        in_specs=in_specs,
        out_specs=pl.BlockSpec((tm, N), lambda i: (i, 0)),
        compiler_params=pltpu.CompilerParams(dimension_semantics=("parallel",)),
    )(*args)
    return out[:M]


# --------------------------------------------------------------- fused classifier head kernel
def _classifier_kernel(x_ref, w6_ref, b6_ref, w7_ref, b7_ref,
                       wb_ref, bb_ref, wf_ref, bf_ref,
                       feat_ref, logit_ref):
    h = jnp.dot(x_ref[...], w6_ref[...], preferred_element_type=jnp.float32) + b6_ref[...]
    h = jnp.maximum(h, 0.0)
    # TODO(synk): nn.Dropout is modeled in eval mode (identity); train-mode masking not implemented.
    h = jnp.dot(h, w7_ref[...], preferred_element_type=jnp.float32) + b7_ref[...]
    h = jnp.maximum(h, 0.0)
    feat = jnp.dot(h, wb_ref[...], preferred_element_type=jnp.float32) + bb_ref[...]
    logit = jnp.dot(feat, wf_ref[...], preferred_element_type=jnp.float32) + bf_ref[...]
    feat_ref[...] = feat
    logit_ref[...] = logit


def classifier_head(x, p):
    """fc6 -> ReLU -> (Dropout) -> fc7 -> ReLU -> (Dropout) -> bottleneck -> fc,
    all chained inside a single pallas_call (batch is tiny; this is launch-bound)."""
    M, _ = x.shape
    Mp = _round_up(M, 8)
    xp = jnp.pad(x, ((0, Mp - M), (0, 0))).astype(jnp.float32)
    w6, w7 = p['fc6_w'], p['fc7_w']
    wb, wf = p['bottleneck_w'], p['fc_w']
    b6 = p['fc6_b'].reshape(1, -1)
    b7 = p['fc7_b'].reshape(1, -1)
    bb = p['bottleneck_b'].reshape(1, -1)
    bf = p['fc_b'].reshape(1, -1)
    args = (xp, w6, b6, w7, b7, wb, bb, wf, bf)
    bd, nc = wb.shape[1], wf.shape[1]
    feat, logit = pl.pallas_call(
        _classifier_kernel,
        out_shape=(jax.ShapeDtypeStruct((Mp, bd), jnp.float32),
                   jax.ShapeDtypeStruct((Mp, nc), jnp.float32)),
        grid=(1,),
        in_specs=[pl.BlockSpec(a.shape, lambda i: (0, 0)) for a in args],
        out_specs=(pl.BlockSpec((Mp, bd), lambda i: (0, 0)),
                   pl.BlockSpec((Mp, nc), lambda i: (0, 0))),
        compiler_params=pltpu.CompilerParams(dimension_semantics=("arbitrary",)),
    )(*args)
    return feat[:M], logit[:M]


# ----------------------------------------------------------------------------- maxpool kernel
def _maxpool3_kernel(x_ref, o_ref):
    x = x_ref[...]                         # (1, H, W, C)
    H, W = x.shape[1], x.shape[2]
    r = jnp.maximum(jnp.maximum(x[:, 0:H - 2], x[:, 1:H - 1]), x[:, 2:H])
    c = jnp.maximum(jnp.maximum(r[:, :, 0:W - 2], r[:, :, 1:W - 1]), r[:, :, 2:W])
    o_ref[...] = c


def maxpool_3x3_s2(x):
    """MaxPool2d(kernel=3, stride=2): overlapping 3x3 max in-kernel, stride-2 subsample in glue."""
    # TODO(synk): stride-2 subsample left as XLA glue (fuses into the next layer's
    # patch extraction); in-kernel strided (pl.ds stride=2) loads skipped to keep
    # lowering risk-free at these tiny feature-map sizes.
    B, H, W, C = x.shape
    full = pl.pallas_call(
        _maxpool3_kernel,
        out_shape=jax.ShapeDtypeStruct((B, H - 2, W - 2, C), x.dtype),
        grid=(B,),
        in_specs=[pl.BlockSpec((1, H, W, C), lambda b: (b, 0, 0, 0))],
        out_specs=pl.BlockSpec((1, H - 2, W - 2, C), lambda b: (b, 0, 0, 0)),
        compiler_params=pltpu.CompilerParams(dimension_semantics=("parallel",)),
    )(x)
    return full[:, ::2, ::2, :]            # data-movement-only subsample (glue)


# ------------------------------------------- conv = im2col (glue) + fused Pallas matmul epilogue
def _extract_patches(x, kh, kw, stride, pad):
    B, H, W, C = x.shape
    if pad:
        x = jnp.pad(x, ((0, 0), (pad, pad), (pad, pad), (0, 0)))
    Hp, Wp = H + 2 * pad, W + 2 * pad
    OH = (Hp - kh) // stride + 1
    OW = (Wp - kw) // stride + 1
    cols = []
    for dh in range(kh):
        for dw in range(kw):
            cols.append(x[:, dh:dh + stride * (OH - 1) + 1:stride,
                          dw:dw + stride * (OW - 1) + 1:stride, :])
    return jnp.concatenate(cols, axis=-1), OH, OW   # patch order (dh, dw, c)


def conv2d(x, w, b, *, stride=1, pad=0, groups=1, relu=False, lrn=False,
           lrn_size=5, lrn_alpha=1e-4, lrn_beta=0.75):
    """x:(B,H,W,Cin) NHWC, w:(KH,KW,Cin//groups,Cout), b:(Cout,).
    Grouped convs are packed into one matmul via a block-diagonal weight (single
    launch, lane-dense N).  Optional ReLU and cross-channel LRN are fused in-kernel."""
    # TODO(synk): im2col stays in XLA glue; fold into a K-reduction grid axis with
    # Element index_maps if image/batch are ever scaled up.
    B, H, W, Cin = x.shape
    KH, KW, Cin_g, Cout = w.shape
    assert Cin_g * groups == Cin and Cout % groups == 0
    if groups > 1:
        Cout_g = Cout // groups
        wf = jnp.zeros((KH, KW, Cin, Cout), w.dtype)
        for g in range(groups):
            wf = wf.at[:, :, g * Cin_g:(g + 1) * Cin_g,
                       g * Cout_g:(g + 1) * Cout_g].set(w[..., g * Cout_g:(g + 1) * Cout_g])
    else:
        wf = w
    patches, OH, OW = _extract_patches(x, KH, KW, stride, pad)
    K = KH * KW * Cin
    band = None
    if lrn:
        half = (lrn_size - 1) // 2
        idx = jnp.arange(Cout)
        band = (jnp.abs(idx[:, None] - idx[None, :]) <= half).astype(jnp.float32)
    y = matmul_fused(patches.reshape(B * OH * OW, K), wf.reshape(K, Cout), b,
                     relu=relu, lrn_band=band, alpha=lrn_alpha, beta=lrn_beta,
                     local_size=lrn_size)
    return y.reshape(B, OH, OW, Cout)


# ----------------------------------------------------------------------------- model
CFG = dict(c1=32, c2=64, c3=96, c4=96, c5=64,
           fc_hidden=128, bottleneck_dim=32, class_num=10, image=99, batch=2)


def init_params(key):
    ks = jax.random.split(key, 9)

    def conv_w(k, kh, kw, cin_g, cout):          # kaiming-style scale, deterministic
        return jax.random.normal(k, (kh, kw, cin_g, cout), jnp.float32) * jnp.sqrt(
            2.0 / (kh * kw * cin_g))

    def lin_w(k, fin, fout):                     # xavier-style scale, deterministic
        return jax.random.normal(k, (fin, fout), jnp.float32) * jnp.sqrt(
            2.0 / (fin + fout))

    c1, c2, c3, c4, c5 = CFG['c1'], CFG['c2'], CFG['c3'], CFG['c4'], CFG['c5']
    p = {}
    p['conv1_w'] = conv_w(ks[0], 11, 11, 3, c1);        p['conv1_b'] = jnp.zeros((c1,), jnp.float32)
    p['conv2_w'] = conv_w(ks[1], 5, 5, c1 // 2, c2);    p['conv2_b'] = jnp.zeros((c2,), jnp.float32)
    p['conv3_w'] = conv_w(ks[2], 3, 3, c2, c3);         p['conv3_b'] = jnp.zeros((c3,), jnp.float32)
    p['conv4_w'] = conv_w(ks[3], 3, 3, c3 // 2, c4);    p['conv4_b'] = jnp.zeros((c4,), jnp.float32)
    p['conv5_w'] = conv_w(ks[4], 3, 3, c4 // 2, c5);    p['conv5_b'] = jnp.zeros((c5,), jnp.float32)
    flat = c5 * 2 * 2                                   # feature map is 2x2 for image=99
    h, bd, nc = CFG['fc_hidden'], CFG['bottleneck_dim'], CFG['class_num']
    p['fc6_w'] = lin_w(ks[5], flat, h);                 p['fc6_b'] = jnp.zeros((h,), jnp.float32)
    p['fc7_w'] = lin_w(ks[6], h, h);                    p['fc7_b'] = jnp.zeros((h,), jnp.float32)
    p['bottleneck_w'] = lin_w(ks[7], h, bd);            p['bottleneck_b'] = jnp.zeros((bd,), jnp.float32)
    p['fc_w'] = lin_w(ks[8], bd, nc);                   p['fc_b'] = jnp.zeros((nc,), jnp.float32)
    return p


def alexnet_fc_forward(params, x_nchw):
    x = jnp.transpose(x_nchw, (0, 2, 3, 1))                        # NCHW -> NHWC
    # ---- features (ReLU + LRN fused into the conv1/conv2 matmul epilogues) ----
    x = conv2d(x, params['conv1_w'], params['conv1_b'], stride=4, pad=0, relu=True, lrn=True)
    x = maxpool_3x3_s2(x)
    x = conv2d(x, params['conv2_w'], params['conv2_b'], stride=1, pad=2, groups=2, relu=True, lrn=True)
    x = maxpool_3x3_s2(x)
    x = conv2d(x, params['conv3_w'], params['conv3_b'], stride=1, pad=1, relu=True)
    x = conv2d(x, params['conv4_w'], params['conv4_b'], stride=1, pad=1, groups=2, relu=True)
    x = conv2d(x, params['conv5_w'], params['conv5_b'], stride=1, pad=1, groups=2, relu=True)
    x = maxpool_3x3_s2(x)
    # ---- flatten in PyTorch NCHW order: x.view(B, -1) ----
    B = x.shape[0]
    x = jnp.transpose(x, (0, 3, 1, 2)).reshape(B, -1)
    # ---- classifier[0:6] + bottleneck + fc, all fused into one pallas_call ----
    feats, logits = classifier_head(x, params)
    return feats, logits


if __name__ == "__main__":
    key = jax.random.PRNGKey(0)
    pkey, xkey = jax.random.split(key)
    params = init_params(pkey)
    x = jax.random.normal(xkey, (CFG['batch'], 3, CFG['image'], CFG['image']), jnp.float32)

    fwd = jax.jit(alexnet_fc_forward)
    feats, logits = fwd(params, x)
    jax.block_until_ready((feats, logits))

    assert feats.shape == (CFG['batch'], CFG['bottleneck_dim']), feats.shape
    assert logits.shape == (CFG['batch'], CFG['class_num']), logits.shape
    assert bool(jnp.isfinite(feats).all()) and bool(jnp.isfinite(logits).all())
    print("KERNEL_OK")
</pallas_src>

<mosaic_0001>
module attributes {stable_mosaic.version = 11 : i64} {
  func.func @_matmul_fused_kernel(%arg0: i32, %arg1: memref<128x363xbf16, #tpu.memory_space<vmem>>, %arg2: memref<363x32xbf16, #tpu.memory_space<vmem>>, %arg3: memref<1x32xf32, #tpu.memory_space<vmem>>, %arg4: memref<32x32xf32, #tpu.memory_space<vmem>>, %arg5: memref<128x32xf32, #tpu.memory_space<vmem>>) attributes {dimension_semantics = [#tpu.dimension_semantics<parallel>], iteration_bounds = array<i64: 9>, scalar_prefetch = 0 : i64, scratch_operands = 0 : i64, tpu.core_type = #tpu.core_type<tc>, window_params = [{transform_indices = @transform_0, window_bounds = array<i64: 128, 363>}, {pipeline_mode = #tpu.pipeline_mode<synchronous>, transform_indices = @transform_1, window_bounds = array<i64: 363, 32>}, {pipeline_mode = #tpu.pipeline_mode<synchronous>, transform_indices = @transform_2, window_bounds = array<i64: 1, 32>}, {pipeline_mode = #tpu.pipeline_mode<synchronous>, transform_indices = @transform_3, window_bounds = array<i64: 32, 32>}, {transform_indices = @transform_4, window_bounds = array<i64: 128, 32>}]} {
    %c0 = arith.constant 0 : index
    %c0_0 = arith.constant 0 : index
    %0 = vector.load %arg1[%c0, %c0_0] : memref<128x363xbf16, #tpu.memory_space<vmem>>, vector<128x363xbf16>
    %c0_1 = arith.constant 0 : index
    %c0_2 = arith.constant 0 : index
    %1 = vector.load %arg2[%c0_1, %c0_2] : memref<363x32xbf16, #tpu.memory_space<vmem>>, vector<363x32xbf16>
    %cst = arith.constant dense<0.000000e+00> : vector<128x32xf32>
    %2 = tpu.matmul %0, %1, %cst {dimension_numbers = #tpu.dot_dimension_numbers<[1], [0], [0], [1], [0, 0, 1, 1], [], []>} : vector<128x363xbf16>, vector<363x32xbf16>, vector<128x32xf32> -> vector<128x32xf32>
    %c0_3 = arith.constant 0 : index
    %c0_4 = arith.constant 0 : index
    %3 = vector.load %arg3[%c0_3, %c0_4] : memref<1x32xf32, #tpu.memory_space<vmem>>, vector<1x32xf32>
    %4 = vector.broadcast %3 : vector<1x32xf32> to vector<128x32xf32>
    %5 = arith.addf %2, %4 : vector<128x32xf32>
    %cst_5 = arith.constant 0.000000e+00 : f32
    %6 = vector.broadcast %cst_5 : f32 to vector<128x32xf32>
    %7 = arith.maximumf %5, %6 : vector<128x32xf32>
    %8 = arith.mulf %7, %7 : vector<128x32xf32>
    %c0_6 = arith.constant 0 : index
    %c0_7 = arith.constant 0 : index
    %9 = vector.load %arg4[%c0_6, %c0_7] : memref<32x32xf32, #tpu.memory_space<vmem>>, vector<32x32xf32>
    %cst_8 = arith.constant dense<0.000000e+00> : vector<128x32xf32>
    %10 = tpu.matmul %8, %9, %cst_8 {dimension_numbers = #tpu.dot_dimension_numbers<[1], [0], [0], [1], [0, 0, 1, 1], [], []>} : vector<128x32xf32>, vector<32x32xf32>, vector<128x32xf32> -> vector<128x32xf32>
    %cst_9 = arith.constant 2.000000e-05 : f32
    %11 = vector.broadcast %cst_9 : f32 to vector<128x32xf32>
    %12 = arith.mulf %10, %11 : vector<128x32xf32>
    %cst_10 = arith.constant 1.000000e+00 : f32
    %13 = vector.broadcast %cst_10 : f32 to vector<128x32xf32>
    %14 = arith.addf %12, %13 : vector<128x32xf32>
    %15 = math.log %14 : vector<128x32xf32>
    %cst_11 = arith.constant -7.500000e-01 : f32
    %16 = vector.broadcast %cst_11 : f32 to vector<128x32xf32>
    %17 = arith.mulf %16, %15 : vector<128x32xf32>
    %18 = math.exp %17 : vector<128x32xf32>
    %19 = arith.mulf %7, %18 : vector<128x32xf32>
    %c0_12 = arith.constant 0 : index
    %c0_13 = arith.constant 0 : index
    %20 = vector.load %arg5[%c0_12, %c0_13] : memref<128x32xf32, #tpu.memory_space<vmem>>, vector<128x32xf32>
    tpu.vector_store %arg5[%c0_12, %c0_13], %19 {strides = array<i32>} : memref<128x32xf32, #tpu.memory_space<vmem>>, vector<128x32xf32>,
    return
  }
  func.func @transform_0(%arg0: i32) -> (i32, i32) {
    %c0_i32 = arith.constant 0 : i32
    %c0_i32_0 = arith.constant 0 : i32
    return %arg0, %c0_i32 : i32, i32
  }
  func.func @transform_1(%arg0: i32) -> (i32, i32) {
    %c0_i32 = arith.constant 0 : i32
    %c0_i32_0 = arith.constant 0 : i32
    %c0_i32_1 = arith.constant 0 : i32
    return %c0_i32, %c0_i32_0 : i32, i32
  }
  func.func @transform_2(%arg0: i32) -> (i32, i32) {
    %c0_i32 = arith.constant 0 : i32
    %c0_i32_0 = arith.constant 0 : i32
    %c0_i32_1 = arith.constant 0 : i32
    return %c0_i32, %c0_i32_0 : i32, i32
  }
  func.func @transform_3(%arg0: i32) -> (i32, i32) {
    %c0_i32 = arith.constant 0 : i32
    %c0_i32_0 = arith.constant 0 : i32
    %c0_i32_1 = arith.constant 0 : i32
    return %c0_i32, %c0_i32_0 : i32, i32
  }
  func.func @transform_4(%arg0: i32) -> (i32, i32) {
    %c0_i32 = arith.constant 0 : i32
    %c0_i32_0 = arith.constant 0 : i32
    return %arg0, %c0_i32 : i32, i32
  }
}

module attributes {stable_mosaic.version = 11 : i64} {
  func.func @_maxpool3_kernel(%arg0: i32, %arg1: memref<1x23x23x32xf32, #tpu.memory_space<vmem>>, %arg2: memref<1x21x21x32xf32, #tpu.memory_space<vmem>>) attributes {dimension_semantics = [#tpu.dimension_semantics<parallel>], iteration_bounds = array<i64: 2>, scalar_prefetch = 0 : i64, scratch_operands = 0 : i64, tpu.core_type = #tpu.core_type<tc>, window_params = [{transform_indices = @transform_0, window_bounds = array<i64: 1, 23, 23, 32>}, {transform_indices = @transform_1, window_bounds = array<i64: 1, 21, 21, 32>}]} {
    %c0 = arith.constant 0 : index
    %c0_0 = arith.constant 0 : index
    %c0_1 = arith.constant 0 : index
    %c0_2 = arith.constant 0 : index
    %0 = vector.load %arg1[%c0, %c0_0, %c0_1, %c0_2] : memref<1x23x23x32xf32, #tpu.memory_space<vmem>>, vector<1x23x23x32xf32>
    %1 = vector.extract_strided_slice %0 {offsets = [0, 0, 0, 0], sizes = [1, 21, 23, 32], strides = [1, 1, 1, 1]} : vector<1x23x23x32xf32> to vector<1x21x23x32xf32>
    %2 = vector.extract_strided_slice %0 {offsets = [0, 1, 0, 0], sizes = [1, 21, 23, 32], strides = [1, 1, 1, 1]} : vector<1x23x23x32xf32> to vector<1x21x23x32xf32>
    %3 = arith.maximumf %1, %2 : vector<1x21x23x32xf32>
    %4 = vector.extract_strided_slice %0 {offsets = [0, 2, 0, 0], sizes = [1, 21, 23, 32], strides = [1, 1, 1, 1]} : vector<1x23x23x32xf32> to vector<1x21x23x32xf32>
    %5 = arith.maximumf %3, %4 : vector<1x21x23x32xf32>
    %6 = vector.extract_strided_slice %5 {offsets = [0, 0, 0, 0], sizes = [1, 21, 21, 32], strides = [1, 1, 1, 1]} : vector<1x21x23x32xf32> to vector<1x21x21x32xf32>
    %7 = vector.extract_strided_slice %5 {offsets = [0, 0, 1, 0], sizes = [1, 21, 21, 32], strides = [1, 1, 1, 1]} : vector<1x21x23x32xf32> to vector<1x21x21x32xf32>
    %8 = arith.maximumf %6, %7 : vector<1x21x21x32xf32>
    %9 = vector.extract_strided_slice %5 {offsets = [0, 0, 2, 0], sizes = [1, 21, 21, 32], strides = [1, 1, 1, 1]} : vector<1x21x23x32xf32> to vector<1x21x21x32xf32>
    %10 = arith.maximumf %8, %9 : vector<1x21x21x32xf32>
    %c0_3 = arith.constant 0 : index
    %c0_4 = arith.constant 0 : index
    %c0_5 = arith.constant 0 : index
    %c0_6 = arith.constant 0 : index
    %11 = vector.load %arg2[%c0_3, %c0_4, %c0_5, %c0_6] : memref<1x21x21x32xf32, #tpu.memory_space<vmem>>, vector<1x21x21x32xf32>
    tpu.vector_store %arg2[%c0_3, %c0_4, %c0_5, %c0_6], %10 {strides = array<i32>} : memref<1x21x21x32xf32, #tpu.memory_space<vmem>>, vector<1x21x21x32xf32>,
    return
  }
  func.func @transform_0(%arg0: i32) -> (i32, i32, i32, i32) {
    %c0_i32 = arith.constant 0 : i32
    %c0_i32_0 = arith.constant 0 : i32
    %c0_i32_1 = arith.constant 0 : i32
    %c0_i32_2 = arith.constant 0 : i32
    return %arg0, %c0_i32, %c0_i32_0, %c0_i32_1 : i32, i32, i32, i32
  }
  func.func @transform_1(%arg0: i32) -> (i32, i32, i32, i32) {
    %c0_i32 = arith.constant 0 : i32
    %c0_i32_0 = arith.constant 0 : i32
    %c0_i32_1 = arith.constant 0 : i32
    %c0_i32_2 = arith.constant 0 : i32
    return %arg0, %c0_i32, %c0_i32_0, %c0_i32_1 : i32, i32, i32, i32
  }
}

module attributes {stable_mosaic.version = 11 : i64} {
  func.func @_matmul_fused_kernel(%arg0: i32, %arg1: memref<128x800xbf16, #tpu.memory_space<vmem>>, %arg2: memref<800x64xbf16, #tpu.memory_space<vmem>>, %arg3: memref<1x64xf32, #tpu.memory_space<vmem>>, %arg4: memref<64x64xf32, #tpu.memory_space<vmem>>, %arg5: memref<128x64xf32, #tpu.memory_space<vmem>>) attributes {dimension_semantics = [#tpu.dimension_semantics<parallel>], iteration_bounds = array<i64: 2>, scalar_prefetch = 0 : i64, scratch_operands = 0 : i64, tpu.core_type = #tpu.core_type<tc>, window_params = [{transform_indices = @transform_0, window_bounds = array<i64: 128, 800>}, {pipeline_mode = #tpu.pipeline_mode<synchronous>, transform_indices = @transform_1, window_bounds = array<i64: 800, 64>}, {pipeline_mode = #tpu.pipeline_mode<synchronous>, transform_indices = @transform_2, window_bounds = array<i64: 1, 64>}, {pipeline_mode = #tpu.pipeline_mode<synchronous>, transform_indices = @transform_3, window_bounds = array<i64: 64, 64>}, {transform_indices = @transform_4, window_bounds = array<i64: 128, 64>}]} {
    %c0 = arith.constant 0 : index
    %c0_0 = arith.constant 0 : index
    %0 = vector.load %arg1[%c0, %c0_0] : memref<128x800xbf16, #tpu.memory_space<vmem>>, vector<128x800xbf16>
    %c0_1 = arith.constant 0 : index
    %c0_2 = arith.constant 0 : index
    %1 = vector.load %arg2[%c0_1, %c0_2] : memref<800x64xbf16, #tpu.memory_space<vmem>>, vector<800x64xbf16>
    %cst = arith.constant dense<0.000000e+00> : vector<128x64xf32>
    %2 = tpu.matmul %0, %1, %cst {dimension_numbers = #tpu.dot_dimension_numbers<[1], [0], [0], [1], [0, 0, 1, 1], [], []>} : vector<128x800xbf16>, vector<800x64xbf16>, vector<128x64xf32> -> vector<128x64xf32>
    %c0_3 = arith.constant 0 : index
    %c0_4 = arith.constant 0 : index
    %3 = vector.load %arg3[%c0_3, %c0_4] : memref<1x64xf32, #tpu.memory_space<vmem>>, vector<1x64xf32>
    %4 = vector.broadcast %3 : vector<1x64xf32> to vector<128x64xf32>
    %5 = arith.addf %2, %4 : vector<128x64xf32>
    %cst_5 = arith.constant 0.000000e+00 : f32
    %6 = vector.broadcast %cst_5 : f32 to vector<128x64xf32>
    %7 = arith.maximumf %5, %6 : vector<128x64xf32>
    %8 = arith.mulf %7, %7 : vector<128x64xf32>
    %c0_6 = arith.constant 0 : index
    %c0_7 = arith.constant 0 : index
    %9 = vector.load %arg4[%c0_6, %c0_7] : memref<64x64xf32, #tpu.memory_space<vmem>>, vector<64x64xf32>
    %cst_8 = arith.constant dense<0.000000e+00> : vector<128x64xf32>
    %10 = tpu.matmul %8, %9, %cst_8 {dimension_numbers = #tpu.dot_dimension_numbers<[1], [0], [0], [1], [0, 0, 1, 1], [], []>} : vector<128x64xf32>, vector<64x64xf32>, vector<128x64xf32> -> vector<128x64xf32>
    %cst_9 = arith.constant 2.000000e-05 : f32
    %11 = vector.broadcast %cst_9 : f32 to vector<128x64xf32>
    %12 = arith.mulf %10, %11 : vector<128x64xf32>
    %cst_10 = arith.constant 1.000000e+00 : f32
    %13 = vector.broadcast %cst_10 : f32 to vector<128x64xf32>
    %14 = arith.addf %12, %13 : vector<128x64xf32>
    %15 = math.log %14 : vector<128x64xf32>
    %cst_11 = arith.constant -7.500000e-01 : f32
    %16 = vector.broadcast %cst_11 : f32 to vector<128x64xf32>
    %17 = arith.mulf %16, %15 : vector<128x64xf32>
    %18 = math.exp %17 : vector<128x64xf32>
    %19 = arith.mulf %7, %18 : vector<128x64xf32>
    %c0_12 = arith.constant 0 : index
    %c0_13 = arith.constant 0 : index
    %20 = vector.load %arg5[%c0_12, %c0_13] : memref<128x64xf32, #tpu.memory_space<vmem>>, vector<128x64xf32>
    tpu.vector_store %arg5[%c0_12, %c0_13], %19 {strides = array<i32>} : memref<128x64xf32, #tpu.memory_space<vmem>>, vector<128x64xf32>,
    return
  }
  func.func @transform_0(%arg0: i32) -> (i32, i32) {
    %c0_i32 = arith.constant 0 : i32
    %c0_i32_0 = arith.constant 0 : i32
    return %arg0, %c0_i32 : i32, i32
  }
  func.func @transform_1(%arg0: i32) -> (i32, i32) {
    %c0_i32 = arith.constant 0 : i32
    %c0_i32_0 = arith.constant 0 : i32
    %c0_i32_1 = arith.constant 0 : i32
    return %c0_i32, %c0_i32_0 : i32, i32
  }
  func.func @transform_2(%arg0: i32) -> (i32, i32) {
    %c0_i32 = arith.constant 0 : i32
    %c0_i32_0 = arith.constant 0 : i32
    %c0_i32_1 = arith.constant 0 : i32
    return %c0_i32, %c0_i32_0 : i32, i32
  }
  func.func @transform_3(%arg0: i32) -> (i32, i32) {
    %c0_i32 = arith.constant 0 : i32
    %c0_i32_0 = arith.constant 0 : i32
    %c0_i32_1 = arith.constant 0 : i32
    return %c0_i32, %c0_i32_0 : i32, i32
  }
  func.func @transform_4(%arg0: i32) -> (i32, i32) {
    %c0_i32 = arith.constant 0 : i32
    %c0_i32_0 = arith.constant 0 : i32
    return %arg0, %c0_i32 : i32, i32
  }
}

module attributes {stable_mosaic.version = 11 : i64} {
  func.func @_maxpool3_kernel(%arg0: i32, %arg1: memref<1x11x11x64xf32, #tpu.memory_space<vmem>>, %arg2: memref<1x9x9x64xf32, #tpu.memory_space<vmem>>) attributes {dimension_semantics = [#tpu.dimension_semantics<parallel>], iteration_bounds = array<i64: 2>, scalar_prefetch = 0 : i64, scratch_operands = 0 : i64, tpu.core_type = #tpu.core_type<tc>, window_params = [{transform_indices = @transform_0, window_bounds = array<i64: 1, 11, 11, 64>}, {transform_indices = @transform_1, window_bounds = array<i64: 1, 9, 9, 64>}]} {
    %c0 = arith.constant 0 : index
    %c0_0 = arith.constant 0 : index
    %c0_1 = arith.constant 0 : index
    %c0_2 = arith.constant 0 : index
    %0 = vector.load %arg1[%c0, %c0_0, %c0_1, %c0_2] : memref<1x11x11x64xf32, #tpu.memory_space<vmem>>, vector<1x11x11x64xf32>
    %1 = vector.extract_strided_slice %0 {offsets = [0, 0, 0, 0], sizes = [1, 9, 11, 64], strides = [1, 1, 1, 1]} : vector<1x11x11x64xf32> to vector<1x9x11x64xf32>
    %2 = vector.extract_strided_slice %0 {offsets = [0, 1, 0, 0], sizes = [1, 9, 11, 64], strides = [1, 1, 1, 1]} : vector<1x11x11x64xf32> to vector<1x9x11x64xf32>
    %3 = arith.maximumf %1, %2 : vector<1x9x11x64xf32>
    %4 = vector.extract_strided_slice %0 {offsets = [0, 2, 0, 0], sizes = [1, 9, 11, 64], strides = [1, 1, 1, 1]} : vector<1x11x11x64xf32> to vector<1x9x11x64xf32>
    %5 = arith.maximumf %3, %4 : vector<1x9x11x64xf32>
    %6 = vector.extract_strided_slice %5 {offsets = [0, 0, 0, 0], sizes = [1, 9, 9, 64], strides = [1, 1, 1, 1]} : vector<1x9x11x64xf32> to vector<1x9x9x64xf32>
    %7 = vector.extract_strided_slice %5 {offsets = [0, 0, 1, 0], sizes = [1, 9, 9, 64], strides = [1, 1, 1, 1]} : vector<1x9x11x64xf32> to vector<1x9x9x64xf32>
    %8 = arith.maximumf %6, %7 : vector<1x9x9x64xf32>
    %9 = vector.extract_strided_slice %5 {offsets = [0, 0, 2, 0], sizes = [1, 9, 9, 64], strides = [1, 1, 1, 1]} : vector<1x9x11x64xf32> to vector<1x9x9x64xf32>
    %10 = arith.maximumf %8, %9 : vector<1x9x9x64xf32>
    %c0_3 = arith.constant 0 : index
    %c0_4 = arith.constant 0 : index
    %c0_5 = arith.constant 0 : index
    %c0_6 = arith.constant 0 : index
    %11 = vector.load %arg2[%c0_3, %c0_4, %c0_5, %c0_6] : memref<1x9x9x64xf32, #tpu.memory_space<vmem>>, vector<1x9x9x64xf32>
    tpu.vector_store %arg2[%c0_3, %c0_4, %c0_5, %c0_6], %10 {strides = array<i32>} : memref<1x9x9x64xf32, #tpu.memory_space<vmem>>, vector<1x9x9x64xf32>,
    return
  }
  func.func @transform_0(%arg0: i32) -> (i32, i32, i32, i32) {
    %c0_i32 = arith.constant 0 : i32
    %c0_i32_0 = arith.constant 0 : i32
    %c0_i32_1 = arith.constant 0 : i32
    %c0_i32_2 = arith.constant 0 : i32
    return %arg0, %c0_i32, %c0_i32_0, %c0_i32_1 : i32, i32, i32, i32
  }
  func.func @transform_1(%arg0: i32) -> (i32, i32, i32, i32) {
    %c0_i32 = arith.constant 0 : i32
    %c0_i32_0 = arith.constant 0 : i32
    %c0_i32_1 = arith.constant 0 : i32
    %c0_i32_2 = arith.constant 0 : i32
    return %arg0, %c0_i32, %c0_i32_0, %c0_i32_1 : i32, i32, i32, i32
  }
}

module attributes {stable_mosaic.version = 11 : i64} {
  func.func @_matmul_fused_kernel(%arg0: i32, %arg1: memref<32x576xbf16, #tpu.memory_space<vmem>>, %arg2: memref<576x96xbf16, #tpu.memory_space<vmem>>, %arg3: memref<1x96xf32, #tpu.memory_space<vmem>>, %arg4: memref<32x96xf32, #tpu.memory_space<vmem>>) attributes {dimension_semantics = [#tpu.dimension_semantics<parallel>], iteration_bounds = array<i64: 2>, scalar_prefetch = 0 : i64, scratch_operands = 0 : i64, tpu.core_type = #tpu.core_type<tc>, window_params = [{transform_indices = @transform_0, window_bounds = array<i64: 32, 576>}, {pipeline_mode = #tpu.pipeline_mode<synchronous>, transform_indices = @transform_1, window_bounds = array<i64: 576, 96>}, {pipeline_mode = #tpu.pipeline_mode<synchronous>, transform_indices = @transform_2, window_bounds = array<i64: 1, 96>}, {transform_indices = @transform_3, window_bounds = array<i64: 32, 96>}]} {
    %c0 = arith.constant 0 : index
    %c0_0 = arith.constant 0 : index
    %0 = vector.load %arg1[%c0, %c0_0] : memref<32x576xbf16, #tpu.memory_space<vmem>>, vector<32x576xbf16>
    %c0_1 = arith.constant 0 : index
    %c0_2 = arith.constant 0 : index
    %1 = vector.load %arg2[%c0_1, %c0_2] : memref<576x96xbf16, #tpu.memory_space<vmem>>, vector<576x96xbf16>
    %cst = arith.constant dense<0.000000e+00> : vector<32x96xf32>
    %2 = tpu.matmul %0, %1, %cst {dimension_numbers = #tpu.dot_dimension_numbers<[1], [0], [0], [1], [0, 0, 1, 1], [], []>} : vector<32x576xbf16>, vector<576x96xbf16>, vector<32x96xf32> -> vector<32x96xf32>
    %c0_3 = arith.constant 0 : index
    %c0_4 = arith.constant 0 : index
    %3 = vector.load %arg3[%c0_3, %c0_4] : memref<1x96xf32, #tpu.memory_space<vmem>>, vector<1x96xf32>
    %4 = vector.broadcast %3 : vector<1x96xf32> to vector<32x96xf32>
    %5 = arith.addf %2, %4 : vector<32x96xf32>
    %cst_5 = arith.constant 0.000000e+00 : f32
    %6 = vector.broadcast %cst_5 : f32 to vector<32x96xf32>
    %7 = arith.maximumf %5, %6 : vector<32x96xf32>
    %c0_6 = arith.constant 0 : index
    %c0_7 = arith.constant 0 : index
    %8 = vector.load %arg4[%c0_6, %c0_7] : memref<32x96xf32, #tpu.memory_space<vmem>>, vector<32x96xf32>
    tpu.vector_store %arg4[%c0_6, %c0_7], %7 {strides = array<i32>} : memref<32x96xf32, #tpu.memory_space<vmem>>, vector<32x96xf32>,
    return
  }
  func.func @transform_0(%arg0: i32) -> (i32, i32) {
    %c0_i32 = arith.constant 0 : i32
    %c0_i32_0 = arith.constant 0 : i32
    return %arg0, %c0_i32 : i32, i32
  }
  func.func @transform_1(%arg0: i32) -> (i32, i32) {
    %c0_i32 = arith.constant 0 : i32
    %c0_i32_0 = arith.constant 0 : i32
    %c0_i32_1 = arith.constant 0 : i32
    return %c0_i32, %c0_i32_0 : i32, i32
  }
  func.func @transform_2(%arg0: i32) -> (i32, i32) {
    %c0_i32 = arith.constant 0 : i32
    %c0_i32_0 = arith.constant 0 : i32
    %c0_i32_1 = arith.constant 0 : i32
    return %c0_i32, %c0_i32_0 : i32, i32
  }
  func.func @transform_3(%arg0: i32) -> (i32, i32) {
    %c0_i32 = arith.constant 0 : i32
    %c0_i32_0 = arith.constant 0 : i32
    return %arg0, %c0_i32 : i32, i32
  }
}

module attributes {stable_mosaic.version = 11 : i64} {
  func.func @_matmul_fused_kernel(%arg0: i32, %arg1: memref<32x864xbf16, #tpu.memory_space<vmem>>, %arg2: memref<864x96xbf16, #tpu.memory_space<vmem>>, %arg3: memref<1x96xf32, #tpu.memory_space<vmem>>, %arg4: memref<32x96xf32, #tpu.memory_space<vmem>>) attributes {dimension_semantics = [#tpu.dimension_semantics<parallel>], iteration_bounds = array<i64: 2>, scalar_prefetch = 0 : i64, scratch_operands = 0 : i64, tpu.core_type = #tpu.core_type<tc>, window_params = [{transform_indices = @transform_0, window_bounds = array<i64: 32, 864>}, {pipeline_mode = #tpu.pipeline_mode<synchronous>, transform_indices = @transform_1, window_bounds = array<i64: 864, 96>}, {pipeline_mode = #tpu.pipeline_mode<synchronous>, transform_indices = @transform_2, window_bounds = array<i64: 1, 96>}, {transform_indices = @transform_3, window_bounds = array<i64: 32, 96>}]} {
    %c0 = arith.constant 0 : index
    %c0_0 = arith.constant 0 : index
    %0 = vector.load %arg1[%c0, %c0_0] : memref<32x864xbf16, #tpu.memory_space<vmem>>, vector<32x864xbf16>
    %c0_1 = arith.constant 0 : index
    %c0_2 = arith.constant 0 : index
    %1 = vector.load %arg2[%c0_1, %c0_2] : memref<864x96xbf16, #tpu.memory_space<vmem>>, vector<864x96xbf16>
    %cst = arith.constant dense<0.000000e+00> : vector<32x96xf32>
    %2 = tpu.matmul %0, %1, %cst {dimension_numbers = #tpu.dot_dimension_numbers<[1], [0], [0], [1], [0, 0, 1, 1], [], []>} : vector<32x864xbf16>, vector<864x96xbf16>, vector<32x96xf32> -> vector<32x96xf32>
    %c0_3 = arith.constant 0 : index
    %c0_4 = arith.constant 0 : index
    %3 = vector.load %arg3[%c0_3, %c0_4] : memref<1x96xf32, #tpu.memory_space<vmem>>, vector<1x96xf32>
    %4 = vector.broadcast %3 : vector<1x96xf32> to vector<32x96xf32>
    %5 = arith.addf %2, %4 : vector<32x96xf32>
    %cst_5 = arith.constant 0.000000e+00 : f32
    %6 = vector.broadcast %cst_5 : f32 to vector<32x96xf32>
    %7 = arith.maximumf %5, %6 : vector<32x96xf32>
    %c0_6 = arith.constant 0 : index
    %c0_7 = arith.constant 0 : index
    %8 = vector.load %arg4[%c0_6, %c0_7] : memref<32x96xf32, #tpu.memory_space<vmem>>, vector<32x96xf32>
    tpu.vector_store %arg4[%c0_6, %c0_7], %7 {strides = array<i32>} : memref<32x96xf32, #tpu.memory_space<vmem>>, vector<32x96xf32>,
    return
  }
  func.func @transform_0(%arg0: i32) -> (i32, i32) {
    %c0_i32 = arith.constant 0 : i32
    %c0_i32_0 = arith.constant 0 : i32
    return %arg0, %c0_i32 : i32, i32
  }
  func.func @transform_1(%arg0: i32) -> (i32, i32) {
    %c0_i32 = arith.constant 0 : i32
    %c0_i32_0 = arith.constant 0 : i32
    %c0_i32_1 = arith.constant 0 : i32
    return %c0_i32, %c0_i32_0 : i32, i32
  }
  func.func @transform_2(%arg0: i32) -> (i32, i32) {
    %c0_i32 = arith.constant 0 : i32
    %c0_i32_0 = arith.constant 0 : i32
    %c0_i32_1 = arith.constant 0 : i32
    return %c0_i32, %c0_i32_0 : i32, i32
  }
  func.func @transform_3(%arg0: i32) -> (i32, i32) {
    %c0_i32 = arith.constant 0 : i32
    %c0_i32_0 = arith.constant 0 : i32
    return %arg0, %c0_i32 : i32, i32
  }
}

module attributes {stable_mosaic.version = 11 : i64} {
  func.func @_matmul_fused_kernel(%arg0: i32, %arg1: memref<32x864xbf16, #tpu.memory_space<vmem>>, %arg2: memref<864x64xbf16, #tpu.memory_space<vmem>>, %arg3: memref<1x64xf32, #tpu.memory_space<vmem>>, %arg4: memref<32x64xf32, #tpu.memory_space<vmem>>) attributes {dimension_semantics = [#tpu.dimension_semantics<parallel>], iteration_bounds = array<i64: 2>, scalar_prefetch = 0 : i64, scratch_operands = 0 : i64, tpu.core_type = #tpu.core_type<tc>, window_params = [{transform_indices = @transform_0, window_bounds = array<i64: 32, 864>}, {pipeline_mode = #tpu.pipeline_mode<synchronous>, transform_indices = @transform_1, window_bounds = array<i64: 864, 64>}, {pipeline_mode = #tpu.pipeline_mode<synchronous>, transform_indices = @transform_2, window_bounds = array<i64: 1, 64>}, {transform_indices = @transform_3, window_bounds = array<i64: 32, 64>}]} {
    %c0 = arith.constant 0 : index
    %c0_0 = arith.constant 0 : index
    %0 = vector.load %arg1[%c0, %c0_0] : memref<32x864xbf16, #tpu.memory_space<vmem>>, vector<32x864xbf16>
    %c0_1 = arith.constant 0 : index
    %c0_2 = arith.constant 0 : index
    %1 = vector.load %arg2[%c0_1, %c0_2] : memref<864x64xbf16, #tpu.memory_space<vmem>>, vector<864x64xbf16>
    %cst = arith.constant dense<0.000000e+00> : vector<32x64xf32>
    %2 = tpu.matmul %0, %1, %cst {dimension_numbers = #tpu.dot_dimension_numbers<[1], [0], [0], [1], [0, 0, 1, 1], [], []>} : vector<32x864xbf16>, vector<864x64xbf16>, vector<32x64xf32> -> vector<32x64xf32>
    %c0_3 = arith.constant 0 : index
    %c0_4 = arith.constant 0 : index
    %3 = vector.load %arg3[%c0_3, %c0_4] : memref<1x64xf32, #tpu.memory_space<vmem>>, vector<1x64xf32>
    %4 = vector.broadcast %3 : vector<1x64xf32> to vector<32x64xf32>
    %5 = arith.addf %2, %4 : vector<32x64xf32>
    %cst_5 = arith.constant 0.000000e+00 : f32
    %6 = vector.broadcast %cst_5 : f32 to vector<32x64xf32>
    %7 = arith.maximumf %5, %6 : vector<32x64xf32>
    %c0_6 = arith.constant 0 : index
    %c0_7 = arith.constant 0 : index
    %8 = vector.load %arg4[%c0_6, %c0_7] : memref<32x64xf32, #tpu.memory_space<vmem>>, vector<32x64xf32>
    tpu.vector_store %arg4[%c0_6, %c0_7], %7 {strides = array<i32>} : memref<32x64xf32, #tpu.memory_space<vmem>>, vector<32x64xf32>,
    return
  }
  func.func @transform_0(%arg0: i32) -> (i32, i32) {
    %c0_i32 = arith.constant 0 : i32
    %c0_i32_0 = arith.constant 0 : i32
    return %arg0, %c0_i32 : i32, i32
  }
  func.func @transform_1(%arg0: i32) -> (i32, i32) {
    %c0_i32 = arith.constant 0 : i32
    %c0_i32_0 = arith.constant 0 : i32
    %c0_i32_1 = arith.constant 0 : i32
    return %c0_i32, %c0_i32_0 : i32, i32
  }
  func.func @transform_2(%arg0: i32) -> (i32, i32) {
    %c0_i32 = arith.constant 0 : i32
    %c0_i32_0 = arith.constant 0 : i32
    %c0_i32_1 = arith.constant 0 : i32
    return %c0_i32, %c0_i32_0 : i32, i32
  }
  func.func @transform_3(%arg0: i32) -> (i32, i32) {
    %c0_i32 = arith.constant 0 : i32
    %c0_i32_0 = arith.constant 0 : i32
    return %arg0, %c0_i32 : i32, i32
  }
}

module attributes {stable_mosaic.version = 11 : i64} {
  func.func @_maxpool3_kernel(%arg0: i32, %arg1: memref<1x5x5x64xf32, #tpu.memory_space<vmem>>, %arg2: memref<1x3x3x64xf32, #tpu.memory_space<vmem>>) attributes {dimension_semantics = [#tpu.dimension_semantics<parallel>], iteration_bounds = array<i64: 2>, scalar_prefetch = 0 : i64, scratch_operands = 0 : i64, tpu.core_type = #tpu.core_type<tc>, window_params = [{transform_indices = @transform_0, window_bounds = array<i64: 1, 5, 5, 64>}, {transform_indices = @transform_1, window_bounds = array<i64: 1, 3, 3, 64>}]} {
    %c0 = arith.constant 0 : index
    %c0_0 = arith.constant 0 : index
    %c0_1 = arith.constant 0 : index
    %c0_2 = arith.constant 0 : index
    %0 = vector.load %arg1[%c0, %c0_0, %c0_1, %c0_2] : memref<1x5x5x64xf32, #tpu.memory_space<vmem>>, vector<1x5x5x64xf32>
    %1 = vector.extract_strided_slice %0 {offsets = [0, 0, 0, 0], sizes = [1, 3, 5, 64], strides = [1, 1, 1, 1]} : vector<1x5x5x64xf32> to vector<1x3x5x64xf32>
    %2 = vector.extract_strided_slice %0 {offsets = [0, 1, 0, 0], sizes = [1, 3, 5, 64], strides = [1, 1, 1, 1]} : vector<1x5x5x64xf32> to vector<1x3x5x64xf32>
    %3 = arith.maximumf %1, %2 : vector<1x3x5x64xf32>
    %4 = vector.extract_strided_slice %0 {offsets = [0, 2, 0, 0], sizes = [1, 3, 5, 64], strides = [1, 1, 1, 1]} : vector<1x5x5x64xf32> to vector<1x3x5x64xf32>
    %5 = arith.maximumf %3, %4 : vector<1x3x5x64xf32>
    %6 = vector.extract_strided_slice %5 {offsets = [0, 0, 0, 0], sizes = [1, 3, 3, 64], strides = [1, 1, 1, 1]} : vector<1x3x5x64xf32> to vector<1x3x3x64xf32>
    %7 = vector.extract_strided_slice %5 {offsets = [0, 0, 1, 0], sizes = [1, 3, 3, 64], strides = [1, 1, 1, 1]} : vector<1x3x5x64xf32> to vector<1x3x3x64xf32>
    %8 = arith.maximumf %6, %7 : vector<1x3x3x64xf32>
    %9 = vector.extract_strided_slice %5 {offsets = [0, 0, 2, 0], sizes = [1, 3, 3, 64], strides = [1, 1, 1, 1]} : vector<1x3x5x64xf32> to vector<1x3x3x64xf32>
    %10 = arith.maximumf %8, %9 : vector<1x3x3x64xf32>
    %c0_3 = arith.constant 0 : index
    %c0_4 = arith.constant 0 : index
    %c0_5 = arith.constant 0 : index
    %c0_6 = arith.constant 0 : index
    %11 = vector.load %arg2[%c0_3, %c0_4, %c0_5, %c0_6] : memref<1x3x3x64xf32, #tpu.memory_space<vmem>>, vector<1x3x3x64xf32>
    tpu.vector_store %arg2[%c0_3, %c0_4, %c0_5, %c0_6], %10 {strides = array<i32>} : memref<1x3x3x64xf32, #tpu.memory_space<vmem>>, vector<1x3x3x64xf32>,
    return
  }
  func.func @transform_0(%arg0: i32) -> (i32, i32, i32, i32) {
    %c0_i32 = arith.constant 0 : i32
    %c0_i32_0 = arith.constant 0 : i32
    %c0_i32_1 = arith.constant 0 : i32
    %c0_i32_2 = arith.constant 0 : i32
    return %arg0, %c0_i32, %c0_i32_0, %c0_i32_1 : i32, i32, i32, i32
  }
  func.func @transform_1(%arg0: i32) -> (i32, i32, i32, i32) {
    %c0_i32 = arith.constant 0 : i32
    %c0_i32_0 = arith.constant 0 : i32
    %c0_i32_1 = arith.constant 0 : i32
    %c0_i32_2 = arith.constant 0 : i32
    return %arg0, %c0_i32, %c0_i32_0, %c0_i32_1 : i32, i32, i32, i32
  }
}

module attributes {stable_mosaic.version = 11 : i64} {
  func.func @_classifier_kernel(%arg0: i32, %arg1: memref<8x256xf32, #tpu.memory_space<vmem>>, %arg2: memref<256x128xf32, #tpu.memory_space<vmem>>, %arg3: memref<1x128xf32, #tpu.memory_space<vmem>>, %arg4: memref<128x128xf32, #tpu.memory_space<vmem>>, %arg5: memref<1x128xf32, #tpu.memory_space<vmem>>, %arg6: memref<128x32xf32, #tpu.memory_space<vmem>>, %arg7: memref<1x32xf32, #tpu.memory_space<vmem>>, %arg8: memref<32x10xf32, #tpu.memory_space<vmem>>, %arg9: memref<1x10xf32, #tpu.memory_space<vmem>>, %arg10: memref<8x32xf32, #tpu.memory_space<vmem>>, %arg11: memref<8x10xf32, #tpu.memory_space<vmem>>) attributes {dimension_semantics = [#tpu.dimension_semantics<arbitrary>], iteration_bounds = array<i64: 1>, scalar_prefetch = 0 : i64, scratch_operands = 0 : i64, tpu.core_type = #tpu.core_type<tc>, window_params = [{pipeline_mode = #tpu.pipeline_mode<synchronous>, transform_indices = @transform_0, window_bounds = array<i64: 8, 256>}, {pipeline_mode = #tpu.pipeline_mode<synchronous>, transform_indices = @transform_1, window_bounds = array<i64: 256, 128>}, {pipeline_mode = #tpu.pipeline_mode<synchronous>, transform_indices = @transform_2, window_bounds = array<i64: 1, 128>}, {pipeline_mode = #tpu.pipeline_mode<synchronous>, transform_indices = @transform_3, window_bounds = array<i64: 128, 128>}, {pipeline_mode = #tpu.pipeline_mode<synchronous>, transform_indices = @transform_4, window_bounds = array<i64: 1, 128>}, {pipeline_mode = #tpu.pipeline_mode<synchronous>, transform_indices = @transform_5, window_bounds = array<i64: 128, 32>}, {pipeline_mode = #tpu.pipeline_mode<synchronous>, transform_indices = @transform_6, window_bounds = array<i64: 1, 32>}, {pipeline_mode = #tpu.pipeline_mode<synchronous>, transform_indices = @transform_7, window_bounds = array<i64: 32, 10>}, {pipeline_mode = #tpu.pipeline_mode<synchronous>, transform_indices = @transform_8, window_bounds = array<i64: 1, 10>}, {pipeline_mode = #tpu.pipeline_mode<synchronous>, transform_indices = @transform_9, window_bounds = array<i64: 8, 32>}, {pipeline_mode = #tpu.pipeline_mode<synchronous>, transform_indices = @transform_10, window_bounds = array<i64: 8, 10>}]} {
    %c0 = arith.constant 0 : index
    %c0_0 = arith.constant 0 : index
    %0 = vector.load %arg1[%c0, %c0_0] : memref<8x256xf32, #tpu.memory_space<vmem>>, vector<8x256xf32>
    %c0_1 = arith.constant 0 : index
    %c0_2 = arith.constant 0 : index
    %1 = vector.load %arg2[%c0_1, %c0_2] : memref<256x128xf32, #tpu.memory_space<vmem>>, vector<256x128xf32>
    %cst = arith.constant dense<0.000000e+00> : vector<8x128xf32>
    %2 = tpu.matmul %0, %1, %cst {dimension_numbers = #tpu.dot_dimension_numbers<[1], [0], [0], [1], [0, 0, 1, 1], [], []>} : vector<8x256xf32>, vector<256x128xf32>, vector<8x128xf32> -> vector<8x128xf32>
    %c0_3 = arith.constant 0 : index
    %c0_4 = arith.constant 0 : index
    %3 = vector.load %arg3[%c0_3, %c0_4] : memref<1x128xf32, #tpu.memory_space<vmem>>, vector<1x128xf32>
    %4 = vector.broadcast %3 : vector<1x128xf32> to vector<8x128xf32>
    %5 = arith.addf %2, %4 : vector<8x128xf32>
    %cst_5 = arith.constant 0.000000e+00 : f32
    %6 = vector.broadcast %cst_5 : f32 to vector<8x128xf32>
    %7 = arith.maximumf %5, %6 : vector<8x128xf32>
    %c0_6 = arith.constant 0 : index
    %c0_7 = arith.constant 0 : index
    %8 = vector.load %arg4[%c0_6, %c0_7] : memref<128x128xf32, #tpu.memory_space<vmem>>, vector<128x128xf32>
    %cst_8 = arith.constant dense<0.000000e+00> : vector<8x128xf32>
    %9 = tpu.matmul %7, %8, %cst_8 {dimension_numbers = #tpu.dot_dimension_numbers<[1], [0], [0], [1], [0, 0, 1, 1], [], []>} : vector<8x128xf32>, vector<128x128xf32>, vector<8x128xf32> -> vector<8x128xf32>
    %c0_9 = arith.constant 0 : index
    %c0_10 = arith.constant 0 : index
    %10 = vector.load %arg5[%c0_9, %c0_10] : memref<1x128xf32, #tpu.memory_space<vmem>>, vector<1x128xf32>
    %11 = vector.broadcast %10 : vector<1x128xf32> to vector<8x128xf32>
    %12 = arith.addf %9, %11 : vector<8x128xf32>
    %cst_11 = arith.constant 0.000000e+00 : f32
    %13 = vector.broadcast %cst_11 : f32 to vector<8x128xf32>
    %14 = arith.maximumf %12, %13 : vector<8x128xf32>
    %c0_12 = arith.constant 0 : index
    %c0_13 = arith.constant 0 : index
    %15 = vector.load %arg6[%c0_12, %c0_13] : memref<128x32xf32, #tpu.memory_space<vmem>>, vector<128x32xf32>
    %cst_14 = arith.constant dense<0.000000e+00> : vector<8x32xf32>
    %16 = tpu.matmul %14, %15, %cst_14 {dimension_numbers = #tpu.dot_dimension_numbers<[1], [0], [0], [1], [0, 0, 1, 1], [], []>} : vector<8x128xf32>, vector<128x32xf32>, vector<8x32xf32> -> vector<8x32xf32>
    %c0_15 = arith.constant 0 : index
    %c0_16 = arith.constant 0 : index
    %17 = vector.load %arg7[%c0_15, %c0_16] : memref<1x32xf32, #tpu.memory_space<vmem>>, vector<1x32xf32>
    %18 = vector.broadcast %17 : vector<1x32xf32> to vector<8x32xf32>
    %19 = arith.addf %16, %18 : vector<8x32xf32>
    %c0_17 = arith.constant 0 : index
    %c0_18 = arith.constant 0 : index
    %20 = vector.load %arg8[%c0_17, %c0_18] : memref<32x10xf32, #tpu.memory_space<vmem>>, vector<32x10xf32>
    %cst_19 = arith.constant dense<0.000000e+00> : vector<8x10xf32>
    %21 = tpu.matmul %19, %20, %cst_19 {dimension_numbers = #tpu.dot_dimension_numbers<[1], [0], [0], [1], [0, 0, 1, 1], [], []>} : vector<8x32xf32>, vector<32x10xf32>, vector<8x10xf32> -> vector<8x10xf32>
    %c0_20 = arith.constant 0 : index
    %c0_21 = arith.constant 0 : index
    %22 = vector.load %arg9[%c0_20, %c0_21] : memref<1x10xf32, #tpu.memory_space<vmem>>, vector<1x10xf32>
    %23 = vector.broadcast %22 : vector<1x10xf32> to vector<8x10xf32>
    %24 = arith.addf %21, %23 : vector<8x10xf32>
    %c0_22 = arith.constant 0 : index
    %c0_23 = arith.constant 0 : index
    %25 = vector.load %arg10[%c0_22, %c0_23] : memref<8x32xf32, #tpu.memory_space<vmem>>, vector<8x32xf32>
    tpu.vector_store %arg10[%c0_22, %c0_23], %19 {strides = array<i32>} : memref<8x32xf32, #tpu.memory_space<vmem>>, vector<8x32xf32>,
    %c0_24 = arith.constant 0 : index
    %c0_25 = arith.constant 0 : index
    %26 = vector.load %arg11[%c0_24, %c0_25] : memref<8x10xf32, #tpu.memory_space<vmem>>, vector<8x10xf32>
    tpu.vector_store %arg11[%c0_24, %c0_25], %24 {strides = array<i32>} : memref<8x10xf32, #tpu.memory_space<vmem>>, vector<8x10xf32>,
    return
  }
  func.func @transform_0(%arg0: i32) -> (i32, i32) {
    %c0_i32 = arith.constant 0 : i32
    %c0_i32_0 = arith.constant 0 : i32
    %c0_i32_1 = arith.constant 0 : i32
    return %c0_i32, %c0_i32_0 : i32, i32
  }
  func.func @transform_1(%arg0: i32) -> (i32, i32) {
    %c0_i32 = arith.constant 0 : i32
    %c0_i32_0 = arith.constant 0 : i32
    %c0_i32_1 = arith.constant 0 : i32
    return %c0_i32, %c0_i32_0 : i32, i32
  }
  func.func @transform_2(%arg0: i32) -> (i32, i32) {
    %c0_i32 = arith.constant 0 : i32
    %c0_i32_0 = arith.constant 0 : i32
    %c0_i32_1 = arith.constant 0 : i32
    return %c0_i32, %c0_i32_0 : i32, i32
  }
  func.func @transform_3(%arg0: i32) -> (i32, i32) {
    %c0_i32 = arith.constant 0 : i32
    %c0_i32_0 = arith.constant 0 : i32
    %c0_i32_1 = arith.constant 0 : i32
    return %c0_i32, %c0_i32_0 : i32, i32
  }
  func.func @transform_4(%arg0: i32) -> (i32, i32) {
    %c0_i32 = arith.constant 0 : i32
    %c0_i32_0 = arith.constant 0 : i32
    %c0_i32_1 = arith.constant 0 : i32
    return %c0_i32, %c0_i32_0 : i32, i32
  }
  func.func @transform_5(%arg0: i32) -> (i32, i32) {
    %c0_i32 = arith.constant 0 : i32
    %c0_i32_0 = arith.constant 0 : i32
    %c0_i32_1 = arith.constant 0 : i32
    return %c0_i32, %c0_i32_0 : i32, i32
  }
  func.func @transform_6(%arg0: i32) -> (i32, i32) {
    %c0_i32 = arith.constant 0 : i32
    %c0_i32_0 = arith.constant 0 : i32
    %c0_i32_1 = arith.constant 0 : i32
    return %c0_i32, %c0_i32_0 : i32, i32
  }
  func.func @transform_7(%arg0: i32) -> (i32, i32) {
    %c0_i32 = arith.constant 0 : i32
    %c0_i32_0 = arith.constant 0 : i32
    %c0_i32_1 = arith.constant 0 : i32
    return %c0_i32, %c0_i32_0 : i32, i32
  }
  func.func @transform_8(%arg0: i32) -> (i32, i32) {
    %c0_i32 = arith.constant 0 : i32
    %c0_i32_0 = arith.constant 0 : i32
    %c0_i32_1 = arith.constant 0 : i32
    return %c0_i32, %c0_i32_0 : i32, i32
  }
  func.func @transform_9(%arg0: i32) -> (i32, i32) {
    %c0_i32 = arith.constant 0 : i32
    %c0_i32_0 = arith.constant 0 : i32
    %c0_i32_1 = arith.constant 0 : i32
    return %c0_i32, %c0_i32_0 : i32, i32
  }
  func.func @transform_10(%arg0: i32) -> (i32, i32) {
    %c0_i32 = arith.constant 0 : i32
    %c0_i32_0 = arith.constant 0 : i32
    %c0_i32_1 = arith.constant 0 : i32
    return %c0_i32, %c0_i32_0 : i32, i32
  }
}

</mosaic_0001>

<llo_original>
// kernel: alexnet_fc_forward.9
$region0: #{alexnet_fc_forward.9}
  #allocation0 [shape = 'u32[]', space=smem, size = 0x4, offset = 0x4, fixed_abs, tag = 'smem constant byte address 0x4 - core index']
  #allocation1 [shape = 'u32[144,128]{1,0:T(1,128)}', space=vmem, size = 0x12000, scoped, tag = 'internal scratch']
  %s0 = inlined_call_operand.vmem [shape: bf16[1152,363], index: 0, kind: input, shape index: {}]
  %s1 = inlined_call_operand.vmem [shape: bf16[363,32], index: 1, kind: input, shape index: {}]
  %s2 = inlined_call_operand.vmem [shape: f32[1,32], index: 2, kind: input, shape index: {}]
  %s3 = inlined_call_operand.vmem [shape: f32[32,32], index: 3, kind: input, shape index: {}]
  %s4 = inlined_call_operand.vmem [shape: f32[1152,32], index: 4, kind: output, shape index: {}]
  %s5 = sld [smem:[#allocation0]]
  $region49: #{alexnet_fc_forward.9} parent=0
    _
  %s7 = ssub.s32 1, %s5
  %s8 = scalar_select 0, %s7, %s5
  loop: start=0, step=1, limit=11
  $region2: #{alexnet_fc_forward.9} parent=0 // loop_pre_header
    _
  $region3: #{alexnet_fc_forward.9} parent=0 // loop_header
    %s10 = sphi 0, %s14
    %p11 = scmp.ge.s32.totalorder %s10, 11
    %s20 = sphi 0, %s22
    %s23 = sphi 0, %s20
    %s24 = sphi 0, %s23
    %s40 = sphi 0, %s24
    %s44 = sphi 0, %s44
    %s46 = sphi 0, %s44
    %s47 = sphi 0, %s46
    %s61 = sphi 0, %s47
    %s65 = sphi 0, %s65
    %s67 = sphi 0, %s65
    %s68 = sphi 0, %s67
    %s82 = sphi 0, %s68
    %s86 = sphi 0, %s86
    %s88 = sphi 0, %s86
    %s89 = sphi 0, %s88
    %s103 = sphi 0, %s89
    %s109 = sphi 0, %s111
    %s112 = sphi 0, %s109
    %s113 = sphi 0, %s112
    %s129 = sphi 0, %s113
  $region4: #{alexnet_fc_forward.9} parent=0 // loop_header_branch
    %13 = sbr.rel (%p11) target = $region8
  $region5: #{alexnet_fc_forward.9} parent=0 // loop_body
    %s15 = ssub.s32 %s10, 1
    %s16 = ssub.s32 %s10, 2
    %s17 = sadd.s32 %s10, 1
    %s18 = ssub.s32 %s10, %s17
    %p19 = scmp.eq.s32.totalorder %s18, 0
    %s21 = sadd.s32 %s20, 1
    %s22 = scalar_select %p19, %s20, %s21
    %p25 = pneg %p19
    %p26 = scmp.eq.s32.totalorder %s10, 8
    %p27 = por %p25, %p26
    %p28 = scmp.ne.s32.totalorder %s20, %s23
    %p29 = scmp.eq.s32.totalorder %s10, 0
    %p30 = por %p28, %p29
    %p31 = scmp.ne.s32.totalorder %s20, %s23
    %p32 = scmp.eq.s32.totalorder %s15, 8
    %p33 = por %p31, %p32
    %p34 = scmp.ne.s32.totalorder %s23, %s24
    %p35 = scmp.eq.s32.totalorder %s15, 0
    %p36 = por %p34, %p35
    %p37 = scmp.ne.s32.totalorder %s23, %s24
    %p38 = scmp.eq.s32.totalorder %s16, 8
    %p39 = por %p37, %p38
    %p41 = scmp.ne.s32.totalorder %s24, %s40
    %p42 = scmp.eq.s32.totalorder %s16, 0
    %p43 = por %p41, %p42
    %s45 = sadd.s32 %s44, 1
    %p48 = scmp.eq.s32.totalorder %s10, 8
    %p49 = scmp.ne.s32.totalorder %s44, %s46
    %p50 = scmp.eq.s32.totalorder %s10, 0
    %p51 = por %p49, %p50
    %p52 = scmp.ne.s32.totalorder %s44, %s46
    %p53 = scmp.eq.s32.totalorder %s15, 8
    %p54 = por %p52, %p53
    %p55 = scmp.ne.s32.totalorder %s46, %s47
    %p56 = scmp.eq.s32.totalorder %s15, 0
    %p57 = por %p55, %p56
    %p58 = scmp.ne.s32.totalorder %s46, %s47
    %p59 = scmp.eq.s32.totalorder %s16, 8
    %p60 = por %p58, %p59
    %p62 = scmp.ne.s32.totalorder %s47, %s61
    %p63 = scmp.eq.s32.totalorder %s16, 0
    %p64 = por %p62, %p63
    %s66 = sadd.s32 %s65, 1
    %p69 = scmp.eq.s32.totalorder %s10, 8
    %p70 = scmp.ne.s32.totalorder %s65, %s67
    %p71 = scmp.eq.s32.totalorder %s10, 0
    %p72 = por %p70, %p71
    %p73 = scmp.ne.s32.totalorder %s65, %s67
    %p74 = scmp.eq.s32.totalorder %s15, 8
    %p75 = por %p73, %p74
    %p76 = scmp.ne.s32.totalorder %s67, %s68
    %p77 = scmp.eq.s32.totalorder %s15, 0
    %p78 = por %p76, %p77
    %p79 = scmp.ne.s32.totalorder %s67, %s68
    %p80 = scmp.eq.s32.totalorder %s16, 8
    %p81 = por %p79, %p80
    %p83 = scmp.ne.s32.totalorder %s68, %s82
    %p84 = scmp.eq.s32.totalorder %s16, 0
    %p85 = por %p83, %p84
    %s87 = sadd.s32 %s86, 1
    %p90 = scmp.eq.s32.totalorder %s10, 8
    %p91 = scmp.ne.s32.totalorder %s86, %s88
    %p92 = scmp.eq.s32.totalorder %s10, 0
    %p93 = por %p91, %p92
    %p94 = scmp.ne.s32.totalorder %s86, %s88
    %p95 = scmp.eq.s32.totalorder %s15, 8
    %p96 = por %p94, %p95
    %p97 = scmp.ne.s32.totalorder %s88, %s89
    %p98 = scmp.eq.s32.totalorder %s15, 0
    %p99 = por %p97, %p98
    %p100 = scmp.ne.s32.totalorder %s88, %s89
    %p101 = scmp.eq.s32.totalorder %s16, 8
    %p102 = por %p100, %p101
    %p104 = scmp.ne.s32.totalorder %s89, %s103
    %p105 = scmp.eq.s32.totalorder %s16, 0
    %p106 = por %p104, %p105
    %s107 = ssub.s32 %s10, %s17
    %p108 = scmp.eq.s32.totalorder %s107, 0
    %s110 = sadd.s32 %s109, 1
    %s111 = scalar_select %p108, %s109, %s110
    %p114 = pneg %p108
    %p115 = scmp.eq.s32.totalorder %s10, 8
    %p116 = por %p114, %p115
    %p117 = scmp.ne.s32.totalorder %s109, %s112
    %p118 = scmp.eq.s32.totalorder %s10, 0
    %p119 = por %p117, %p118
    %p120 = scmp.ne.s32.totalorder %s109, %s112
    %p121 = scmp.eq.s32.totalorder %s15, 8
    %p122 = por %p120, %p121
    %p123 = scmp.ne.s32.totalorder %s112, %s113
    %p124 = scmp.eq.s32.totalorder %s15, 0
    %p125 = por %p123, %p124
    %p126 = scmp.ne.s32.totalorder %s112, %s113
    %p127 = scmp.eq.s32.totalorder %s16, 8
    %p128 = por %p126, %p127
    %p130 = scmp.ne.s32.totalorder %s113, %s129
    %p131 = scmp.eq.s32.totalorder %s16, 0
    %p132 = por %p130, %p131
    %p133 = scmp.le.s32.totalorder 1, %s10
    %p134 = scmp.lt.s32.totalorder %s10, 10
    %p135 = pnand %p133, %p134
    %p136 = pneg %p135
    // Predicated region
    $region9: #{alexnet_fc_forward.9} parent=5 // pred_check
      _
    $region10: #{alexnet_fc_forward.9} parent=5 // pred_check_branch
      %138 = sbr.rel (%p135) target = $region12
    $region11: #{alexnet_fc_forward.9} parent=5 // pred_region
      %s139 = ssub.s32 %s10, 1
      // Predicated region
      $region13: #{alexnet_fc_forward.9} parent=11 // pred_check
        %p140 = pneg %p57
      $region14: #{alexnet_fc_forward.9} parent=11 // pred_check_branch
        %142 = sbr.rel (%p140) target = $region16
      $region15: #{alexnet_fc_forward.9} parent=11 // pred_region
        _
      $region16: #{alexnet_fc_forward.9} parent=11 // pred_fallthru
        _
      // Predicated region
      $region17: #{alexnet_fc_forward.9} parent=11 // pred_check
        %p143 = pneg %p78
      $region18: #{alexnet_fc_forward.9} parent=11 // pred_check_branch
        %145 = sbr.rel (%p143) target = $region20
      $region19: #{alexnet_fc_forward.9} parent=11 // pred_region
        _
      $region20: #{alexnet_fc_forward.9} parent=11 // pred_fallthru
        _
      // Predicated region
      $region21: #{alexnet_fc_forward.9} parent=11 // pred_check
        %p146 = pneg %p99
      $region22: #{alexnet_fc_forward.9} parent=11 // pred_check_branch
        %148 = sbr.rel (%p146) target = $region24
      $region23: #{alexnet_fc_forward.9} parent=11 // pred_region
        _
      $region24: #{alexnet_fc_forward.9} parent=11 // pred_fallthru
        _
    $region12: #{alexnet_fc_forward.9} parent=5 // pred_fallthru
      _
    %p149 = scmp.lt.s32.totalorder %s10, 9
    // Predicated region
    $region25: #{alexnet_fc_forward.9} parent=5 // pred_check
      %p150 = pneg %p149
    $region26: #{alexnet_fc_forward.9} parent=5 // pred_check_branch
      %152 = sbr.rel (%p150) target = $region28
    $region27: #{alexnet_fc_forward.9} parent=5 // pred_region
      // Predicated region
      $region29: #{alexnet_fc_forward.9} parent=27 // pred_check
        %p153 = pneg %p30
      $region30: #{alexnet_fc_forward.9} parent=27 // pred_check_branch
        %155 = sbr.rel (%p153) target = $region32
      $region31: #{alexnet_fc_forward.9} parent=27 // pred_region
        %s156 = smul.u32 16, %s10
        %p157 = scmp.lt.s32.totalorder %s156, 143
        %s158 = scalar_select %p157, %s156, 143
        %s159 = smul.addr %s158, 3
        %s160 = smul.addr %s159, 4
        %s161 = scalar_lea.vmem %s0, %s160
        %s162 = smul.u32 16, %s10
      $region32: #{alexnet_fc_forward.9} parent=27 // pred_fallthru
        _
    $region28: #{alexnet_fc_forward.9} parent=5 // pred_fallthru
      _
    %p163 = scmp.le.s32.totalorder 1, %s10
    %p164 = scmp.lt.s32.totalorder %s10, 10
    %p165 = pnand %p163, %p164
    %p166 = pneg %p165
    // Predicated region
    $region33: #{alexnet_fc_forward.9} parent=5 // pred_check
      _
    $region34: #{alexnet_fc_forward.9} parent=5 // pred_check_branch
      %168 = sbr.rel (%p165) target = $region36
    $region35: #{alexnet_fc_forward.9} parent=5 // pred_region
      %s169 = ssub.s32 %s10, 1
      %s170 = smul.u32 16, %s15
      %p171 = scmp.lt.s32.totalorder %s170, 143
      %s172 = scalar_select %p171, %s170, 143
      %s173 = smul.addr %s172, 3
      %s174 = smul.addr %s173, 4
      %s175 = scalar_lea.vmem %s0, %s174
      %p176 = pneg %p36
      %p177 = pneg %p33
      %p178 = pneg %p57
      %p179 = pneg %p54
      %p180 = pneg %p78
      %p181 = pneg %p75
      %p182 = pneg %p99
      %p183 = pneg %p96
      %p184 = pneg %p125
      %p185 = pneg %p122
      %s186 = smul.u32 16, %s15
      %p187 = scmp.lt.s32.totalorder %s186, 143
      %s188 = scalar_select %p187, %s186, 143
      %s189 = smul.addr %s188, 8
      %s190 = scalar_lea.vmem %s4, %s189
      %s191 = smul.u32 16, %s15
      %p192 = scmp.lt.s32.totalorder %s191, 143
      %s193 = scalar_select %p192, %s191, 143
      %s194 = smul.addr %s193, 3
      %s195 = smul.addr %s194, 4
      %s196 = scalar_lea.vmem %s0, %s195
      %s197 = smul.u32 16, %s15
      %s198 = smul.u32 16, %s15
      %p199 = scmp.lt.s32.totalorder %s198, 143
      %s200 = scalar_select %p199, %s198, 143
      %s201 = smul.addr %s200, 8
      %s202 = scalar_lea.vmem %s4, %s201
      %s203 = smul.u32 16, %s15
      %v205 = vld [vmem:[%s196] sm:$0xff]
      %v206 = vld [vmem:[%s196 + $0x8] sm:$0xf]
      %v207 = vld [vmem:[%s196 + $0xc] sm:$0xff]
      %v208 = vld [vmem:[%s196 + $0x14] sm:$0xf]
      %v209 = vld [vmem:[%s196 + $0x18] sm:$0xff]
      %v210 = vld [vmem:[%s196 + $0x20] sm:$0xf]
      %v211 = vld [vmem:[%s196 + $0x24] sm:$0xff]
      %v212 = vld [vmem:[%s196 + $0x2c] sm:$0xf]
      %v213 = vld [vmem:[%s196 + $0x30] sm:$0xff]
      %v214 = vld [vmem:[%s196 + $0x38] sm:$0xf]
      %v215 = vld [vmem:[%s196 + $0x3c] sm:$0xff]
      %v216 = vld [vmem:[%s196 + $0x44] sm:$0xf]
      %v217 = vld [vmem:[%s196 + $0x48] sm:$0xff]
      %v218 = vld [vmem:[%s196 + $0x50] sm:$0xf]
      %v219 = vld [vmem:[%s196 + $0x54] sm:$0xff]
      %v220 = vld [vmem:[%s196 + $0x5c] sm:$0xf]
      %v221 = vld [vmem:[%s196 + $0x60] sm:$0xff]
      %v222 = vld [vmem:[%s196 + $0x68] sm:$0xf]
      %v223 = vld [vmem:[%s196 + $0x6c] sm:$0xff]
      %v224 = vld [vmem:[%s196 + $0x74] sm:$0xf]
      %v225 = vld [vmem:[%s196 + $0x78] sm:$0xff]
      %v226 = vld [vmem:[%s196 + $0x80] sm:$0xf]
      %v227 = vld [vmem:[%s196 + $0x84] sm:$0xff]
      %v228 = vld [vmem:[%s196 + $0x8c] sm:$0xf]
      %v229 = vld [vmem:[%s196 + $0x90] sm:$0xff]
      %v230 = vld [vmem:[%s196 + $0x98] sm:$0xf]
      %v231 = vld [vmem:[%s196 + $0x9c] sm:$0xff]
      %v232 = vld [vmem:[%s196 + $0xa4] sm:$0xf]
      %v233 = vld [vmem:[%s196 + $0xa8] sm:$0xff]
      %v234 = vld [vmem:[%s196 + $0xb0] sm:$0xf]
      %v235 = vld [vmem:[%s196 + $0xb4] sm:$0xff]
      %v236 = vld [vmem:[%s196 + $0xbc] sm:$0xf]
      %v237 = vld [vmem:[%s1] sm:$0xf]
      %v238 = vld [vmem:[%s1 + $0x4] sm:$0xf]
      %v239 = vld [vmem:[%s1 + $0x8] sm:$0xf]
      %v240 = vld [vmem:[%s1 + $0xc] sm:$0xf]
      %v241 = vld [vmem:[%s1 + $0x10] sm:$0xf]
      %v242 = vld [vmem:[%s1 + $0x14] sm:$0xf]
      %v243 = vld [vmem:[%s1 + $0x18] sm:$0xf]
      %v244 = vld [vmem:[%s1 + $0x1c] sm:$0xf]
      %v245 = vld [vmem:[%s1 + $0x20] sm:$0xf]
      %v246 = vld [vmem:[%s1 + $0x24] sm:$0xf]
      %v247 = vld [vmem:[%s1 + $0x28] sm:$0xf]
      %v248 = vld [vmem:[%s1 + $0x2c] sm:$0xf]
      %v249 = vld [vmem:[%s1 + $0x30] sm:$0xf]
      %v250 = vld [vmem:[%s1 + $0x34] sm:$0xf]
      %v251 = vld [vmem:[%s1 + $0x38] sm:$0xf]
      %v252 = vld [vmem:[%s1 + $0x3c] sm:$0xf]
      %v253 = vld [vmem:[%s1 + $0x40] sm:$0xf]
      %v254 = vld [vmem:[%s1 + $0x44] sm:$0xf]
      %v255 = vld [vmem:[%s1 + $0x48] sm:$0xf]
      %v256 = vld [vmem:[%s1 + $0x4c] sm:$0xf]
      %v257 = vld [vmem:[%s1 + $0x50] sm:$0xf]
      %v258 = vld [vmem:[%s1 + $0x54] sm:$0xf]
      %v259 = vld [vmem:[%s1 + $0x58] sm:$0xf]
      %v260 = vld [vmem:[%s1 + $0x5c] sm:$0xf]
      %v261 = vld [vmem:[%s1 + $0x60] sm:$0xf]
      %v262 = vld [vmem:[%s1 + $0x64] sm:$0xf]
      %v263 = vld [vmem:[%s1 + $0x68] sm:$0xf]
      %v264 = vld [vmem:[%s1 + $0x6c] sm:$0xf]
      %v265 = vld [vmem:[%s1 + $0x70] sm:$0xf]
      %v266 = vld [vmem:[%s1 + $0x74] sm:$0xf]
      %v267 = vld [vmem:[%s1 + $0x78] sm:$0xf]
      %v268 = vld [vmem:[%s1 + $0x7c] sm:$0xf]
      %v269 = vld [vmem:[%s1 + $0x80] sm:$0xf]
      %v270 = vld [vmem:[%s1 + $0x84] sm:$0xf]
      %v271 = vld [vmem:[%s1 + $0x88] sm:$0xf]
      %v272 = vld [vmem:[%s1 + $0x8c] sm:$0xf]
      %v273 = vld [vmem:[%s1 + $0x90] sm:$0xf]
      %v274 = vld [vmem:[%s1 + $0x94] sm:$0xf]
      %v275 = vld [vmem:[%s1 + $0x98] sm:$0xf]
      %v276 = vld [vmem:[%s1 + $0x9c] sm:$0xf]
      %v277 = vld [vmem:[%s1 + $0xa0] sm:$0xf]
      %v278 = vld [vmem:[%s1 + $0xa4] sm:$0xf]
      %v279 = vld [vmem:[%s1 + $0xa8] sm:$0xf]
      %v280 = vld [vmem:[%s1 + $0xac] sm:$0xf]
      %v281 = vld [vmem:[%s1 + $0xb0] sm:$0xf]
      %v282 = vld [vmem:[%s1 + $0xb4] sm:$0x3]
      %v283 = vld [vmem:[%s2] sm:$0x1]
      %v285 = vlaneseq
      %v286 = vshrl.u32 %v285, 7
      %v287 = vsub.s32 0, %v286
      %v288 = vrot.slane %v283, %v287
      %v322 = vunpack.c.l.b16 %v205
      %v323 = vunpack.c.h.b16 %v205
      %v324 = vunpack.c.l.b16 %v206
      %v325 = vunpack.c.l.b16 %v207
      %v326 = vunpack.c.h.b16 %v207
      %v327 = vunpack.c.l.b16 %v208
      %v328 = vunpack.c.l.b16 %v209
      %v329 = vunpack.c.h.b16 %v209
      %v330 = vunpack.c.l.b16 %v210
      %v331 = vunpack.c.l.b16 %v211
      %v332 = vunpack.c.h.b16 %v211
      %v333 = vunpack.c.l.b16 %v212
      %v334 = vunpack.c.l.b16 %v213
      %v335 = vunpack.c.h.b16 %v213
      %v336 = vunpack.c.l.b16 %v214
      %v337 = vunpack.c.l.b16 %v215
      %v338 = vunpack.c.h.b16 %v215
      %v339 = vunpack.c.l.b16 %v216
      %v340 = vunpack.c.l.b16 %v217
      %v341 = vunpack.c.h.b16 %v217
      %v342 = vunpack.c.l.b16 %v218
      %v343 = vunpack.c.l.b16 %v219
      %v344 = vunpack.c.h.b16 %v219
      %v345 = vunpack.c.l.b16 %v220
      %v346 = vunpack.c.l.b16 %v221
      %v347 = vunpack.c.h.b16 %v221
      %v348 = vunpack.c.l.b16 %v222
      %v349 = vunpack.c.l.b16 %v223
      %v350 = vunpack.c.h.b16 %v223
      %v351 = vunpack.c.l.b16 %v224
      %v352 = vunpack.c.l.b16 %v225
      %v353 = vunpack.c.h.b16 %v225
      %v354 = vunpack.c.l.b16 %v226
      %v355 = vunpack.c.l.b16 %v227
      %v356 = vunpack.c.h.b16 %v227
      %v357 = vunpack.c.l.b16 %v228
      %v358 = vunpack.c.l.b16 %v229
      %v359 = vunpack.c.h.b16 %v229
      %v360 = vunpack.c.l.b16 %v230
      %v361 = vunpack.c.l.b16 %v231
      %v362 = vunpack.c.h.b16 %v231
      %v363 = vunpack.c.l.b16 %v232
      %v364 = vunpack.c.l.b16 %v233
      %v365 = vunpack.c.h.b16 %v233
      %v366 = vunpack.c.l.b16 %v234
      %v367 = vunpack.c.l.b16 %v235
      %v368 = vunpack.c.h.b16 %v235
      %v369 = vunpack.c.l.b16 %v236
      %v370 = vpack.c.b16 %v325, %v322
      %v371 = vpack.c.b16 %v326, %v323
      %v372 = vpack.c.b16 %v327, %v324
      %v373 = vpack.c.b16 %v331, %v328
      %v374 = vpack.c.b16 %v332, %v329
      %v375 = vpack.c.b16 %v333, %v330
      %v376 = vpack.c.b16 %v337, %v334
      %v377 = vpack.c.b16 %v338, %v335
      %v378 = vpack.c.b16 %v339, %v336
      %v379 = vpack.c.b16 %v343, %v340
      %v380 = vpack.c.b16 %v344, %v341
      %v381 = vpack.c.b16 %v345, %v342
      %v382 = vpack.c.b16 %v349, %v346
      %v383 = vpack.c.b16 %v350, %v347
      %v384 = vpack.c.b16 %v351, %v348
      %v385 = vpack.c.b16 %v355, %v352
      %v386 = vpack.c.b16 %v356, %v353
      %v387 = vpack.c.b16 %v357, %v354
      %v388 = vpack.c.b16 %v361, %v358
      %v389 = vpack.c.b16 %v362, %v359
      %v390 = vpack.c.b16 %v363, %v360
      %v391 = vpack.c.b16 %v367, %v364
      %v392 = vpack.c.b16 %v368, %v365
      %v393 = vpack.c.b16 %v369, %v366
      %v456 = vunpack.c.l.b16 %v237
      %v457 = vunpack.c.l.b16 %v238
      %v458 = vunpack.c.l.b16 %v239
      %v459 = vunpack.c.l.b16 %v240
      %v460 = vunpack.c.l.b16 %v241
      %v461 = vunpack.c.l.b16 %v242
      %v462 = vunpack.c.l.b16 %v243
      %v463 = vunpack.c.l.b16 %v244
      %v464 = vunpack.c.l.b16 %v245
      %v465 = vunpack.c.l.b16 %v246
      %v466 = vunpack.c.l.b16 %v247
      %v467 = vunpack.c.l.b16 %v248
      %v468 = vunpack.c.l.b16 %v249
      %v469 = vunpack.c.l.b16 %v250
      %v470 = vunpack.c.l.b16 %v251
      %v471 = vunpack.c.l.b16 %v252
      %v472 = vunpack.c.l.b16 %v253
      %v473 = vunpack.c.l.b16 %v254
      %v474 = vunpack.c.l.b16 %v255
      %v475 = vunpack.c.l.b16 %v256
      %v476 = vunpack.c.l.b16 %v257
      %v477 = vunpack.c.l.b16 %v258
      %v478 = vunpack.c.l.b16 %v259
      %v479 = vunpack.c.l.b16 %v260
      %v480 = vunpack.c.l.b16 %v261
      %v481 = vunpack.c.l.b16 %v262
      %v482 = vunpack.c.l.b16 %v263
      %v483 = vunpack.c.l.b16 %v264
      %v484 = vunpack.c.l.b16 %v265
      %v485 = vunpack.c.l.b16 %v266
      %v486 = vunpack.c.l.b16 %v267
      %v487 = vunpack.c.l.b16 %v268
      %v488 = vunpack.c.l.b16 %v269
      %v489 = vunpack.c.l.b16 %v270
      %v490 = vunpack.c.l.b16 %v271
      %v491 = vunpack.c.l.b16 %v272
      %v492 = vunpack.c.l.b16 %v273
      %v493 = vunpack.c.l.b16 %v274
      %v494 = vunpack.c.l.b16 %v275
      %v495 = vunpack.c.l.b16 %v276
      %v496 = vunpack.c.l.b16 %v277
      %v497 = vunpack.c.l.b16 %v278
      %v498 = vunpack.c.l.b16 %v279
      %v499 = vunpack.c.l.b16 %v280
      %v500 = vunpack.c.l.b16 %v281
      %v501 = vunpack.c.l.b16 %v282
      %v502 = vpack.c.b16 %v457, %v456
      %v503 = vpack.c.b16 %v459, %v458
      %v504 = vpack.c.b16 %v461, %v460
      %v505 = vpack.c.b16 %v463, %v462
      %v506 = vpack.c.b16 %v465, %v464
      %v507 = vpack.c.b16 %v467, %v466
      %v508 = vpack.c.b16 %v469, %v468
      %v509 = vpack.c.b16 %v471, %v470
      %v510 = vpack.c.b16 %v473, %v472
      %v511 = vpack.c.b16 %v475, %v474
      %v512 = vpack.c.b16 %v477, %v476
      %v513 = vpack.c.b16 %v479, %v478
      %v514 = vpack.c.b16 %v481, %v480
      %v515 = vpack.c.b16 %v483, %v482
      %v516 = vpack.c.b16 %v485, %v484
      %v517 = vpack.c.b16 %v487, %v486
      %v518 = vpack.c.b16 %v489, %v488
      %v519 = vpack.c.b16 %v491, %v490
      %v520 = vpack.c.b16 %v493, %v492
      %v521 = vpack.c.b16 %v495, %v494
      %v522 = vpack.c.b16 %v497, %v496
      %v523 = vpack.c.b16 %v499, %v498
      %v524 = vpack.c.b16 %v501, %v500
      %vm547 = vcmask 875520
      %v549 = vsel %vm547, %v372, 0
      %v552 = vsel %vm547, %v375, 0
      %v555 = vsel %vm547, %v378, 0
      %v558 = vsel %vm547, %v381, 0
      %v561 = vsel %vm547, %v384, 0
      %v564 = vsel %vm547, %v387, 0
      %v567 = vsel %vm547, %v390, 0
      %v570 = vsel %vm547, %v393, 0
      %vm572 = vcmask 1044480
      %vm573 = vcmask 1045504
      %v574 = vsel %vm572, 4294967295, 65535
      %v575 = vsel %vm573, %v574, 0
      %v577 = vand.u32 %v524, %v575
      %579 = vmatprep.subr.bf16.mxu0 0
      %580 = vmatpush1.bf16.msra.mxu0 %v509
      %581 = vmatprep.subr.bf16.mxu0 0
      %582 = vmatpush1.bf16.msra.mxu0 %v508
      %583 = vmatprep.subr.bf16.mxu0 0
      %584 = vmatpush1.bf16.msra.mxu0 %v507
      %585 = vmatprep.subr.bf16.mxu0 0
      %586 = vmatpush1.bf16.msra.mxu0 %v506
      %587 = vmatprep.subr.bf16.mxu0 0
      %588 = vmatpush1.bf16.msra.mxu0 %v505
      %589 = vmatprep.subr.bf16.mxu0 0
      %590 = vmatpush1.bf16.msra.mxu0 %v504
      %591 = vmatprep.subr.bf16.mxu0 0
      %592 = vmatpush1.bf16.msra.mxu0 %v503
      %593 = vmatprep.subr.bf16.mxu0 0
      %594 = vmatpush1.bf16.msra.mxu0 %v502
      %595 = vmatprep.subr.bf16.mxu0 0
      %596 = vmatpush2.bf16.msra.mxu0 %v517
      %597 = vmatprep.subr.bf16.mxu0 0
      %598 = vmatpush2.bf16.msra.mxu0 %v516
      %599 = vmatprep.subr.bf16.mxu0 0
      %600 = vmatpush2.bf16.msra.mxu0 %v515
      %601 = vmatprep.subr.bf16.mxu0 0
      %602 = vmatpush2.bf16.msra.mxu0 %v514
      %603 = vmatprep.subr.bf16.mxu0 0
      %604 = vmatpush2.bf16.msra.mxu0 %v513
      %605 = vmatprep.subr.bf16.mxu0 0
      %606 = vmatpush2.bf16.msra.mxu0 %v512
      %607 = vmatprep.subr.bf16.mxu0 0
      %608 = vmatpush2.bf16.msra.mxu0 %v511
      %609 = vmatprep.subr.bf16.mxu0 0
      %610 = vmatpush2.bf16.msra.mxu0 %v510
      %611 = vmatprep.mubr.bf16.mxu0 %v371
      %612 = vmatmul.mubr.bf16.gmra.mxu0 %v370
      %v613 = vpop.f32.mrf.mxu0
      %v614 = vadd.f32 %v288, %v613
      %v615 = vpop.f32.mrf.mxu0
      %v616 = vpop.f32.mrf.mxu0
      %v617 = vadd.f32 %v288, %v616
      %v618 = vpop.f32.mrf.mxu0
      %619 = vmatprep.mubr.bf16.mxu0 %v374
      %620 = vmatmul.mubr.bf16.gmra.mxu0 %v373
      %v621 = vpop.f32.mrf.mxu0
      %v622 = vadd.f32 %v288, %v621
      %v623 = vpop.f32.mrf.mxu0
      %v624 = vpop.f32.mrf.mxu0
      %v625 = vadd.f32 %v288, %v624
      %v626 = vpop.f32.mrf.mxu0
      %627 = vmatprep.mubr.bf16.mxu0 %v377
      %628 = vmatmul.mubr.bf16.gmra.mxu0 %v376
      %v629 = vpop.f32.mrf.mxu0
      %v630 = vadd.f32 %v288, %v629
      %v631 = vpop.f32.mrf.mxu0
      %v632 = vpop.f32.mrf.mxu0
      %v633 = vadd.f32 %v288, %v632
      %v634 = vpop.f32.mrf.mxu0
      %635 = vmatprep.mubr.bf16.mxu0 %v380
      %636 = vmatmul.mubr.bf16.gmra.mxu0 %v379
      %v637 = vpop.f32.mrf.mxu0
      %v638 = vadd.f32 %v288, %v637
      %v639 = vpop.f32.mrf.mxu0
      %v640 = vpop.f32.mrf.mxu0
      %v641 = vadd.f32 %v288, %v640
      %v642 = vpop.f32.mrf.mxu0
      %643 = vmatprep.mubr.bf16.mxu0 %v383
      %644 = vmatmul.mubr.bf16.gmra.mxu0 %v382
      %v645 = vpop.f32.mrf.mxu0
      %v646 = vadd.f32 %v288, %v645
      %v647 = vpop.f32.mrf.mxu0
      %v648 = vpop.f32.mrf.mxu0
      %v649 = vadd.f32 %v288, %v648
      %v650 = vpop.f32.mrf.mxu0
      %651 = vmatprep.mubr.bf16.mxu0 %v386
      %652 = vmatmul.mubr.bf16.gmra.mxu0 %v385
      %v653 = vpop.f32.mrf.mxu0
      %v654 = vadd.f32 %v288, %v653
      %v655 = vpop.f32.mrf.mxu0
      %v656 = vpop.f32.mrf.mxu0
      %v657 = vadd.f32 %v288, %v656
      %v658 = vpop.f32.mrf.mxu0
      %659 = vmatprep.mubr.bf16.mxu0 %v389
      %660 = vmatmul.mubr.bf16.gmra.mxu0 %v388
      %v661 = vpop.f32.mrf.mxu0
      %v662 = vadd.f32 %v288, %v661
      %v663 = vpop.f32.mrf.mxu0
      %v664 = vpop.f32.mrf.mxu0
      %v665 = vadd.f32 %v288, %v664
      %v666 = vpop.f32.mrf.mxu0
      %667 = vmatprep.mubr.bf16.mxu0 %v392
      %668 = vmatmul.mubr.bf16.gmra.mxu0 %v391
      %v669 = vpop.f32.mrf.mxu0
      %v670 = vadd.f32 %v288, %v669
      %v671 = vpop.f32.mrf.mxu0
      %v672 = vpop.f32.mrf.mxu0
      %v673 = vadd.f32 %v288, %v672
      %v674 = vpop.f32.mrf.mxu0
      %675 = vdwg.mxu0
      %676 = vmatprep.subr.bf16.mxu0 0
      %677 = vmatpush1.bf16.msra.mxu0 0
      %678 = vmatprep.subr.bf16.mxu0 0
      %679 = vmatpush1.bf16.msra.mxu0 %v577
      %680 = vmatprep.subr.bf16.mxu0 0
      %681 = vmatpush1.bf16.msra.mxu0 %v523
      %682 = vmatprep.subr.bf16.mxu0 0
      %683 = vmatpush1.bf16.msra.mxu0 %v522
      %684 = vmatprep.subr.bf16.mxu0 0
      %685 = vmatpush1.bf16.msra.mxu0 %v521
      %686 = vmatprep.subr.bf16.mxu0 0
      %687 = vmatpush1.bf16.msra.mxu0 %v520
      %688 = vmatprep.subr.bf16.mxu0 0
      %689 = vmatpush1.bf16.msra.mxu0 %v519
      %690 = vmatprep.subr.bf16.mxu0 0
      %691 = vmatpush1.bf16.msra.mxu0 %v518
      %692 = vmatprep.subr.bf16.mxu0 0
      %693 = vmatpush2.bf16.msra.mxu0 0
      %694 = vmatprep.subr.bf16.mxu0 0
      %695 = vmatpush2.bf16.msra.mxu0 0
      %696 = vmatprep.subr.bf16.mxu0 0
      %697 = vmatpush2.bf16.msra.mxu0 0
      %698 = vmatprep.subr.bf16.mxu0 0
      %699 = vmatpush2.bf16.msra.mxu0 0
      %700 = vmatprep.subr.bf16.mxu0 0
      %701 = vmatpush2.bf16.msra.mxu0 0
      %702 = vmatprep.subr.bf16.mxu0 0
      %703 = vmatpush2.bf16.msra.mxu0 0
      %704 = vmatprep.subr.bf16.mxu0 0
      %705 = vmatpush2.bf16.msra.mxu0 0
      %706 = vmatprep.subr.bf16.mxu0 0
      %707 = vmatpush2.bf16.msra.mxu0 0
      %708 = vmatprep.mubr.bf16.mxu0 0
      %709 = vmatmul.mubr.bf16.gmra.mxu0 %v549
      %v710 = vpop.f32.mrf.mxu0
      %v711 = vadd.f32 %v614, %v710
      %v712 = vpop.f32.mrf.mxu0
      %v713 = vpop.f32.mrf.mxu0
      %v714 = vadd.f32 %v617, %v713
      %v715 = vpop.f32.mrf.mxu0
      %716 = vmatprep.mubr.bf16.mxu0 0
      %717 = vmatmul.mubr.bf16.gmra.mxu0 %v552
      %v718 = vpop.f32.mrf.mxu0
      %v719 = vadd.f32 %v622, %v718
      %v720 = vpop.f32.mrf.mxu0
      %v721 = vpop.f32.mrf.mxu0
      %v722 = vadd.f32 %v625, %v721
      %v723 = vpop.f32.mrf.mxu0
      %724 = vmatprep.mubr.bf16.mxu0 0
      %725 = vmatmul.mubr.bf16.gmra.mxu0 %v555
      %v726 = vpop.f32.mrf.mxu0
      %v727 = vadd.f32 %v630, %v726
      %v728 = vpop.f32.mrf.mxu0
      %v729 = vpop.f32.mrf.mxu0
      %v730 = vadd.f32 %v633, %v729
      %v731 = vpop.f32.mrf.mxu0
      %732 = vmatprep.mubr.bf16.mxu0 0
      %733 = vmatmul.mubr.bf16.gmra.mxu0 %v558
      %v734 = vpop.f32.mrf.mxu0
      %v735 = vadd.f32 %v638, %v734
      %v736 = vpop.f32.mrf.mxu0
      %v737 = vpop.f32.mrf.mxu0
      %v738 = vadd.f32 %v641, %v737
      %v739 = vpop.f32.mrf.mxu0
      %740 = vmatprep.mubr.bf16.mxu0 0
      %741 = vmatmul.mubr.bf16.gmra.mxu0 %v561
      %v742 = vpop.f32.mrf.mxu0
      %v743 = vadd.f32 %v646, %v742
      %v744 = vpop.f32.mrf.mxu0
      %v745 = vpop.f32.mrf.mxu0
      %v746 = vadd.f32 %v649, %v745
      %v747 = vpop.f32.mrf.mxu0
      %748 = vmatprep.mubr.bf16.mxu0 0
      %749 = vmatmul.mubr.bf16.gmra.mxu0 %v564
      %v750 = vpop.f32.mrf.mxu0
      %v751 = vadd.f32 %v654, %v750
      %v752 = vpop.f32.mrf.mxu0
      %v753 = vpop.f32.mrf.mxu0
      %v754 = vadd.f32 %v657, %v753
      %v755 = vpop.f32.mrf.mxu0
      %756 = vmatprep.mubr.bf16.mxu0 0
      %757 = vmatmul.mubr.bf16.gmra.mxu0 %v567
      %v758 = vpop.f32.mrf.mxu0
      %v759 = vadd.f32 %v662, %v758
      %v760 = vpop.f32.mrf.mxu0
      %v761 = vpop.f32.mrf.mxu0
      %v762 = vadd.f32 %v665, %v761
      %v763 = vpop.f32.mrf.mxu0
      %764 = vmatprep.mubr.bf16.mxu0 0
      %765 = vmatmul.mubr.bf16.gmra.mxu0 %v570
      %v766 = vpop.f32.mrf.mxu0
      %v767 = vadd.f32 %v670, %v766
      %v768 = vpop.f32.mrf.mxu0
      %v769 = vpop.f32.mrf.mxu0
      %v770 = vadd.f32 %v673, %v769
      %v771 = vpop.f32.mrf.mxu0
      %772 = vdwg.mxu0
      %v773 = vmax.f32 %v711, 0.0
      %v774 = vmax.f32 %v714, 0.0
      %v775 = vmax.f32 %v719, 0.0
      %v776 = vmax.f32 %v722, 0.0
      %v777 = vmax.f32 %v727, 0.0
      %v778 = vmax.f32 %v730, 0.0
      %v779 = vmax.f32 %v735, 0.0
      %v780 = vmax.f32 %v738, 0.0
      %v781 = vmax.f32 %v743, 0.0
      %v782 = vmax.f32 %v746, 0.0
      %v783 = vmax.f32 %v751, 0.0
      %v784 = vmax.f32 %v754, 0.0
      %v785 = vmax.f32 %v759, 0.0
      %v786 = vmax.f32 %v762, 0.0
      %v787 = vmax.f32 %v767, 0.0
      %v788 = vmax.f32 %v770, 0.0
      %v789 = vmul.f32 %v773, %v773
      %v790 = vmul.f32 %v774, %v774
      %v791 = vmul.f32 %v775, %v775
      %v792 = vmul.f32 %v776, %v776
      %v793 = vmul.f32 %v777, %v777
      %v794 = vmul.f32 %v778, %v778
      %v795 = vmul.f32 %v779, %v779
      %v796 = vmul.f32 %v780, %v780
      %v797 = vmul.f32 %v781, %v781
      %v798 = vmul.f32 %v782, %v782
      %v799 = vmul.f32 %v783, %v783
      %v800 = vmul.f32 %v784, %v784
      %v801 = vmul.f32 %v785, %v785
      %v802 = vmul.f32 %v786, %v786
      %v803 = vmul.f32 %v787, %v787
      %v804 = vmul.f32 %v788, %v788
      %v805 = vld [vmem:[%s3] sm:$0xff]
      %v806 = vld [vmem:[%s3 + $0x8] sm:$0xff]
      %v807 = vld [vmem:[%s3 + $0x10] sm:$0xff]
      %v808 = vld [vmem:[%s3 + $0x18] sm:$0xff]
      %vm809 = vcmask 261120
      %v811 = vsel %vm809, %v789, 0
      %v814 = vsel %vm809, %v790, 0
      %v817 = vsel %vm809, %v791, 0
      %v820 = vsel %vm809, %v792, 0
      %v823 = vsel %vm809, %v793, 0
      %v826 = vsel %vm809, %v794, 0
      %v829 = vsel %vm809, %v795, 0
      %v832 = vsel %vm809, %v796, 0
      %v835 = vsel %vm809, %v797, 0
      %v838 = vsel %vm809, %v798, 0
      %v841 = vsel %vm809, %v799, 0
      %v844 = vsel %vm809, %v800, 0
      %v847 = vsel %vm809, %v801, 0
      %v850 = vsel %vm809, %v802, 0
      %v853 = vsel %vm809, %v803, 0
      %v856 = vsel %vm809, %v804, 0
      %858 = vmatprep.subr.mxu0 0.0
      %859 = vmatpush1.msra.mxu0 0.0
      %860 = vmatprep.subr.mxu0 0.0
      %861 = vmatpush1.msra.mxu0 0.0
      %862 = vmatprep.subr.mxu0 0.0
      %863 = vmatpush1.msra.mxu0 0.0
      %864 = vmatprep.subr.mxu0 0.0
      %865 = vmatpush1.msra.mxu0 0.0
      %866 = vmatprep.subr.mxu0 0.0
      %867 = vmatpush1.msra.mxu0 0.0
      %868 = vmatprep.subr.mxu0 0.0
      %869 = vmatpush1.msra.mxu0 0.0
      %870 = vmatprep.subr.mxu0 0.0
      %871 = vmatpush1.msra.mxu0 0.0
      %872 = vmatprep.subr.mxu0 0.0
      %873 = vmatpush1.msra.mxu0 0.0
      %874 = vmatprep.subr.mxu0 0.0
      %875 = vmatpush1.msra.mxu0 0.0
      %876 = vmatprep.subr.mxu0 0.0
      %877 = vmatpush1.msra.mxu0 0.0
      %878 = vmatprep.subr.mxu0 0.0
      %879 = vmatpush1.msra.mxu0 0.0
      %880 = vmatprep.subr.mxu0 0.0
      %881 = vmatpush1.msra.mxu0 0.0
      %882 = vmatprep.subr.mxu0 0.0
      %883 = vmatpush1.msra.mxu0 %v808
      %884 = vmatprep.subr.mxu0 0.0
      %885 = vmatpush1.msra.mxu0 %v807
      %886 = vmatprep.subr.mxu0 0.0
      %887 = vmatpush1.msra.mxu0 %v806
      %888 = vmatprep.subr.mxu0 0.0
      %889 = vmatpush1.msra.mxu0 %v805
      %890 = vmatprep.subr.mxu0 0.0
      %891 = vmatpush2.msra.mxu0 0.0
      %892 = vmatprep.subr.mxu0 0.0
      %893 = vmatpush2.msra.mxu0 0.0
      %894 = vmatprep.subr.mxu0 0.0
      %895 = vmatpush2.msra.mxu0 0.0
      %896 = vmatprep.subr.mxu0 0.0
      %897 = vmatpush2.msra.mxu0 0.0
      %898 = vmatprep.subr.mxu0 0.0
      %899 = vmatpush2.msra.mxu0 0.0
      %900 = vmatprep.subr.mxu0 0.0
      %901 = vmatpush2.msra.mxu0 0.0
      %902 = vmatprep.subr.mxu0 0.0
      %903 = vmatpush2.msra.mxu0 0.0
      %904 = vmatprep.subr.mxu0 0.0
      %905 = vmatpush2.msra.mxu0 0.0
      %906 = vmatprep.subr.mxu0 0.0
      %907 = vmatpush2.msra.mxu0 0.0
      %908 = vmatprep.subr.mxu0 0.0
      %909 = vmatpush2.msra.mxu0 0.0
      %910 = vmatprep.subr.mxu0 0.0
      %911 = vmatpush2.msra.mxu0 0.0
      %912 = vmatprep.subr.mxu0 0.0
      %913 = vmatpush2.msra.mxu0 0.0
      %914 = vmatprep.subr.mxu0 0.0
      %915 = vmatpush2.msra.mxu0 0.0
      %916 = vmatprep.subr.mxu0 0.0
      %917 = vmatpush2.msra.mxu0 0.0
      %918 = vmatprep.subr.mxu0 0.0
      %919 = vmatpush2.msra.mxu0 0.0
      %920 = vmatprep.subr.mxu0 0.0
      %921 = vmatpush2.msra.mxu0 0.0
      %922 = vmatprep.mubr.f32.mxu0 0.0
      %923 = vmatmul.mubr.f32.gmra.mxu0 %v811
      %v924 = vpop.f32.mrf.mxu0
      %v925 = vadd.f32 0.0, %v924
      %v926 = vpop.f32.mrf.mxu0
      %927 = vmatprep.mubr.f32.mxu0 0.0
      %928 = vmatmul.mubr.f32.gmra.mxu0 %v814
      %v929 = vpop.f32.mrf.mxu0
      %v930 = vadd.f32 0.0, %v929
      %v931 = vpop.f32.mrf.mxu0
      %932 = vmatprep.mubr.f32.mxu0 0.0
      %933 = vmatmul.mubr.f32.gmra.mxu0 %v817
      %v934 = vpop.f32.mrf.mxu0
      %v935 = vadd.f32 0.0, %v934
      %v936 = vpop.f32.mrf.mxu0
      %937 = vmatprep.mubr.f32.mxu0 0.0
      %938 = vmatmul.mubr.f32.gmra.mxu0 %v820
      %v939 = vpop.f32.mrf.mxu0
      %v940 = vadd.f32 0.0, %v939
      %v941 = vpop.f32.mrf.mxu0
      %942 = vmatprep.mubr.f32.mxu0 0.0
      %943 = vmatmul.mubr.f32.gmra.mxu0 %v823
      %v944 = vpop.f32.mrf.mxu0
      %v945 = vadd.f32 0.0, %v944
      %v946 = vpop.f32.mrf.mxu0
      %947 = vmatprep.mubr.f32.mxu0 0.0
      %948 = vmatmul.mubr.f32.gmra.mxu0 %v826
      %v949 = vpop.f32.mrf.mxu0
      %v950 = vadd.f32 0.0, %v949
      %v951 = vpop.f32.mrf.mxu0
      %952 = vmatprep.mubr.f32.mxu0 0.0
      %953 = vmatmul.mubr.f32.gmra.mxu0 %v829
      %v954 = vpop.f32.mrf.mxu0
      %v955 = vadd.f32 0.0, %v954
      %v956 = vpop.f32.mrf.mxu0
      %957 = vmatprep.mubr.f32.mxu0 0.0
      %958 = vmatmul.mubr.f32.gmra.mxu0 %v832
      %v959 = vpop.f32.mrf.mxu0
      %v960 = vadd.f32 0.0, %v959
      %v961 = vpop.f32.mrf.mxu0
      %962 = vmatprep.mubr.f32.mxu0 0.0
      %963 = vmatmul.mubr.f32.gmra.mxu0 %v835
      %v964 = vpop.f32.mrf.mxu0
      %v965 = vadd.f32 0.0, %v964
      %v966 = vpop.f32.mrf.mxu0
      %967 = vmatprep.mubr.f32.mxu0 0.0
      %968 = vmatmul.mubr.f32.gmra.mxu0 %v838
      %v969 = vpop.f32.mrf.mxu0
      %v970 = vadd.f32 0.0, %v969
      %v971 = vpop.f32.mrf.mxu0
      %972 = vmatprep.mubr.f32.mxu0 0.0
      %973 = vmatmul.mubr.f32.gmra.mxu0 %v841
      %v974 = vpop.f32.mrf.mxu0
      %v975 = vadd.f32 0.0, %v974
      %v976 = vpop.f32.mrf.mxu0
      %977 = vmatprep.mubr.f32.mxu0 0.0
      %978 = vmatmul.mubr.f32.gmra.mxu0 %v844
      %v979 = vpop.f32.mrf.mxu0
      %v980 = vadd.f32 0.0, %v979
      %v981 = vpop.f32.mrf.mxu0
      %982 = vmatprep.mubr.f32.mxu0 0.0
      %983 = vmatmul.mubr.f32.gmra.mxu0 %v847
      %v984 = vpop.f32.mrf.mxu0
      %v985 = vadd.f32 0.0, %v984
      %v986 = vpop.f32.mrf.mxu0
      %987 = vmatprep.mubr.f32.mxu0 0.0
      %988 = vmatmul.mubr.f32.gmra.mxu0 %v850
      %v989 = vpop.f32.mrf.mxu0
      %v990 = vadd.f32 0.0, %v989
      %v991 = vpop.f32.mrf.mxu0
      %992 = vmatprep.mubr.f32.mxu0 0.0
      %993 = vmatmul.mubr.f32.gmra.mxu0 %v853
      %v994 = vpop.f32.mrf.mxu0
      %v995 = vadd.f32 0.0, %v994
      %v996 = vpop.f32.mrf.mxu0
      %997 = vmatprep.mubr.f32.mxu0 0.0
      %998 = vmatmul.mubr.f32.gmra.mxu0 %v856
      %v999 = vpop.f32.mrf.mxu0
      %v1000 = vadd.f32 0.0, %v999
      %v1001 = vpop.f32.mrf.mxu0
      %1002 = vdwg.mxu0
      %v1003 = vmul.f32 %v925, 2e-05
      %v1004 = vmul.f32 %v930, 2e-05
      %v1005 = vmul.f32 %v935, 2e-05
      %v1006 = vmul.f32 %v940, 2e-05
      %v1007 = vmul.f32 %v945, 2e-05
      %v1008 = vmul.f32 %v950, 2e-05
      %v1009 = vmul.f32 %v955, 2e-05
      %v1010 = vmul.f32 %v960, 2e-05
      %v1011 = vmul.f32 %v965, 2e-05
      %v1012 = vmul.f32 %v970, 2e-05
      %v1013 = vmul.f32 %v975, 2e-05
      %v1014 = vmul.f32 %v980, 2e-05
      %v1015 = vmul.f32 %v985, 2e-05
      %v1016 = vmul.f32 %v990, 2e-05
      %v1017 = vmul.f32 %v995, 2e-05
      %v1018 = vmul.f32 %v1000, 2e-05
      %v1019 = vadd.f32 %v1003, 1.0
      %v1020 = vadd.f32 %v1004, 1.0
      %v1021 = vadd.f32 %v1005, 1.0
      %v1022 = vadd.f32 %v1006, 1.0
      %v1023 = vadd.f32 %v1007, 1.0
      %v1024 = vadd.f32 %v1008, 1.0
      %v1025 = vadd.f32 %v1009, 1.0
      %v1026 = vadd.f32 %v1010, 1.0
      %v1027 = vadd.f32 %v1011, 1.0
      %v1028 = vadd.f32 %v1012, 1.0
      %v1029 = vadd.f32 %v1013, 1.0
      %v1030 = vadd.f32 %v1014, 1.0
      %v1031 = vadd.f32 %v1015, 1.0
      %v1032 = vadd.f32 %v1016, 1.0
      %v1033 = vadd.f32 %v1017, 1.0
      %v1034 = vadd.f32 %v1018, 1.0
      %v1035 = vlog2.pop %v1019
      %v1036 = vmul.f32 %v1035, 0.6931472
      %v1037 = vlog2.pop %v1020
      %v1038 = vmul.f32 %v1037, 0.6931472
      %v1039 = vlog2.pop %v1021
      %v1040 = vmul.f32 %v1039, 0.6931472
      %v1041 = vlog2.pop %v1022
      %v1042 = vmul.f32 %v1041, 0.6931472
      %v1043 = vlog2.pop %v1023
      %v1044 = vmul.f32 %v1043, 0.6931472
      %v1045 = vlog2.pop %v1024
      %v1046 = vmul.f32 %v1045, 0.6931472
      %v1047 = vlog2.pop %v1025
      %v1048 = vmul.f32 %v1047, 0.6931472
      %v1049 = vlog2.pop %v1026
      %v1050 = vmul.f32 %v1049, 0.6931472
      %v1051 = vlog2.pop %v1027
      %v1052 = vmul.f32 %v1051, 0.6931472
      %v1053 = vlog2.pop %v1028
      %v1054 = vmul.f32 %v1053, 0.6931472
      %v1055 = vlog2.pop %v1029
      %v1056 = vmul.f32 %v1055, 0.6931472
      %v1057 = vlog2.pop %v1030
      %v1058 = vmul.f32 %v1057, 0.6931472
      %v1059 = vlog2.pop %v1031
      %v1060 = vmul.f32 %v1059, 0.6931472
      %v1061 = vlog2.pop %v1032
      %v1062 = vmul.f32 %v1061, 0.6931472
      %v1063 = vlog2.pop %v1033
      %v1064 = vmul.f32 %v1063, 0.6931472
      %v1065 = vlog2.pop %v1034
      %v1066 = vmul.f32 %v1065, 0.6931472
      %v1067 = vmul.f32 %v1036, -0.75
      %v1068 = vmul.f32 %v1038, -0.75
      %v1069 = vmul.f32 %v1040, -0.75
      %v1070 = vmul.f32 %v1042, -0.75
      %v1071 = vmul.f32 %v1044, -0.75
      %v1072 = vmul.f32 %v1046, -0.75
      %v1073 = vmul.f32 %v1048, -0.75
      %v1074 = vmul.f32 %v1050, -0.75
      %v1075 = vmul.f32 %v1052, -0.75
      %v1076 = vmul.f32 %v1054, -0.75
      %v1077 = vmul.f32 %v1056, -0.75
      %v1078 = vmul.f32 %v1058, -0.75
      %v1079 = vmul.f32 %v1060, -0.75
      %v1080 = vmul.f32 %v1062, -0.75
      %v1081 = vmul.f32 %v1064, -0.75
      %v1082 = vmul.f32 %v1066, -0.75
      %v1083 = vmul.f32 %v1067, 1.442695
      %v1084 = vpow.pop %v1083
      %v1085 = vmul.f32 %v1068, 1.442695
      %v1086 = vpow.pop %v1085
      %v1087 = vmul.f32 %v1069, 1.442695
      %v1088 = vpow.pop %v1087
      %v1089 = vmul.f32 %v1070, 1.442695
      %v1090 = vpow.pop %v1089
      %v1091 = vmul.f32 %v1071, 1.442695
      %v1092 = vpow.pop %v1091
      %v1093 = vmul.f32 %v1072, 1.442695
      %v1094 = vpow.pop %v1093
      %v1095 = vmul.f32 %v1073, 1.442695
      %v1096 = vpow.pop %v1095
      %v1097 = vmul.f32 %v1074, 1.442695
      %v1098 = vpow.pop %v1097
      %v1099 = vmul.f32 %v1075, 1.442695
      %v1100 = vpow.pop %v1099
      %v1101 = vmul.f32 %v1076, 1.442695
      %v1102 = vpow.pop %v1101
      %v1103 = vmul.f32 %v1077, 1.442695
      %v1104 = vpow.pop %v1103
      %v1105 = vmul.f32 %v1078, 1.442695
      %v1106 = vpow.pop %v1105
      %v1107 = vmul.f32 %v1079, 1.442695
      %v1108 = vpow.pop %v1107
      %v1109 = vmul.f32 %v1080, 1.442695
      %v1110 = vpow.pop %v1109
      %v1111 = vmul.f32 %v1081, 1.442695
      %v1112 = vpow.pop %v1111
      %v1113 = vmul.f32 %v1082, 1.442695
      %v1114 = vpow.pop %v1113
      %v1115 = vmul.f32 %v773, %v1084
      %v1116 = vmul.f32 %v774, %v1086
      %v1117 = vmul.f32 %v775, %v1088
      %v1118 = vmul.f32 %v776, %v1090
      %v1119 = vmul.f32 %v777, %v1092
      %v1120 = vmul.f32 %v778, %v1094
      %v1121 = vmul.f32 %v779, %v1096
      %v1122 = vmul.f32 %v780, %v1098
      %v1123 = vmul.f32 %v781, %v1100
      %v1124 = vmul.f32 %v782, %v1102
      %v1125 = vmul.f32 %v783, %v1104
      %v1126 = vmul.f32 %v784, %v1106
      %v1127 = vmul.f32 %v785, %v1108
      %v1128 = vmul.f32 %v786, %v1110
      %v1129 = vmul.f32 %v787, %v1112
      %v1130 = vmul.f32 %v788, %v1114
      %1131 = vst.msk [vmem:[%s202] sm:$0xff] %vm809, %v1115
      %1132 = vst.msk [vmem:[%s202 + $0x8] sm:$0xff] %vm809, %v1116
      %1133 = vst.msk [vmem:[%s202 + $0x10] sm:$0xff] %vm809, %v1117
      %1134 = vst.msk [vmem:[%s202 + $0x18] sm:$0xff] %vm809, %v1118
      %1135 = vst.msk [vmem:[%s202 + $0x20] sm:$0xff] %vm809, %v1119
      %1136 = vst.msk [vmem:[%s202 + $0x28] sm:$0xff] %vm809, %v1120
      %1137 = vst.msk [vmem:[%s202 + $0x30] sm:$0xff] %vm809, %v1121
      %1138 = vst.msk [vmem:[%s202 + $0x38] sm:$0xff] %vm809, %v1122
      %1139 = vst.msk [vmem:[%s202 + $0x40] sm:$0xff] %vm809, %v1123
      %1140 = vst.msk [vmem:[%s202 + $0x48] sm:$0xff] %vm809, %v1124
      %1141 = vst.msk [vmem:[%s202 + $0x50] sm:$0xff] %vm809, %v1125
      %1142 = vst.msk [vmem:[%s202 + $0x58] sm:$0xff] %vm809, %v1126
      %1143 = vst.msk [vmem:[%s202 + $0x60] sm:$0xff] %vm809, %v1127
      %1144 = vst.msk [vmem:[%s202 + $0x68] sm:$0xff] %vm809, %v1128
      %1145 = vst.msk [vmem:[%s202 + $0x70] sm:$0xff] %vm809, %v1129
      %1146 = vst.msk [vmem:[%s202 + $0x78] sm:$0xff] %vm809, %v1130
      %s1147 = smul.u32 16, %s15
      %p1148 = scmp.lt.s32.totalorder %s1147, 143
      %s1149 = scalar_select %p1148, %s1147, 143
      %s1150 = smul.addr %s1149, 8
      %s1151 = scalar_lea.vmem %s4, %s1150
      // Predicated region
      $region37: #{alexnet_fc_forward.9} parent=35 // pred_check
        %p1152 = pneg %p122
      $region38: #{alexnet_fc_forward.9} parent=35 // pred_check_branch
        %1154 = sbr.rel (%p1152) target = $region40
      $region39: #{alexnet_fc_forward.9} parent=35 // pred_region
        %s1155 = smul.u32 16, %s15
      $region40: #{alexnet_fc_forward.9} parent=35 // pred_fallthru
        _
    $region36: #{alexnet_fc_forward.9} parent=5 // pred_fallthru
      _
    %p1156 = scmp.le.s32.totalorder 2, %s10
    // Predicated region
    $region41: #{alexnet_fc_forward.9} parent=5 // pred_check
      %p1157 = pneg %p1156
    $region42: #{alexnet_fc_forward.9} parent=5 // pred_check_branch
      %1159 = sbr.rel (%p1157) target = $region44
    $region43: #{alexnet_fc_forward.9} parent=5 // pred_region
      %s1160 = ssub.s32 %s10, 2
      // Predicated region
      $region45: #{alexnet_fc_forward.9} parent=43 // pred_check
        %p1161 = pneg %p128
      $region46: #{alexnet_fc_forward.9} parent=43 // pred_check_branch
        %1163 = sbr.rel (%p1161) target = $region48
      $region47: #{alexnet_fc_forward.9} parent=43 // pred_region
        %s1164 = smul.u32 16, %s16
        %p1165 = scmp.lt.s32.totalorder %s1164, 143
        %s1166 = scalar_select %p1165, %s1164, 143
        %s1167 = smul.addr %s1166, 8
        %s1168 = scalar_lea.vmem %s4, %s1167
      $region48: #{alexnet_fc_forward.9} parent=43 // pred_fallthru
        _
    $region44: #{alexnet_fc_forward.9} parent=5 // pred_fallthru
      _
  $region6: #{alexnet_fc_forward.9} parent=0 // loop_footer
    %s14 = sadd.s32 1, %s10
  $region7: #{alexnet_fc_forward.9} parent=0 // loop_footer_branch
    %9 = sbr.rel target = $region3
  $region8: #{alexnet_fc_forward.9} parent=0 // loop_exit
    _

// kernel: alexnet_fc_forward.10
$region0: #{alexnet_fc_forward.10}
  #allocation0 [shape = 'u32[]', space=smem, size = 0x4, offset = 0x4, fixed_abs, tag = 'smem constant byte address 0x4 - core index']
  #allocation1 [shape = 'u32[144,128]{1,0:T(1,128)}', space=vmem, size = 0x12000, scoped, tag = 'internal scratch']
  %s0 = inlined_call_operand.vmem [shape: f32[2,23,23,32], index: 0, kind: input, shape index: {}]
  %s1 = inlined_call_operand.vmem [shape: f32[2,21,21,32], index: 1, kind: output, shape index: {}]
  %s2 = sld [smem:[#allocation0]]
  $region37: #{alexnet_fc_forward.10} parent=0
    _
  %s4 = ssub.s32 1, %s2
  %s5 = scalar_select 0, %s4, %s2
  loop: start=0, step=1, limit=4
  $region2: #{alexnet_fc_forward.10} parent=0 // loop_pre_header
    _
  $region3: #{alexnet_fc_forward.10} parent=0 // loop_header
    %s7 = sphi 0, %s11
    %p8 = scmp.ge.s32.totalorder %s7, 4
    %s17 = sphi 0, %s19
    %s20 = sphi 0, %s17
    %s21 = sphi 0, %s20
    %s37 = sphi 0, %s21
    %s43 = sphi 0, %s45
    %s46 = sphi 0, %s43
    %s47 = sphi 0, %s46
    %s63 = sphi 0, %s47
  $region4: #{alexnet_fc_forward.10} parent=0 // loop_header_branch
    %10 = sbr.rel (%p8) target = $region8
  $region5: #{alexnet_fc_forward.10} parent=0 // loop_body
    %s12 = ssub.s32 %s7, 1
    %s13 = ssub.s32 %s7, 2
    %s14 = sadd.s32 %s7, 1
    %s15 = ssub.s32 %s7, %s14
    %p16 = scmp.eq.s32.totalorder %s15, 0
    %s18 = sadd.s32 %s17, 1
    %s19 = scalar_select %p16, %s17, %s18
    %p22 = pneg %p16
    %p23 = scmp.eq.s32.totalorder %s7, 1
    %p24 = por %p22, %p23
    %p25 = scmp.ne.s32.totalorder %s17, %s20
    %p26 = scmp.eq.s32.totalorder %s7, 0
    %p27 = por %p25, %p26
    %p28 = scmp.ne.s32.totalorder %s17, %s20
    %p29 = scmp.eq.s32.totalorder %s12, 1
    %p30 = por %p28, %p29
    %p31 = scmp.ne.s32.totalorder %s20, %s21
    %p32 = scmp.eq.s32.totalorder %s12, 0
    %p33 = por %p31, %p32
    %p34 = scmp.ne.s32.totalorder %s20, %s21
    %p35 = scmp.eq.s32.totalorder %s13, 1
    %p36 = por %p34, %p35
    %p38 = scmp.ne.s32.totalorder %s21, %s37
    %p39 = scmp.eq.s32.totalorder %s13, 0
    %p40 = por %p38, %p39
    %s41 = ssub.s32 %s7, %s14
    %p42 = scmp.eq.s32.totalorder %s41, 0
    %s44 = sadd.s32 %s43, 1
    %s45 = scalar_select %p42, %s43, %s44
    %p48 = pneg %p42
    %p49 = scmp.eq.s32.totalorder %s7, 1
    %p50 = por %p48, %p49
    %p51 = scmp.ne.s32.totalorder %s43, %s46
    %p52 = scmp.eq.s32.totalorder %s7, 0
    %p53 = por %p51, %p52
    %p54 = scmp.ne.s32.totalorder %s43, %s46
    %p55 = scmp.eq.s32.totalorder %s12, 1
    %p56 = por %p54, %p55
    %p57 = scmp.ne.s32.totalorder %s46, %s47
    %p58 = scmp.eq.s32.totalorder %s12, 0
    %p59 = por %p57, %p58
    %p60 = scmp.ne.s32.totalorder %s46, %s47
    %p61 = scmp.eq.s32.totalorder %s13, 1
    %p62 = por %p60, %p61
    %p64 = scmp.ne.s32.totalorder %s47, %s63
    %p65 = scmp.eq.s32.totalorder %s13, 0
    %p66 = por %p64, %p65
    %p67 = scmp.le.s32.totalorder 1, %s7
    %p68 = scmp.lt.s32.totalorder %s7, 3
    %p69 = pnand %p67, %p68
    %p70 = pneg %p69
    // Predicated region
    $region9: #{alexnet_fc_forward.10} parent=5 // pred_check
      _
    $region10: #{alexnet_fc_forward.10} parent=5 // pred_check_branch
      %72 = sbr.rel (%p69) target = $region12
    $region11: #{alexnet_fc_forward.10} parent=5 // pred_region
      %s73 = ssub.s32 %s7, 1
    $region12: #{alexnet_fc_forward.10} parent=5 // pred_fallthru
      _
    %p74 = scmp.lt.s32.totalorder %s7, 2
    // Predicated region
    $region13: #{alexnet_fc_forward.10} parent=5 // pred_check
      %p75 = pneg %p74
    $region14: #{alexnet_fc_forward.10} parent=5 // pred_check_branch
      %77 = sbr.rel (%p75) target = $region16
    $region15: #{alexnet_fc_forward.10} parent=5 // pred_region
      // Predicated region
      $region17: #{alexnet_fc_forward.10} parent=15 // pred_check
        %p78 = pneg %p27
      $region18: #{alexnet_fc_forward.10} parent=15 // pred_check_branch
        %80 = sbr.rel (%p78) target = $region20
      $region19: #{alexnet_fc_forward.10} parent=15 // pred_region
        %p81 = scmp.lt.s32.totalorder %s7, 1
        %s82 = scalar_select %p81, %s7, 1
        %s83 = smul.addr %s82, 69
        %s84 = smul.addr %s83, 8
        %s85 = scalar_lea.vmem %s0, %s84
      $region20: #{alexnet_fc_forward.10} parent=15 // pred_fallthru
        _
    $region16: #{alexnet_fc_forward.10} parent=5 // pred_fallthru
      _
    %p86 = scmp.le.s32.totalorder 1, %s7
    %p87 = scmp.lt.s32.totalorder %s7, 3
    %p88 = pnand %p86, %p87
    %p89 = pneg %p88
    // Predicated region
    $region21: #{alexnet_fc_forward.10} parent=5 // pred_check
      _
    $region22: #{alexnet_fc_forward.10} parent=5 // pred_check_branch
      %91 = sbr.rel (%p88) target = $region24
    $region23: #{alexnet_fc_forward.10} parent=5 // pred_region
      %s92 = ssub.s32 %s7, 1
      %p93 = scmp.lt.s32.totalorder %s12, 1
      %s94 = scalar_select %p93, %s12, 1
      %s95 = smul.addr %s94, 69
      %s96 = smul.addr %s95, 8
      %s97 = scalar_lea.vmem %s0, %s96
      %p98 = pneg %p33
      %p99 = pneg %p30
      %p100 = pneg %p59
      %p101 = pneg %p56
      %p102 = scmp.lt.s32.totalorder %s12, 1
      %s103 = scalar_select %p102, %s12, 1
      %s104 = smul.addr %s103, 63
      %s105 = smul.addr %s104, 8
      %s106 = scalar_lea.vmem %s1, %s105
      %p107 = scmp.lt.s32.totalorder %s12, 1
      %s108 = scalar_select %p107, %s12, 1
      %s109 = smul.addr %s108, 69
      %s110 = smul.addr %s109, 8
      %s111 = scalar_lea.vmem %s0, %s110
      %p112 = scmp.lt.s32.totalorder %s12, 1
      %s113 = scalar_select %p112, %s12, 1
      %s114 = smul.addr %s113, 63
      %s115 = smul.addr %s114, 8
      %s116 = scalar_lea.vmem %s1, %s115
      %v117 = vld [vmem:[%s111] sm:$0xff]
      %v118 = vld [vmem:[%s111 + $0x8] sm:$0xff]
      %v119 = vld [vmem:[%s111 + $0x10] sm:$0x7f]
      %v120 = vld [vmem:[%s111 + $0x18] sm:$0xff]
      %v121 = vld [vmem:[%s111 + $0x20] sm:$0xff]
      %v122 = vld [vmem:[%s111 + $0x28] sm:$0x7f]
      %v123 = vld [vmem:[%s111 + $0x30] sm:$0xff]
      %v124 = vld [vmem:[%s111 + $0x38] sm:$0xff]
      %v125 = vld [vmem:[%s111 + $0x40] sm:$0x7f]
      %v126 = vld [vmem:[%s111 + $0x48] sm:$0xff]
      %v127 = vld [vmem:[%s111 + $0x50] sm:$0xff]
      %v128 = vld [vmem:[%s111 + $0x58] sm:$0x7f]
      %v129 = vld [vmem:[%s111 + $0x60] sm:$0xff]
      %v130 = vld [vmem:[%s111 + $0x68] sm:$0xff]
      %v131 = vld [vmem:[%s111 + $0x70] sm:$0x7f]
      %v132 = vld [vmem:[%s111 + $0x78] sm:$0xff]
      %v133 = vld [vmem:[%s111 + $0x80] sm:$0xff]
      %v134 = vld [vmem:[%s111 + $0x88] sm:$0x7f]
      %v135 = vld [vmem:[%s111 + $0x90] sm:$0xff]
      %v136 = vld [vmem:[%s111 + $0x98] sm:$0xff]
      %v137 = vld [vmem:[%s111 + $0xa0] sm:$0x7f]
      %v138 = vld [vmem:[%s111 + $0xa8] sm:$0xff]
      %v139 = vld [vmem:[%s111 + $0xb0] sm:$0xff]
      %v140 = vld [vmem:[%s111 + $0xb8] sm:$0x7f]
      %v141 = vld [vmem:[%s111 + $0xc0] sm:$0xff]
      %v142 = vld [vmem:[%s111 + $0xc8] sm:$0xff]
      %v143 = vld [vmem:[%s111 + $0xd0] sm:$0x7f]
      %v144 = vld [vmem:[%s111 + $0xd8] sm:$0xff]
      %v145 = vld [vmem:[%s111 + $0xe0] sm:$0xff]
      %v146 = vld [vmem:[%s111 + $0xe8] sm:$0x7f]
      %v147 = vld [vmem:[%s111 + $0xf0] sm:$0xff]
      %v148 = vld [vmem:[%s111 + $0xf8] sm:$0xff]
      %v149 = vld [vmem:[%s111 + $0x100] sm:$0x7f]
      %v150 = vld [vmem:[%s111 + $0x108] sm:$0xff]
      %v151 = vld [vmem:[%s111 + $0x110] sm:$0xff]
      %v152 = vld [vmem:[%s111 + $0x118] sm:$0x7f]
      %v153 = vld [vmem:[%s111 + $0x120] sm:$0xff]
      %v154 = vld [vmem:[%s111 + $0x128] sm:$0xff]
      %v155 = vld [vmem:[%s111 + $0x130] sm:$0x7f]
      %v156 = vld [vmem:[%s111 + $0x138] sm:$0xff]
      %v157 = vld [vmem:[%s111 + $0x140] sm:$0xff]
      %v158 = vld [vmem:[%s111 + $0x148] sm:$0x7f]
      %v159 = vld [vmem:[%s111 + $0x150] sm:$0xff]
      %v160 = vld [vmem:[%s111 + $0x158] sm:$0xff]
      %v161 = vld [vmem:[%s111 + $0x160] sm:$0x7f]
      %v162 = vld [vmem:[%s111 + $0x168] sm:$0xff]
      %v163 = vld [vmem:[%s111 + $0x170] sm:$0xff]
      %v164 = vld [vmem:[%s111 + $0x178] sm:$0x7f]
      %v165 = vld [vmem:[%s111 + $0x180] sm:$0xff]
      %v166 = vld [vmem:[%s111 + $0x188] sm:$0xff]
      %v167 = vld [vmem:[%s111 + $0x190] sm:$0x7f]
      %v168 = vld [vmem:[%s111 + $0x198] sm:$0xff]
      %v169 = vld [vmem:[%s111 + $0x1a0] sm:$0xff]
      %v170 = vld [vmem:[%s111 + $0x1a8] sm:$0x7f]
      %v171 = vld [vmem:[%s111 + $0x1b0] sm:$0xff]
      %v172 = vld [vmem:[%s111 + $0x1b8] sm:$0xff]
      %v173 = vld [vmem:[%s111 + $0x1c0] sm:$0x7f]
      %v174 = vld [vmem:[%s111 + $0x1c8] sm:$0xff]
      %v175 = vld [vmem:[%s111 + $0x1d0] sm:$0xff]
      %v176 = vld [vmem:[%s111 + $0x1d8] sm:$0x7f]
      %v177 = vld [vmem:[%s111 + $0x1e0] sm:$0xff]
      %v178 = vld [vmem:[%s111 + $0x1e8] sm:$0xff]
      %v179 = vld [vmem:[%s111 + $0x1f0] sm:$0x7f]
      %v180 = vld [vmem:[%s111 + $0x1f8] sm:$0xff]
      %v181 = vld [vmem:[%s111 + $0x200] sm:$0xff]
      %v182 = vld [vmem:[%s111 + $0x208] sm:$0x7f]
      %v183 = vld [vmem:[%s111 + $0x210] sm:$0xff]
      %v184 = vld [vmem:[%s111 + $0x218] sm:$0xff]
      %v185 = vld [vmem:[%s111 + $0x220] sm:$0x7f]
      %v186 = vmax.f32 %v117, %v120
      %v187 = vmax.f32 %v118, %v121
      %v188 = vmax.f32 %v119, %v122
      %v189 = vmax.f32 %v120, %v123
      %v190 = vmax.f32 %v121, %v124
      %v191 = vmax.f32 %v122, %v125
      %v192 = vmax.f32 %v123, %v126
      %v193 = vmax.f32 %v124, %v127
      %v194 = vmax.f32 %v125, %v128
      %v195 = vmax.f32 %v126, %v129
      %v196 = vmax.f32 %v127, %v130
      %v197 = vmax.f32 %v128, %v131
      %v198 = vmax.f32 %v129, %v132
      %v199 = vmax.f32 %v130, %v133
      %v200 = vmax.f32 %v131, %v134
      %v201 = vmax.f32 %v132, %v135
      %v202 = vmax.f32 %v133, %v136
      %v203 = vmax.f32 %v134, %v137
      %v204 = vmax.f32 %v135, %v138
      %v205 = vmax.f32 %v136, %v139
      %v206 = vmax.f32 %v137, %v140
      %v207 = vmax.f32 %v138, %v141
      %v208 = vmax.f32 %v139, %v142
      %v209 = vmax.f32 %v140, %v143
      %v210 = vmax.f32 %v141, %v144
      %v211 = vmax.f32 %v142, %v145
      %v212 = vmax.f32 %v143, %v146
      %v213 = vmax.f32 %v144, %v147
      %v214 = vmax.f32 %v145, %v148
      %v215 = vmax.f32 %v146, %v149
      %v216 = vmax.f32 %v147, %v150
      %v217 = vmax.f32 %v148, %v151
      %v218 = vmax.f32 %v149, %v152
      %v219 = vmax.f32 %v150, %v153
      %v220 = vmax.f32 %v151, %v154
      %v221 = vmax.f32 %v152, %v155
      %v222 = vmax.f32 %v153, %v156
      %v223 = vmax.f32 %v154, %v157
      %v224 = vmax.f32 %v155, %v158
      %v225 = vmax.f32 %v156, %v159
      %v226 = vmax.f32 %v157, %v160
      %v227 = vmax.f32 %v158, %v161
      %v228 = vmax.f32 %v159, %v162
      %v229 = vmax.f32 %v160, %v163
      %v230 = vmax.f32 %v161, %v164
      %v231 = vmax.f32 %v162, %v165
      %v232 = vmax.f32 %v163, %v166
      %v233 = vmax.f32 %v164, %v167
      %v234 = vmax.f32 %v165, %v168
      %v235 = vmax.f32 %v166, %v169
      %v236 = vmax.f32 %v167, %v170
      %v237 = vmax.f32 %v168, %v171
      %v238 = vmax.f32 %v169, %v172
      %v239 = vmax.f32 %v170, %v173
      %v240 = vmax.f32 %v171, %v174
      %v241 = vmax.f32 %v172, %v175
      %v242 = vmax.f32 %v173, %v176
      %v243 = vmax.f32 %v174, %v177
      %v244 = vmax.f32 %v175, %v178
      %v245 = vmax.f32 %v176, %v179
      %v246 = vmax.f32 %v177, %v180
      %v247 = vmax.f32 %v178, %v181
      %v248 = vmax.f32 %v179, %v182
      %v249 = vmax.f32 %v186, %v123
      %v250 = vmax.f32 %v187, %v124
      %v251 = vmax.f32 %v188, %v125
      %v252 = vmax.f32 %v189, %v126
      %v253 = vmax.f32 %v190, %v127
      %v254 = vmax.f32 %v191, %v128
      %v255 = vmax.f32 %v192, %v129
      %v256 = vmax.f32 %v193, %v130
      %v257 = vmax.f32 %v194, %v131
      %v258 = vmax.f32 %v195, %v132
      %v259 = vmax.f32 %v196, %v133
      %v260 = vmax.f32 %v197, %v134
      %v261 = vmax.f32 %v198, %v135
      %v262 = vmax.f32 %v199, %v136
      %v263 = vmax.f32 %v200, %v137
      %v264 = vmax.f32 %v201, %v138
      %v265 = vmax.f32 %v202, %v139
      %v266 = vmax.f32 %v203, %v140
      %v267 = vmax.f32 %v204, %v141
      %v268 = vmax.f32 %v205, %v142
      %v269 = vmax.f32 %v206, %v143
      %v270 = vmax.f32 %v207, %v144
      %v271 = vmax.f32 %v208, %v145
      %v272 = vmax.f32 %v209, %v146
      %v273 = vmax.f32 %v210, %v147
      %v274 = vmax.f32 %v211, %v148
      %v275 = vmax.f32 %v212, %v149
      %v276 = vmax.f32 %v213, %v150
      %v277 = vmax.f32 %v214, %v151
      %v278 = vmax.f32 %v215, %v152
      %v279 = vmax.f32 %v216, %v153
      %v280 = vmax.f32 %v217, %v154
      %v281 = vmax.f32 %v218, %v155
      %v282 = vmax.f32 %v219, %v156
      %v283 = vmax.f32 %v220, %v157
      %v284 = vmax.f32 %v221, %v158
      %v285 = vmax.f32 %v222, %v159
      %v286 = vmax.f32 %v223, %v160
      %v287 = vmax.f32 %v224, %v161
      %v288 = vmax.f32 %v225, %v162
      %v289 = vmax.f32 %v226, %v163
      %v290 = vmax.f32 %v227, %v164
      %v291 = vmax.f32 %v228, %v165
      %v292 = vmax.f32 %v229, %v166
      %v293 = vmax.f32 %v230, %v167
      %v294 = vmax.f32 %v231, %v168
      %v295 = vmax.f32 %v232, %v169
      %v296 = vmax.f32 %v233, %v170
      %v297 = vmax.f32 %v234, %v171
      %v298 = vmax.f32 %v235, %v172
      %v299 = vmax.f32 %v236, %v173
      %v300 = vmax.f32 %v237, %v174
      %v301 = vmax.f32 %v238, %v175
      %v302 = vmax.f32 %v239, %v176
      %v303 = vmax.f32 %v240, %v177
      %v304 = vmax.f32 %v241, %v178
      %v305 = vmax.f32 %v242, %v179
      %v306 = vmax.f32 %v243, %v180
      %v307 = vmax.f32 %v244, %v181
      %v308 = vmax.f32 %v245, %v182
      %v309 = vmax.f32 %v246, %v183
      %v310 = vmax.f32 %v247, %v184
      %v311 = vmax.f32 %v248, %v185
      %vm375 = vcmask 1046528
      %v376 = vrot.slane %v249, 1
      %v377 = vrot.slane %v250, 1
      %v378 = vsel %vm375, %v376, %v377
      %v379 = vrot.slane %v251, 1
      %v380 = vsel %vm375, %v377, %v379
      %v381 = vrot.slane %v252, 1
      %v382 = vrot.slane %v253, 1
      %v383 = vsel %vm375, %v381, %v382
      %v384 = vrot.slane %v254, 1
      %v385 = vsel %vm375, %v382, %v384
      %v386 = vrot.slane %v255, 1
      %v387 = vrot.slane %v256, 1
      %v388 = vsel %vm375, %v386, %v387
      %v389 = vrot.slane %v257, 1
      %v390 = vsel %vm375, %v387, %v389
      %v391 = vrot.slane %v258, 1
      %v392 = vrot.slane %v259, 1
      %v393 = vsel %vm375, %v391, %v392
      %v394 = vrot.slane %v260, 1
      %v395 = vsel %vm375, %v392, %v394
      %v396 = vrot.slane %v261, 1
      %v397 = vrot.slane %v262, 1
      %v398 = vsel %vm375, %v396, %v397
      %v399 = vrot.slane %v263, 1
      %v400 = vsel %vm375, %v397, %v399
      %v401 = vrot.slane %v264, 1
      %v402 = vrot.slane %v265, 1
      %v403 = vsel %vm375, %v401, %v402
      %v404 = vrot.slane %v266, 1
      %v405 = vsel %vm375, %v402, %v404
      %v406 = vrot.slane %v267, 1
      %v407 = vrot.slane %v268, 1
      %v408 = vsel %vm375, %v406, %v407
      %v409 = vrot.slane %v269, 1
      %v410 = vsel %vm375, %v407, %v409
      %v411 = vrot.slane %v270, 1
      %v412 = vrot.slane %v271, 1
      %v413 = vsel %vm375, %v411, %v412
      %v414 = vrot.slane %v272, 1
      %v415 = vsel %vm375, %v412, %v414
      %v416 = vrot.slane %v273, 1
      %v417 = vrot.slane %v274, 1
      %v418 = vsel %vm375, %v416, %v417
      %v419 = vrot.slane %v275, 1
      %v420 = vsel %vm375, %v417, %v419
      %v421 = vrot.slane %v276, 1
      %v422 = vrot.slane %v277, 1
      %v423 = vsel %vm375, %v421, %v422
      %v424 = vrot.slane %v278, 1
      %v425 = vsel %vm375, %v422, %v424
      %v426 = vrot.slane %v279, 1
      %v427 = vrot.slane %v280, 1
      %v428 = vsel %vm375, %v426, %v427
      %v429 = vrot.slane %v281, 1
      %v430 = vsel %vm375, %v427, %v429
      %v431 = vrot.slane %v282, 1
      %v432 = vrot.slane %v283, 1
      %v433 = vsel %vm375, %v431, %v432
      %v434 = vrot.slane %v284, 1
      %v435 = vsel %vm375, %v432, %v434
      %v436 = vrot.slane %v285, 1
      %v437 = vrot.slane %v286, 1
      %v438 = vsel %vm375, %v436, %v437
      %v439 = vrot.slane %v287, 1
      %v440 = vsel %vm375, %v437, %v439
      %v441 = vrot.slane %v288, 1
      %v442 = vrot.slane %v289, 1
      %v443 = vsel %vm375, %v441, %v442
      %v444 = vrot.slane %v290, 1
      %v445 = vsel %vm375, %v442, %v444
      %v446 = vrot.slane %v291, 1
      %v447 = vrot.slane %v292, 1
      %v448 = vsel %vm375, %v446, %v447
      %v449 = vrot.slane %v293, 1
      %v450 = vsel %vm375, %v447, %v449
      %v451 = vrot.slane %v294, 1
      %v452 = vrot.slane %v295, 1
      %v453 = vsel %vm375, %v451, %v452
      %v454 = vrot.slane %v296, 1
      %v455 = vsel %vm375, %v452, %v454
      %v456 = vrot.slane %v297, 1
      %v457 = vrot.slane %v298, 1
      %v458 = vsel %vm375, %v456, %v457
      %v459 = vrot.slane %v299, 1
      %v460 = vsel %vm375, %v457, %v459
      %v461 = vrot.slane %v300, 1
      %v462 = vrot.slane %v301, 1
      %v463 = vsel %vm375, %v461, %v462
      %v464 = vrot.slane %v302, 1
      %v465 = vsel %vm375, %v462, %v464
      %v466 = vrot.slane %v303, 1
      %v467 = vrot.slane %v304, 1
      %v468 = vsel %vm375, %v466, %v467
      %v469 = vrot.slane %v305, 1
      %v470 = vsel %vm375, %v467, %v469
      %v471 = vrot.slane %v306, 1
      %v472 = vrot.slane %v307, 1
      %v473 = vsel %vm375, %v471, %v472
      %v474 = vrot.slane %v308, 1
      %v475 = vsel %vm375, %v472, %v474
      %v476 = vrot.slane %v309, 1
      %v477 = vrot.slane %v310, 1
      %v478 = vsel %vm375, %v476, %v477
      %v479 = vrot.slane %v311, 1
      %v480 = vsel %vm375, %v477, %v479
      %v544 = vmax.f32 %v249, %v378
      %v545 = vmax.f32 %v250, %v380
      %v546 = vmax.f32 %v251, %v379
      %v547 = vmax.f32 %v252, %v383
      %v548 = vmax.f32 %v253, %v385
      %v549 = vmax.f32 %v254, %v384
      %v550 = vmax.f32 %v255, %v388
      %v551 = vmax.f32 %v256, %v390
      %v552 = vmax.f32 %v257, %v389
      %v553 = vmax.f32 %v258, %v393
      %v554 = vmax.f32 %v259, %v395
      %v555 = vmax.f32 %v260, %v394
      %v556 = vmax.f32 %v261, %v398
      %v557 = vmax.f32 %v262, %v400
      %v558 = vmax.f32 %v263, %v399
      %v559 = vmax.f32 %v264, %v403
      %v560 = vmax.f32 %v265, %v405
      %v561 = vmax.f32 %v266, %v404
      %v562 = vmax.f32 %v267, %v408
      %v563 = vmax.f32 %v268, %v410
      %v564 = vmax.f32 %v269, %v409
      %v565 = vmax.f32 %v270, %v413
      %v566 = vmax.f32 %v271, %v415
      %v567 = vmax.f32 %v272, %v414
      %v568 = vmax.f32 %v273, %v418
      %v569 = vmax.f32 %v274, %v420
      %v570 = vmax.f32 %v275, %v419
      %v571 = vmax.f32 %v276, %v423
      %v572 = vmax.f32 %v277, %v425
      %v573 = vmax.f32 %v278, %v424
      %v574 = vmax.f32 %v279, %v428
      %v575 = vmax.f32 %v280, %v430
      %v576 = vmax.f32 %v281, %v429
      %v577 = vmax.f32 %v282, %v433
      %v578 = vmax.f32 %v283, %v435
      %v579 = vmax.f32 %v284, %v434
      %v580 = vmax.f32 %v285, %v438
      %v581 = vmax.f32 %v286, %v440
      %v582 = vmax.f32 %v287, %v439
      %v583 = vmax.f32 %v288, %v443
      %v584 = vmax.f32 %v289, %v445
      %v585 = vmax.f32 %v290, %v444
      %v586 = vmax.f32 %v291, %v448
      %v587 = vmax.f32 %v292, %v450
      %v588 = vmax.f32 %v293, %v449
      %v589 = vmax.f32 %v294, %v453
      %v590 = vmax.f32 %v295, %v455
      %v591 = vmax.f32 %v296, %v454
      %v592 = vmax.f32 %v297, %v458
      %v593 = vmax.f32 %v298, %v460
      %v594 = vmax.f32 %v299, %v459
      %v595 = vmax.f32 %v300, %v463
      %v596 = vmax.f32 %v301, %v465
      %v597 = vmax.f32 %v302, %v464
      %v598 = vmax.f32 %v303, %v468
      %v599 = vmax.f32 %v304, %v470
      %v600 = vmax.f32 %v305, %v469
      %v601 = vmax.f32 %v306, %v473
      %v602 = vmax.f32 %v307, %v475
      %v603 = vmax.f32 %v308, %v474
      %v604 = vmax.f32 %v309, %v478
      %v605 = vmax.f32 %v310, %v480
      %v606 = vmax.f32 %v311, %v479
      %vm607 = vcmask 1045504
      %v608 = vrot.slane %v249, 2
      %v609 = vrot.slane %v250, 2
      %v610 = vsel %vm607, %v608, %v609
      %v611 = vrot.slane %v251, 2
      %v612 = vsel %vm607, %v609, %v611
      %v613 = vrot.slane %v252, 2
      %v614 = vrot.slane %v253, 2
      %v615 = vsel %vm607, %v613, %v614
      %v616 = vrot.slane %v254, 2
      %v617 = vsel %vm607, %v614, %v616
      %v618 = vrot.slane %v255, 2
      %v619 = vrot.slane %v256, 2
      %v620 = vsel %vm607, %v618, %v619
      %v621 = vrot.slane %v257, 2
      %v622 = vsel %vm607, %v619, %v621
      %v623 = vrot.slane %v258, 2
      %v624 = vrot.slane %v259, 2
      %v625 = vsel %vm607, %v623, %v624
      %v626 = vrot.slane %v260, 2
      %v627 = vsel %vm607, %v624, %v626
      %v628 = vrot.slane %v261, 2
      %v629 = vrot.slane %v262, 2
      %v630 = vsel %vm607, %v628, %v629
      %v631 = vrot.slane %v263, 2
      %v632 = vsel %vm607, %v629, %v631
      %v633 = vrot.slane %v264, 2
      %v634 = vrot.slane %v265, 2
      %v635 = vsel %vm607, %v633, %v634
      %v636 = vrot.slane %v266, 2
      %v637 = vsel %vm607, %v634, %v636
      %v638 = vrot.slane %v267, 2
      %v639 = vrot.slane %v268, 2
      %v640 = vsel %vm607, %v638, %v639
      %v641 = vrot.slane %v269, 2
      %v642 = vsel %vm607, %v639, %v641
      %v643 = vrot.slane %v270, 2
      %v644 = vrot.slane %v271, 2
      %v645 = vsel %vm607, %v643, %v644
      %v646 = vrot.slane %v272, 2
      %v647 = vsel %vm607, %v644, %v646
      %v648 = vrot.slane %v273, 2
      %v649 = vrot.slane %v274, 2
      %v650 = vsel %vm607, %v648, %v649
      %v651 = vrot.slane %v275, 2
      %v652 = vsel %vm607, %v649, %v651
      %v653 = vrot.slane %v276, 2
      %v654 = vrot.slane %v277, 2
      %v655 = vsel %vm607, %v653, %v654
      %v656 = vrot.slane %v278, 2
      %v657 = vsel %vm607, %v654, %v656
      %v658 = vrot.slane %v279, 2
      %v659 = vrot.slane %v280, 2
      %v660 = vsel %vm607, %v658, %v659
      %v661 = vrot.slane %v281, 2
      %v662 = vsel %vm607, %v659, %v661
      %v663 = vrot.slane %v282, 2
      %v664 = vrot.slane %v283, 2
      %v665 = vsel %vm607, %v663, %v664
      %v666 = vrot.slane %v284, 2
      %v667 = vsel %vm607, %v664, %v666
      %v668 = vrot.slane %v285, 2
      %v669 = vrot.slane %v286, 2
      %v670 = vsel %vm607, %v668, %v669
      %v671 = vrot.slane %v287, 2
      %v672 = vsel %vm607, %v669, %v671
      %v673 = vrot.slane %v288, 2
      %v674 = vrot.slane %v289, 2
      %v675 = vsel %vm607, %v673, %v674
      %v676 = vrot.slane %v290, 2
      %v677 = vsel %vm607, %v674, %v676
      %v678 = vrot.slane %v291, 2
      %v679 = vrot.slane %v292, 2
      %v680 = vsel %vm607, %v678, %v679
      %v681 = vrot.slane %v293, 2
      %v682 = vsel %vm607, %v679, %v681
      %v683 = vrot.slane %v294, 2
      %v684 = vrot.slane %v295, 2
      %v685 = vsel %vm607, %v683, %v684
      %v686 = vrot.slane %v296, 2
      %v687 = vsel %vm607, %v684, %v686
      %v688 = vrot.slane %v297, 2
      %v689 = vrot.slane %v298, 2
      %v690 = vsel %vm607, %v688, %v689
      %v691 = vrot.slane %v299, 2
      %v692 = vsel %vm607, %v689, %v691
      %v693 = vrot.slane %v300, 2
      %v694 = vrot.slane %v301, 2
      %v695 = vsel %vm607, %v693, %v694
      %v696 = vrot.slane %v302, 2
      %v697 = vsel %vm607, %v694, %v696
      %v698 = vrot.slane %v303, 2
      %v699 = vrot.slane %v304, 2
      %v700 = vsel %vm607, %v698, %v699
      %v701 = vrot.slane %v305, 2
      %v702 = vsel %vm607, %v699, %v701
      %v703 = vrot.slane %v306, 2
      %v704 = vrot.slane %v307, 2
      %v705 = vsel %vm607, %v703, %v704
      %v706 = vrot.slane %v308, 2
      %v707 = vsel %vm607, %v704, %v706
      %v708 = vrot.slane %v309, 2
      %v709 = vrot.slane %v310, 2
      %v710 = vsel %vm607, %v708, %v709
      %v711 = vrot.slane %v311, 2
      %v712 = vsel %vm607, %v709, %v711
      %v776 = vmax.f32 %v544, %v610
      %v777 = vmax.f32 %v545, %v612
      %v778 = vmax.f32 %v546, %v611
      %v779 = vmax.f32 %v547, %v615
      %v780 = vmax.f32 %v548, %v617
      %v781 = vmax.f32 %v549, %v616
      %v782 = vmax.f32 %v550, %v620
      %v783 = vmax.f32 %v551, %v622
      %v784 = vmax.f32 %v552, %v621
      %v785 = vmax.f32 %v553, %v625
      %v786 = vmax.f32 %v554, %v627
      %v787 = vmax.f32 %v555, %v626
      %v788 = vmax.f32 %v556, %v630
      %v789 = vmax.f32 %v557, %v632
      %v790 = vmax.f32 %v558, %v631
      %v791 = vmax.f32 %v559, %v635
      %v792 = vmax.f32 %v560, %v637
      %v793 = vmax.f32 %v561, %v636
      %v794 = vmax.f32 %v562, %v640
      %v795 = vmax.f32 %v563, %v642
      %v796 = vmax.f32 %v564, %v641
      %v797 = vmax.f32 %v565, %v645
      %v798 = vmax.f32 %v566, %v647
      %v799 = vmax.f32 %v567, %v646
      %v800 = vmax.f32 %v568, %v650
      %v801 = vmax.f32 %v569, %v652
      %v802 = vmax.f32 %v570, %v651
      %v803 = vmax.f32 %v571, %v655
      %v804 = vmax.f32 %v572, %v657
      %v805 = vmax.f32 %v573, %v656
      %v806 = vmax.f32 %v574, %v660
      %v807 = vmax.f32 %v575, %v662
      %v808 = vmax.f32 %v576, %v661
      %v809 = vmax.f32 %v577, %v665
      %v810 = vmax.f32 %v578, %v667
      %v811 = vmax.f32 %v579, %v666
      %v812 = vmax.f32 %v580, %v670
      %v813 = vmax.f32 %v581, %v672
      %v814 = vmax.f32 %v582, %v671
      %v815 = vmax.f32 %v583, %v675
      %v816 = vmax.f32 %v584, %v677
      %v817 = vmax.f32 %v585, %v676
      %v818 = vmax.f32 %v586, %v680
      %v819 = vmax.f32 %v587, %v682
      %v820 = vmax.f32 %v588, %v681
      %v821 = vmax.f32 %v589, %v685
      %v822 = vmax.f32 %v590, %v687
      %v823 = vmax.f32 %v591, %v686
      %v824 = vmax.f32 %v592, %v690
      %v825 = vmax.f32 %v593, %v692
      %v826 = vmax.f32 %v594, %v691
      %v827 = vmax.f32 %v595, %v695
      %v828 = vmax.f32 %v596, %v697
      %v829 = vmax.f32 %v597, %v696
      %v830 = vmax.f32 %v598, %v700
      %v831 = vmax.f32 %v599, %v702
      %v832 = vmax.f32 %v600, %v701
      %v833 = vmax.f32 %v601, %v705
      %v834 = vmax.f32 %v602, %v707
      %v835 = vmax.f32 %v603, %v706
      %v836 = vmax.f32 %v604, %v710
      %v837 = vmax.f32 %v605, %v712
      %v838 = vmax.f32 %v606, %v711
      %vm839 = vcmask 261120
      %840 = vst.msk [vmem:[%s116] sm:$0xff] %vm839, %v776
      %841 = vst.msk [vmem:[%s116 + $0x8] sm:$0xff] %vm839, %v777
      %vm842 = vcmask 258048
      %843 = vst.msk [vmem:[%s116 + $0x10] sm:$0x1f] %vm842, %v778
      %844 = vst.msk [vmem:[%s116 + $0x18] sm:$0xff] %vm839, %v779
      %845 = vst.msk [vmem:[%s116 + $0x20] sm:$0xff] %vm839, %v780
      %846 = vst.msk [vmem:[%s116 + $0x28] sm:$0x1f] %vm842, %v781
      %847 = vst.msk [vmem:[%s116 + $0x30] sm:$0xff] %vm839, %v782
      %848 = vst.msk [vmem:[%s116 + $0x38] sm:$0xff] %vm839, %v783
      %849 = vst.msk [vmem:[%s116 + $0x40] sm:$0x1f] %vm842, %v784
      %850 = vst.msk [vmem:[%s116 + $0x48] sm:$0xff] %vm839, %v785
      %851 = vst.msk [vmem:[%s116 + $0x50] sm:$0xff] %vm839, %v786
      %852 = vst.msk [vmem:[%s116 + $0x58] sm:$0x1f] %vm842, %v787
      %853 = vst.msk [vmem:[%s116 + $0x60] sm:$0xff] %vm839, %v788
      %854 = vst.msk [vmem:[%s116 + $0x68] sm:$0xff] %vm839, %v789
      %855 = vst.msk [vmem:[%s116 + $0x70] sm:$0x1f] %vm842, %v790
      %856 = vst.msk [vmem:[%s116 + $0x78] sm:$0xff] %vm839, %v791
      %857 = vst.msk [vmem:[%s116 + $0x80] sm:$0xff] %vm839, %v792
      %858 = vst.msk [vmem:[%s116 + $0x88] sm:$0x1f] %vm842, %v793
      %859 = vst.msk [vmem:[%s116 + $0x90] sm:$0xff] %vm839, %v794
      %860 = vst.msk [vmem:[%s116 + $0x98] sm:$0xff] %vm839, %v795
      %861 = vst.msk [vmem:[%s116 + $0xa0] sm:$0x1f] %vm842, %v796
      %862 = vst.msk [vmem:[%s116 + $0xa8] sm:$0xff] %vm839, %v797
      %863 = vst.msk [vmem:[%s116 + $0xb0] sm:$0xff] %vm839, %v798
      %864 = vst.msk [vmem:[%s116 + $0xb8] sm:$0x1f] %vm842, %v799
      %865 = vst.msk [vmem:[%s116 + $0xc0] sm:$0xff] %vm839, %v800
      %866 = vst.msk [vmem:[%s116 + $0xc8] sm:$0xff] %vm839, %v801
      %867 = vst.msk [vmem:[%s116 + $0xd0] sm:$0x1f] %vm842, %v802
      %868 = vst.msk [vmem:[%s116 + $0xd8] sm:$0xff] %vm839, %v803
      %869 = vst.msk [vmem:[%s116 + $0xe0] sm:$0xff] %vm839, %v804
      %870 = vst.msk [vmem:[%s116 + $0xe8] sm:$0x1f] %vm842, %v805
      %871 = vst.msk [vmem:[%s116 + $0xf0] sm:$0xff] %vm839, %v806
      %872 = vst.msk [vmem:[%s116 + $0xf8] sm:$0xff] %vm839, %v807
      %873 = vst.msk [vmem:[%s116 + $0x100] sm:$0x1f] %vm842, %v808
      %874 = vst.msk [vmem:[%s116 + $0x108] sm:$0xff] %vm839, %v809
      %875 = vst.msk [vmem:[%s116 + $0x110] sm:$0xff] %vm839, %v810
      %876 = vst.msk [vmem:[%s116 + $0x118] sm:$0x1f] %vm842, %v811
      %877 = vst.msk [vmem:[%s116 + $0x120] sm:$0xff] %vm839, %v812
      %878 = vst.msk [vmem:[%s116 + $0x128] sm:$0xff] %vm839, %v813
      %879 = vst.msk [vmem:[%s116 + $0x130] sm:$0x1f] %vm842, %v814
      %880 = vst.msk [vmem:[%s116 + $0x138] sm:$0xff] %vm839, %v815
      %881 = vst.msk [vmem:[%s116 + $0x140] sm:$0xff] %vm839, %v816
      %882 = vst.msk [vmem:[%s116 + $0x148] sm:$0x1f] %vm842, %v817
      %883 = vst.msk [vmem:[%s116 + $0x150] sm:$0xff] %vm839, %v818
      %884 = vst.msk [vmem:[%s116 + $0x158] sm:$0xff] %vm839, %v819
      %885 = vst.msk [vmem:[%s116 + $0x160] sm:$0x1f] %vm842, %v820
      %886 = vst.msk [vmem:[%s116 + $0x168] sm:$0xff] %vm839, %v821
      %887 = vst.msk [vmem:[%s116 + $0x170] sm:$0xff] %vm839, %v822
      %888 = vst.msk [vmem:[%s116 + $0x178] sm:$0x1f] %vm842, %v823
      %889 = vst.msk [vmem:[%s116 + $0x180] sm:$0xff] %vm839, %v824
      %890 = vst.msk [vmem:[%s116 + $0x188] sm:$0xff] %vm839, %v825
      %891 = vst.msk [vmem:[%s116 + $0x190] sm:$0x1f] %vm842, %v826
      %892 = vst.msk [vmem:[%s116 + $0x198] sm:$0xff] %vm839, %v827
      %893 = vst.msk [vmem:[%s116 + $0x1a0] sm:$0xff] %vm839, %v828
      %894 = vst.msk [vmem:[%s116 + $0x1a8] sm:$0x1f] %vm842, %v829
      %895 = vst.msk [vmem:[%s116 + $0x1b0] sm:$0xff] %vm839, %v830
      %896 = vst.msk [vmem:[%s116 + $0x1b8] sm:$0xff] %vm839, %v831
      %897 = vst.msk [vmem:[%s116 + $0x1c0] sm:$0x1f] %vm842, %v832
      %898 = vst.msk [vmem:[%s116 + $0x1c8] sm:$0xff] %vm839, %v833
      %899 = vst.msk [vmem:[%s116 + $0x1d0] sm:$0xff] %vm839, %v834
      %900 = vst.msk [vmem:[%s116 + $0x1d8] sm:$0x1f] %vm842, %v835
      %901 = vst.msk [vmem:[%s116 + $0x1e0] sm:$0xff] %vm839, %v836
      %902 = vst.msk [vmem:[%s116 + $0x1e8] sm:$0xff] %vm839, %v837
      %903 = vst.msk [vmem:[%s116 + $0x1f0] sm:$0x1f] %vm842, %v838
      %p904 = scmp.lt.s32.totalorder %s12, 1
      %s905 = scalar_select %p904, %s12, 1
      %s906 = smul.addr %s905, 63
      %s907 = smul.addr %s906, 8
      %s908 = scalar_lea.vmem %s1, %s907
      // Predicated region
      $region25: #{alexnet_fc_forward.10} parent=23 // pred_check
        %p909 = pneg %p56
      $region26: #{alexnet_fc_forward.10} parent=23 // pred_check_branch
        %911 = sbr.rel (%p909) target = $region28
      $region27: #{alexnet_fc_forward.10} parent=23 // pred_region
        _
      $region28: #{alexnet_fc_forward.10} parent=23 // pred_fallthru
        _
    $region24: #{alexnet_fc_forward.10} parent=5 // pred_fallthru
      _
    %p912 = scmp.le.s32.totalorder 2, %s7
    // Predicated region
    $region29: #{alexnet_fc_forward.10} parent=5 // pred_check
      %p913 = pneg %p912
    $region30: #{alexnet_fc_forward.10} parent=5 // pred_check_branch
      %915 = sbr.rel (%p913) target = $region32
    $region31: #{alexnet_fc_forward.10} parent=5 // pred_region
      %s916 = ssub.s32 %s7, 2
      // Predicated region
      $region33: #{alexnet_fc_forward.10} parent=31 // pred_check
        %p917 = pneg %p62
      $region34: #{alexnet_fc_forward.10} parent=31 // pred_check_branch
        %919 = sbr.rel (%p917) target = $region36
      $region35: #{alexnet_fc_forward.10} parent=31 // pred_region
        %p920 = scmp.lt.s32.totalorder %s13, 1
        %s921 = scalar_select %p920, %s13, 1
        %s922 = smul.addr %s921, 63
        %s923 = smul.addr %s922, 8
        %s924 = scalar_lea.vmem %s1, %s923
      $region36: #{alexnet_fc_forward.10} parent=31 // pred_fallthru
        _
    $region32: #{alexnet_fc_forward.10} parent=5 // pred_fallthru
      _
  $region6: #{alexnet_fc_forward.10} parent=0 // loop_footer
    %s11 = sadd.s32 1, %s7
  $region7: #{alexnet_fc_forward.10} parent=0 // loop_footer_branch
    %6 = sbr.rel target = $region3
  $region8: #{alexnet_fc_forward.10} parent=0 // loop_exit
    _

// kernel: alexnet_fc_forward.11
$region0: #{alexnet_fc_forward.11}
  #allocation0 [shape = 'u32[]', space=smem, size = 0x4, offset = 0x4, fixed_abs, tag = 'smem constant byte address 0x4 - core index']
  #allocation1 [shape = 'u32[144,128]{1,0:T(1,128)}', space=vmem, size = 0x12000, scoped, tag = 'internal scratch']
  %s0 = inlined_call_operand.vmem [shape: bf16[256,800], index: 0, kind: input, shape index: {}]
  %s1 = inlined_call_operand.vmem [shape: bf16[800,64], index: 1, kind: input, shape index: {}]
  %s2 = inlined_call_operand.vmem [shape: f32[1,64], index: 2, kind: input, shape index: {}]
  %s3 = inlined_call_operand.vmem [shape: f32[64,64], index: 3, kind: input, shape index: {}]
  %s4 = inlined_call_operand.vmem [shape: f32[256,64], index: 4, kind: output, shape index: {}]
  %s5 = sld [smem:[#allocation0]]
  $region49: #{alexnet_fc_forward.11} parent=0
    _
  %s7 = ssub.s32 1, %s5
  %s8 = scalar_select 0, %s7, %s5
  loop: start=0, step=1, limit=4
  $region2: #{alexnet_fc_forward.11} parent=0 // loop_pre_header
    _
  $region3: #{alexnet_fc_forward.11} parent=0 // loop_header
    %s10 = sphi 0, %s14
    %p11 = scmp.ge.s32.totalorder %s10, 4
    %s20 = sphi 0, %s22
    %s23 = sphi 0, %s20
    %s24 = sphi 0, %s23
    %s40 = sphi 0, %s24
    %s44 = sphi 0, %s44
    %s46 = sphi 0, %s44
    %s47 = sphi 0, %s46
    %s61 = sphi 0, %s47
    %s65 = sphi 0, %s65
    %s67 = sphi 0, %s65
    %s68 = sphi 0, %s67
    %s82 = sphi 0, %s68
    %s86 = sphi 0, %s86
    %s88 = sphi 0, %s86
    %s89 = sphi 0, %s88
    %s103 = sphi 0, %s89
    %s109 = sphi 0, %s111
    %s112 = sphi 0, %s109
    %s113 = sphi 0, %s112
    %s129 = sphi 0, %s113
  $region4: #{alexnet_fc_forward.11} parent=0 // loop_header_branch
    %13 = sbr.rel (%p11) target = $region8
  $region5: #{alexnet_fc_forward.11} parent=0 // loop_body
    %s15 = ssub.s32 %s10, 1
    %s16 = ssub.s32 %s10, 2
    %s17 = sadd.s32 %s10, 1
    %s18 = ssub.s32 %s10, %s17
    %p19 = scmp.eq.s32.totalorder %s18, 0
    %s21 = sadd.s32 %s20, 1
    %s22 = scalar_select %p19, %s20, %s21
    %p25 = pneg %p19
    %p26 = scmp.eq.s32.totalorder %s10, 1
    %p27 = por %p25, %p26
    %p28 = scmp.ne.s32.totalorder %s20, %s23
    %p29 = scmp.eq.s32.totalorder %s10, 0
    %p30 = por %p28, %p29
    %p31 = scmp.ne.s32.totalorder %s20, %s23
    %p32 = scmp.eq.s32.totalorder %s15, 1
    %p33 = por %p31, %p32
    %p34 = scmp.ne.s32.totalorder %s23, %s24
    %p35 = scmp.eq.s32.totalorder %s15, 0
    %p36 = por %p34, %p35
    %p37 = scmp.ne.s32.totalorder %s23, %s24
    %p38 = scmp.eq.s32.totalorder %s16, 1
    %p39 = por %p37, %p38
    %p41 = scmp.ne.s32.totalorder %s24, %s40
    %p42 = scmp.eq.s32.totalorder %s16, 0
    %p43 = por %p41, %p42
    %s45 = sadd.s32 %s44, 1
    %p48 = scmp.eq.s32.totalorder %s10, 1
    %p49 = scmp.ne.s32.totalorder %s44, %s46
    %p50 = scmp.eq.s32.totalorder %s10, 0
    %p51 = por %p49, %p50
    %p52 = scmp.ne.s32.totalorder %s44, %s46
    %p53 = scmp.eq.s32.totalorder %s15, 1
    %p54 = por %p52, %p53
    %p55 = scmp.ne.s32.totalorder %s46, %s47
    %p56 = scmp.eq.s32.totalorder %s15, 0
    %p57 = por %p55, %p56
    %p58 = scmp.ne.s32.totalorder %s46, %s47
    %p59 = scmp.eq.s32.totalorder %s16, 1
    %p60 = por %p58, %p59
    %p62 = scmp.ne.s32.totalorder %s47, %s61
    %p63 = scmp.eq.s32.totalorder %s16, 0
    %p64 = por %p62, %p63
    %s66 = sadd.s32 %s65, 1
    %p69 = scmp.eq.s32.totalorder %s10, 1
    %p70 = scmp.ne.s32.totalorder %s65, %s67
    %p71 = scmp.eq.s32.totalorder %s10, 0
    %p72 = por %p70, %p71
    %p73 = scmp.ne.s32.totalorder %s65, %s67
    %p74 = scmp.eq.s32.totalorder %s15, 1
    %p75 = por %p73, %p74
    %p76 = scmp.ne.s32.totalorder %s67, %s68
    %p77 = scmp.eq.s32.totalorder %s15, 0
    %p78 = por %p76, %p77
    %p79 = scmp.ne.s32.totalorder %s67, %s68
    %p80 = scmp.eq.s32.totalorder %s16, 1
    %p81 = por %p79, %p80
    %p83 = scmp.ne.s32.totalorder %s68, %s82
    %p84 = scmp.eq.s32.totalorder %s16, 0
    %p85 = por %p83, %p84
    %s87 = sadd.s32 %s86, 1
    %p90 = scmp.eq.s32.totalorder %s10, 1
    %p91 = scmp.ne.s32.totalorder %s86, %s88
    %p92 = scmp.eq.s32.totalorder %s10, 0
    %p93 = por %p91, %p92
    %p94 = scmp.ne.s32.totalorder %s86, %s88
    %p95 = scmp.eq.s32.totalorder %s15, 1
    %p96 = por %p94, %p95
    %p97 = scmp.ne.s32.totalorder %s88, %s89
    %p98 = scmp.eq.s32.totalorder %s15, 0
    %p99 = por %p97, %p98
    %p100 = scmp.ne.s32.totalorder %s88, %s89
    %p101 = scmp.eq.s32.totalorder %s16, 1
    %p102 = por %p100, %p101
    %p104 = scmp.ne.s32.totalorder %s89, %s103
    %p105 = scmp.eq.s32.totalorder %s16, 0
    %p106 = por %p104, %p105
    %s107 = ssub.s32 %s10, %s17
    %p108 = scmp.eq.s32.totalorder %s107, 0
    %s110 = sadd.s32 %s109, 1
    %s111 = scalar_select %p108, %s109, %s110
    %p114 = pneg %p108
    %p115 = scmp.eq.s32.totalorder %s10, 1
    %p116 = por %p114, %p115
    %p117 = scmp.ne.s32.totalorder %s109, %s112
    %p118 = scmp.eq.s32.totalorder %s10, 0
    %p119 = por %p117, %p118
    %p120 = scmp.ne.s32.totalorder %s109, %s112
    %p121 = scmp.eq.s32.totalorder %s15, 1
    %p122 = por %p120, %p121
    %p123 = scmp.ne.s32.totalorder %s112, %s113
    %p124 = scmp.eq.s32.totalorder %s15, 0
    %p125 = por %p123, %p124
    %p126 = scmp.ne.s32.totalorder %s112, %s113
    %p127 = scmp.eq.s32.totalorder %s16, 1
    %p128 = por %p126, %p127
    %p130 = scmp.ne.s32.totalorder %s113, %s129
    %p131 = scmp.eq.s32.totalorder %s16, 0
    %p132 = por %p130, %p131
    %p133 = scmp.le.s32.totalorder 1, %s10
    %p134 = scmp.lt.s32.totalorder %s10, 3
    %p135 = pnand %p133, %p134
    %p136 = pneg %p135
    // Predicated region
    $region9: #{alexnet_fc_forward.11} parent=5 // pred_check
      _
    $region10: #{alexnet_fc_forward.11} parent=5 // pred_check_branch
      %138 = sbr.rel (%p135) target = $region12
    $region11: #{alexnet_fc_forward.11} parent=5 // pred_region
      %s139 = ssub.s32 %s10, 1
      // Predicated region
      $region13: #{alexnet_fc_forward.11} parent=11 // pred_check
        %p140 = pneg %p57
      $region14: #{alexnet_fc_forward.11} parent=11 // pred_check_branch
        %142 = sbr.rel (%p140) target = $region16
      $region15: #{alexnet_fc_forward.11} parent=11 // pred_region
        _
      $region16: #{alexnet_fc_forward.11} parent=11 // pred_fallthru
        _
      // Predicated region
      $region17: #{alexnet_fc_forward.11} parent=11 // pred_check
        %p143 = pneg %p78
      $region18: #{alexnet_fc_forward.11} parent=11 // pred_check_branch
        %145 = sbr.rel (%p143) target = $region20
      $region19: #{alexnet_fc_forward.11} parent=11 // pred_region
        _
      $region20: #{alexnet_fc_forward.11} parent=11 // pred_fallthru
        _
      // Predicated region
      $region21: #{alexnet_fc_forward.11} parent=11 // pred_check
        %p146 = pneg %p99
      $region22: #{alexnet_fc_forward.11} parent=11 // pred_check_branch
        %148 = sbr.rel (%p146) target = $region24
      $region23: #{alexnet_fc_forward.11} parent=11 // pred_region
        _
      $region24: #{alexnet_fc_forward.11} parent=11 // pred_fallthru
        _
    $region12: #{alexnet_fc_forward.11} parent=5 // pred_fallthru
      _
    %p149 = scmp.lt.s32.totalorder %s10, 2
    // Predicated region
    $region25: #{alexnet_fc_forward.11} parent=5 // pred_check
      %p150 = pneg %p149
    $region26: #{alexnet_fc_forward.11} parent=5 // pred_check_branch
      %152 = sbr.rel (%p150) target = $region28
    $region27: #{alexnet_fc_forward.11} parent=5 // pred_region
      // Predicated region
      $region29: #{alexnet_fc_forward.11} parent=27 // pred_check
        %p153 = pneg %p30
      $region30: #{alexnet_fc_forward.11} parent=27 // pred_check_branch
        %155 = sbr.rel (%p153) target = $region32
      $region31: #{alexnet_fc_forward.11} parent=27 // pred_region
        %s156 = smul.u32 16, %s10
        %p157 = scmp.lt.s32.totalorder %s156, 31
        %s158 = scalar_select %p157, %s156, 31
        %s159 = smul.addr %s158, 7
        %s160 = smul.addr %s159, 4
        %s161 = scalar_lea.vmem %s0, %s160
        %s162 = smul.u32 16, %s10
      $region32: #{alexnet_fc_forward.11} parent=27 // pred_fallthru
        _
    $region28: #{alexnet_fc_forward.11} parent=5 // pred_fallthru
      _
    %p163 = scmp.le.s32.totalorder 1, %s10
    %p164 = scmp.lt.s32.totalorder %s10, 3
    %p165 = pnand %p163, %p164
    %p166 = pneg %p165
    // Predicated region
    $region33: #{alexnet_fc_forward.11} parent=5 // pred_check
      _
    $region34: #{alexnet_fc_forward.11} parent=5 // pred_check_branch
      %168 = sbr.rel (%p165) target = $region36
    $region35: #{alexnet_fc_forward.11} parent=5 // pred_region
      %s169 = ssub.s32 %s10, 1
      %s170 = smul.u32 16, %s15
      %p171 = scmp.lt.s32.totalorder %s170, 31
      %s172 = scalar_select %p171, %s170, 31
      %s173 = smul.addr %s172, 7
      %s174 = smul.addr %s173, 4
      %s175 = scalar_lea.vmem %s0, %s174
      %p176 = pneg %p36
      %p177 = pneg %p33
      %p178 = pneg %p57
      %p179 = pneg %p54
      %p180 = pneg %p78
      %p181 = pneg %p75
      %p182 = pneg %p99
      %p183 = pneg %p96
      %p184 = pneg %p125
      %p185 = pneg %p122
      %s186 = smul.u32 16, %s15
      %p187 = scmp.lt.s32.totalorder %s186, 31
      %s188 = scalar_select %p187, %s186, 31
      %s189 = smul.addr %s188, 8
      %s190 = scalar_lea.vmem %s4, %s189
      %s191 = smul.u32 16, %s15
      %p192 = scmp.lt.s32.totalorder %s191, 31
      %s193 = scalar_select %p192, %s191, 31
      %s194 = smul.addr %s193, 7
      %s195 = smul.addr %s194, 4
      %s196 = scalar_lea.vmem %s0, %s195
      %s197 = smul.u32 16, %s15
      %s198 = smul.u32 16, %s15
      %p199 = scmp.lt.s32.totalorder %s198, 31
      %s200 = scalar_select %p199, %s198, 31
      %s201 = smul.addr %s200, 8
      %s202 = scalar_lea.vmem %s4, %s201
      %s203 = smul.u32 16, %s15
      %v205 = vld [vmem:[%s196] sm:$0xff]
      %v206 = vld [vmem:[%s196 + $0x8] sm:$0xff]
      %v207 = vld [vmem:[%s196 + $0x10] sm:$0xff]
      %v208 = vld [vmem:[%s196 + $0x18] sm:$0xf]
      %v209 = vld [vmem:[%s196 + $0x1c] sm:$0xff]
      %v210 = vld [vmem:[%s196 + $0x24] sm:$0xff]
      %v211 = vld [vmem:[%s196 + $0x2c] sm:$0xff]
      %v212 = vld [vmem:[%s196 + $0x34] sm:$0xf]
      %v213 = vld [vmem:[%s196 + $0x38] sm:$0xff]
      %v214 = vld [vmem:[%s196 + $0x40] sm:$0xff]
      %v215 = vld [vmem:[%s196 + $0x48] sm:$0xff]
      %v216 = vld [vmem:[%s196 + $0x50] sm:$0xf]
      %v217 = vld [vmem:[%s196 + $0x54] sm:$0xff]
      %v218 = vld [vmem:[%s196 + $0x5c] sm:$0xff]
      %v219 = vld [vmem:[%s196 + $0x64] sm:$0xff]
      %v220 = vld [vmem:[%s196 + $0x6c] sm:$0xf]
      %v221 = vld [vmem:[%s196 + $0x70] sm:$0xff]
      %v222 = vld [vmem:[%s196 + $0x78] sm:$0xff]
      %v223 = vld [vmem:[%s196 + $0x80] sm:$0xff]
      %v224 = vld [vmem:[%s196 + $0x88] sm:$0xf]
      %v225 = vld [vmem:[%s196 + $0x8c] sm:$0xff]
      %v226 = vld [vmem:[%s196 + $0x94] sm:$0xff]
      %v227 = vld [vmem:[%s196 + $0x9c] sm:$0xff]
      %v228 = vld [vmem:[%s196 + $0xa4] sm:$0xf]
      %v229 = vld [vmem:[%s196 + $0xa8] sm:$0xff]
      %v230 = vld [vmem:[%s196 + $0xb0] sm:$0xff]
      %v231 = vld [vmem:[%s196 + $0xb8] sm:$0xff]
      %v232 = vld [vmem:[%s196 + $0xc0] sm:$0xf]
      %v233 = vld [vmem:[%s196 + $0xc4] sm:$0xff]
      %v234 = vld [vmem:[%s196 + $0xcc] sm:$0xff]
      %v235 = vld [vmem:[%s196 + $0xd4] sm:$0xff]
      %v236 = vld [vmem:[%s196 + $0xdc] sm:$0xf]
      %v237 = vld [vmem:[%s196 + $0xe0] sm:$0xff]
      %v238 = vld [vmem:[%s196 + $0xe8] sm:$0xff]
      %v239 = vld [vmem:[%s196 + $0xf0] sm:$0xff]
      %v240 = vld [vmem:[%s196 + $0xf8] sm:$0xf]
      %v241 = vld [vmem:[%s196 + $0xfc] sm:$0xff]
      %v242 = vld [vmem:[%s196 + $0x104] sm:$0xff]
      %v243 = vld [vmem:[%s196 + $0x10c] sm:$0xff]
      %v244 = vld [vmem:[%s196 + $0x114] sm:$0xf]
      %v245 = vld [vmem:[%s196 + $0x118] sm:$0xff]
      %v246 = vld [vmem:[%s196 + $0x120] sm:$0xff]
      %v247 = vld [vmem:[%s196 + $0x128] sm:$0xff]
      %v248 = vld [vmem:[%s196 + $0x130] sm:$0xf]
      %v249 = vld [vmem:[%s196 + $0x134] sm:$0xff]
      %v250 = vld [vmem:[%s196 + $0x13c] sm:$0xff]
      %v251 = vld [vmem:[%s196 + $0x144] sm:$0xff]
      %v252 = vld [vmem:[%s196 + $0x14c] sm:$0xf]
      %v253 = vld [vmem:[%s196 + $0x150] sm:$0xff]
      %v254 = vld [vmem:[%s196 + $0x158] sm:$0xff]
      %v255 = vld [vmem:[%s196 + $0x160] sm:$0xff]
      %v256 = vld [vmem:[%s196 + $0x168] sm:$0xf]
      %v257 = vld [vmem:[%s196 + $0x16c] sm:$0xff]
      %v258 = vld [vmem:[%s196 + $0x174] sm:$0xff]
      %v259 = vld [vmem:[%s196 + $0x17c] sm:$0xff]
      %v260 = vld [vmem:[%s196 + $0x184] sm:$0xf]
      %v261 = vld [vmem:[%s196 + $0x188] sm:$0xff]
      %v262 = vld [vmem:[%s196 + $0x190] sm:$0xff]
      %v263 = vld [vmem:[%s196 + $0x198] sm:$0xff]
      %v264 = vld [vmem:[%s196 + $0x1a0] sm:$0xf]
      %v265 = vld [vmem:[%s196 + $0x1a4] sm:$0xff]
      %v266 = vld [vmem:[%s196 + $0x1ac] sm:$0xff]
      %v267 = vld [vmem:[%s196 + $0x1b4] sm:$0xff]
      %v268 = vld [vmem:[%s196 + $0x1bc] sm:$0xf]
      %v269 = vld [vmem:[%s1] sm:$0xf]
      %v270 = vld [vmem:[%s1 + $0x4] sm:$0xf]
      %v271 = vld [vmem:[%s1 + $0x8] sm:$0xf]
      %v272 = vld [vmem:[%s1 + $0xc] sm:$0xf]
      %v273 = vld [vmem:[%s1 + $0x10] sm:$0xf]
      %v274 = vld [vmem:[%s1 + $0x14] sm:$0xf]
      %v275 = vld [vmem:[%s1 + $0x18] sm:$0xf]
      %v276 = vld [vmem:[%s1 + $0x1c] sm:$0xf]
      %v277 = vld [vmem:[%s1 + $0x20] sm:$0xf]
      %v278 = vld [vmem:[%s1 + $0x24] sm:$0xf]
      %v279 = vld [vmem:[%s1 + $0x28] sm:$0xf]
      %v280 = vld [vmem:[%s1 + $0x2c] sm:$0xf]
      %v281 = vld [vmem:[%s1 + $0x30] sm:$0xf]
      %v282 = vld [vmem:[%s1 + $0x34] sm:$0xf]
      %v283 = vld [vmem:[%s1 + $0x38] sm:$0xf]
      %v284 = vld [vmem:[%s1 + $0x3c] sm:$0xf]
      %v285 = vld [vmem:[%s1 + $0x40] sm:$0xf]
      %v286 = vld [vmem:[%s1 + $0x44] sm:$0xf]
      %v287 = vld [vmem:[%s1 + $0x48] sm:$0xf]
      %v288 = vld [vmem:[%s1 + $0x4c] sm:$0xf]
      %v289 = vld [vmem:[%s1 + $0x50] sm:$0xf]
      %v290 = vld [vmem:[%s1 + $0x54] sm:$0xf]
      %v291 = vld [vmem:[%s1 + $0x58] sm:$0xf]
      %v292 = vld [vmem:[%s1 + $0x5c] sm:$0xf]
      %v293 = vld [vmem:[%s1 + $0x60] sm:$0xf]
      %v294 = vld [vmem:[%s1 + $0x64] sm:$0xf]
      %v295 = vld [vmem:[%s1 + $0x68] sm:$0xf]
      %v296 = vld [vmem:[%s1 + $0x6c] sm:$0xf]
      %v297 = vld [vmem:[%s1 + $0x70] sm:$0xf]
      %v298 = vld [vmem:[%s1 + $0x74] sm:$0xf]
      %v299 = vld [vmem:[%s1 + $0x78] sm:$0xf]
      %v300 = vld [vmem:[%s1 + $0x7c] sm:$0xf]
      %v301 = vld [vmem:[%s1 + $0x80] sm:$0xf]
      %v302 = vld [vmem:[%s1 + $0x84] sm:$0xf]
      %v303 = vld [vmem:[%s1 + $0x88] sm:$0xf]
      %v304 = vld [vmem:[%s1 + $0x8c] sm:$0xf]
      %v305 = vld [vmem:[%s1 + $0x90] sm:$0xf]
      %v306 = vld [vmem:[%s1 + $0x94] sm:$0xf]
      %v307 = vld [vmem:[%s1 + $0x98] sm:$0xf]
      %v308 = vld [vmem:[%s1 + $0x9c] sm:$0xf]
      %v309 = vld [vmem:[%s1 + $0xa0] sm:$0xf]
      %v310 = vld [vmem:[%s1 + $0xa4] sm:$0xf]
      %v311 = vld [vmem:[%s1 + $0xa8] sm:$0xf]
      %v312 = vld [vmem:[%s1 + $0xac] sm:$0xf]
      %v313 = vld [vmem:[%s1 + $0xb0] sm:$0xf]
      %v314 = vld [vmem:[%s1 + $0xb4] sm:$0xf]
      %v315 = vld [vmem:[%s1 + $0xb8] sm:$0xf]
      %v316 = vld [vmem:[%s1 + $0xbc] sm:$0xf]
      %v317 = vld [vmem:[%s1 + $0xc0] sm:$0xf]
      %v318 = vld [vmem:[%s1 + $0xc4] sm:$0xf]
      %v319 = vld [vmem:[%s1 + $0xc8] sm:$0xf]
      %v320 = vld [vmem:[%s1 + $0xcc] sm:$0xf]
      %v321 = vld [vmem:[%s1 + $0xd0] sm:$0xf]
      %v322 = vld [vmem:[%s1 + $0xd4] sm:$0xf]
      %v323 = vld [vmem:[%s1 + $0xd8] sm:$0xf]
      %v324 = vld [vmem:[%s1 + $0xdc] sm:$0xf]
      %v325 = vld [vmem:[%s1 + $0xe0] sm:$0xf]
      %v326 = vld [vmem:[%s1 + $0xe4] sm:$0xf]
      %v327 = vld [vmem:[%s1 + $0xe8] sm:$0xf]
      %v328 = vld [vmem:[%s1 + $0xec] sm:$0xf]
      %v329 = vld [vmem:[%s1 + $0xf0] sm:$0xf]
      %v330 = vld [vmem:[%s1 + $0xf4] sm:$0xf]
      %v331 = vld [vmem:[%s1 + $0xf8] sm:$0xf]
      %v332 = vld [vmem:[%s1 + $0xfc] sm:$0xf]
      %v333 = vld [vmem:[%s1 + $0x100] sm:$0xf]
      %v334 = vld [vmem:[%s1 + $0x104] sm:$0xf]
      %v335 = vld [vmem:[%s1 + $0x108] sm:$0xf]
      %v336 = vld [vmem:[%s1 + $0x10c] sm:$0xf]
      %v337 = vld [vmem:[%s1 + $0x110] sm:$0xf]
      %v338 = vld [vmem:[%s1 + $0x114] sm:$0xf]
      %v339 = vld [vmem:[%s1 + $0x118] sm:$0xf]
      %v340 = vld [vmem:[%s1 + $0x11c] sm:$0xf]
      %v341 = vld [vmem:[%s1 + $0x120] sm:$0xf]
      %v342 = vld [vmem:[%s1 + $0x124] sm:$0xf]
      %v343 = vld [vmem:[%s1 + $0x128] sm:$0xf]
      %v344 = vld [vmem:[%s1 + $0x12c] sm:$0xf]
      %v345 = vld [vmem:[%s1 + $0x130] sm:$0xf]
      %v346 = vld [vmem:[%s1 + $0x134] sm:$0xf]
      %v347 = vld [vmem:[%s1 + $0x138] sm:$0xf]
      %v348 = vld [vmem:[%s1 + $0x13c] sm:$0xf]
      %v349 = vld [vmem:[%s1 + $0x140] sm:$0xf]
      %v350 = vld [vmem:[%s1 + $0x144] sm:$0xf]
      %v351 = vld [vmem:[%s1 + $0x148] sm:$0xf]
      %v352 = vld [vmem:[%s1 + $0x14c] sm:$0xf]
      %v353 = vld [vmem:[%s1 + $0x150] sm:$0xf]
      %v354 = vld [vmem:[%s1 + $0x154] sm:$0xf]
      %v355 = vld [vmem:[%s1 + $0x158] sm:$0xf]
      %v356 = vld [vmem:[%s1 + $0x15c] sm:$0xf]
      %v357 = vld [vmem:[%s1 + $0x160] sm:$0xf]
      %v358 = vld [vmem:[%s1 + $0x164] sm:$0xf]
      %v359 = vld [vmem:[%s1 + $0x168] sm:$0xf]
      %v360 = vld [vmem:[%s1 + $0x16c] sm:$0xf]
      %v361 = vld [vmem:[%s1 + $0x170] sm:$0xf]
      %v362 = vld [vmem:[%s1 + $0x174] sm:$0xf]
      %v363 = vld [vmem:[%s1 + $0x178] sm:$0xf]
      %v364 = vld [vmem:[%s1 + $0x17c] sm:$0xf]
      %v365 = vld [vmem:[%s1 + $0x180] sm:$0xf]
      %v366 = vld [vmem:[%s1 + $0x184] sm:$0xf]
      %v367 = vld [vmem:[%s1 + $0x188] sm:$0xf]
      %v368 = vld [vmem:[%s1 + $0x18c] sm:$0xf]
      %v369 = vld [vmem:[%s2] sm:$0x1]
      %v371 = vlaneseq
      %v372 = vshrl.u32 %v371, 7
      %v373 = vsub.s32 0, %v372
      %v374 = vrot.slane %v369, %v373
      %v440 = vunpack.c.l.b16 %v205
      %v441 = vunpack.c.h.b16 %v205
      %v442 = vunpack.c.l.b16 %v206
      %v443 = vunpack.c.h.b16 %v206
      %v444 = vunpack.c.l.b16 %v207
      %v445 = vunpack.c.h.b16 %v207
      %v446 = vunpack.c.l.b16 %v208
      %v447 = vunpack.c.l.b16 %v209
      %v448 = vunpack.c.h.b16 %v209
      %v449 = vunpack.c.l.b16 %v210
      %v450 = vunpack.c.h.b16 %v210
      %v451 = vunpack.c.l.b16 %v211
      %v452 = vunpack.c.h.b16 %v211
      %v453 = vunpack.c.l.b16 %v212
      %v454 = vunpack.c.l.b16 %v213
      %v455 = vunpack.c.h.b16 %v213
      %v456 = vunpack.c.l.b16 %v214
      %v457 = vunpack.c.h.b16 %v214
      %v458 = vunpack.c.l.b16 %v215
      %v459 = vunpack.c.h.b16 %v215
      %v460 = vunpack.c.l.b16 %v216
      %v461 = vunpack.c.l.b16 %v217
      %v462 = vunpack.c.h.b16 %v217
      %v463 = vunpack.c.l.b16 %v218
      %v464 = vunpack.c.h.b16 %v218
      %v465 = vunpack.c.l.b16 %v219
      %v466 = vunpack.c.h.b16 %v219
      %v467 = vunpack.c.l.b16 %v220
      %v468 = vunpack.c.l.b16 %v221
      %v469 = vunpack.c.h.b16 %v221
      %v470 = vunpack.c.l.b16 %v222
      %v471 = vunpack.c.h.b16 %v222
      %v472 = vunpack.c.l.b16 %v223
      %v473 = vunpack.c.h.b16 %v223
      %v474 = vunpack.c.l.b16 %v224
      %v475 = vunpack.c.l.b16 %v225
      %v476 = vunpack.c.h.b16 %v225
      %v477 = vunpack.c.l.b16 %v226
      %v478 = vunpack.c.h.b16 %v226
      %v479 = vunpack.c.l.b16 %v227
      %v480 = vunpack.c.h.b16 %v227
      %v481 = vunpack.c.l.b16 %v228
      %v482 = vunpack.c.l.b16 %v229
      %v483 = vunpack.c.h.b16 %v229
      %v484 = vunpack.c.l.b16 %v230
      %v485 = vunpack.c.h.b16 %v230
      %v486 = vunpack.c.l.b16 %v231
      %v487 = vunpack.c.h.b16 %v231
      %v488 = vunpack.c.l.b16 %v232
      %v489 = vunpack.c.l.b16 %v233
      %v490 = vunpack.c.h.b16 %v233
      %v491 = vunpack.c.l.b16 %v234
      %v492 = vunpack.c.h.b16 %v234
      %v493 = vunpack.c.l.b16 %v235
      %v494 = vunpack.c.h.b16 %v235
      %v495 = vunpack.c.l.b16 %v236
      %v496 = vunpack.c.l.b16 %v237
      %v497 = vunpack.c.h.b16 %v237
      %v498 = vunpack.c.l.b16 %v238
      %v499 = vunpack.c.h.b16 %v238
      %v500 = vunpack.c.l.b16 %v239
      %v501 = vunpack.c.h.b16 %v239
      %v502 = vunpack.c.l.b16 %v240
      %v503 = vunpack.c.l.b16 %v241
      %v504 = vunpack.c.h.b16 %v241
      %v505 = vunpack.c.l.b16 %v242
      %v506 = vunpack.c.h.b16 %v242
      %v507 = vunpack.c.l.b16 %v243
      %v508 = vunpack.c.h.b16 %v243
      %v509 = vunpack.c.l.b16 %v244
      %v510 = vunpack.c.l.b16 %v245
      %v511 = vunpack.c.h.b16 %v245
      %v512 = vunpack.c.l.b16 %v246
      %v513 = vunpack.c.h.b16 %v246
      %v514 = vunpack.c.l.b16 %v247
      %v515 = vunpack.c.h.b16 %v247
      %v516 = vunpack.c.l.b16 %v248
      %v517 = vunpack.c.l.b16 %v249
      %v518 = vunpack.c.h.b16 %v249
      %v519 = vunpack.c.l.b16 %v250
      %v520 = vunpack.c.h.b16 %v250
      %v521 = vunpack.c.l.b16 %v251
      %v522 = vunpack.c.h.b16 %v251
      %v523 = vunpack.c.l.b16 %v252
      %v524 = vunpack.c.l.b16 %v253
      %v525 = vunpack.c.h.b16 %v253
      %v526 = vunpack.c.l.b16 %v254
      %v527 = vunpack.c.h.b16 %v254
      %v528 = vunpack.c.l.b16 %v255
      %v529 = vunpack.c.h.b16 %v255
      %v530 = vunpack.c.l.b16 %v256
      %v531 = vunpack.c.l.b16 %v257
      %v532 = vunpack.c.h.b16 %v257
      %v533 = vunpack.c.l.b16 %v258
      %v534 = vunpack.c.h.b16 %v258
      %v535 = vunpack.c.l.b16 %v259
      %v536 = vunpack.c.h.b16 %v259
      %v537 = vunpack.c.l.b16 %v260
      %v538 = vunpack.c.l.b16 %v261
      %v539 = vunpack.c.h.b16 %v261
      %v540 = vunpack.c.l.b16 %v262
      %v541 = vunpack.c.h.b16 %v262
      %v542 = vunpack.c.l.b16 %v263
      %v543 = vunpack.c.h.b16 %v263
      %v544 = vunpack.c.l.b16 %v264
      %v545 = vunpack.c.l.b16 %v265
      %v546 = vunpack.c.h.b16 %v265
      %v547 = vunpack.c.l.b16 %v266
      %v548 = vunpack.c.h.b16 %v266
      %v549 = vunpack.c.l.b16 %v267
      %v550 = vunpack.c.h.b16 %v267
      %v551 = vunpack.c.l.b16 %v268
      %v552 = vpack.c.b16 %v447, %v440
      %v553 = vpack.c.b16 %v448, %v441
      %v554 = vpack.c.b16 %v449, %v442
      %v555 = vpack.c.b16 %v450, %v443
      %v556 = vpack.c.b16 %v451, %v444
      %v557 = vpack.c.b16 %v452, %v445
      %v558 = vpack.c.b16 %v453, %v446
      %v559 = vpack.c.b16 %v461, %v454
      %v560 = vpack.c.b16 %v462, %v455
      %v561 = vpack.c.b16 %v463, %v456
      %v562 = vpack.c.b16 %v464, %v457
      %v563 = vpack.c.b16 %v465, %v458
      %v564 = vpack.c.b16 %v466, %v459
      %v565 = vpack.c.b16 %v467, %v460
      %v566 = vpack.c.b16 %v475, %v468
      %v567 = vpack.c.b16 %v476, %v469
      %v568 = vpack.c.b16 %v477, %v470
      %v569 = vpack.c.b16 %v478, %v471
      %v570 = vpack.c.b16 %v479, %v472
      %v571 = vpack.c.b16 %v480, %v473
      %v572 = vpack.c.b16 %v481, %v474
      %v573 = vpack.c.b16 %v489, %v482
      %v574 = vpack.c.b16 %v490, %v483
      %v575 = vpack.c.b16 %v491, %v484
      %v576 = vpack.c.b16 %v492, %v485
      %v577 = vpack.c.b16 %v493, %v486
      %v578 = vpack.c.b16 %v494, %v487
      %v579 = vpack.c.b16 %v495, %v488
      %v580 = vpack.c.b16 %v503, %v496
      %v581 = vpack.c.b16 %v504, %v497
      %v582 = vpack.c.b16 %v505, %v498
      %v583 = vpack.c.b16 %v506, %v499
      %v584 = vpack.c.b16 %v507, %v500
      %v585 = vpack.c.b16 %v508, %v501
      %v586 = vpack.c.b16 %v509, %v502
      %v587 = vpack.c.b16 %v517, %v510
      %v588 = vpack.c.b16 %v518, %v511
      %v589 = vpack.c.b16 %v519, %v512
      %v590 = vpack.c.b16 %v520, %v513
      %v591 = vpack.c.b16 %v521, %v514
      %v592 = vpack.c.b16 %v522, %v515
      %v593 = vpack.c.b16 %v523, %v516
      %v594 = vpack.c.b16 %v531, %v524
      %v595 = vpack.c.b16 %v532, %v525
      %v596 = vpack.c.b16 %v533, %v526
      %v597 = vpack.c.b16 %v534, %v527
      %v598 = vpack.c.b16 %v535, %v528
      %v599 = vpack.c.b16 %v536, %v529
      %v600 = vpack.c.b16 %v537, %v530
      %v601 = vpack.c.b16 %v545, %v538
      %v602 = vpack.c.b16 %v546, %v539
      %v603 = vpack.c.b16 %v547, %v540
      %v604 = vpack.c.b16 %v548, %v541
      %v605 = vpack.c.b16 %v549, %v542
      %v606 = vpack.c.b16 %v550, %v543
      %v607 = vpack.c.b16 %v551, %v544
      %v756 = vunpack.c.l.b16 %v269
      %v757 = vunpack.c.l.b16 %v270
      %v758 = vunpack.c.l.b16 %v271
      %v759 = vunpack.c.l.b16 %v272
      %v760 = vunpack.c.l.b16 %v273
      %v761 = vunpack.c.l.b16 %v274
      %v762 = vunpack.c.l.b16 %v275
      %v763 = vunpack.c.l.b16 %v276
      %v764 = vunpack.c.l.b16 %v277
      %v765 = vunpack.c.l.b16 %v278
      %v766 = vunpack.c.l.b16 %v279
      %v767 = vunpack.c.l.b16 %v280
      %v768 = vunpack.c.l.b16 %v281
      %v769 = vunpack.c.l.b16 %v282
      %v770 = vunpack.c.l.b16 %v283
      %v771 = vunpack.c.l.b16 %v284
      %v772 = vunpack.c.l.b16 %v285
      %v773 = vunpack.c.l.b16 %v286
      %v774 = vunpack.c.l.b16 %v287
      %v775 = vunpack.c.l.b16 %v288
      %v776 = vunpack.c.l.b16 %v289
      %v777 = vunpack.c.l.b16 %v290
      %v778 = vunpack.c.l.b16 %v291
      %v779 = vunpack.c.l.b16 %v292
      %v780 = vunpack.c.l.b16 %v293
      %v781 = vunpack.c.l.b16 %v294
      %v782 = vunpack.c.l.b16 %v295
      %v783 = vunpack.c.l.b16 %v296
      %v784 = vunpack.c.l.b16 %v297
      %v785 = vunpack.c.l.b16 %v298
      %v786 = vunpack.c.l.b16 %v299
      %v787 = vunpack.c.l.b16 %v300
      %v788 = vunpack.c.l.b16 %v301
      %v789 = vunpack.c.l.b16 %v302
      %v790 = vunpack.c.l.b16 %v303
      %v791 = vunpack.c.l.b16 %v304
      %v792 = vunpack.c.l.b16 %v305
      %v793 = vunpack.c.l.b16 %v306
      %v794 = vunpack.c.l.b16 %v307
      %v795 = vunpack.c.l.b16 %v308
      %v796 = vunpack.c.l.b16 %v309
      %v797 = vunpack.c.l.b16 %v310
      %v798 = vunpack.c.l.b16 %v311
      %v799 = vunpack.c.l.b16 %v312
      %v800 = vunpack.c.l.b16 %v313
      %v801 = vunpack.c.l.b16 %v314
      %v802 = vunpack.c.l.b16 %v315
      %v803 = vunpack.c.l.b16 %v316
      %v804 = vunpack.c.l.b16 %v317
      %v805 = vunpack.c.l.b16 %v318
      %v806 = vunpack.c.l.b16 %v319
      %v807 = vunpack.c.l.b16 %v320
      %v808 = vunpack.c.l.b16 %v321
      %v809 = vunpack.c.l.b16 %v322
      %v810 = vunpack.c.l.b16 %v323
      %v811 = vunpack.c.l.b16 %v324
      %v812 = vunpack.c.l.b16 %v325
      %v813 = vunpack.c.l.b16 %v326
      %v814 = vunpack.c.l.b16 %v327
      %v815 = vunpack.c.l.b16 %v328
      %v816 = vunpack.c.l.b16 %v329
      %v817 = vunpack.c.l.b16 %v330
      %v818 = vunpack.c.l.b16 %v331
      %v819 = vunpack.c.l.b16 %v332
      %v820 = vunpack.c.l.b16 %v333
      %v821 = vunpack.c.l.b16 %v334
      %v822 = vunpack.c.l.b16 %v335
      %v823 = vunpack.c.l.b16 %v336
      %v824 = vunpack.c.l.b16 %v337
      %v825 = vunpack.c.l.b16 %v338
      %v826 = vunpack.c.l.b16 %v339
      %v827 = vunpack.c.l.b16 %v340
      %v828 = vunpack.c.l.b16 %v341
      %v829 = vunpack.c.l.b16 %v342
      %v830 = vunpack.c.l.b16 %v343
      %v831 = vunpack.c.l.b16 %v344
      %v832 = vunpack.c.l.b16 %v345
      %v833 = vunpack.c.l.b16 %v346
      %v834 = vunpack.c.l.b16 %v347
      %v835 = vunpack.c.l.b16 %v348
      %v836 = vunpack.c.l.b16 %v349
      %v837 = vunpack.c.l.b16 %v350
      %v838 = vunpack.c.l.b16 %v351
      %v839 = vunpack.c.l.b16 %v352
      %v840 = vunpack.c.l.b16 %v353
      %v841 = vunpack.c.l.b16 %v354
      %v842 = vunpack.c.l.b16 %v355
      %v843 = vunpack.c.l.b16 %v356
      %v844 = vunpack.c.l.b16 %v357
      %v845 = vunpack.c.l.b16 %v358
      %v846 = vunpack.c.l.b16 %v359
      %v847 = vunpack.c.l.b16 %v360
      %v848 = vunpack.c.l.b16 %v361
      %v849 = vunpack.c.l.b16 %v362
      %v850 = vunpack.c.l.b16 %v363
      %v851 = vunpack.c.l.b16 %v364
      %v852 = vunpack.c.l.b16 %v365
      %v853 = vunpack.c.l.b16 %v366
      %v854 = vunpack.c.l.b16 %v367
      %v855 = vunpack.c.l.b16 %v368
      %v856 = vpack.c.b16 %v757, %v756
      %v857 = vpack.c.b16 %v759, %v758
      %v858 = vpack.c.b16 %v761, %v760
      %v859 = vpack.c.b16 %v763, %v762
      %v860 = vpack.c.b16 %v765, %v764
      %v861 = vpack.c.b16 %v767, %v766
      %v862 = vpack.c.b16 %v769, %v768
      %v863 = vpack.c.b16 %v771, %v770
      %v864 = vpack.c.b16 %v773, %v772
      %v865 = vpack.c.b16 %v775, %v774
      %v866 = vpack.c.b16 %v777, %v776
      %v867 = vpack.c.b16 %v779, %v778
      %v868 = vpack.c.b16 %v781, %v780
      %v869 = vpack.c.b16 %v783, %v782
      %v870 = vpack.c.b16 %v785, %v784
      %v871 = vpack.c.b16 %v787, %v786
      %v872 = vpack.c.b16 %v789, %v788
      %v873 = vpack.c.b16 %v791, %v790
      %v874 = vpack.c.b16 %v793, %v792
      %v875 = vpack.c.b16 %v795, %v794
      %v876 = vpack.c.b16 %v797, %v796
      %v877 = vpack.c.b16 %v799, %v798
      %v878 = vpack.c.b16 %v801, %v800
      %v879 = vpack.c.b16 %v803, %v802
      %v880 = vpack.c.b16 %v805, %v804
      %v881 = vpack.c.b16 %v807, %v806
      %v882 = vpack.c.b16 %v809, %v808
      %v883 = vpack.c.b16 %v811, %v810
      %v884 = vpack.c.b16 %v813, %v812
      %v885 = vpack.c.b16 %v815, %v814
      %v886 = vpack.c.b16 %v817, %v816
      %v887 = vpack.c.b16 %v819, %v818
      %v888 = vpack.c.b16 %v821, %v820
      %v889 = vpack.c.b16 %v823, %v822
      %v890 = vpack.c.b16 %v825, %v824
      %v891 = vpack.c.b16 %v827, %v826
      %v892 = vpack.c.b16 %v829, %v828
      %v893 = vpack.c.b16 %v831, %v830
      %v894 = vpack.c.b16 %v833, %v832
      %v895 = vpack.c.b16 %v835, %v834
      %v896 = vpack.c.b16 %v837, %v836
      %v897 = vpack.c.b16 %v839, %v838
      %v898 = vpack.c.b16 %v841, %v840
      %v899 = vpack.c.b16 %v843, %v842
      %v900 = vpack.c.b16 %v845, %v844
      %v901 = vpack.c.b16 %v847, %v846
      %v902 = vpack.c.b16 %v849, %v848
      %v903 = vpack.c.b16 %v851, %v850
      %v904 = vpack.c.b16 %v853, %v852
      %v905 = vpack.c.b16 %v855, %v854
      %vm956 = vcmask 261120
      %v958 = vsel %vm956, %v558, 0
      %v961 = vsel %vm956, %v565, 0
      %v964 = vsel %vm956, %v572, 0
      %v967 = vsel %vm956, %v579, 0
      %v970 = vsel %vm956, %v586, 0
      %v973 = vsel %vm956, %v593, 0
      %v976 = vsel %vm956, %v600, 0
      %v979 = vsel %vm956, %v607, 0
      %981 = vmatprep.subr.bf16.mxu0 0
      %982 = vmatpush1.bf16.msra.mxu0 %v863
      %983 = vmatprep.subr.bf16.mxu0 0
      %984 = vmatpush1.bf16.msra.mxu0 %v862
      %985 = vmatprep.subr.bf16.mxu0 0
      %986 = vmatpush1.bf16.msra.mxu0 %v861
      %987 = vmatprep.subr.bf16.mxu0 0
      %988 = vmatpush1.bf16.msra.mxu0 %v860
      %989 = vmatprep.subr.bf16.mxu0 0
      %990 = vmatpush1.bf16.msra.mxu0 %v859
      %991 = vmatprep.subr.bf16.mxu0 0
      %992 = vmatpush1.bf16.msra.mxu0 %v858
      %993 = vmatprep.subr.bf16.mxu0 0
      %994 = vmatpush1.bf16.msra.mxu0 %v857
      %995 = vmatprep.subr.bf16.mxu0 0
      %996 = vmatpush1.bf16.msra.mxu0 %v856
      %997 = vmatprep.subr.bf16.mxu0 0
      %998 = vmatpush2.bf16.msra.mxu0 %v871
      %999 = vmatprep.subr.bf16.mxu0 0
      %1000 = vmatpush2.bf16.msra.mxu0 %v870
      %1001 = vmatprep.subr.bf16.mxu0 0
      %1002 = vmatpush2.bf16.msra.mxu0 %v869
      %1003 = vmatprep.subr.bf16.mxu0 0
      %1004 = vmatpush2.bf16.msra.mxu0 %v868
      %1005 = vmatprep.subr.bf16.mxu0 0
      %1006 = vmatpush2.bf16.msra.mxu0 %v867
      %1007 = vmatprep.subr.bf16.mxu0 0
      %1008 = vmatpush2.bf16.msra.mxu0 %v866
      %1009 = vmatprep.subr.bf16.mxu0 0
      %1010 = vmatpush2.bf16.msra.mxu0 %v865
      %1011 = vmatprep.subr.bf16.mxu0 0
      %1012 = vmatpush2.bf16.msra.mxu0 %v864
      %1013 = vmatprep.mubr.bf16.mxu0 %v553
      %1014 = vmatmul.mubr.bf16.gmra.mxu0 %v552
      %v1015 = vpop.f32.mrf.mxu0
      %v1016 = vadd.f32 %v374, %v1015
      %v1017 = vpop.f32.mrf.mxu0
      %v1018 = vpop.f32.mrf.mxu0
      %v1019 = vadd.f32 %v374, %v1018
      %v1020 = vpop.f32.mrf.mxu0
      %1021 = vmatprep.mubr.bf16.mxu0 %v560
      %1022 = vmatmul.mubr.bf16.gmra.mxu0 %v559
      %v1023 = vpop.f32.mrf.mxu0
      %v1024 = vadd.f32 %v374, %v1023
      %v1025 = vpop.f32.mrf.mxu0
      %v1026 = vpop.f32.mrf.mxu0
      %v1027 = vadd.f32 %v374, %v1026
      %v1028 = vpop.f32.mrf.mxu0
      %1029 = vmatprep.mubr.bf16.mxu0 %v567
      %1030 = vmatmul.mubr.bf16.gmra.mxu0 %v566
      %v1031 = vpop.f32.mrf.mxu0
      %v1032 = vadd.f32 %v374, %v1031
      %v1033 = vpop.f32.mrf.mxu0
      %v1034 = vpop.f32.mrf.mxu0
      %v1035 = vadd.f32 %v374, %v1034
      %v1036 = vpop.f32.mrf.mxu0
      %1037 = vmatprep.mubr.bf16.mxu0 %v574
      %1038 = vmatmul.mubr.bf16.gmra.mxu0 %v573
      %v1039 = vpop.f32.mrf.mxu0
      %v1040 = vadd.f32 %v374, %v1039
      %v1041 = vpop.f32.mrf.mxu0
      %v1042 = vpop.f32.mrf.mxu0
      %v1043 = vadd.f32 %v374, %v1042
      %v1044 = vpop.f32.mrf.mxu0
      %1045 = vmatprep.mubr.bf16.mxu0 %v581
      %1046 = vmatmul.mubr.bf16.gmra.mxu0 %v580
      %v1047 = vpop.f32.mrf.mxu0
      %v1048 = vadd.f32 %v374, %v1047
      %v1049 = vpop.f32.mrf.mxu0
      %v1050 = vpop.f32.mrf.mxu0
      %v1051 = vadd.f32 %v374, %v1050
      %v1052 = vpop.f32.mrf.mxu0
      %1053 = vmatprep.mubr.bf16.mxu0 %v588
      %1054 = vmatmul.mubr.bf16.gmra.mxu0 %v587
      %v1055 = vpop.f32.mrf.mxu0
      %v1056 = vadd.f32 %v374, %v1055
      %v1057 = vpop.f32.mrf.mxu0
      %v1058 = vpop.f32.mrf.mxu0
      %v1059 = vadd.f32 %v374, %v1058
      %v1060 = vpop.f32.mrf.mxu0
      %1061 = vmatprep.mubr.bf16.mxu0 %v595
      %1062 = vmatmul.mubr.bf16.gmra.mxu0 %v594
      %v1063 = vpop.f32.mrf.mxu0
      %v1064 = vadd.f32 %v374, %v1063
      %v1065 = vpop.f32.mrf.mxu0
      %v1066 = vpop.f32.mrf.mxu0
      %v1067 = vadd.f32 %v374, %v1066
      %v1068 = vpop.f32.mrf.mxu0
      %1069 = vmatprep.mubr.bf16.mxu0 %v602
      %1070 = vmatmul.mubr.bf16.gmra.mxu0 %v601
      %v1071 = vpop.f32.mrf.mxu0
      %v1072 = vadd.f32 %v374, %v1071
      %v1073 = vpop.f32.mrf.mxu0
      %v1074 = vpop.f32.mrf.mxu0
      %v1075 = vadd.f32 %v374, %v1074
      %v1076 = vpop.f32.mrf.mxu0
      %1077 = vdwg.mxu0
      %1078 = vmatprep.subr.bf16.mxu0 0
      %1079 = vmatpush1.bf16.msra.mxu0 %v879
      %1080 = vmatprep.subr.bf16.mxu0 0
      %1081 = vmatpush1.bf16.msra.mxu0 %v878
      %1082 = vmatprep.subr.bf16.mxu0 0
      %1083 = vmatpush1.bf16.msra.mxu0 %v877
      %1084 = vmatprep.subr.bf16.mxu0 0
      %1085 = vmatpush1.bf16.msra.mxu0 %v876
      %1086 = vmatprep.subr.bf16.mxu0 0
      %1087 = vmatpush1.bf16.msra.mxu0 %v875
      %1088 = vmatprep.subr.bf16.mxu0 0
      %1089 = vmatpush1.bf16.msra.mxu0 %v874
      %1090 = vmatprep.subr.bf16.mxu0 0
      %1091 = vmatpush1.bf16.msra.mxu0 %v873
      %1092 = vmatprep.subr.bf16.mxu0 0
      %1093 = vmatpush1.bf16.msra.mxu0 %v872
      %1094 = vmatprep.subr.bf16.mxu0 0
      %1095 = vmatpush2.bf16.msra.mxu0 %v887
      %1096 = vmatprep.subr.bf16.mxu0 0
      %1097 = vmatpush2.bf16.msra.mxu0 %v886
      %1098 = vmatprep.subr.bf16.mxu0 0
      %1099 = vmatpush2.bf16.msra.mxu0 %v885
      %1100 = vmatprep.subr.bf16.mxu0 0
      %1101 = vmatpush2.bf16.msra.mxu0 %v884
      %1102 = vmatprep.subr.bf16.mxu0 0
      %1103 = vmatpush2.bf16.msra.mxu0 %v883
      %1104 = vmatprep.subr.bf16.mxu0 0
      %1105 = vmatpush2.bf16.msra.mxu0 %v882
      %1106 = vmatprep.subr.bf16.mxu0 0
      %1107 = vmatpush2.bf16.msra.mxu0 %v881
      %1108 = vmatprep.subr.bf16.mxu0 0
      %1109 = vmatpush2.bf16.msra.mxu0 %v880
      %1110 = vmatprep.mubr.bf16.mxu0 %v555
      %1111 = vmatmul.mubr.bf16.gmra.mxu0 %v554
      %v1112 = vpop.f32.mrf.mxu0
      %v1113 = vadd.f32 %v1016, %v1112
      %v1114 = vpop.f32.mrf.mxu0
      %v1115 = vpop.f32.mrf.mxu0
      %v1116 = vadd.f32 %v1019, %v1115
      %v1117 = vpop.f32.mrf.mxu0
      %1118 = vmatprep.mubr.bf16.mxu0 %v562
      %1119 = vmatmul.mubr.bf16.gmra.mxu0 %v561
      %v1120 = vpop.f32.mrf.mxu0
      %v1121 = vadd.f32 %v1024, %v1120
      %v1122 = vpop.f32.mrf.mxu0
      %v1123 = vpop.f32.mrf.mxu0
      %v1124 = vadd.f32 %v1027, %v1123
      %v1125 = vpop.f32.mrf.mxu0
      %1126 = vmatprep.mubr.bf16.mxu0 %v569
      %1127 = vmatmul.mubr.bf16.gmra.mxu0 %v568
      %v1128 = vpop.f32.mrf.mxu0
      %v1129 = vadd.f32 %v1032, %v1128
      %v1130 = vpop.f32.mrf.mxu0
      %v1131 = vpop.f32.mrf.mxu0
      %v1132 = vadd.f32 %v1035, %v1131
      %v1133 = vpop.f32.mrf.mxu0
      %1134 = vmatprep.mubr.bf16.mxu0 %v576
      %1135 = vmatmul.mubr.bf16.gmra.mxu0 %v575
      %v1136 = vpop.f32.mrf.mxu0
      %v1137 = vadd.f32 %v1040, %v1136
      %v1138 = vpop.f32.mrf.mxu0
      %v1139 = vpop.f32.mrf.mxu0
      %v1140 = vadd.f32 %v1043, %v1139
      %v1141 = vpop.f32.mrf.mxu0
      %1142 = vmatprep.mubr.bf16.mxu0 %v583
      %1143 = vmatmul.mubr.bf16.gmra.mxu0 %v582
      %v1144 = vpop.f32.mrf.mxu0
      %v1145 = vadd.f32 %v1048, %v1144
      %v1146 = vpop.f32.mrf.mxu0
      %v1147 = vpop.f32.mrf.mxu0
      %v1148 = vadd.f32 %v1051, %v1147
      %v1149 = vpop.f32.mrf.mxu0
      %1150 = vmatprep.mubr.bf16.mxu0 %v590
      %1151 = vmatmul.mubr.bf16.gmra.mxu0 %v589
      %v1152 = vpop.f32.mrf.mxu0
      %v1153 = vadd.f32 %v1056, %v1152
      %v1154 = vpop.f32.mrf.mxu0
      %v1155 = vpop.f32.mrf.mxu0
      %v1156 = vadd.f32 %v1059, %v1155
      %v1157 = vpop.f32.mrf.mxu0
      %1158 = vmatprep.mubr.bf16.mxu0 %v597
      %1159 = vmatmul.mubr.bf16.gmra.mxu0 %v596
      %v1160 = vpop.f32.mrf.mxu0
      %v1161 = vadd.f32 %v1064, %v1160
      %v1162 = vpop.f32.mrf.mxu0
      %v1163 = vpop.f32.mrf.mxu0
      %v1164 = vadd.f32 %v1067, %v1163
      %v1165 = vpop.f32.mrf.mxu0
      %1166 = vmatprep.mubr.bf16.mxu0 %v604
      %1167 = vmatmul.mubr.bf16.gmra.mxu0 %v603
      %v1168 = vpop.f32.mrf.mxu0
      %v1169 = vadd.f32 %v1072, %v1168
      %v1170 = vpop.f32.mrf.mxu0
      %v1171 = vpop.f32.mrf.mxu0
      %v1172 = vadd.f32 %v1075, %v1171
      %v1173 = vpop.f32.mrf.mxu0
      %1174 = vdwg.mxu0
      %1175 = vmatprep.subr.bf16.mxu0 0
      %1176 = vmatpush1.bf16.msra.mxu0 %v895
      %1177 = vmatprep.subr.bf16.mxu0 0
      %1178 = vmatpush1.bf16.msra.mxu0 %v894
      %1179 = vmatprep.subr.bf16.mxu0 0
      %1180 = vmatpush1.bf16.msra.mxu0 %v893
      %1181 = vmatprep.subr.bf16.mxu0 0
      %1182 = vmatpush1.bf16.msra.mxu0 %v892
      %1183 = vmatprep.subr.bf16.mxu0 0
      %1184 = vmatpush1.bf16.msra.mxu0 %v891
      %1185 = vmatprep.subr.bf16.mxu0 0
      %1186 = vmatpush1.bf16.msra.mxu0 %v890
      %1187 = vmatprep.subr.bf16.mxu0 0
      %1188 = vmatpush1.bf16.msra.mxu0 %v889
      %1189 = vmatprep.subr.bf16.mxu0 0
      %1190 = vmatpush1.bf16.msra.mxu0 %v888
      %1191 = vmatprep.subr.bf16.mxu0 0
      %1192 = vmatpush2.bf16.msra.mxu0 %v903
      %1193 = vmatprep.subr.bf16.mxu0 0
      %1194 = vmatpush2.bf16.msra.mxu0 %v902
      %1195 = vmatprep.subr.bf16.mxu0 0
      %1196 = vmatpush2.bf16.msra.mxu0 %v901
      %1197 = vmatprep.subr.bf16.mxu0 0
      %1198 = vmatpush2.bf16.msra.mxu0 %v900
      %1199 = vmatprep.subr.bf16.mxu0 0
      %1200 = vmatpush2.bf16.msra.mxu0 %v899
      %1201 = vmatprep.subr.bf16.mxu0 0
      %1202 = vmatpush2.bf16.msra.mxu0 %v898
      %1203 = vmatprep.subr.bf16.mxu0 0
      %1204 = vmatpush2.bf16.msra.mxu0 %v897
      %1205 = vmatprep.subr.bf16.mxu0 0
      %1206 = vmatpush2.bf16.msra.mxu0 %v896
      %1207 = vmatprep.mubr.bf16.mxu0 %v557
      %1208 = vmatmul.mubr.bf16.gmra.mxu0 %v556
      %v1209 = vpop.f32.mrf.mxu0
      %v1210 = vadd.f32 %v1113, %v1209
      %v1211 = vpop.f32.mrf.mxu0
      %v1212 = vpop.f32.mrf.mxu0
      %v1213 = vadd.f32 %v1116, %v1212
      %v1214 = vpop.f32.mrf.mxu0
      %1215 = vmatprep.mubr.bf16.mxu0 %v564
      %1216 = vmatmul.mubr.bf16.gmra.mxu0 %v563
      %v1217 = vpop.f32.mrf.mxu0
      %v1218 = vadd.f32 %v1121, %v1217
      %v1219 = vpop.f32.mrf.mxu0
      %v1220 = vpop.f32.mrf.mxu0
      %v1221 = vadd.f32 %v1124, %v1220
      %v1222 = vpop.f32.mrf.mxu0
      %1223 = vmatprep.mubr.bf16.mxu0 %v571
      %1224 = vmatmul.mubr.bf16.gmra.mxu0 %v570
      %v1225 = vpop.f32.mrf.mxu0
      %v1226 = vadd.f32 %v1129, %v1225
      %v1227 = vpop.f32.mrf.mxu0
      %v1228 = vpop.f32.mrf.mxu0
      %v1229 = vadd.f32 %v1132, %v1228
      %v1230 = vpop.f32.mrf.mxu0
      %1231 = vmatprep.mubr.bf16.mxu0 %v578
      %1232 = vmatmul.mubr.bf16.gmra.mxu0 %v577
      %v1233 = vpop.f32.mrf.mxu0
      %v1234 = vadd.f32 %v1137, %v1233
      %v1235 = vpop.f32.mrf.mxu0
      %v1236 = vpop.f32.mrf.mxu0
      %v1237 = vadd.f32 %v1140, %v1236
      %v1238 = vpop.f32.mrf.mxu0
      %1239 = vmatprep.mubr.bf16.mxu0 %v585
      %1240 = vmatmul.mubr.bf16.gmra.mxu0 %v584
      %v1241 = vpop.f32.mrf.mxu0
      %v1242 = vadd.f32 %v1145, %v1241
      %v1243 = vpop.f32.mrf.mxu0
      %v1244 = vpop.f32.mrf.mxu0
      %v1245 = vadd.f32 %v1148, %v1244
      %v1246 = vpop.f32.mrf.mxu0
      %1247 = vmatprep.mubr.bf16.mxu0 %v592
      %1248 = vmatmul.mubr.bf16.gmra.mxu0 %v591
      %v1249 = vpop.f32.mrf.mxu0
      %v1250 = vadd.f32 %v1153, %v1249
      %v1251 = vpop.f32.mrf.mxu0
      %v1252 = vpop.f32.mrf.mxu0
      %v1253 = vadd.f32 %v1156, %v1252
      %v1254 = vpop.f32.mrf.mxu0
      %1255 = vmatprep.mubr.bf16.mxu0 %v599
      %1256 = vmatmul.mubr.bf16.gmra.mxu0 %v598
      %v1257 = vpop.f32.mrf.mxu0
      %v1258 = vadd.f32 %v1161, %v1257
      %v1259 = vpop.f32.mrf.mxu0
      %v1260 = vpop.f32.mrf.mxu0
      %v1261 = vadd.f32 %v1164, %v1260
      %v1262 = vpop.f32.mrf.mxu0
      %1263 = vmatprep.mubr.bf16.mxu0 %v606
      %1264 = vmatmul.mubr.bf16.gmra.mxu0 %v605
      %v1265 = vpop.f32.mrf.mxu0
      %v1266 = vadd.f32 %v1169, %v1265
      %v1267 = vpop.f32.mrf.mxu0
      %v1268 = vpop.f32.mrf.mxu0
      %v1269 = vadd.f32 %v1172, %v1268
      %v1270 = vpop.f32.mrf.mxu0
      %1271 = vdwg.mxu0
      %1272 = vmatprep.subr.bf16.mxu0 0
      %1273 = vmatpush1.bf16.msra.mxu0 0
      %1274 = vmatprep.subr.bf16.mxu0 0
      %1275 = vmatpush1.bf16.msra.mxu0 0
      %1276 = vmatprep.subr.bf16.mxu0 0
      %1277 = vmatpush1.bf16.msra.mxu0 0
      %1278 = vmatprep.subr.bf16.mxu0 0
      %1279 = vmatpush1.bf16.msra.mxu0 0
      %1280 = vmatprep.subr.bf16.mxu0 0
      %1281 = vmatpush1.bf16.msra.mxu0 0
      %1282 = vmatprep.subr.bf16.mxu0 0
      %1283 = vmatpush1.bf16.msra.mxu0 0
      %1284 = vmatprep.subr.bf16.mxu0 0
      %1285 = vmatpush1.bf16.msra.mxu0 %v905
      %1286 = vmatprep.subr.bf16.mxu0 0
      %1287 = vmatpush1.bf16.msra.mxu0 %v904
      %1288 = vmatprep.subr.bf16.mxu0 0
      %1289 = vmatpush2.bf16.msra.mxu0 0
      %1290 = vmatprep.subr.bf16.mxu0 0
      %1291 = vmatpush2.bf16.msra.mxu0 0
      %1292 = vmatprep.subr.bf16.mxu0 0
      %1293 = vmatpush2.bf16.msra.mxu0 0
      %1294 = vmatprep.subr.bf16.mxu0 0
      %1295 = vmatpush2.bf16.msra.mxu0 0
      %1296 = vmatprep.subr.bf16.mxu0 0
      %1297 = vmatpush2.bf16.msra.mxu0 0
      %1298 = vmatprep.subr.bf16.mxu0 0
      %1299 = vmatpush2.bf16.msra.mxu0 0
      %1300 = vmatprep.subr.bf16.mxu0 0
      %1301 = vmatpush2.bf16.msra.mxu0 0
      %1302 = vmatprep.subr.bf16.mxu0 0
      %1303 = vmatpush2.bf16.msra.mxu0 0
      %1304 = vmatprep.mubr.bf16.mxu0 0
      %1305 = vmatmul.mubr.bf16.gmra.mxu0 %v958
      %v1306 = vpop.f32.mrf.mxu0
      %v1307 = vadd.f32 %v1210, %v1306
      %v1308 = vpop.f32.mrf.mxu0
      %v1309 = vpop.f32.mrf.mxu0
      %v1310 = vadd.f32 %v1213, %v1309
      %v1311 = vpop.f32.mrf.mxu0
      %1312 = vmatprep.mubr.bf16.mxu0 0
      %1313 = vmatmul.mubr.bf16.gmra.mxu0 %v961
      %v1314 = vpop.f32.mrf.mxu0
      %v1315 = vadd.f32 %v1218, %v1314
      %v1316 = vpop.f32.mrf.mxu0
      %v1317 = vpop.f32.mrf.mxu0
      %v1318 = vadd.f32 %v1221, %v1317
      %v1319 = vpop.f32.mrf.mxu0
      %1320 = vmatprep.mubr.bf16.mxu0 0
      %1321 = vmatmul.mubr.bf16.gmra.mxu0 %v964
      %v1322 = vpop.f32.mrf.mxu0
      %v1323 = vadd.f32 %v1226, %v1322
      %v1324 = vpop.f32.mrf.mxu0
      %v1325 = vpop.f32.mrf.mxu0
      %v1326 = vadd.f32 %v1229, %v1325
      %v1327 = vpop.f32.mrf.mxu0
      %1328 = vmatprep.mubr.bf16.mxu0 0
      %1329 = vmatmul.mubr.bf16.gmra.mxu0 %v967
      %v1330 = vpop.f32.mrf.mxu0
      %v1331 = vadd.f32 %v1234, %v1330
      %v1332 = vpop.f32.mrf.mxu0
      %v1333 = vpop.f32.mrf.mxu0
      %v1334 = vadd.f32 %v1237, %v1333
      %v1335 = vpop.f32.mrf.mxu0
      %1336 = vmatprep.mubr.bf16.mxu0 0
      %1337 = vmatmul.mubr.bf16.gmra.mxu0 %v970
      %v1338 = vpop.f32.mrf.mxu0
      %v1339 = vadd.f32 %v1242, %v1338
      %v1340 = vpop.f32.mrf.mxu0
      %v1341 = vpop.f32.mrf.mxu0
      %v1342 = vadd.f32 %v1245, %v1341
      %v1343 = vpop.f32.mrf.mxu0
      %1344 = vmatprep.mubr.bf16.mxu0 0
      %1345 = vmatmul.mubr.bf16.gmra.mxu0 %v973
      %v1346 = vpop.f32.mrf.mxu0
      %v1347 = vadd.f32 %v1250, %v1346
      %v1348 = vpop.f32.mrf.mxu0
      %v1349 = vpop.f32.mrf.mxu0
      %v1350 = vadd.f32 %v1253, %v1349
      %v1351 = vpop.f32.mrf.mxu0
      %1352 = vmatprep.mubr.bf16.mxu0 0
      %1353 = vmatmul.mubr.bf16.gmra.mxu0 %v976
      %v1354 = vpop.f32.mrf.mxu0
      %v1355 = vadd.f32 %v1258, %v1354
      %v1356 = vpop.f32.mrf.mxu0
      %v1357 = vpop.f32.mrf.mxu0
      %v1358 = vadd.f32 %v1261, %v1357
      %v1359 = vpop.f32.mrf.mxu0
      %1360 = vmatprep.mubr.bf16.mxu0 0
      %1361 = vmatmul.mubr.bf16.gmra.mxu0 %v979
      %v1362 = vpop.f32.mrf.mxu0
      %v1363 = vadd.f32 %v1266, %v1362
      %v1364 = vpop.f32.mrf.mxu0
      %v1365 = vpop.f32.mrf.mxu0
      %v1366 = vadd.f32 %v1269, %v1365
      %v1367 = vpop.f32.mrf.mxu0
      %1368 = vdwg.mxu0
      %v1369 = vmax.f32 %v1307, 0.0
      %v1370 = vmax.f32 %v1310, 0.0
      %v1371 = vmax.f32 %v1315, 0.0
      %v1372 = vmax.f32 %v1318, 0.0
      %v1373 = vmax.f32 %v1323, 0.0
      %v1374 = vmax.f32 %v1326, 0.0
      %v1375 = vmax.f32 %v1331, 0.0
      %v1376 = vmax.f32 %v1334, 0.0
      %v1377 = vmax.f32 %v1339, 0.0
      %v1378 = vmax.f32 %v1342, 0.0
      %v1379 = vmax.f32 %v1347, 0.0
      %v1380 = vmax.f32 %v1350, 0.0
      %v1381 = vmax.f32 %v1355, 0.0
      %v1382 = vmax.f32 %v1358, 0.0
      %v1383 = vmax.f32 %v1363, 0.0
      %v1384 = vmax.f32 %v1366, 0.0
      %v1385 = vmul.f32 %v1369, %v1369
      %v1386 = vmul.f32 %v1370, %v1370
      %v1387 = vmul.f32 %v1371, %v1371
      %v1388 = vmul.f32 %v1372, %v1372
      %v1389 = vmul.f32 %v1373, %v1373
      %v1390 = vmul.f32 %v1374, %v1374
      %v1391 = vmul.f32 %v1375, %v1375
      %v1392 = vmul.f32 %v1376, %v1376
      %v1393 = vmul.f32 %v1377, %v1377
      %v1394 = vmul.f32 %v1378, %v1378
      %v1395 = vmul.f32 %v1379, %v1379
      %v1396 = vmul.f32 %v1380, %v1380
      %v1397 = vmul.f32 %v1381, %v1381
      %v1398 = vmul.f32 %v1382, %v1382
      %v1399 = vmul.f32 %v1383, %v1383
      %v1400 = vmul.f32 %v1384, %v1384
      %v1401 = vld [vmem:[%s3] sm:$0xff]
      %v1402 = vld [vmem:[%s3 + $0x8] sm:$0xff]
      %v1403 = vld [vmem:[%s3 + $0x10] sm:$0xff]
      %v1404 = vld [vmem:[%s3 + $0x18] sm:$0xff]
      %v1405 = vld [vmem:[%s3 + $0x20] sm:$0xff]
      %v1406 = vld [vmem:[%s3 + $0x28] sm:$0xff]
      %v1407 = vld [vmem:[%s3 + $0x30] sm:$0xff]
      %v1408 = vld [vmem:[%s3 + $0x38] sm:$0xff]
      %vm1409 = vcmask 523264
      %v1411 = vsel %vm1409, %v1385, 0
      %v1414 = vsel %vm1409, %v1386, 0
      %v1417 = vsel %vm1409, %v1387, 0
      %v1420 = vsel %vm1409, %v1388, 0
      %v1423 = vsel %vm1409, %v1389, 0
      %v1426 = vsel %vm1409, %v1390, 0
      %v1429 = vsel %vm1409, %v1391, 0
      %v1432 = vsel %vm1409, %v1392, 0
      %v1435 = vsel %vm1409, %v1393, 0
      %v1438 = vsel %vm1409, %v1394, 0
      %v1441 = vsel %vm1409, %v1395, 0
      %v1444 = vsel %vm1409, %v1396, 0
      %v1447 = vsel %vm1409, %v1397, 0
      %v1450 = vsel %vm1409, %v1398, 0
      %v1453 = vsel %vm1409, %v1399, 0
      %v1456 = vsel %vm1409, %v1400, 0
      %1458 = vmatprep.subr.mxu0 0.0
      %1459 = vmatpush1.msra.mxu0 0.0
      %1460 = vmatprep.subr.mxu0 0.0
      %1461 = vmatpush1.msra.mxu0 0.0
      %1462 = vmatprep.subr.mxu0 0.0
      %1463 = vmatpush1.msra.mxu0 0.0
      %1464 = vmatprep.subr.mxu0 0.0
      %1465 = vmatpush1.msra.mxu0 0.0
      %1466 = vmatprep.subr.mxu0 0.0
      %1467 = vmatpush1.msra.mxu0 0.0
      %1468 = vmatprep.subr.mxu0 0.0
      %1469 = vmatpush1.msra.mxu0 0.0
      %1470 = vmatprep.subr.mxu0 0.0
      %1471 = vmatpush1.msra.mxu0 0.0
      %1472 = vmatprep.subr.mxu0 0.0
      %1473 = vmatpush1.msra.mxu0 0.0
      %1474 = vmatprep.subr.mxu0 0.0
      %1475 = vmatpush1.msra.mxu0 %v1408
      %1476 = vmatprep.subr.mxu0 0.0
      %1477 = vmatpush1.msra.mxu0 %v1407
      %1478 = vmatprep.subr.mxu0 0.0
      %1479 = vmatpush1.msra.mxu0 %v1406
      %1480 = vmatprep.subr.mxu0 0.0
      %1481 = vmatpush1.msra.mxu0 %v1405
      %1482 = vmatprep.subr.mxu0 0.0
      %1483 = vmatpush1.msra.mxu0 %v1404
      %1484 = vmatprep.subr.mxu0 0.0
      %1485 = vmatpush1.msra.mxu0 %v1403
      %1486 = vmatprep.subr.mxu0 0.0
      %1487 = vmatpush1.msra.mxu0 %v1402
      %1488 = vmatprep.subr.mxu0 0.0
      %1489 = vmatpush1.msra.mxu0 %v1401
      %1490 = vmatprep.subr.mxu0 0.0
      %1491 = vmatpush2.msra.mxu0 0.0
      %1492 = vmatprep.subr.mxu0 0.0
      %1493 = vmatpush2.msra.mxu0 0.0
      %1494 = vmatprep.subr.mxu0 0.0
      %1495 = vmatpush2.msra.mxu0 0.0
      %1496 = vmatprep.subr.mxu0 0.0
      %1497 = vmatpush2.msra.mxu0 0.0
      %1498 = vmatprep.subr.mxu0 0.0
      %1499 = vmatpush2.msra.mxu0 0.0
      %1500 = vmatprep.subr.mxu0 0.0
      %1501 = vmatpush2.msra.mxu0 0.0
      %1502 = vmatprep.subr.mxu0 0.0
      %1503 = vmatpush2.msra.mxu0 0.0
      %1504 = vmatprep.subr.mxu0 0.0
      %1505 = vmatpush2.msra.mxu0 0.0
      %1506 = vmatprep.subr.mxu0 0.0
      %1507 = vmatpush2.msra.mxu0 0.0
      %1508 = vmatprep.subr.mxu0 0.0
      %1509 = vmatpush2.msra.mxu0 0.0
      %1510 = vmatprep.subr.mxu0 0.0
      %1511 = vmatpush2.msra.mxu0 0.0
      %1512 = vmatprep.subr.mxu0 0.0
      %1513 = vmatpush2.msra.mxu0 0.0
      %1514 = vmatprep.subr.mxu0 0.0
      %1515 = vmatpush2.msra.mxu0 0.0
      %1516 = vmatprep.subr.mxu0 0.0
      %1517 = vmatpush2.msra.mxu0 0.0
      %1518 = vmatprep.subr.mxu0 0.0
      %1519 = vmatpush2.msra.mxu0 0.0
      %1520 = vmatprep.subr.mxu0 0.0
      %1521 = vmatpush2.msra.mxu0 0.0
      %1522 = vmatprep.mubr.f32.mxu0 0.0
      %1523 = vmatmul.mubr.f32.gmra.mxu0 %v1411
      %v1524 = vpop.f32.mrf.mxu0
      %v1525 = vadd.f32 0.0, %v1524
      %v1526 = vpop.f32.mrf.mxu0
      %1527 = vmatprep.mubr.f32.mxu0 0.0
      %1528 = vmatmul.mubr.f32.gmra.mxu0 %v1414
      %v1529 = vpop.f32.mrf.mxu0
      %v1530 = vadd.f32 0.0, %v1529
      %v1531 = vpop.f32.mrf.mxu0
      %1532 = vmatprep.mubr.f32.mxu0 0.0
      %1533 = vmatmul.mubr.f32.gmra.mxu0 %v1417
      %v1534 = vpop.f32.mrf.mxu0
      %v1535 = vadd.f32 0.0, %v1534
      %v1536 = vpop.f32.mrf.mxu0
      %1537 = vmatprep.mubr.f32.mxu0 0.0
      %1538 = vmatmul.mubr.f32.gmra.mxu0 %v1420
      %v1539 = vpop.f32.mrf.mxu0
      %v1540 = vadd.f32 0.0, %v1539
      %v1541 = vpop.f32.mrf.mxu0
      %1542 = vmatprep.mubr.f32.mxu0 0.0
      %1543 = vmatmul.mubr.f32.gmra.mxu0 %v1423
      %v1544 = vpop.f32.mrf.mxu0
      %v1545 = vadd.f32 0.0, %v1544
      %v1546 = vpop.f32.mrf.mxu0
      %1547 = vmatprep.mubr.f32.mxu0 0.0
      %1548 = vmatmul.mubr.f32.gmra.mxu0 %v1426
      %v1549 = vpop.f32.mrf.mxu0
      %v1550 = vadd.f32 0.0, %v1549
      %v1551 = vpop.f32.mrf.mxu0
      %1552 = vmatprep.mubr.f32.mxu0 0.0
      %1553 = vmatmul.mubr.f32.gmra.mxu0 %v1429
      %v1554 = vpop.f32.mrf.mxu0
      %v1555 = vadd.f32 0.0, %v1554
      %v1556 = vpop.f32.mrf.mxu0
      %1557 = vmatprep.mubr.f32.mxu0 0.0
      %1558 = vmatmul.mubr.f32.gmra.mxu0 %v1432
      %v1559 = vpop.f32.mrf.mxu0
      %v1560 = vadd.f32 0.0, %v1559
      %v1561 = vpop.f32.mrf.mxu0
      %1562 = vmatprep.mubr.f32.mxu0 0.0
      %1563 = vmatmul.mubr.f32.gmra.mxu0 %v1435
      %v1564 = vpop.f32.mrf.mxu0
      %v1565 = vadd.f32 0.0, %v1564
      %v1566 = vpop.f32.mrf.mxu0
      %1567 = vmatprep.mubr.f32.mxu0 0.0
      %1568 = vmatmul.mubr.f32.gmra.mxu0 %v1438
      %v1569 = vpop.f32.mrf.mxu0
      %v1570 = vadd.f32 0.0, %v1569
      %v1571 = vpop.f32.mrf.mxu0
      %1572 = vmatprep.mubr.f32.mxu0 0.0
      %1573 = vmatmul.mubr.f32.gmra.mxu0 %v1441
      %v1574 = vpop.f32.mrf.mxu0
      %v1575 = vadd.f32 0.0, %v1574
      %v1576 = vpop.f32.mrf.mxu0
      %1577 = vmatprep.mubr.f32.mxu0 0.0
      %1578 = vmatmul.mubr.f32.gmra.mxu0 %v1444
      %v1579 = vpop.f32.mrf.mxu0
      %v1580 = vadd.f32 0.0, %v1579
      %v1581 = vpop.f32.mrf.mxu0
      %1582 = vmatprep.mubr.f32.mxu0 0.0
      %1583 = vmatmul.mubr.f32.gmra.mxu0 %v1447
      %v1584 = vpop.f32.mrf.mxu0
      %v1585 = vadd.f32 0.0, %v1584
      %v1586 = vpop.f32.mrf.mxu0
      %1587 = vmatprep.mubr.f32.mxu0 0.0
      %1588 = vmatmul.mubr.f32.gmra.mxu0 %v1450
      %v1589 = vpop.f32.mrf.mxu0
      %v1590 = vadd.f32 0.0, %v1589
      %v1591 = vpop.f32.mrf.mxu0
      %1592 = vmatprep.mubr.f32.mxu0 0.0
      %1593 = vmatmul.mubr.f32.gmra.mxu0 %v1453
      %v1594 = vpop.f32.mrf.mxu0
      %v1595 = vadd.f32 0.0, %v1594
      %v1596 = vpop.f32.mrf.mxu0
      %1597 = vmatprep.mubr.f32.mxu0 0.0
      %1598 = vmatmul.mubr.f32.gmra.mxu0 %v1456
      %v1599 = vpop.f32.mrf.mxu0
      %v1600 = vadd.f32 0.0, %v1599
      %v1601 = vpop.f32.mrf.mxu0
      %1602 = vdwg.mxu0
      %v1603 = vmul.f32 %v1525, 2e-05
      %v1604 = vmul.f32 %v1530, 2e-05
      %v1605 = vmul.f32 %v1535, 2e-05
      %v1606 = vmul.f32 %v1540, 2e-05
      %v1607 = vmul.f32 %v1545, 2e-05
      %v1608 = vmul.f32 %v1550, 2e-05
      %v1609 = vmul.f32 %v1555, 2e-05
      %v1610 = vmul.f32 %v1560, 2e-05
      %v1611 = vmul.f32 %v1565, 2e-05
      %v1612 = vmul.f32 %v1570, 2e-05
      %v1613 = vmul.f32 %v1575, 2e-05
      %v1614 = vmul.f32 %v1580, 2e-05
      %v1615 = vmul.f32 %v1585, 2e-05
      %v1616 = vmul.f32 %v1590, 2e-05
      %v1617 = vmul.f32 %v1595, 2e-05
      %v1618 = vmul.f32 %v1600, 2e-05
      %v1619 = vadd.f32 %v1603, 1.0
      %v1620 = vadd.f32 %v1604, 1.0
      %v1621 = vadd.f32 %v1605, 1.0
      %v1622 = vadd.f32 %v1606, 1.0
      %v1623 = vadd.f32 %v1607, 1.0
      %v1624 = vadd.f32 %v1608, 1.0
      %v1625 = vadd.f32 %v1609, 1.0
      %v1626 = vadd.f32 %v1610, 1.0
      %v1627 = vadd.f32 %v1611, 1.0
      %v1628 = vadd.f32 %v1612, 1.0
      %v1629 = vadd.f32 %v1613, 1.0
      %v1630 = vadd.f32 %v1614, 1.0
      %v1631 = vadd.f32 %v1615, 1.0
      %v1632 = vadd.f32 %v1616, 1.0
      %v1633 = vadd.f32 %v1617, 1.0
      %v1634 = vadd.f32 %v1618, 1.0
      %v1635 = vlog2.pop %v1619
      %v1636 = vmul.f32 %v1635, 0.6931472
      %v1637 = vlog2.pop %v1620
      %v1638 = vmul.f32 %v1637, 0.6931472
      %v1639 = vlog2.pop %v1621
      %v1640 = vmul.f32 %v1639, 0.6931472
      %v1641 = vlog2.pop %v1622
      %v1642 = vmul.f32 %v1641, 0.6931472
      %v1643 = vlog2.pop %v1623
      %v1644 = vmul.f32 %v1643, 0.6931472
      %v1645 = vlog2.pop %v1624
      %v1646 = vmul.f32 %v1645, 0.6931472
      %v1647 = vlog2.pop %v1625
      %v1648 = vmul.f32 %v1647, 0.6931472
      %v1649 = vlog2.pop %v1626
      %v1650 = vmul.f32 %v1649, 0.6931472
      %v1651 = vlog2.pop %v1627
      %v1652 = vmul.f32 %v1651, 0.6931472
      %v1653 = vlog2.pop %v1628
      %v1654 = vmul.f32 %v1653, 0.6931472
      %v1655 = vlog2.pop %v1629
      %v1656 = vmul.f32 %v1655, 0.6931472
      %v1657 = vlog2.pop %v1630
      %v1658 = vmul.f32 %v1657, 0.6931472
      %v1659 = vlog2.pop %v1631
      %v1660 = vmul.f32 %v1659, 0.6931472
      %v1661 = vlog2.pop %v1632
      %v1662 = vmul.f32 %v1661, 0.6931472
      %v1663 = vlog2.pop %v1633
      %v1664 = vmul.f32 %v1663, 0.6931472
      %v1665 = vlog2.pop %v1634
      %v1666 = vmul.f32 %v1665, 0.6931472
      %v1667 = vmul.f32 %v1636, -0.75
      %v1668 = vmul.f32 %v1638, -0.75
      %v1669 = vmul.f32 %v1640, -0.75
      %v1670 = vmul.f32 %v1642, -0.75
      %v1671 = vmul.f32 %v1644, -0.75
      %v1672 = vmul.f32 %v1646, -0.75
      %v1673 = vmul.f32 %v1648, -0.75
      %v1674 = vmul.f32 %v1650, -0.75
      %v1675 = vmul.f32 %v1652, -0.75
      %v1676 = vmul.f32 %v1654, -0.75
      %v1677 = vmul.f32 %v1656, -0.75
      %v1678 = vmul.f32 %v1658, -0.75
      %v1679 = vmul.f32 %v1660, -0.75
      %v1680 = vmul.f32 %v1662, -0.75
      %v1681 = vmul.f32 %v1664, -0.75
      %v1682 = vmul.f32 %v1666, -0.75
      %v1683 = vmul.f32 %v1667, 1.442695
      %v1684 = vpow.pop %v1683
      %v1685 = vmul.f32 %v1668, 1.442695
      %v1686 = vpow.pop %v1685
      %v1687 = vmul.f32 %v1669, 1.442695
      %v1688 = vpow.pop %v1687
      %v1689 = vmul.f32 %v1670, 1.442695
      %v1690 = vpow.pop %v1689
      %v1691 = vmul.f32 %v1671, 1.442695
      %v1692 = vpow.pop %v1691
      %v1693 = vmul.f32 %v1672, 1.442695
      %v1694 = vpow.pop %v1693
      %v1695 = vmul.f32 %v1673, 1.442695
      %v1696 = vpow.pop %v1695
      %v1697 = vmul.f32 %v1674, 1.442695
      %v1698 = vpow.pop %v1697
      %v1699 = vmul.f32 %v1675, 1.442695
      %v1700 = vpow.pop %v1699
      %v1701 = vmul.f32 %v1676, 1.442695
      %v1702 = vpow.pop %v1701
      %v1703 = vmul.f32 %v1677, 1.442695
      %v1704 = vpow.pop %v1703
      %v1705 = vmul.f32 %v1678, 1.442695
      %v1706 = vpow.pop %v1705
      %v1707 = vmul.f32 %v1679, 1.442695
      %v1708 = vpow.pop %v1707
      %v1709 = vmul.f32 %v1680, 1.442695
      %v1710 = vpow.pop %v1709
      %v1711 = vmul.f32 %v1681, 1.442695
      %v1712 = vpow.pop %v1711
      %v1713 = vmul.f32 %v1682, 1.442695
      %v1714 = vpow.pop %v1713
      %v1715 = vmul.f32 %v1369, %v1684
      %v1716 = vmul.f32 %v1370, %v1686
      %v1717 = vmul.f32 %v1371, %v1688
      %v1718 = vmul.f32 %v1372, %v1690
      %v1719 = vmul.f32 %v1373, %v1692
      %v1720 = vmul.f32 %v1374, %v1694
      %v1721 = vmul.f32 %v1375, %v1696
      %v1722 = vmul.f32 %v1376, %v1698
      %v1723 = vmul.f32 %v1377, %v1700
      %v1724 = vmul.f32 %v1378, %v1702
      %v1725 = vmul.f32 %v1379, %v1704
      %v1726 = vmul.f32 %v1380, %v1706
      %v1727 = vmul.f32 %v1381, %v1708
      %v1728 = vmul.f32 %v1382, %v1710
      %v1729 = vmul.f32 %v1383, %v1712
      %v1730 = vmul.f32 %v1384, %v1714
      %1731 = vst.msk [vmem:[%s202] sm:$0xff] %vm1409, %v1715
      %1732 = vst.msk [vmem:[%s202 + $0x8] sm:$0xff] %vm1409, %v1716
      %1733 = vst.msk [vmem:[%s202 + $0x10] sm:$0xff] %vm1409, %v1717
      %1734 = vst.msk [vmem:[%s202 + $0x18] sm:$0xff] %vm1409, %v1718
      %1735 = vst.msk [vmem:[%s202 + $0x20] sm:$0xff] %vm1409, %v1719
      %1736 = vst.msk [vmem:[%s202 + $0x28] sm:$0xff] %vm1409, %v1720
      %1737 = vst.msk [vmem:[%s202 + $0x30] sm:$0xff] %vm1409, %v1721
      %1738 = vst.msk [vmem:[%s202 + $0x38] sm:$0xff] %vm1409, %v1722
      %1739 = vst.msk [vmem:[%s202 + $0x40] sm:$0xff] %vm1409, %v1723
      %1740 = vst.msk [vmem:[%s202 + $0x48] sm:$0xff] %vm1409, %v1724
      %1741 = vst.msk [vmem:[%s202 + $0x50] sm:$0xff] %vm1409, %v1725
      %1742 = vst.msk [vmem:[%s202 + $0x58] sm:$0xff] %vm1409, %v1726
      %1743 = vst.msk [vmem:[%s202 + $0x60] sm:$0xff] %vm1409, %v1727
      %1744 = vst.msk [vmem:[%s202 + $0x68] sm:$0xff] %vm1409, %v1728
      %1745 = vst.msk [vmem:[%s202 + $0x70] sm:$0xff] %vm1409, %v1729
      %1746 = vst.msk [vmem:[%s202 + $0x78] sm:$0xff] %vm1409, %v1730
      %s1747 = smul.u32 16, %s15
      %p1748 = scmp.lt.s32.totalorder %s1747, 31
      %s1749 = scalar_select %p1748, %s1747, 31
      %s1750 = smul.addr %s1749, 8
      %s1751 = scalar_lea.vmem %s4, %s1750
      // Predicated region
      $region37: #{alexnet_fc_forward.11} parent=35 // pred_check
        %p1752 = pneg %p122
      $region38: #{alexnet_fc_forward.11} parent=35 // pred_check_branch
        %1754 = sbr.rel (%p1752) target = $region40
      $region39: #{alexnet_fc_forward.11} parent=35 // pred_region
        %s1755 = smul.u32 16, %s15
      $region40: #{alexnet_fc_forward.11} parent=35 // pred_fallthru
        _
    $region36: #{alexnet_fc_forward.11} parent=5 // pred_fallthru
      _
    %p1756 = scmp.le.s32.totalorder 2, %s10
    // Predicated region
    $region41: #{alexnet_fc_forward.11} parent=5 // pred_check
      %p1757 = pneg %p1756
    $region42: #{alexnet_fc_forward.11} parent=5 // pred_check_branch
      %1759 = sbr.rel (%p1757) target = $region44
    $region43: #{alexnet_fc_forward.11} parent=5 // pred_region
      %s1760 = ssub.s32 %s10, 2
      // Predicated region
      $region45: #{alexnet_fc_forward.11} parent=43 // pred_check
        %p1761 = pneg %p128
      $region46: #{alexnet_fc_forward.11} parent=43 // pred_check_branch
        %1763 = sbr.rel (%p1761) target = $region48
      $region47: #{alexnet_fc_forward.11} parent=43 // pred_region
        %s1764 = smul.u32 16, %s16
        %p1765 = scmp.lt.s32.totalorder %s1764, 31
        %s1766 = scalar_select %p1765, %s1764, 31
        %s1767 = smul.addr %s1766, 8
        %s1768 = scalar_lea.vmem %s4, %s1767
      $region48: #{alexnet_fc_forward.11} parent=43 // pred_fallthru
        _
    $region44: #{alexnet_fc_forward.11} parent=5 // pred_fallthru
      _
  $region6: #{alexnet_fc_forward.11} parent=0 // loop_footer
    %s14 = sadd.s32 1, %s10
  $region7: #{alexnet_fc_forward.11} parent=0 // loop_footer_branch
    %9 = sbr.rel target = $region3
  $region8: #{alexnet_fc_forward.11} parent=0 // loop_exit
    _

// kernel: alexnet_fc_forward.12
$region0: #{alexnet_fc_forward.12}
  #allocation0 [shape = 'u32[]', space=smem, size = 0x4, offset = 0x4, fixed_abs, tag = 'smem constant byte address 0x4 - core index']
  #allocation1 [shape = 'u32[144,128]{1,0:T(1,128)}', space=vmem, size = 0x12000, scoped, tag = 'internal scratch']
  %s0 = inlined_call_operand.vmem [shape: f32[2,11,11,64], index: 0, kind: input, shape index: {}]
  %s1 = inlined_call_operand.vmem [shape: f32[2,9,9,64], index: 1, kind: output, shape index: {}]
  %s2 = sld [smem:[#allocation0]]
  $region37: #{alexnet_fc_forward.12} parent=0
    _
  %s4 = ssub.s32 1, %s2
  %s5 = scalar_select 0, %s4, %s2
  loop: start=0, step=1, limit=4
  $region2: #{alexnet_fc_forward.12} parent=0 // loop_pre_header
    _
  $region3: #{alexnet_fc_forward.12} parent=0 // loop_header
    %s7 = sphi 0, %s11
    %p8 = scmp.ge.s32.totalorder %s7, 4
    %s17 = sphi 0, %s19
    %s20 = sphi 0, %s17
    %s21 = sphi 0, %s20
    %s37 = sphi 0, %s21
    %s43 = sphi 0, %s45
    %s46 = sphi 0, %s43
    %s47 = sphi 0, %s46
    %s63 = sphi 0, %s47
  $region4: #{alexnet_fc_forward.12} parent=0 // loop_header_branch
    %10 = sbr.rel (%p8) target = $region8
  $region5: #{alexnet_fc_forward.12} parent=0 // loop_body
    %s12 = ssub.s32 %s7, 1
    %s13 = ssub.s32 %s7, 2
    %s14 = sadd.s32 %s7, 1
    %s15 = ssub.s32 %s7, %s14
    %p16 = scmp.eq.s32.totalorder %s15, 0
    %s18 = sadd.s32 %s17, 1
    %s19 = scalar_select %p16, %s17, %s18
    %p22 = pneg %p16
    %p23 = scmp.eq.s32.totalorder %s7, 1
    %p24 = por %p22, %p23
    %p25 = scmp.ne.s32.totalorder %s17, %s20
    %p26 = scmp.eq.s32.totalorder %s7, 0
    %p27 = por %p25, %p26
    %p28 = scmp.ne.s32.totalorder %s17, %s20
    %p29 = scmp.eq.s32.totalorder %s12, 1
    %p30 = por %p28, %p29
    %p31 = scmp.ne.s32.totalorder %s20, %s21
    %p32 = scmp.eq.s32.totalorder %s12, 0
    %p33 = por %p31, %p32
    %p34 = scmp.ne.s32.totalorder %s20, %s21
    %p35 = scmp.eq.s32.totalorder %s13, 1
    %p36 = por %p34, %p35
    %p38 = scmp.ne.s32.totalorder %s21, %s37
    %p39 = scmp.eq.s32.totalorder %s13, 0
    %p40 = por %p38, %p39
    %s41 = ssub.s32 %s7, %s14
    %p42 = scmp.eq.s32.totalorder %s41, 0
    %s44 = sadd.s32 %s43, 1
    %s45 = scalar_select %p42, %s43, %s44
    %p48 = pneg %p42
    %p49 = scmp.eq.s32.totalorder %s7, 1
    %p50 = por %p48, %p49
    %p51 = scmp.ne.s32.totalorder %s43, %s46
    %p52 = scmp.eq.s32.totalorder %s7, 0
    %p53 = por %p51, %p52
    %p54 = scmp.ne.s32.totalorder %s43, %s46
    %p55 = scmp.eq.s32.totalorder %s12, 1
    %p56 = por %p54, %p55
    %p57 = scmp.ne.s32.totalorder %s46, %s47
    %p58 = scmp.eq.s32.totalorder %s12, 0
    %p59 = por %p57, %p58
    %p60 = scmp.ne.s32.totalorder %s46, %s47
    %p61 = scmp.eq.s32.totalorder %s13, 1
    %p62 = por %p60, %p61
    %p64 = scmp.ne.s32.totalorder %s47, %s63
    %p65 = scmp.eq.s32.totalorder %s13, 0
    %p66 = por %p64, %p65
    %p67 = scmp.le.s32.totalorder 1, %s7
    %p68 = scmp.lt.s32.totalorder %s7, 3
    %p69 = pnand %p67, %p68
    %p70 = pneg %p69
    // Predicated region
    $region9: #{alexnet_fc_forward.12} parent=5 // pred_check
      _
    $region10: #{alexnet_fc_forward.12} parent=5 // pred_check_branch
      %72 = sbr.rel (%p69) target = $region12
    $region11: #{alexnet_fc_forward.12} parent=5 // pred_region
      %s73 = ssub.s32 %s7, 1
    $region12: #{alexnet_fc_forward.12} parent=5 // pred_fallthru
      _
    %p74 = scmp.lt.s32.totalorder %s7, 2
    // Predicated region
    $region13: #{alexnet_fc_forward.12} parent=5 // pred_check
      %p75 = pneg %p74
    $region14: #{alexnet_fc_forward.12} parent=5 // pred_check_branch
      %77 = sbr.rel (%p75) target = $region16
    $region15: #{alexnet_fc_forward.12} parent=5 // pred_region
      // Predicated region
      $region17: #{alexnet_fc_forward.12} parent=15 // pred_check
        %p78 = pneg %p27
      $region18: #{alexnet_fc_forward.12} parent=15 // pred_check_branch
        %80 = sbr.rel (%p78) target = $region20
      $region19: #{alexnet_fc_forward.12} parent=15 // pred_region
        %p81 = scmp.lt.s32.totalorder %s7, 1
        %s82 = scalar_select %p81, %s7, 1
        %s83 = smul.addr %s82, 22
        %s84 = smul.addr %s83, 8
        %s85 = scalar_lea.vmem %s0, %s84
      $region20: #{alexnet_fc_forward.12} parent=15 // pred_fallthru
        _
    $region16: #{alexnet_fc_forward.12} parent=5 // pred_fallthru
      _
    %p86 = scmp.le.s32.totalorder 1, %s7
    %p87 = scmp.lt.s32.totalorder %s7, 3
    %p88 = pnand %p86, %p87
    %p89 = pneg %p88
    // Predicated region
    $region21: #{alexnet_fc_forward.12} parent=5 // pred_check
      _
    $region22: #{alexnet_fc_forward.12} parent=5 // pred_check_branch
      %91 = sbr.rel (%p88) target = $region24
    $region23: #{alexnet_fc_forward.12} parent=5 // pred_region
      %s92 = ssub.s32 %s7, 1
      %p93 = scmp.lt.s32.totalorder %s12, 1
      %s94 = scalar_select %p93, %s12, 1
      %s95 = smul.addr %s94, 22
      %s96 = smul.addr %s95, 8
      %s97 = scalar_lea.vmem %s0, %s96
      %p98 = pneg %p33
      %p99 = pneg %p30
      %p100 = pneg %p59
      %p101 = pneg %p56
      %p102 = scmp.lt.s32.totalorder %s12, 1
      %s103 = scalar_select %p102, %s12, 1
      %s104 = smul.addr %s103, 18
      %s105 = smul.addr %s104, 8
      %s106 = scalar_lea.vmem %s1, %s105
      %p107 = scmp.lt.s32.totalorder %s12, 1
      %s108 = scalar_select %p107, %s12, 1
      %s109 = smul.addr %s108, 22
      %s110 = smul.addr %s109, 8
      %s111 = scalar_lea.vmem %s0, %s110
      %p112 = scmp.lt.s32.totalorder %s12, 1
      %s113 = scalar_select %p112, %s12, 1
      %s114 = smul.addr %s113, 18
      %s115 = smul.addr %s114, 8
      %s116 = scalar_lea.vmem %s1, %s115
      %v117 = vld [vmem:[%s111] sm:$0xff]
      %v118 = vld [vmem:[%s111 + $0x8] sm:$0x7]
      %v119 = vld [vmem:[%s111 + $0x10] sm:$0xff]
      %v120 = vld [vmem:[%s111 + $0x18] sm:$0x7]
      %v121 = vld [vmem:[%s111 + $0x20] sm:$0xff]
      %v122 = vld [vmem:[%s111 + $0x28] sm:$0x7]
      %v123 = vld [vmem:[%s111 + $0x30] sm:$0xff]
      %v124 = vld [vmem:[%s111 + $0x38] sm:$0x7]
      %v125 = vld [vmem:[%s111 + $0x40] sm:$0xff]
      %v126 = vld [vmem:[%s111 + $0x48] sm:$0x7]
      %v127 = vld [vmem:[%s111 + $0x50] sm:$0xff]
      %v128 = vld [vmem:[%s111 + $0x58] sm:$0x7]
      %v129 = vld [vmem:[%s111 + $0x60] sm:$0xff]
      %v130 = vld [vmem:[%s111 + $0x68] sm:$0x7]
      %v131 = vld [vmem:[%s111 + $0x70] sm:$0xff]
      %v132 = vld [vmem:[%s111 + $0x78] sm:$0x7]
      %v133 = vld [vmem:[%s111 + $0x80] sm:$0xff]
      %v134 = vld [vmem:[%s111 + $0x88] sm:$0x7]
      %v135 = vld [vmem:[%s111 + $0x90] sm:$0xff]
      %v136 = vld [vmem:[%s111 + $0x98] sm:$0x7]
      %v137 = vld [vmem:[%s111 + $0xa0] sm:$0xff]
      %v138 = vld [vmem:[%s111 + $0xa8] sm:$0x7]
      %v139 = vmax.f32 %v117, %v119
      %v140 = vmax.f32 %v118, %v120
      %v141 = vmax.f32 %v119, %v121
      %v142 = vmax.f32 %v120, %v122
      %v143 = vmax.f32 %v121, %v123
      %v144 = vmax.f32 %v122, %v124
      %v145 = vmax.f32 %v123, %v125
      %v146 = vmax.f32 %v124, %v126
      %v147 = vmax.f32 %v125, %v127
      %v148 = vmax.f32 %v126, %v128
      %v149 = vmax.f32 %v127, %v129
      %v150 = vmax.f32 %v128, %v130
      %v151 = vmax.f32 %v129, %v131
      %v152 = vmax.f32 %v130, %v132
      %v153 = vmax.f32 %v131, %v133
      %v154 = vmax.f32 %v132, %v134
      %v155 = vmax.f32 %v133, %v135
      %v156 = vmax.f32 %v134, %v136
      %v157 = vmax.f32 %v139, %v121
      %v158 = vmax.f32 %v140, %v122
      %v159 = vmax.f32 %v141, %v123
      %v160 = vmax.f32 %v142, %v124
      %v161 = vmax.f32 %v143, %v125
      %v162 = vmax.f32 %v144, %v126
      %v163 = vmax.f32 %v145, %v127
      %v164 = vmax.f32 %v146, %v128
      %v165 = vmax.f32 %v147, %v129
      %v166 = vmax.f32 %v148, %v130
      %v167 = vmax.f32 %v149, %v131
      %v168 = vmax.f32 %v150, %v132
      %v169 = vmax.f32 %v151, %v133
      %v170 = vmax.f32 %v152, %v134
      %v171 = vmax.f32 %v153, %v135
      %v172 = vmax.f32 %v154, %v136
      %v173 = vmax.f32 %v155, %v137
      %v174 = vmax.f32 %v156, %v138
      %vm193 = vcmask 1046528
      %v194 = vrot.slane %v157, 1
      %v195 = vrot.slane %v158, 1
      %v196 = vsel %vm193, %v194, %v195
      %v197 = vrot.slane %v159, 1
      %v198 = vrot.slane %v160, 1
      %v199 = vsel %vm193, %v197, %v198
      %v200 = vrot.slane %v161, 1
      %v201 = vrot.slane %v162, 1
      %v202 = vsel %vm193, %v200, %v201
      %v203 = vrot.slane %v163, 1
      %v204 = vrot.slane %v164, 1
      %v205 = vsel %vm193, %v203, %v204
      %v206 = vrot.slane %v165, 1
      %v207 = vrot.slane %v166, 1
      %v208 = vsel %vm193, %v206, %v207
      %v209 = vrot.slane %v167, 1
      %v210 = vrot.slane %v168, 1
      %v211 = vsel %vm193, %v209, %v210
      %v212 = vrot.slane %v169, 1
      %v213 = vrot.slane %v170, 1
      %v214 = vsel %vm193, %v212, %v213
      %v215 = vrot.slane %v171, 1
      %v216 = vrot.slane %v172, 1
      %v217 = vsel %vm193, %v215, %v216
      %v218 = vrot.slane %v173, 1
      %v219 = vrot.slane %v174, 1
      %v220 = vsel %vm193, %v218, %v219
      %v239 = vmax.f32 %v157, %v196
      %v240 = vmax.f32 %v158, %v195
      %v241 = vmax.f32 %v159, %v199
      %v242 = vmax.f32 %v160, %v198
      %v243 = vmax.f32 %v161, %v202
      %v244 = vmax.f32 %v162, %v201
      %v245 = vmax.f32 %v163, %v205
      %v246 = vmax.f32 %v164, %v204
      %v247 = vmax.f32 %v165, %v208
      %v248 = vmax.f32 %v166, %v207
      %v249 = vmax.f32 %v167, %v211
      %v250 = vmax.f32 %v168, %v210
      %v251 = vmax.f32 %v169, %v214
      %v252 = vmax.f32 %v170, %v213
      %v253 = vmax.f32 %v171, %v217
      %v254 = vmax.f32 %v172, %v216
      %v255 = vmax.f32 %v173, %v220
      %v256 = vmax.f32 %v174, %v219
      %vm257 = vcmask 1045504
      %v258 = vrot.slane %v157, 2
      %v259 = vrot.slane %v158, 2
      %v260 = vsel %vm257, %v258, %v259
      %v261 = vrot.slane %v159, 2
      %v262 = vrot.slane %v160, 2
      %v263 = vsel %vm257, %v261, %v262
      %v264 = vrot.slane %v161, 2
      %v265 = vrot.slane %v162, 2
      %v266 = vsel %vm257, %v264, %v265
      %v267 = vrot.slane %v163, 2
      %v268 = vrot.slane %v164, 2
      %v269 = vsel %vm257, %v267, %v268
      %v270 = vrot.slane %v165, 2
      %v271 = vrot.slane %v166, 2
      %v272 = vsel %vm257, %v270, %v271
      %v273 = vrot.slane %v167, 2
      %v274 = vrot.slane %v168, 2
      %v275 = vsel %vm257, %v273, %v274
      %v276 = vrot.slane %v169, 2
      %v277 = vrot.slane %v170, 2
      %v278 = vsel %vm257, %v276, %v277
      %v279 = vrot.slane %v171, 2
      %v280 = vrot.slane %v172, 2
      %v281 = vsel %vm257, %v279, %v280
      %v282 = vrot.slane %v173, 2
      %v283 = vrot.slane %v174, 2
      %v284 = vsel %vm257, %v282, %v283
      %v303 = vmax.f32 %v239, %v260
      %v304 = vmax.f32 %v240, %v259
      %v305 = vmax.f32 %v241, %v263
      %v306 = vmax.f32 %v242, %v262
      %v307 = vmax.f32 %v243, %v266
      %v308 = vmax.f32 %v244, %v265
      %v309 = vmax.f32 %v245, %v269
      %v310 = vmax.f32 %v246, %v268
      %v311 = vmax.f32 %v247, %v272
      %v312 = vmax.f32 %v248, %v271
      %v313 = vmax.f32 %v249, %v275
      %v314 = vmax.f32 %v250, %v274
      %v315 = vmax.f32 %v251, %v278
      %v316 = vmax.f32 %v252, %v277
      %v317 = vmax.f32 %v253, %v281
      %v318 = vmax.f32 %v254, %v280
      %v319 = vmax.f32 %v255, %v284
      %v320 = vmax.f32 %v256, %v283
      %vm321 = vcmask 523264
      %322 = vst.msk [vmem:[%s116] sm:$0xff] %vm321, %v303
      %vm323 = vcmask 516096
      %324 = vst.msk [vmem:[%s116 + $0x8] sm:$0x1] %vm323, %v304
      %325 = vst.msk [vmem:[%s116 + $0x10] sm:$0xff] %vm321, %v305
      %326 = vst.msk [vmem:[%s116 + $0x18] sm:$0x1] %vm323, %v306
      %327 = vst.msk [vmem:[%s116 + $0x20] sm:$0xff] %vm321, %v307
      %328 = vst.msk [vmem:[%s116 + $0x28] sm:$0x1] %vm323, %v308
      %329 = vst.msk [vmem:[%s116 + $0x30] sm:$0xff] %vm321, %v309
      %330 = vst.msk [vmem:[%s116 + $0x38] sm:$0x1] %vm323, %v310
      %331 = vst.msk [vmem:[%s116 + $0x40] sm:$0xff] %vm321, %v311
      %332 = vst.msk [vmem:[%s116 + $0x48] sm:$0x1] %vm323, %v312
      %333 = vst.msk [vmem:[%s116 + $0x50] sm:$0xff] %vm321, %v313
      %334 = vst.msk [vmem:[%s116 + $0x58] sm:$0x1] %vm323, %v314
      %335 = vst.msk [vmem:[%s116 + $0x60] sm:$0xff] %vm321, %v315
      %336 = vst.msk [vmem:[%s116 + $0x68] sm:$0x1] %vm323, %v316
      %337 = vst.msk [vmem:[%s116 + $0x70] sm:$0xff] %vm321, %v317
      %338 = vst.msk [vmem:[%s116 + $0x78] sm:$0x1] %vm323, %v318
      %339 = vst.msk [vmem:[%s116 + $0x80] sm:$0xff] %vm321, %v319
      %340 = vst.msk [vmem:[%s116 + $0x88] sm:$0x1] %vm323, %v320
      %p341 = scmp.lt.s32.totalorder %s12, 1
      %s342 = scalar_select %p341, %s12, 1
      %s343 = smul.addr %s342, 18
      %s344 = smul.addr %s343, 8
      %s345 = scalar_lea.vmem %s1, %s344
      // Predicated region
      $region25: #{alexnet_fc_forward.12} parent=23 // pred_check
        %p346 = pneg %p56
      $region26: #{alexnet_fc_forward.12} parent=23 // pred_check_branch
        %348 = sbr.rel (%p346) target = $region28
      $region27: #{alexnet_fc_forward.12} parent=23 // pred_region
        _
      $region28: #{alexnet_fc_forward.12} parent=23 // pred_fallthru
        _
    $region24: #{alexnet_fc_forward.12} parent=5 // pred_fallthru
      _
    %p349 = scmp.le.s32.totalorder 2, %s7
    // Predicated region
    $region29: #{alexnet_fc_forward.12} parent=5 // pred_check
      %p350 = pneg %p349
    $region30: #{alexnet_fc_forward.12} parent=5 // pred_check_branch
      %352 = sbr.rel (%p350) target = $region32
    $region31: #{alexnet_fc_forward.12} parent=5 // pred_region
      %s353 = ssub.s32 %s7, 2
      // Predicated region
      $region33: #{alexnet_fc_forward.12} parent=31 // pred_check
        %p354 = pneg %p62
      $region34: #{alexnet_fc_forward.12} parent=31 // pred_check_branch
        %356 = sbr.rel (%p354) target = $region36
      $region35: #{alexnet_fc_forward.12} parent=31 // pred_region
        %p357 = scmp.lt.s32.totalorder %s13, 1
        %s358 = scalar_select %p357, %s13, 1
        %s359 = smul.addr %s358, 18
        %s360 = smul.addr %s359, 8
        %s361 = scalar_lea.vmem %s1, %s360
      $region36: #{alexnet_fc_forward.12} parent=31 // pred_fallthru
        _
    $region32: #{alexnet_fc_forward.12} parent=5 // pred_fallthru
      _
  $region6: #{alexnet_fc_forward.12} parent=0 // loop_footer
    %s11 = sadd.s32 1, %s7
  $region7: #{alexnet_fc_forward.12} parent=0 // loop_footer_branch
    %6 = sbr.rel target = $region3
  $region8: #{alexnet_fc_forward.12} parent=0 // loop_exit
    _

// kernel: alexnet_fc_forward.13
$region0: #{alexnet_fc_forward.13}
  #allocation0 [shape = 'u32[]', space=smem, size = 0x4, offset = 0x4, fixed_abs, tag = 'smem constant byte address 0x4 - core index']
  #allocation1 [shape = 'u32[144,128]{1,0:T(1,128)}', space=vmem, size = 0x12000, scoped, tag = 'internal scratch']
  %s0 = inlined_call_operand.vmem [shape: bf16[64,576], index: 0, kind: input, shape index: {}]
  %s1 = inlined_call_operand.vmem [shape: bf16[576,96], index: 1, kind: input, shape index: {}]
  %s2 = inlined_call_operand.vmem [shape: f32[1,96], index: 2, kind: input, shape index: {}]
  %s3 = inlined_call_operand.vmem [shape: f32[64,96], index: 3, kind: output, shape index: {}]
  %s4 = sld [smem:[#allocation0]]
  $region45: #{alexnet_fc_forward.13} parent=0
    _
  %s6 = ssub.s32 1, %s4
  %s7 = scalar_select 0, %s6, %s4
  loop: start=0, step=1, limit=4
  $region2: #{alexnet_fc_forward.13} parent=0 // loop_pre_header
    _
  $region3: #{alexnet_fc_forward.13} parent=0 // loop_header
    %s9 = sphi 0, %s13
    %p10 = scmp.ge.s32.totalorder %s9, 4
    %s19 = sphi 0, %s21
    %s22 = sphi 0, %s19
    %s23 = sphi 0, %s22
    %s39 = sphi 0, %s23
    %s43 = sphi 0, %s43
    %s45 = sphi 0, %s43
    %s46 = sphi 0, %s45
    %s60 = sphi 0, %s46
    %s64 = sphi 0, %s64
    %s66 = sphi 0, %s64
    %s67 = sphi 0, %s66
    %s81 = sphi 0, %s67
    %s87 = sphi 0, %s89
    %s90 = sphi 0, %s87
    %s91 = sphi 0, %s90
    %s107 = sphi 0, %s91
  $region4: #{alexnet_fc_forward.13} parent=0 // loop_header_branch
    %12 = sbr.rel (%p10) target = $region8
  $region5: #{alexnet_fc_forward.13} parent=0 // loop_body
    %s14 = ssub.s32 %s9, 1
    %s15 = ssub.s32 %s9, 2
    %s16 = sadd.s32 %s9, 1
    %s17 = ssub.s32 %s9, %s16
    %p18 = scmp.eq.s32.totalorder %s17, 0
    %s20 = sadd.s32 %s19, 1
    %s21 = scalar_select %p18, %s19, %s20
    %p24 = pneg %p18
    %p25 = scmp.eq.s32.totalorder %s9, 1
    %p26 = por %p24, %p25
    %p27 = scmp.ne.s32.totalorder %s19, %s22
    %p28 = scmp.eq.s32.totalorder %s9, 0
    %p29 = por %p27, %p28
    %p30 = scmp.ne.s32.totalorder %s19, %s22
    %p31 = scmp.eq.s32.totalorder %s14, 1
    %p32 = por %p30, %p31
    %p33 = scmp.ne.s32.totalorder %s22, %s23
    %p34 = scmp.eq.s32.totalorder %s14, 0
    %p35 = por %p33, %p34
    %p36 = scmp.ne.s32.totalorder %s22, %s23
    %p37 = scmp.eq.s32.totalorder %s15, 1
    %p38 = por %p36, %p37
    %p40 = scmp.ne.s32.totalorder %s23, %s39
    %p41 = scmp.eq.s32.totalorder %s15, 0
    %p42 = por %p40, %p41
    %s44 = sadd.s32 %s43, 1
    %p47 = scmp.eq.s32.totalorder %s9, 1
    %p48 = scmp.ne.s32.totalorder %s43, %s45
    %p49 = scmp.eq.s32.totalorder %s9, 0
    %p50 = por %p48, %p49
    %p51 = scmp.ne.s32.totalorder %s43, %s45
    %p52 = scmp.eq.s32.totalorder %s14, 1
    %p53 = por %p51, %p52
    %p54 = scmp.ne.s32.totalorder %s45, %s46
    %p55 = scmp.eq.s32.totalorder %s14, 0
    %p56 = por %p54, %p55
    %p57 = scmp.ne.s32.totalorder %s45, %s46
    %p58 = scmp.eq.s32.totalorder %s15, 1
    %p59 = por %p57, %p58
    %p61 = scmp.ne.s32.totalorder %s46, %s60
    %p62 = scmp.eq.s32.totalorder %s15, 0
    %p63 = por %p61, %p62
    %s65 = sadd.s32 %s64, 1
    %p68 = scmp.eq.s32.totalorder %s9, 1
    %p69 = scmp.ne.s32.totalorder %s64, %s66
    %p70 = scmp.eq.s32.totalorder %s9, 0
    %p71 = por %p69, %p70
    %p72 = scmp.ne.s32.totalorder %s64, %s66
    %p73 = scmp.eq.s32.totalorder %s14, 1
    %p74 = por %p72, %p73
    %p75 = scmp.ne.s32.totalorder %s66, %s67
    %p76 = scmp.eq.s32.totalorder %s14, 0
    %p77 = por %p75, %p76
    %p78 = scmp.ne.s32.totalorder %s66, %s67
    %p79 = scmp.eq.s32.totalorder %s15, 1
    %p80 = por %p78, %p79
    %p82 = scmp.ne.s32.totalorder %s67, %s81
    %p83 = scmp.eq.s32.totalorder %s15, 0
    %p84 = por %p82, %p83
    %s85 = ssub.s32 %s9, %s16
    %p86 = scmp.eq.s32.totalorder %s85, 0
    %s88 = sadd.s32 %s87, 1
    %s89 = scalar_select %p86, %s87, %s88
    %p92 = pneg %p86
    %p93 = scmp.eq.s32.totalorder %s9, 1
    %p94 = por %p92, %p93
    %p95 = scmp.ne.s32.totalorder %s87, %s90
    %p96 = scmp.eq.s32.totalorder %s9, 0
    %p97 = por %p95, %p96
    %p98 = scmp.ne.s32.totalorder %s87, %s90
    %p99 = scmp.eq.s32.totalorder %s14, 1
    %p100 = por %p98, %p99
    %p101 = scmp.ne.s32.totalorder %s90, %s91
    %p102 = scmp.eq.s32.totalorder %s14, 0
    %p103 = por %p101, %p102
    %p104 = scmp.ne.s32.totalorder %s90, %s91
    %p105 = scmp.eq.s32.totalorder %s15, 1
    %p106 = por %p104, %p105
    %p108 = scmp.ne.s32.totalorder %s91, %s107
    %p109 = scmp.eq.s32.totalorder %s15, 0
    %p110 = por %p108, %p109
    %p111 = scmp.le.s32.totalorder 1, %s9
    %p112 = scmp.lt.s32.totalorder %s9, 3
    %p113 = pnand %p111, %p112
    %p114 = pneg %p113
    // Predicated region
    $region9: #{alexnet_fc_forward.13} parent=5 // pred_check
      _
    $region10: #{alexnet_fc_forward.13} parent=5 // pred_check_branch
      %116 = sbr.rel (%p113) target = $region12
    $region11: #{alexnet_fc_forward.13} parent=5 // pred_region
      %s117 = ssub.s32 %s9, 1
      // Predicated region
      $region13: #{alexnet_fc_forward.13} parent=11 // pred_check
        %p118 = pneg %p56
      $region14: #{alexnet_fc_forward.13} parent=11 // pred_check_branch
        %120 = sbr.rel (%p118) target = $region16
      $region15: #{alexnet_fc_forward.13} parent=11 // pred_region
        _
      $region16: #{alexnet_fc_forward.13} parent=11 // pred_fallthru
        _
      // Predicated region
      $region17: #{alexnet_fc_forward.13} parent=11 // pred_check
        %p121 = pneg %p77
      $region18: #{alexnet_fc_forward.13} parent=11 // pred_check_branch
        %123 = sbr.rel (%p121) target = $region20
      $region19: #{alexnet_fc_forward.13} parent=11 // pred_region
        _
      $region20: #{alexnet_fc_forward.13} parent=11 // pred_fallthru
        _
    $region12: #{alexnet_fc_forward.13} parent=5 // pred_fallthru
      _
    %p124 = scmp.lt.s32.totalorder %s9, 2
    // Predicated region
    $region21: #{alexnet_fc_forward.13} parent=5 // pred_check
      %p125 = pneg %p124
    $region22: #{alexnet_fc_forward.13} parent=5 // pred_check_branch
      %127 = sbr.rel (%p125) target = $region24
    $region23: #{alexnet_fc_forward.13} parent=5 // pred_region
      // Predicated region
      $region25: #{alexnet_fc_forward.13} parent=23 // pred_check
        %p128 = pneg %p29
      $region26: #{alexnet_fc_forward.13} parent=23 // pred_check_branch
        %130 = sbr.rel (%p128) target = $region28
      $region27: #{alexnet_fc_forward.13} parent=23 // pred_region
        %s131 = smul.u32 4, %s9
        %p132 = scmp.lt.s32.totalorder %s131, 7
        %s133 = scalar_select %p132, %s131, 7
        %s134 = smul.addr %s133, 5
        %s135 = smul.addr %s134, 4
        %s136 = scalar_lea.vmem %s0, %s135
        %s137 = smul.u32 4, %s9
      $region28: #{alexnet_fc_forward.13} parent=23 // pred_fallthru
        _
    $region24: #{alexnet_fc_forward.13} parent=5 // pred_fallthru
      _
    %p138 = scmp.le.s32.totalorder 1, %s9
    %p139 = scmp.lt.s32.totalorder %s9, 3
    %p140 = pnand %p138, %p139
    %p141 = pneg %p140
    // Predicated region
    $region29: #{alexnet_fc_forward.13} parent=5 // pred_check
      _
    $region30: #{alexnet_fc_forward.13} parent=5 // pred_check_branch
      %143 = sbr.rel (%p140) target = $region32
    $region31: #{alexnet_fc_forward.13} parent=5 // pred_region
      %s144 = ssub.s32 %s9, 1
      %s145 = smul.u32 4, %s14
      %p146 = scmp.lt.s32.totalorder %s145, 7
      %s147 = scalar_select %p146, %s145, 7
      %s148 = smul.addr %s147, 5
      %s149 = smul.addr %s148, 4
      %s150 = scalar_lea.vmem %s0, %s149
      %p151 = pneg %p35
      %p152 = pneg %p32
      %p153 = pneg %p56
      %p154 = pneg %p53
      %p155 = pneg %p77
      %p156 = pneg %p74
      %p157 = pneg %p103
      %p158 = pneg %p100
      %s159 = smul.u32 4, %s14
      %p160 = scmp.lt.s32.totalorder %s159, 7
      %s161 = scalar_select %p160, %s159, 7
      %s162 = smul.addr %s161, 8
      %s163 = scalar_lea.vmem %s3, %s162
      %s164 = smul.u32 4, %s14
      %p165 = scmp.lt.s32.totalorder %s164, 7
      %s166 = scalar_select %p165, %s164, 7
      %s167 = smul.addr %s166, 5
      %s168 = smul.addr %s167, 4
      %s169 = scalar_lea.vmem %s0, %s168
      %s170 = smul.u32 4, %s14
      %s171 = smul.u32 4, %s14
      %p172 = scmp.lt.s32.totalorder %s171, 7
      %s173 = scalar_select %p172, %s171, 7
      %s174 = smul.addr %s173, 8
      %s175 = scalar_lea.vmem %s3, %s174
      %s176 = smul.u32 4, %s14
      %v178 = vld [vmem:[%s169] sm:$0xff]
      %v179 = vld [vmem:[%s169 + $0x8] sm:$0xff]
      %v180 = vld [vmem:[%s169 + $0x10] sm:$0xf]
      %v181 = vld [vmem:[%s169 + $0x14] sm:$0xff]
      %v182 = vld [vmem:[%s169 + $0x1c] sm:$0xff]
      %v183 = vld [vmem:[%s169 + $0x24] sm:$0xf]
      %v184 = vld [vmem:[%s169 + $0x28] sm:$0xff]
      %v185 = vld [vmem:[%s169 + $0x30] sm:$0xff]
      %v186 = vld [vmem:[%s169 + $0x38] sm:$0xf]
      %v187 = vld [vmem:[%s169 + $0x3c] sm:$0xff]
      %v188 = vld [vmem:[%s169 + $0x44] sm:$0xff]
      %v189 = vld [vmem:[%s169 + $0x4c] sm:$0xf]
      %v190 = vld [vmem:[%s1] sm:$0xf]
      %v191 = vld [vmem:[%s1 + $0x4] sm:$0xf]
      %v192 = vld [vmem:[%s1 + $0x8] sm:$0xf]
      %v193 = vld [vmem:[%s1 + $0xc] sm:$0xf]
      %v194 = vld [vmem:[%s1 + $0x10] sm:$0xf]
      %v195 = vld [vmem:[%s1 + $0x14] sm:$0xf]
      %v196 = vld [vmem:[%s1 + $0x18] sm:$0xf]
      %v197 = vld [vmem:[%s1 + $0x1c] sm:$0xf]
      %v198 = vld [vmem:[%s1 + $0x20] sm:$0xf]
      %v199 = vld [vmem:[%s1 + $0x24] sm:$0xf]
      %v200 = vld [vmem:[%s1 + $0x28] sm:$0xf]
      %v201 = vld [vmem:[%s1 + $0x2c] sm:$0xf]
      %v202 = vld [vmem:[%s1 + $0x30] sm:$0xf]
      %v203 = vld [vmem:[%s1 + $0x34] sm:$0xf]
      %v204 = vld [vmem:[%s1 + $0x38] sm:$0xf]
      %v205 = vld [vmem:[%s1 + $0x3c] sm:$0xf]
      %v206 = vld [vmem:[%s1 + $0x40] sm:$0xf]
      %v207 = vld [vmem:[%s1 + $0x44] sm:$0xf]
      %v208 = vld [vmem:[%s1 + $0x48] sm:$0xf]
      %v209 = vld [vmem:[%s1 + $0x4c] sm:$0xf]
      %v210 = vld [vmem:[%s1 + $0x50] sm:$0xf]
      %v211 = vld [vmem:[%s1 + $0x54] sm:$0xf]
      %v212 = vld [vmem:[%s1 + $0x58] sm:$0xf]
      %v213 = vld [vmem:[%s1 + $0x5c] sm:$0xf]
      %v214 = vld [vmem:[%s1 + $0x60] sm:$0xf]
      %v215 = vld [vmem:[%s1 + $0x64] sm:$0xf]
      %v216 = vld [vmem:[%s1 + $0x68] sm:$0xf]
      %v217 = vld [vmem:[%s1 + $0x6c] sm:$0xf]
      %v218 = vld [vmem:[%s1 + $0x70] sm:$0xf]
      %v219 = vld [vmem:[%s1 + $0x74] sm:$0xf]
      %v220 = vld [vmem:[%s1 + $0x78] sm:$0xf]
      %v221 = vld [vmem:[%s1 + $0x7c] sm:$0xf]
      %v222 = vld [vmem:[%s1 + $0x80] sm:$0xf]
      %v223 = vld [vmem:[%s1 + $0x84] sm:$0xf]
      %v224 = vld [vmem:[%s1 + $0x88] sm:$0xf]
      %v225 = vld [vmem:[%s1 + $0x8c] sm:$0xf]
      %v226 = vld [vmem:[%s1 + $0x90] sm:$0xf]
      %v227 = vld [vmem:[%s1 + $0x94] sm:$0xf]
      %v228 = vld [vmem:[%s1 + $0x98] sm:$0xf]
      %v229 = vld [vmem:[%s1 + $0x9c] sm:$0xf]
      %v230 = vld [vmem:[%s1 + $0xa0] sm:$0xf]
      %v231 = vld [vmem:[%s1 + $0xa4] sm:$0xf]
      %v232 = vld [vmem:[%s1 + $0xa8] sm:$0xf]
      %v233 = vld [vmem:[%s1 + $0xac] sm:$0xf]
      %v234 = vld [vmem:[%s1 + $0xb0] sm:$0xf]
      %v235 = vld [vmem:[%s1 + $0xb4] sm:$0xf]
      %v236 = vld [vmem:[%s1 + $0xb8] sm:$0xf]
      %v237 = vld [vmem:[%s1 + $0xbc] sm:$0xf]
      %v238 = vld [vmem:[%s1 + $0xc0] sm:$0xf]
      %v239 = vld [vmem:[%s1 + $0xc4] sm:$0xf]
      %v240 = vld [vmem:[%s1 + $0xc8] sm:$0xf]
      %v241 = vld [vmem:[%s1 + $0xcc] sm:$0xf]
      %v242 = vld [vmem:[%s1 + $0xd0] sm:$0xf]
      %v243 = vld [vmem:[%s1 + $0xd4] sm:$0xf]
      %v244 = vld [vmem:[%s1 + $0xd8] sm:$0xf]
      %v245 = vld [vmem:[%s1 + $0xdc] sm:$0xf]
      %v246 = vld [vmem:[%s1 + $0xe0] sm:$0xf]
      %v247 = vld [vmem:[%s1 + $0xe4] sm:$0xf]
      %v248 = vld [vmem:[%s1 + $0xe8] sm:$0xf]
      %v249 = vld [vmem:[%s1 + $0xec] sm:$0xf]
      %v250 = vld [vmem:[%s1 + $0xf0] sm:$0xf]
      %v251 = vld [vmem:[%s1 + $0xf4] sm:$0xf]
      %v252 = vld [vmem:[%s1 + $0xf8] sm:$0xf]
      %v253 = vld [vmem:[%s1 + $0xfc] sm:$0xf]
      %v254 = vld [vmem:[%s1 + $0x100] sm:$0xf]
      %v255 = vld [vmem:[%s1 + $0x104] sm:$0xf]
      %v256 = vld [vmem:[%s1 + $0x108] sm:$0xf]
      %v257 = vld [vmem:[%s1 + $0x10c] sm:$0xf]
      %v258 = vld [vmem:[%s1 + $0x110] sm:$0xf]
      %v259 = vld [vmem:[%s1 + $0x114] sm:$0xf]
      %v260 = vld [vmem:[%s1 + $0x118] sm:$0xf]
      %v261 = vld [vmem:[%s1 + $0x11c] sm:$0xf]
      %v262 = vld [vmem:[%s2] sm:$0x1]
      %v264 = vlaneseq
      %v265 = vshrl.u32 %v264, 7
      %v266 = vsub.s32 0, %v265
      %v267 = vrot.slane %v262, %v266
      %v281 = vunpack.c.l.b16 %v178
      %v282 = vunpack.c.h.b16 %v178
      %v283 = vunpack.c.l.b16 %v179
      %v284 = vunpack.c.h.b16 %v179
      %v285 = vunpack.c.l.b16 %v180
      %v286 = vunpack.c.l.b16 %v181
      %v287 = vunpack.c.h.b16 %v181
      %v288 = vunpack.c.l.b16 %v182
      %v289 = vunpack.c.h.b16 %v182
      %v290 = vunpack.c.l.b16 %v183
      %v291 = vunpack.c.l.b16 %v184
      %v292 = vunpack.c.h.b16 %v184
      %v293 = vunpack.c.l.b16 %v185
      %v294 = vunpack.c.h.b16 %v185
      %v295 = vunpack.c.l.b16 %v186
      %v296 = vunpack.c.l.b16 %v187
      %v297 = vunpack.c.h.b16 %v187
      %v298 = vunpack.c.l.b16 %v188
      %v299 = vunpack.c.h.b16 %v188
      %v300 = vunpack.c.l.b16 %v189
      %v301 = vpack.c.b16 %v286, %v281
      %v302 = vpack.c.b16 %v287, %v282
      %v303 = vpack.c.b16 %v288, %v283
      %v304 = vpack.c.b16 %v289, %v284
      %v305 = vpack.c.b16 %v290, %v285
      %v306 = vpack.c.b16 %v296, %v291
      %v307 = vpack.c.b16 %v297, %v292
      %v308 = vpack.c.b16 %v298, %v293
      %v309 = vpack.c.b16 %v299, %v294
      %v310 = vpack.c.b16 %v300, %v295
      %v391 = vunpack.c.l.b16 %v190
      %v392 = vunpack.c.l.b16 %v191
      %v393 = vunpack.c.l.b16 %v192
      %v394 = vunpack.c.l.b16 %v193
      %v395 = vunpack.c.l.b16 %v194
      %v396 = vunpack.c.l.b16 %v195
      %v397 = vunpack.c.l.b16 %v196
      %v398 = vunpack.c.l.b16 %v197
      %v399 = vunpack.c.l.b16 %v198
      %v400 = vunpack.c.l.b16 %v199
      %v401 = vunpack.c.l.b16 %v200
      %v402 = vunpack.c.l.b16 %v201
      %v403 = vunpack.c.l.b16 %v202
      %v404 = vunpack.c.l.b16 %v203
      %v405 = vunpack.c.l.b16 %v204
      %v406 = vunpack.c.l.b16 %v205
      %v407 = vunpack.c.l.b16 %v206
      %v408 = vunpack.c.l.b16 %v207
      %v409 = vunpack.c.l.b16 %v208
      %v410 = vunpack.c.l.b16 %v209
      %v411 = vunpack.c.l.b16 %v210
      %v412 = vunpack.c.l.b16 %v211
      %v413 = vunpack.c.l.b16 %v212
      %v414 = vunpack.c.l.b16 %v213
      %v415 = vunpack.c.l.b16 %v214
      %v416 = vunpack.c.l.b16 %v215
      %v417 = vunpack.c.l.b16 %v216
      %v418 = vunpack.c.l.b16 %v217
      %v419 = vunpack.c.l.b16 %v218
      %v420 = vunpack.c.l.b16 %v219
      %v421 = vunpack.c.l.b16 %v220
      %v422 = vunpack.c.l.b16 %v221
      %v423 = vunpack.c.l.b16 %v222
      %v424 = vunpack.c.l.b16 %v223
      %v425 = vunpack.c.l.b16 %v224
      %v426 = vunpack.c.l.b16 %v225
      %v427 = vunpack.c.l.b16 %v226
      %v428 = vunpack.c.l.b16 %v227
      %v429 = vunpack.c.l.b16 %v228
      %v430 = vunpack.c.l.b16 %v229
      %v431 = vunpack.c.l.b16 %v230
      %v432 = vunpack.c.l.b16 %v231
      %v433 = vunpack.c.l.b16 %v232
      %v434 = vunpack.c.l.b16 %v233
      %v435 = vunpack.c.l.b16 %v234
      %v436 = vunpack.c.l.b16 %v235
      %v437 = vunpack.c.l.b16 %v236
      %v438 = vunpack.c.l.b16 %v237
      %v439 = vunpack.c.l.b16 %v238
      %v440 = vunpack.c.l.b16 %v239
      %v441 = vunpack.c.l.b16 %v240
      %v442 = vunpack.c.l.b16 %v241
      %v443 = vunpack.c.l.b16 %v242
      %v444 = vunpack.c.l.b16 %v243
      %v445 = vunpack.c.l.b16 %v244
      %v446 = vunpack.c.l.b16 %v245
      %v447 = vunpack.c.l.b16 %v246
      %v448 = vunpack.c.l.b16 %v247
      %v449 = vunpack.c.l.b16 %v248
      %v450 = vunpack.c.l.b16 %v249
      %v451 = vunpack.c.l.b16 %v250
      %v452 = vunpack.c.l.b16 %v251
      %v453 = vunpack.c.l.b16 %v252
      %v454 = vunpack.c.l.b16 %v253
      %v455 = vunpack.c.l.b16 %v254
      %v456 = vunpack.c.l.b16 %v255
      %v457 = vunpack.c.l.b16 %v256
      %v458 = vunpack.c.l.b16 %v257
      %v459 = vunpack.c.l.b16 %v258
      %v460 = vunpack.c.l.b16 %v259
      %v461 = vunpack.c.l.b16 %v260
      %v462 = vunpack.c.l.b16 %v261
      %v463 = vpack.c.b16 %v392, %v391
      %v464 = vpack.c.b16 %v394, %v393
      %v465 = vpack.c.b16 %v396, %v395
      %v466 = vpack.c.b16 %v398, %v397
      %v467 = vpack.c.b16 %v400, %v399
      %v468 = vpack.c.b16 %v402, %v401
      %v469 = vpack.c.b16 %v404, %v403
      %v470 = vpack.c.b16 %v406, %v405
      %v471 = vpack.c.b16 %v408, %v407
      %v472 = vpack.c.b16 %v410, %v409
      %v473 = vpack.c.b16 %v412, %v411
      %v474 = vpack.c.b16 %v414, %v413
      %v475 = vpack.c.b16 %v416, %v415
      %v476 = vpack.c.b16 %v418, %v417
      %v477 = vpack.c.b16 %v420, %v419
      %v478 = vpack.c.b16 %v422, %v421
      %v479 = vpack.c.b16 %v424, %v423
      %v480 = vpack.c.b16 %v426, %v425
      %v481 = vpack.c.b16 %v428, %v427
      %v482 = vpack.c.b16 %v430, %v429
      %v483 = vpack.c.b16 %v432, %v431
      %v484 = vpack.c.b16 %v434, %v433
      %v485 = vpack.c.b16 %v436, %v435
      %v486 = vpack.c.b16 %v438, %v437
      %v487 = vpack.c.b16 %v440, %v439
      %v488 = vpack.c.b16 %v442, %v441
      %v489 = vpack.c.b16 %v444, %v443
      %v490 = vpack.c.b16 %v446, %v445
      %v491 = vpack.c.b16 %v448, %v447
      %v492 = vpack.c.b16 %v450, %v449
      %v493 = vpack.c.b16 %v452, %v451
      %v494 = vpack.c.b16 %v454, %v453
      %v495 = vpack.c.b16 %v456, %v455
      %v496 = vpack.c.b16 %v458, %v457
      %v497 = vpack.c.b16 %v460, %v459
      %v498 = vpack.c.b16 %v462, %v461
      %vm535 = vcmask 523264
      %v537 = vsel %vm535, %v305, 0
      %v540 = vsel %vm535, %v310, 0
      %542 = vmatprep.subr.bf16.mxu0 0
      %543 = vmatpush1.bf16.msra.mxu0 %v470
      %544 = vmatprep.subr.bf16.mxu0 0
      %545 = vmatpush1.bf16.msra.mxu0 %v469
      %546 = vmatprep.subr.bf16.mxu0 0
      %547 = vmatpush1.bf16.msra.mxu0 %v468
      %548 = vmatprep.subr.bf16.mxu0 0
      %549 = vmatpush1.bf16.msra.mxu0 %v467
      %550 = vmatprep.subr.bf16.mxu0 0
      %551 = vmatpush1.bf16.msra.mxu0 %v466
      %552 = vmatprep.subr.bf16.mxu0 0
      %553 = vmatpush1.bf16.msra.mxu0 %v465
      %554 = vmatprep.subr.bf16.mxu0 0
      %555 = vmatpush1.bf16.msra.mxu0 %v464
      %556 = vmatprep.subr.bf16.mxu0 0
      %557 = vmatpush1.bf16.msra.mxu0 %v463
      %558 = vmatprep.subr.bf16.mxu0 0
      %559 = vmatpush2.bf16.msra.mxu0 %v478
      %560 = vmatprep.subr.bf16.mxu0 0
      %561 = vmatpush2.bf16.msra.mxu0 %v477
      %562 = vmatprep.subr.bf16.mxu0 0
      %563 = vmatpush2.bf16.msra.mxu0 %v476
      %564 = vmatprep.subr.bf16.mxu0 0
      %565 = vmatpush2.bf16.msra.mxu0 %v475
      %566 = vmatprep.subr.bf16.mxu0 0
      %567 = vmatpush2.bf16.msra.mxu0 %v474
      %568 = vmatprep.subr.bf16.mxu0 0
      %569 = vmatpush2.bf16.msra.mxu0 %v473
      %570 = vmatprep.subr.bf16.mxu0 0
      %571 = vmatpush2.bf16.msra.mxu0 %v472
      %572 = vmatprep.subr.bf16.mxu0 0
      %573 = vmatpush2.bf16.msra.mxu0 %v471
      %574 = vmatprep.mubr.bf16.mxu0 %v302
      %575 = vmatmul.mubr.bf16.gmra.mxu0 %v301
      %v576 = vpop.f32.mrf.mxu0
      %v577 = vadd.f32 %v267, %v576
      %v578 = vpop.f32.mrf.mxu0
      %v579 = vpop.f32.mrf.mxu0
      %v580 = vadd.f32 %v267, %v579
      %v581 = vpop.f32.mrf.mxu0
      %582 = vmatprep.mubr.bf16.mxu0 %v307
      %583 = vmatmul.mubr.bf16.gmra.mxu0 %v306
      %v584 = vpop.f32.mrf.mxu0
      %v585 = vadd.f32 %v267, %v584
      %v586 = vpop.f32.mrf.mxu0
      %v587 = vpop.f32.mrf.mxu0
      %v588 = vadd.f32 %v267, %v587
      %v589 = vpop.f32.mrf.mxu0
      %590 = vdwg.mxu0
      %591 = vmatprep.subr.bf16.mxu0 0
      %592 = vmatpush1.bf16.msra.mxu0 %v486
      %593 = vmatprep.subr.bf16.mxu0 0
      %594 = vmatpush1.bf16.msra.mxu0 %v485
      %595 = vmatprep.subr.bf16.mxu0 0
      %596 = vmatpush1.bf16.msra.mxu0 %v484
      %597 = vmatprep.subr.bf16.mxu0 0
      %598 = vmatpush1.bf16.msra.mxu0 %v483
      %599 = vmatprep.subr.bf16.mxu0 0
      %600 = vmatpush1.bf16.msra.mxu0 %v482
      %601 = vmatprep.subr.bf16.mxu0 0
      %602 = vmatpush1.bf16.msra.mxu0 %v481
      %603 = vmatprep.subr.bf16.mxu0 0
      %604 = vmatpush1.bf16.msra.mxu0 %v480
      %605 = vmatprep.subr.bf16.mxu0 0
      %606 = vmatpush1.bf16.msra.mxu0 %v479
      %607 = vmatprep.subr.bf16.mxu0 0
      %608 = vmatpush2.bf16.msra.mxu0 %v494
      %609 = vmatprep.subr.bf16.mxu0 0
      %610 = vmatpush2.bf16.msra.mxu0 %v493
      %611 = vmatprep.subr.bf16.mxu0 0
      %612 = vmatpush2.bf16.msra.mxu0 %v492
      %613 = vmatprep.subr.bf16.mxu0 0
      %614 = vmatpush2.bf16.msra.mxu0 %v491
      %615 = vmatprep.subr.bf16.mxu0 0
      %616 = vmatpush2.bf16.msra.mxu0 %v490
      %617 = vmatprep.subr.bf16.mxu0 0
      %618 = vmatpush2.bf16.msra.mxu0 %v489
      %619 = vmatprep.subr.bf16.mxu0 0
      %620 = vmatpush2.bf16.msra.mxu0 %v488
      %621 = vmatprep.subr.bf16.mxu0 0
      %622 = vmatpush2.bf16.msra.mxu0 %v487
      %623 = vmatprep.mubr.bf16.mxu0 %v304
      %624 = vmatmul.mubr.bf16.gmra.mxu0 %v303
      %v625 = vpop.f32.mrf.mxu0
      %v626 = vadd.f32 %v577, %v625
      %v627 = vpop.f32.mrf.mxu0
      %v628 = vpop.f32.mrf.mxu0
      %v629 = vadd.f32 %v580, %v628
      %v630 = vpop.f32.mrf.mxu0
      %631 = vmatprep.mubr.bf16.mxu0 %v309
      %632 = vmatmul.mubr.bf16.gmra.mxu0 %v308
      %v633 = vpop.f32.mrf.mxu0
      %v634 = vadd.f32 %v585, %v633
      %v635 = vpop.f32.mrf.mxu0
      %v636 = vpop.f32.mrf.mxu0
      %v637 = vadd.f32 %v588, %v636
      %v638 = vpop.f32.mrf.mxu0
      %639 = vdwg.mxu0
      %640 = vmatprep.subr.bf16.mxu0 0
      %641 = vmatpush1.bf16.msra.mxu0 0
      %642 = vmatprep.subr.bf16.mxu0 0
      %643 = vmatpush1.bf16.msra.mxu0 0
      %644 = vmatprep.subr.bf16.mxu0 0
      %645 = vmatpush1.bf16.msra.mxu0 0
      %646 = vmatprep.subr.bf16.mxu0 0
      %647 = vmatpush1.bf16.msra.mxu0 0
      %648 = vmatprep.subr.bf16.mxu0 0
      %649 = vmatpush1.bf16.msra.mxu0 %v498
      %650 = vmatprep.subr.bf16.mxu0 0
      %651 = vmatpush1.bf16.msra.mxu0 %v497
      %652 = vmatprep.subr.bf16.mxu0 0
      %653 = vmatpush1.bf16.msra.mxu0 %v496
      %654 = vmatprep.subr.bf16.mxu0 0
      %655 = vmatpush1.bf16.msra.mxu0 %v495
      %656 = vmatprep.subr.bf16.mxu0 0
      %657 = vmatpush2.bf16.msra.mxu0 0
      %658 = vmatprep.subr.bf16.mxu0 0
      %659 = vmatpush2.bf16.msra.mxu0 0
      %660 = vmatprep.subr.bf16.mxu0 0
      %661 = vmatpush2.bf16.msra.mxu0 0
      %662 = vmatprep.subr.bf16.mxu0 0
      %663 = vmatpush2.bf16.msra.mxu0 0
      %664 = vmatprep.subr.bf16.mxu0 0
      %665 = vmatpush2.bf16.msra.mxu0 0
      %666 = vmatprep.subr.bf16.mxu0 0
      %667 = vmatpush2.bf16.msra.mxu0 0
      %668 = vmatprep.subr.bf16.mxu0 0
      %669 = vmatpush2.bf16.msra.mxu0 0
      %670 = vmatprep.subr.bf16.mxu0 0
      %671 = vmatpush2.bf16.msra.mxu0 0
      %672 = vmatprep.mubr.bf16.mxu0 0
      %673 = vmatmul.mubr.bf16.gmra.mxu0 %v537
      %v674 = vpop.f32.mrf.mxu0
      %v675 = vadd.f32 %v626, %v674
      %v676 = vpop.f32.mrf.mxu0
      %v677 = vpop.f32.mrf.mxu0
      %v678 = vadd.f32 %v629, %v677
      %v679 = vpop.f32.mrf.mxu0
      %680 = vmatprep.mubr.bf16.mxu0 0
      %681 = vmatmul.mubr.bf16.gmra.mxu0 %v540
      %v682 = vpop.f32.mrf.mxu0
      %v683 = vadd.f32 %v634, %v682
      %v684 = vpop.f32.mrf.mxu0
      %v685 = vpop.f32.mrf.mxu0
      %v686 = vadd.f32 %v637, %v685
      %v687 = vpop.f32.mrf.mxu0
      %688 = vdwg.mxu0
      %v689 = vmax.f32 %v675, 0.0
      %v690 = vmax.f32 %v678, 0.0
      %v691 = vmax.f32 %v683, 0.0
      %v692 = vmax.f32 %v686, 0.0
      %vm693 = vcmask 785408
      %694 = vst.msk [vmem:[%s175] sm:$0xff] %vm693, %v689
      %695 = vst.msk [vmem:[%s175 + $0x8] sm:$0xff] %vm693, %v690
      %696 = vst.msk [vmem:[%s175 + $0x10] sm:$0xff] %vm693, %v691
      %697 = vst.msk [vmem:[%s175 + $0x18] sm:$0xff] %vm693, %v692
      %s698 = smul.u32 4, %s14
      %p699 = scmp.lt.s32.totalorder %s698, 7
      %s700 = scalar_select %p699, %s698, 7
      %s701 = smul.addr %s700, 8
      %s702 = scalar_lea.vmem %s3, %s701
      // Predicated region
      $region33: #{alexnet_fc_forward.13} parent=31 // pred_check
        %p703 = pneg %p100
      $region34: #{alexnet_fc_forward.13} parent=31 // pred_check_branch
        %705 = sbr.rel (%p703) target = $region36
      $region35: #{alexnet_fc_forward.13} parent=31 // pred_region
        %s706 = smul.u32 4, %s14
      $region36: #{alexnet_fc_forward.13} parent=31 // pred_fallthru
        _
    $region32: #{alexnet_fc_forward.13} parent=5 // pred_fallthru
      _
    %p707 = scmp.le.s32.totalorder 2, %s9
    // Predicated region
    $region37: #{alexnet_fc_forward.13} parent=5 // pred_check
      %p708 = pneg %p707
    $region38: #{alexnet_fc_forward.13} parent=5 // pred_check_branch
      %710 = sbr.rel (%p708) target = $region40
    $region39: #{alexnet_fc_forward.13} parent=5 // pred_region
      %s711 = ssub.s32 %s9, 2
      // Predicated region
      $region41: #{alexnet_fc_forward.13} parent=39 // pred_check
        %p712 = pneg %p106
      $region42: #{alexnet_fc_forward.13} parent=39 // pred_check_branch
        %714 = sbr.rel (%p712) target = $region44
      $region43: #{alexnet_fc_forward.13} parent=39 // pred_region
        %s715 = smul.u32 4, %s15
        %p716 = scmp.lt.s32.totalorder %s715, 7
        %s717 = scalar_select %p716, %s715, 7
        %s718 = smul.addr %s717, 8
        %s719 = scalar_lea.vmem %s3, %s718
      $region44: #{alexnet_fc_forward.13} parent=39 // pred_fallthru
        _
    $region40: #{alexnet_fc_forward.13} parent=5 // pred_fallthru
      _
  $region6: #{alexnet_fc_forward.13} parent=0 // loop_footer
    %s13 = sadd.s32 1, %s9
  $region7: #{alexnet_fc_forward.13} parent=0 // loop_footer_branch
    %8 = sbr.rel target = $region3
  $region8: #{alexnet_fc_forward.13} parent=0 // loop_exit
    _

// kernel: alexnet_fc_forward.14
$region0: #{alexnet_fc_forward.14}
  #allocation0 [shape = 'u32[]', space=smem, size = 0x4, offset = 0x4, fixed_abs, tag = 'smem constant byte address 0x4 - core index']
  #allocation1 [shape = 'u32[144,128]{1,0:T(1,128)}', space=vmem, size = 0x12000, scoped, tag = 'internal scratch']
  %s0 = inlined_call_operand.vmem [shape: bf16[64,864], index: 0, kind: input, shape index: {}]
  %s1 = inlined_call_operand.vmem [shape: bf16[864,96], index: 1, kind: input, shape index: {}]
  %s2 = inlined_call_operand.vmem [shape: f32[1,96], index: 2, kind: input, shape index: {}]
  %s3 = inlined_call_operand.vmem [shape: f32[64,96], index: 3, kind: output, shape index: {}]
  %s4 = sld [smem:[#allocation0]]
  $region45: #{alexnet_fc_forward.14} parent=0
    _
  %s6 = ssub.s32 1, %s4
  %s7 = scalar_select 0, %s6, %s4
  loop: start=0, step=1, limit=4
  $region2: #{alexnet_fc_forward.14} parent=0 // loop_pre_header
    _
  $region3: #{alexnet_fc_forward.14} parent=0 // loop_header
    %s9 = sphi 0, %s13
    %p10 = scmp.ge.s32.totalorder %s9, 4
    %s19 = sphi 0, %s21
    %s22 = sphi 0, %s19
    %s23 = sphi 0, %s22
    %s39 = sphi 0, %s23
    %s43 = sphi 0, %s43
    %s45 = sphi 0, %s43
    %s46 = sphi 0, %s45
    %s60 = sphi 0, %s46
    %s64 = sphi 0, %s64
    %s66 = sphi 0, %s64
    %s67 = sphi 0, %s66
    %s81 = sphi 0, %s67
    %s87 = sphi 0, %s89
    %s90 = sphi 0, %s87
    %s91 = sphi 0, %s90
    %s107 = sphi 0, %s91
  $region4: #{alexnet_fc_forward.14} parent=0 // loop_header_branch
    %12 = sbr.rel (%p10) target = $region8
  $region5: #{alexnet_fc_forward.14} parent=0 // loop_body
    %s14 = ssub.s32 %s9, 1
    %s15 = ssub.s32 %s9, 2
    %s16 = sadd.s32 %s9, 1
    %s17 = ssub.s32 %s9, %s16
    %p18 = scmp.eq.s32.totalorder %s17, 0
    %s20 = sadd.s32 %s19, 1
    %s21 = scalar_select %p18, %s19, %s20
    %p24 = pneg %p18
    %p25 = scmp.eq.s32.totalorder %s9, 1
    %p26 = por %p24, %p25
    %p27 = scmp.ne.s32.totalorder %s19, %s22
    %p28 = scmp.eq.s32.totalorder %s9, 0
    %p29 = por %p27, %p28
    %p30 = scmp.ne.s32.totalorder %s19, %s22
    %p31 = scmp.eq.s32.totalorder %s14, 1
    %p32 = por %p30, %p31
    %p33 = scmp.ne.s32.totalorder %s22, %s23
    %p34 = scmp.eq.s32.totalorder %s14, 0
    %p35 = por %p33, %p34
    %p36 = scmp.ne.s32.totalorder %s22, %s23
    %p37 = scmp.eq.s32.totalorder %s15, 1
    %p38 = por %p36, %p37
    %p40 = scmp.ne.s32.totalorder %s23, %s39
    %p41 = scmp.eq.s32.totalorder %s15, 0
    %p42 = por %p40, %p41
    %s44 = sadd.s32 %s43, 1
    %p47 = scmp.eq.s32.totalorder %s9, 1
    %p48 = scmp.ne.s32.totalorder %s43, %s45
    %p49 = scmp.eq.s32.totalorder %s9, 0
    %p50 = por %p48, %p49
    %p51 = scmp.ne.s32.totalorder %s43, %s45
    %p52 = scmp.eq.s32.totalorder %s14, 1
    %p53 = por %p51, %p52
    %p54 = scmp.ne.s32.totalorder %s45, %s46
    %p55 = scmp.eq.s32.totalorder %s14, 0
    %p56 = por %p54, %p55
    %p57 = scmp.ne.s32.totalorder %s45, %s46
    %p58 = scmp.eq.s32.totalorder %s15, 1
    %p59 = por %p57, %p58
    %p61 = scmp.ne.s32.totalorder %s46, %s60
    %p62 = scmp.eq.s32.totalorder %s15, 0
    %p63 = por %p61, %p62
    %s65 = sadd.s32 %s64, 1
    %p68 = scmp.eq.s32.totalorder %s9, 1
    %p69 = scmp.ne.s32.totalorder %s64, %s66
    %p70 = scmp.eq.s32.totalorder %s9, 0
    %p71 = por %p69, %p70
    %p72 = scmp.ne.s32.totalorder %s64, %s66
    %p73 = scmp.eq.s32.totalorder %s14, 1
    %p74 = por %p72, %p73
    %p75 = scmp.ne.s32.totalorder %s66, %s67
    %p76 = scmp.eq.s32.totalorder %s14, 0
    %p77 = por %p75, %p76
    %p78 = scmp.ne.s32.totalorder %s66, %s67
    %p79 = scmp.eq.s32.totalorder %s15, 1
    %p80 = por %p78, %p79
    %p82 = scmp.ne.s32.totalorder %s67, %s81
    %p83 = scmp.eq.s32.totalorder %s15, 0
    %p84 = por %p82, %p83
    %s85 = ssub.s32 %s9, %s16
    %p86 = scmp.eq.s32.totalorder %s85, 0
    %s88 = sadd.s32 %s87, 1
    %s89 = scalar_select %p86, %s87, %s88
    %p92 = pneg %p86
    %p93 = scmp.eq.s32.totalorder %s9, 1
    %p94 = por %p92, %p93
    %p95 = scmp.ne.s32.totalorder %s87, %s90
    %p96 = scmp.eq.s32.totalorder %s9, 0
    %p97 = por %p95, %p96
    %p98 = scmp.ne.s32.totalorder %s87, %s90
    %p99 = scmp.eq.s32.totalorder %s14, 1
    %p100 = por %p98, %p99
    %p101 = scmp.ne.s32.totalorder %s90, %s91
    %p102 = scmp.eq.s32.totalorder %s14, 0
    %p103 = por %p101, %p102
    %p104 = scmp.ne.s32.totalorder %s90, %s91
    %p105 = scmp.eq.s32.totalorder %s15, 1
    %p106 = por %p104, %p105
    %p108 = scmp.ne.s32.totalorder %s91, %s107
    %p109 = scmp.eq.s32.totalorder %s15, 0
    %p110 = por %p108, %p109
    %p111 = scmp.le.s32.totalorder 1, %s9
    %p112 = scmp.lt.s32.totalorder %s9, 3
    %p113 = pnand %p111, %p112
    %p114 = pneg %p113
    // Predicated region
    $region9: #{alexnet_fc_forward.14} parent=5 // pred_check
      _
    $region10: #{alexnet_fc_forward.14} parent=5 // pred_check_branch
      %116 = sbr.rel (%p113) target = $region12
    $region11: #{alexnet_fc_forward.14} parent=5 // pred_region
      %s117 = ssub.s32 %s9, 1
      // Predicated region
      $region13: #{alexnet_fc_forward.14} parent=11 // pred_check
        %p118 = pneg %p56
      $region14: #{alexnet_fc_forward.14} parent=11 // pred_check_branch
        %120 = sbr.rel (%p118) target = $region16
      $region15: #{alexnet_fc_forward.14} parent=11 // pred_region
        _
      $region16: #{alexnet_fc_forward.14} parent=11 // pred_fallthru
        _
      // Predicated region
      $region17: #{alexnet_fc_forward.14} parent=11 // pred_check
        %p121 = pneg %p77
      $region18: #{alexnet_fc_forward.14} parent=11 // pred_check_branch
        %123 = sbr.rel (%p121) target = $region20
      $region19: #{alexnet_fc_forward.14} parent=11 // pred_region
        _
      $region20: #{alexnet_fc_forward.14} parent=11 // pred_fallthru
        _
    $region12: #{alexnet_fc_forward.14} parent=5 // pred_fallthru
      _
    %p124 = scmp.lt.s32.totalorder %s9, 2
    // Predicated region
    $region21: #{alexnet_fc_forward.14} parent=5 // pred_check
      %p125 = pneg %p124
    $region22: #{alexnet_fc_forward.14} parent=5 // pred_check_branch
      %127 = sbr.rel (%p125) target = $region24
    $region23: #{alexnet_fc_forward.14} parent=5 // pred_region
      // Predicated region
      $region25: #{alexnet_fc_forward.14} parent=23 // pred_check
        %p128 = pneg %p29
      $region26: #{alexnet_fc_forward.14} parent=23 // pred_check_branch
        %130 = sbr.rel (%p128) target = $region28
      $region27: #{alexnet_fc_forward.14} parent=23 // pred_region
        %s131 = smul.u32 4, %s9
        %p132 = scmp.lt.s32.totalorder %s131, 7
        %s133 = scalar_select %p132, %s131, 7
        %s134 = smul.addr %s133, 7
        %s135 = smul.addr %s134, 4
        %s136 = scalar_lea.vmem %s0, %s135
        %s137 = smul.u32 4, %s9
      $region28: #{alexnet_fc_forward.14} parent=23 // pred_fallthru
        _
    $region24: #{alexnet_fc_forward.14} parent=5 // pred_fallthru
      _
    %p138 = scmp.le.s32.totalorder 1, %s9
    %p139 = scmp.lt.s32.totalorder %s9, 3
    %p140 = pnand %p138, %p139
    %p141 = pneg %p140
    // Predicated region
    $region29: #{alexnet_fc_forward.14} parent=5 // pred_check
      _
    $region30: #{alexnet_fc_forward.14} parent=5 // pred_check_branch
      %143 = sbr.rel (%p140) target = $region32
    $region31: #{alexnet_fc_forward.14} parent=5 // pred_region
      %s144 = ssub.s32 %s9, 1
      %s145 = smul.u32 4, %s14
      %p146 = scmp.lt.s32.totalorder %s145, 7
      %s147 = scalar_select %p146, %s145, 7
      %s148 = smul.addr %s147, 7
      %s149 = smul.addr %s148, 4
      %s150 = scalar_lea.vmem %s0, %s149
      %p151 = pneg %p35
      %p152 = pneg %p32
      %p153 = pneg %p56
      %p154 = pneg %p53
      %p155 = pneg %p77
      %p156 = pneg %p74
      %p157 = pneg %p103
      %p158 = pneg %p100
      %s159 = smul.u32 4, %s14
      %p160 = scmp.lt.s32.totalorder %s159, 7
      %s161 = scalar_select %p160, %s159, 7
      %s162 = smul.addr %s161, 8
      %s163 = scalar_lea.vmem %s3, %s162
      %s164 = smul.u32 4, %s14
      %p165 = scmp.lt.s32.totalorder %s164, 7
      %s166 = scalar_select %p165, %s164, 7
      %s167 = smul.addr %s166, 7
      %s168 = smul.addr %s167, 4
      %s169 = scalar_lea.vmem %s0, %s168
      %s170 = smul.u32 4, %s14
      %s171 = smul.u32 4, %s14
      %p172 = scmp.lt.s32.totalorder %s171, 7
      %s173 = scalar_select %p172, %s171, 7
      %s174 = smul.addr %s173, 8
      %s175 = scalar_lea.vmem %s3, %s174
      %s176 = smul.u32 4, %s14
      %v178 = vld [vmem:[%s169] sm:$0xff]
      %v179 = vld [vmem:[%s169 + $0x8] sm:$0xff]
      %v180 = vld [vmem:[%s169 + $0x10] sm:$0xff]
      %v181 = vld [vmem:[%s169 + $0x18] sm:$0xf]
      %v182 = vld [vmem:[%s169 + $0x1c] sm:$0xff]
      %v183 = vld [vmem:[%s169 + $0x24] sm:$0xff]
      %v184 = vld [vmem:[%s169 + $0x2c] sm:$0xff]
      %v185 = vld [vmem:[%s169 + $0x34] sm:$0xf]
      %v186 = vld [vmem:[%s169 + $0x38] sm:$0xff]
      %v187 = vld [vmem:[%s169 + $0x40] sm:$0xff]
      %v188 = vld [vmem:[%s169 + $0x48] sm:$0xff]
      %v189 = vld [vmem:[%s169 + $0x50] sm:$0xf]
      %v190 = vld [vmem:[%s169 + $0x54] sm:$0xff]
      %v191 = vld [vmem:[%s169 + $0x5c] sm:$0xff]
      %v192 = vld [vmem:[%s169 + $0x64] sm:$0xff]
      %v193 = vld [vmem:[%s169 + $0x6c] sm:$0xf]
      %v194 = vld [vmem:[%s1] sm:$0xf]
      %v195 = vld [vmem:[%s1 + $0x4] sm:$0xf]
      %v196 = vld [vmem:[%s1 + $0x8] sm:$0xf]
      %v197 = vld [vmem:[%s1 + $0xc] sm:$0xf]
      %v198 = vld [vmem:[%s1 + $0x10] sm:$0xf]
      %v199 = vld [vmem:[%s1 + $0x14] sm:$0xf]
      %v200 = vld [vmem:[%s1 + $0x18] sm:$0xf]
      %v201 = vld [vmem:[%s1 + $0x1c] sm:$0xf]
      %v202 = vld [vmem:[%s1 + $0x20] sm:$0xf]
      %v203 = vld [vmem:[%s1 + $0x24] sm:$0xf]
      %v204 = vld [vmem:[%s1 + $0x28] sm:$0xf]
      %v205 = vld [vmem:[%s1 + $0x2c] sm:$0xf]
      %v206 = vld [vmem:[%s1 + $0x30] sm:$0xf]
      %v207 = vld [vmem:[%s1 + $0x34] sm:$0xf]
      %v208 = vld [vmem:[%s1 + $0x38] sm:$0xf]
      %v209 = vld [vmem:[%s1 + $0x3c] sm:$0xf]
      %v210 = vld [vmem:[%s1 + $0x40] sm:$0xf]
      %v211 = vld [vmem:[%s1 + $0x44] sm:$0xf]
      %v212 = vld [vmem:[%s1 + $0x48] sm:$0xf]
      %v213 = vld [vmem:[%s1 + $0x4c] sm:$0xf]
      %v214 = vld [vmem:[%s1 + $0x50] sm:$0xf]
      %v215 = vld [vmem:[%s1 + $0x54] sm:$0xf]
      %v216 = vld [vmem:[%s1 + $0x58] sm:$0xf]
      %v217 = vld [vmem:[%s1 + $0x5c] sm:$0xf]
      %v218 = vld [vmem:[%s1 + $0x60] sm:$0xf]
      %v219 = vld [vmem:[%s1 + $0x64] sm:$0xf]
      %v220 = vld [vmem:[%s1 + $0x68] sm:$0xf]
      %v221 = vld [vmem:[%s1 + $0x6c] sm:$0xf]
      %v222 = vld [vmem:[%s1 + $0x70] sm:$0xf]
      %v223 = vld [vmem:[%s1 + $0x74] sm:$0xf]
      %v224 = vld [vmem:[%s1 + $0x78] sm:$0xf]
      %v225 = vld [vmem:[%s1 + $0x7c] sm:$0xf]
      %v226 = vld [vmem:[%s1 + $0x80] sm:$0xf]
      %v227 = vld [vmem:[%s1 + $0x84] sm:$0xf]
      %v228 = vld [vmem:[%s1 + $0x88] sm:$0xf]
      %v229 = vld [vmem:[%s1 + $0x8c] sm:$0xf]
      %v230 = vld [vmem:[%s1 + $0x90] sm:$0xf]
      %v231 = vld [vmem:[%s1 + $0x94] sm:$0xf]
      %v232 = vld [vmem:[%s1 + $0x98] sm:$0xf]
      %v233 = vld [vmem:[%s1 + $0x9c] sm:$0xf]
      %v234 = vld [vmem:[%s1 + $0xa0] sm:$0xf]
      %v235 = vld [vmem:[%s1 + $0xa4] sm:$0xf]
      %v236 = vld [vmem:[%s1 + $0xa8] sm:$0xf]
      %v237 = vld [vmem:[%s1 + $0xac] sm:$0xf]
      %v238 = vld [vmem:[%s1 + $0xb0] sm:$0xf]
      %v239 = vld [vmem:[%s1 + $0xb4] sm:$0xf]
      %v240 = vld [vmem:[%s1 + $0xb8] sm:$0xf]
      %v241 = vld [vmem:[%s1 + $0xbc] sm:$0xf]
      %v242 = vld [vmem:[%s1 + $0xc0] sm:$0xf]
      %v243 = vld [vmem:[%s1 + $0xc4] sm:$0xf]
      %v244 = vld [vmem:[%s1 + $0xc8] sm:$0xf]
      %v245 = vld [vmem:[%s1 + $0xcc] sm:$0xf]
      %v246 = vld [vmem:[%s1 + $0xd0] sm:$0xf]
      %v247 = vld [vmem:[%s1 + $0xd4] sm:$0xf]
      %v248 = vld [vmem:[%s1 + $0xd8] sm:$0xf]
      %v249 = vld [vmem:[%s1 + $0xdc] sm:$0xf]
      %v250 = vld [vmem:[%s1 + $0xe0] sm:$0xf]
      %v251 = vld [vmem:[%s1 + $0xe4] sm:$0xf]
      %v252 = vld [vmem:[%s1 + $0xe8] sm:$0xf]
      %v253 = vld [vmem:[%s1 + $0xec] sm:$0xf]
      %v254 = vld [vmem:[%s1 + $0xf0] sm:$0xf]
      %v255 = vld [vmem:[%s1 + $0xf4] sm:$0xf]
      %v256 = vld [vmem:[%s1 + $0xf8] sm:$0xf]
      %v257 = vld [vmem:[%s1 + $0xfc] sm:$0xf]
      %v258 = vld [vmem:[%s1 + $0x100] sm:$0xf]
      %v259 = vld [vmem:[%s1 + $0x104] sm:$0xf]
      %v260 = vld [vmem:[%s1 + $0x108] sm:$0xf]
      %v261 = vld [vmem:[%s1 + $0x10c] sm:$0xf]
      %v262 = vld [vmem:[%s1 + $0x110] sm:$0xf]
      %v263 = vld [vmem:[%s1 + $0x114] sm:$0xf]
      %v264 = vld [vmem:[%s1 + $0x118] sm:$0xf]
      %v265 = vld [vmem:[%s1 + $0x11c] sm:$0xf]
      %v266 = vld [vmem:[%s1 + $0x120] sm:$0xf]
      %v267 = vld [vmem:[%s1 + $0x124] sm:$0xf]
      %v268 = vld [vmem:[%s1 + $0x128] sm:$0xf]
      %v269 = vld [vmem:[%s1 + $0x12c] sm:$0xf]
      %v270 = vld [vmem:[%s1 + $0x130] sm:$0xf]
      %v271 = vld [vmem:[%s1 + $0x134] sm:$0xf]
      %v272 = vld [vmem:[%s1 + $0x138] sm:$0xf]
      %v273 = vld [vmem:[%s1 + $0x13c] sm:$0xf]
      %v274 = vld [vmem:[%s1 + $0x140] sm:$0xf]
      %v275 = vld [vmem:[%s1 + $0x144] sm:$0xf]
      %v276 = vld [vmem:[%s1 + $0x148] sm:$0xf]
      %v277 = vld [vmem:[%s1 + $0x14c] sm:$0xf]
      %v278 = vld [vmem:[%s1 + $0x150] sm:$0xf]
      %v279 = vld [vmem:[%s1 + $0x154] sm:$0xf]
      %v280 = vld [vmem:[%s1 + $0x158] sm:$0xf]
      %v281 = vld [vmem:[%s1 + $0x15c] sm:$0xf]
      %v282 = vld [vmem:[%s1 + $0x160] sm:$0xf]
      %v283 = vld [vmem:[%s1 + $0x164] sm:$0xf]
      %v284 = vld [vmem:[%s1 + $0x168] sm:$0xf]
      %v285 = vld [vmem:[%s1 + $0x16c] sm:$0xf]
      %v286 = vld [vmem:[%s1 + $0x170] sm:$0xf]
      %v287 = vld [vmem:[%s1 + $0x174] sm:$0xf]
      %v288 = vld [vmem:[%s1 + $0x178] sm:$0xf]
      %v289 = vld [vmem:[%s1 + $0x17c] sm:$0xf]
      %v290 = vld [vmem:[%s1 + $0x180] sm:$0xf]
      %v291 = vld [vmem:[%s1 + $0x184] sm:$0xf]
      %v292 = vld [vmem:[%s1 + $0x188] sm:$0xf]
      %v293 = vld [vmem:[%s1 + $0x18c] sm:$0xf]
      %v294 = vld [vmem:[%s1 + $0x190] sm:$0xf]
      %v295 = vld [vmem:[%s1 + $0x194] sm:$0xf]
      %v296 = vld [vmem:[%s1 + $0x198] sm:$0xf]
      %v297 = vld [vmem:[%s1 + $0x19c] sm:$0xf]
      %v298 = vld [vmem:[%s1 + $0x1a0] sm:$0xf]
      %v299 = vld [vmem:[%s1 + $0x1a4] sm:$0xf]
      %v300 = vld [vmem:[%s1 + $0x1a8] sm:$0xf]
      %v301 = vld [vmem:[%s1 + $0x1ac] sm:$0xf]
      %v302 = vld [vmem:[%s2] sm:$0x1]
      %v304 = vlaneseq
      %v305 = vshrl.u32 %v304, 7
      %v306 = vsub.s32 0, %v305
      %v307 = vrot.slane %v302, %v306
      %v325 = vunpack.c.l.b16 %v178
      %v326 = vunpack.c.h.b16 %v178
      %v327 = vunpack.c.l.b16 %v179
      %v328 = vunpack.c.h.b16 %v179
      %v329 = vunpack.c.l.b16 %v180
      %v330 = vunpack.c.h.b16 %v180
      %v331 = vunpack.c.l.b16 %v181
      %v332 = vunpack.c.l.b16 %v182
      %v333 = vunpack.c.h.b16 %v182
      %v334 = vunpack.c.l.b16 %v183
      %v335 = vunpack.c.h.b16 %v183
      %v336 = vunpack.c.l.b16 %v184
      %v337 = vunpack.c.h.b16 %v184
      %v338 = vunpack.c.l.b16 %v185
      %v339 = vunpack.c.l.b16 %v186
      %v340 = vunpack.c.h.b16 %v186
      %v341 = vunpack.c.l.b16 %v187
      %v342 = vunpack.c.h.b16 %v187
      %v343 = vunpack.c.l.b16 %v188
      %v344 = vunpack.c.h.b16 %v188
      %v345 = vunpack.c.l.b16 %v189
      %v346 = vunpack.c.l.b16 %v190
      %v347 = vunpack.c.h.b16 %v190
      %v348 = vunpack.c.l.b16 %v191
      %v349 = vunpack.c.h.b16 %v191
      %v350 = vunpack.c.l.b16 %v192
      %v351 = vunpack.c.h.b16 %v192
      %v352 = vunpack.c.l.b16 %v193
      %v353 = vpack.c.b16 %v332, %v325
      %v354 = vpack.c.b16 %v333, %v326
      %v355 = vpack.c.b16 %v334, %v327
      %v356 = vpack.c.b16 %v335, %v328
      %v357 = vpack.c.b16 %v336, %v329
      %v358 = vpack.c.b16 %v337, %v330
      %v359 = vpack.c.b16 %v338, %v331
      %v360 = vpack.c.b16 %v346, %v339
      %v361 = vpack.c.b16 %v347, %v340
      %v362 = vpack.c.b16 %v348, %v341
      %v363 = vpack.c.b16 %v349, %v342
      %v364 = vpack.c.b16 %v350, %v343
      %v365 = vpack.c.b16 %v351, %v344
      %v366 = vpack.c.b16 %v352, %v345
      %v487 = vunpack.c.l.b16 %v194
      %v488 = vunpack.c.l.b16 %v195
      %v489 = vunpack.c.l.b16 %v196
      %v490 = vunpack.c.l.b16 %v197
      %v491 = vunpack.c.l.b16 %v198
      %v492 = vunpack.c.l.b16 %v199
      %v493 = vunpack.c.l.b16 %v200
      %v494 = vunpack.c.l.b16 %v201
      %v495 = vunpack.c.l.b16 %v202
      %v496 = vunpack.c.l.b16 %v203
      %v497 = vunpack.c.l.b16 %v204
      %v498 = vunpack.c.l.b16 %v205
      %v499 = vunpack.c.l.b16 %v206
      %v500 = vunpack.c.l.b16 %v207
      %v501 = vunpack.c.l.b16 %v208
      %v502 = vunpack.c.l.b16 %v209
      %v503 = vunpack.c.l.b16 %v210
      %v504 = vunpack.c.l.b16 %v211
      %v505 = vunpack.c.l.b16 %v212
      %v506 = vunpack.c.l.b16 %v213
      %v507 = vunpack.c.l.b16 %v214
      %v508 = vunpack.c.l.b16 %v215
      %v509 = vunpack.c.l.b16 %v216
      %v510 = vunpack.c.l.b16 %v217
      %v511 = vunpack.c.l.b16 %v218
      %v512 = vunpack.c.l.b16 %v219
      %v513 = vunpack.c.l.b16 %v220
      %v514 = vunpack.c.l.b16 %v221
      %v515 = vunpack.c.l.b16 %v222
      %v516 = vunpack.c.l.b16 %v223
      %v517 = vunpack.c.l.b16 %v224
      %v518 = vunpack.c.l.b16 %v225
      %v519 = vunpack.c.l.b16 %v226
      %v520 = vunpack.c.l.b16 %v227
      %v521 = vunpack.c.l.b16 %v228
      %v522 = vunpack.c.l.b16 %v229
      %v523 = vunpack.c.l.b16 %v230
      %v524 = vunpack.c.l.b16 %v231
      %v525 = vunpack.c.l.b16 %v232
      %v526 = vunpack.c.l.b16 %v233
      %v527 = vunpack.c.l.b16 %v234
      %v528 = vunpack.c.l.b16 %v235
      %v529 = vunpack.c.l.b16 %v236
      %v530 = vunpack.c.l.b16 %v237
      %v531 = vunpack.c.l.b16 %v238
      %v532 = vunpack.c.l.b16 %v239
      %v533 = vunpack.c.l.b16 %v240
      %v534 = vunpack.c.l.b16 %v241
      %v535 = vunpack.c.l.b16 %v242
      %v536 = vunpack.c.l.b16 %v243
      %v537 = vunpack.c.l.b16 %v244
      %v538 = vunpack.c.l.b16 %v245
      %v539 = vunpack.c.l.b16 %v246
      %v540 = vunpack.c.l.b16 %v247
      %v541 = vunpack.c.l.b16 %v248
      %v542 = vunpack.c.l.b16 %v249
      %v543 = vunpack.c.l.b16 %v250
      %v544 = vunpack.c.l.b16 %v251
      %v545 = vunpack.c.l.b16 %v252
      %v546 = vunpack.c.l.b16 %v253
      %v547 = vunpack.c.l.b16 %v254
      %v548 = vunpack.c.l.b16 %v255
      %v549 = vunpack.c.l.b16 %v256
      %v550 = vunpack.c.l.b16 %v257
      %v551 = vunpack.c.l.b16 %v258
      %v552 = vunpack.c.l.b16 %v259
      %v553 = vunpack.c.l.b16 %v260
      %v554 = vunpack.c.l.b16 %v261
      %v555 = vunpack.c.l.b16 %v262
      %v556 = vunpack.c.l.b16 %v263
      %v557 = vunpack.c.l.b16 %v264
      %v558 = vunpack.c.l.b16 %v265
      %v559 = vunpack.c.l.b16 %v266
      %v560 = vunpack.c.l.b16 %v267
      %v561 = vunpack.c.l.b16 %v268
      %v562 = vunpack.c.l.b16 %v269
      %v563 = vunpack.c.l.b16 %v270
      %v564 = vunpack.c.l.b16 %v271
      %v565 = vunpack.c.l.b16 %v272
      %v566 = vunpack.c.l.b16 %v273
      %v567 = vunpack.c.l.b16 %v274
      %v568 = vunpack.c.l.b16 %v275
      %v569 = vunpack.c.l.b16 %v276
      %v570 = vunpack.c.l.b16 %v277
      %v571 = vunpack.c.l.b16 %v278
      %v572 = vunpack.c.l.b16 %v279
      %v573 = vunpack.c.l.b16 %v280
      %v574 = vunpack.c.l.b16 %v281
      %v575 = vunpack.c.l.b16 %v282
      %v576 = vunpack.c.l.b16 %v283
      %v577 = vunpack.c.l.b16 %v284
      %v578 = vunpack.c.l.b16 %v285
      %v579 = vunpack.c.l.b16 %v286
      %v580 = vunpack.c.l.b16 %v287
      %v581 = vunpack.c.l.b16 %v288
      %v582 = vunpack.c.l.b16 %v289
      %v583 = vunpack.c.l.b16 %v290
      %v584 = vunpack.c.l.b16 %v291
      %v585 = vunpack.c.l.b16 %v292
      %v586 = vunpack.c.l.b16 %v293
      %v587 = vunpack.c.l.b16 %v294
      %v588 = vunpack.c.l.b16 %v295
      %v589 = vunpack.c.l.b16 %v296
      %v590 = vunpack.c.l.b16 %v297
      %v591 = vunpack.c.l.b16 %v298
      %v592 = vunpack.c.l.b16 %v299
      %v593 = vunpack.c.l.b16 %v300
      %v594 = vunpack.c.l.b16 %v301
      %v595 = vpack.c.b16 %v488, %v487
      %v596 = vpack.c.b16 %v490, %v489
      %v597 = vpack.c.b16 %v492, %v491
      %v598 = vpack.c.b16 %v494, %v493
      %v599 = vpack.c.b16 %v496, %v495
      %v600 = vpack.c.b16 %v498, %v497
      %v601 = vpack.c.b16 %v500, %v499
      %v602 = vpack.c.b16 %v502, %v501
      %v603 = vpack.c.b16 %v504, %v503
      %v604 = vpack.c.b16 %v506, %v505
      %v605 = vpack.c.b16 %v508, %v507
      %v606 = vpack.c.b16 %v510, %v509
      %v607 = vpack.c.b16 %v512, %v511
      %v608 = vpack.c.b16 %v514, %v513
      %v609 = vpack.c.b16 %v516, %v515
      %v610 = vpack.c.b16 %v518, %v517
      %v611 = vpack.c.b16 %v520, %v519
      %v612 = vpack.c.b16 %v522, %v521
      %v613 = vpack.c.b16 %v524, %v523
      %v614 = vpack.c.b16 %v526, %v525
      %v615 = vpack.c.b16 %v528, %v527
      %v616 = vpack.c.b16 %v530, %v529
      %v617 = vpack.c.b16 %v532, %v531
      %v618 = vpack.c.b16 %v534, %v533
      %v619 = vpack.c.b16 %v536, %v535
      %v620 = vpack.c.b16 %v538, %v537
      %v621 = vpack.c.b16 %v540, %v539
      %v622 = vpack.c.b16 %v542, %v541
      %v623 = vpack.c.b16 %v544, %v543
      %v624 = vpack.c.b16 %v546, %v545
      %v625 = vpack.c.b16 %v548, %v547
      %v626 = vpack.c.b16 %v550, %v549
      %v627 = vpack.c.b16 %v552, %v551
      %v628 = vpack.c.b16 %v554, %v553
      %v629 = vpack.c.b16 %v556, %v555
      %v630 = vpack.c.b16 %v558, %v557
      %v631 = vpack.c.b16 %v560, %v559
      %v632 = vpack.c.b16 %v562, %v561
      %v633 = vpack.c.b16 %v564, %v563
      %v634 = vpack.c.b16 %v566, %v565
      %v635 = vpack.c.b16 %v568, %v567
      %v636 = vpack.c.b16 %v570, %v569
      %v637 = vpack.c.b16 %v572, %v571
      %v638 = vpack.c.b16 %v574, %v573
      %v639 = vpack.c.b16 %v576, %v575
      %v640 = vpack.c.b16 %v578, %v577
      %v641 = vpack.c.b16 %v580, %v579
      %v642 = vpack.c.b16 %v582, %v581
      %v643 = vpack.c.b16 %v584, %v583
      %v644 = vpack.c.b16 %v586, %v585
      %v645 = vpack.c.b16 %v588, %v587
      %v646 = vpack.c.b16 %v590, %v589
      %v647 = vpack.c.b16 %v592, %v591
      %v648 = vpack.c.b16 %v594, %v593
      %vm703 = vcmask 785408
      %v705 = vsel %vm703, %v359, 0
      %v708 = vsel %vm703, %v366, 0
      %710 = vmatprep.subr.bf16.mxu0 0
      %711 = vmatpush1.bf16.msra.mxu0 %v602
      %712 = vmatprep.subr.bf16.mxu0 0
      %713 = vmatpush1.bf16.msra.mxu0 %v601
      %714 = vmatprep.subr.bf16.mxu0 0
      %715 = vmatpush1.bf16.msra.mxu0 %v600
      %716 = vmatprep.subr.bf16.mxu0 0
      %717 = vmatpush1.bf16.msra.mxu0 %v599
      %718 = vmatprep.subr.bf16.mxu0 0
      %719 = vmatpush1.bf16.msra.mxu0 %v598
      %720 = vmatprep.subr.bf16.mxu0 0
      %721 = vmatpush1.bf16.msra.mxu0 %v597
      %722 = vmatprep.subr.bf16.mxu0 0
      %723 = vmatpush1.bf16.msra.mxu0 %v596
      %724 = vmatprep.subr.bf16.mxu0 0
      %725 = vmatpush1.bf16.msra.mxu0 %v595
      %726 = vmatprep.subr.bf16.mxu0 0
      %727 = vmatpush2.bf16.msra.mxu0 %v610
      %728 = vmatprep.subr.bf16.mxu0 0
      %729 = vmatpush2.bf16.msra.mxu0 %v609
      %730 = vmatprep.subr.bf16.mxu0 0
      %731 = vmatpush2.bf16.msra.mxu0 %v608
      %732 = vmatprep.subr.bf16.mxu0 0
      %733 = vmatpush2.bf16.msra.mxu0 %v607
      %734 = vmatprep.subr.bf16.mxu0 0
      %735 = vmatpush2.bf16.msra.mxu0 %v606
      %736 = vmatprep.subr.bf16.mxu0 0
      %737 = vmatpush2.bf16.msra.mxu0 %v605
      %738 = vmatprep.subr.bf16.mxu0 0
      %739 = vmatpush2.bf16.msra.mxu0 %v604
      %740 = vmatprep.subr.bf16.mxu0 0
      %741 = vmatpush2.bf16.msra.mxu0 %v603
      %742 = vmatprep.mubr.bf16.mxu0 %v354
      %743 = vmatmul.mubr.bf16.gmra.mxu0 %v353
      %v744 = vpop.f32.mrf.mxu0
      %v745 = vadd.f32 %v307, %v744
      %v746 = vpop.f32.mrf.mxu0
      %v747 = vpop.f32.mrf.mxu0
      %v748 = vadd.f32 %v307, %v747
      %v749 = vpop.f32.mrf.mxu0
      %750 = vmatprep.mubr.bf16.mxu0 %v361
      %751 = vmatmul.mubr.bf16.gmra.mxu0 %v360
      %v752 = vpop.f32.mrf.mxu0
      %v753 = vadd.f32 %v307, %v752
      %v754 = vpop.f32.mrf.mxu0
      %v755 = vpop.f32.mrf.mxu0
      %v756 = vadd.f32 %v307, %v755
      %v757 = vpop.f32.mrf.mxu0
      %758 = vdwg.mxu0
      %759 = vmatprep.subr.bf16.mxu0 0
      %760 = vmatpush1.bf16.msra.mxu0 %v618
      %761 = vmatprep.subr.bf16.mxu0 0
      %762 = vmatpush1.bf16.msra.mxu0 %v617
      %763 = vmatprep.subr.bf16.mxu0 0
      %764 = vmatpush1.bf16.msra.mxu0 %v616
      %765 = vmatprep.subr.bf16.mxu0 0
      %766 = vmatpush1.bf16.msra.mxu0 %v615
      %767 = vmatprep.subr.bf16.mxu0 0
      %768 = vmatpush1.bf16.msra.mxu0 %v614
      %769 = vmatprep.subr.bf16.mxu0 0
      %770 = vmatpush1.bf16.msra.mxu0 %v613
      %771 = vmatprep.subr.bf16.mxu0 0
      %772 = vmatpush1.bf16.msra.mxu0 %v612
      %773 = vmatprep.subr.bf16.mxu0 0
      %774 = vmatpush1.bf16.msra.mxu0 %v611
      %775 = vmatprep.subr.bf16.mxu0 0
      %776 = vmatpush2.bf16.msra.mxu0 %v626
      %777 = vmatprep.subr.bf16.mxu0 0
      %778 = vmatpush2.bf16.msra.mxu0 %v625
      %779 = vmatprep.subr.bf16.mxu0 0
      %780 = vmatpush2.bf16.msra.mxu0 %v624
      %781 = vmatprep.subr.bf16.mxu0 0
      %782 = vmatpush2.bf16.msra.mxu0 %v623
      %783 = vmatprep.subr.bf16.mxu0 0
      %784 = vmatpush2.bf16.msra.mxu0 %v622
      %785 = vmatprep.subr.bf16.mxu0 0
      %786 = vmatpush2.bf16.msra.mxu0 %v621
      %787 = vmatprep.subr.bf16.mxu0 0
      %788 = vmatpush2.bf16.msra.mxu0 %v620
      %789 = vmatprep.subr.bf16.mxu0 0
      %790 = vmatpush2.bf16.msra.mxu0 %v619
      %791 = vmatprep.mubr.bf16.mxu0 %v356
      %792 = vmatmul.mubr.bf16.gmra.mxu0 %v355
      %v793 = vpop.f32.mrf.mxu0
      %v794 = vadd.f32 %v745, %v793
      %v795 = vpop.f32.mrf.mxu0
      %v796 = vpop.f32.mrf.mxu0
      %v797 = vadd.f32 %v748, %v796
      %v798 = vpop.f32.mrf.mxu0
      %799 = vmatprep.mubr.bf16.mxu0 %v363
      %800 = vmatmul.mubr.bf16.gmra.mxu0 %v362
      %v801 = vpop.f32.mrf.mxu0
      %v802 = vadd.f32 %v753, %v801
      %v803 = vpop.f32.mrf.mxu0
      %v804 = vpop.f32.mrf.mxu0
      %v805 = vadd.f32 %v756, %v804
      %v806 = vpop.f32.mrf.mxu0
      %807 = vdwg.mxu0
      %808 = vmatprep.subr.bf16.mxu0 0
      %809 = vmatpush1.bf16.msra.mxu0 %v634
      %810 = vmatprep.subr.bf16.mxu0 0
      %811 = vmatpush1.bf16.msra.mxu0 %v633
      %812 = vmatprep.subr.bf16.mxu0 0
      %813 = vmatpush1.bf16.msra.mxu0 %v632
      %814 = vmatprep.subr.bf16.mxu0 0
      %815 = vmatpush1.bf16.msra.mxu0 %v631
      %816 = vmatprep.subr.bf16.mxu0 0
      %817 = vmatpush1.bf16.msra.mxu0 %v630
      %818 = vmatprep.subr.bf16.mxu0 0
      %819 = vmatpush1.bf16.msra.mxu0 %v629
      %820 = vmatprep.subr.bf16.mxu0 0
      %821 = vmatpush1.bf16.msra.mxu0 %v628
      %822 = vmatprep.subr.bf16.mxu0 0
      %823 = vmatpush1.bf16.msra.mxu0 %v627
      %824 = vmatprep.subr.bf16.mxu0 0
      %825 = vmatpush2.bf16.msra.mxu0 %v642
      %826 = vmatprep.subr.bf16.mxu0 0
      %827 = vmatpush2.bf16.msra.mxu0 %v641
      %828 = vmatprep.subr.bf16.mxu0 0
      %829 = vmatpush2.bf16.msra.mxu0 %v640
      %830 = vmatprep.subr.bf16.mxu0 0
      %831 = vmatpush2.bf16.msra.mxu0 %v639
      %832 = vmatprep.subr.bf16.mxu0 0
      %833 = vmatpush2.bf16.msra.mxu0 %v638
      %834 = vmatprep.subr.bf16.mxu0 0
      %835 = vmatpush2.bf16.msra.mxu0 %v637
      %836 = vmatprep.subr.bf16.mxu0 0
      %837 = vmatpush2.bf16.msra.mxu0 %v636
      %838 = vmatprep.subr.bf16.mxu0 0
      %839 = vmatpush2.bf16.msra.mxu0 %v635
      %840 = vmatprep.mubr.bf16.mxu0 %v358
      %841 = vmatmul.mubr.bf16.gmra.mxu0 %v357
      %v842 = vpop.f32.mrf.mxu0
      %v843 = vadd.f32 %v794, %v842
      %v844 = vpop.f32.mrf.mxu0
      %v845 = vpop.f32.mrf.mxu0
      %v846 = vadd.f32 %v797, %v845
      %v847 = vpop.f32.mrf.mxu0
      %848 = vmatprep.mubr.bf16.mxu0 %v365
      %849 = vmatmul.mubr.bf16.gmra.mxu0 %v364
      %v850 = vpop.f32.mrf.mxu0
      %v851 = vadd.f32 %v802, %v850
      %v852 = vpop.f32.mrf.mxu0
      %v853 = vpop.f32.mrf.mxu0
      %v854 = vadd.f32 %v805, %v853
      %v855 = vpop.f32.mrf.mxu0
      %856 = vdwg.mxu0
      %857 = vmatprep.subr.bf16.mxu0 0
      %858 = vmatpush1.bf16.msra.mxu0 0
      %859 = vmatprep.subr.bf16.mxu0 0
      %860 = vmatpush1.bf16.msra.mxu0 0
      %861 = vmatprep.subr.bf16.mxu0 0
      %862 = vmatpush1.bf16.msra.mxu0 %v648
      %863 = vmatprep.subr.bf16.mxu0 0
      %864 = vmatpush1.bf16.msra.mxu0 %v647
      %865 = vmatprep.subr.bf16.mxu0 0
      %866 = vmatpush1.bf16.msra.mxu0 %v646
      %867 = vmatprep.subr.bf16.mxu0 0
      %868 = vmatpush1.bf16.msra.mxu0 %v645
      %869 = vmatprep.subr.bf16.mxu0 0
      %870 = vmatpush1.bf16.msra.mxu0 %v644
      %871 = vmatprep.subr.bf16.mxu0 0
      %872 = vmatpush1.bf16.msra.mxu0 %v643
      %873 = vmatprep.subr.bf16.mxu0 0
      %874 = vmatpush2.bf16.msra.mxu0 0
      %875 = vmatprep.subr.bf16.mxu0 0
      %876 = vmatpush2.bf16.msra.mxu0 0
      %877 = vmatprep.subr.bf16.mxu0 0
      %878 = vmatpush2.bf16.msra.mxu0 0
      %879 = vmatprep.subr.bf16.mxu0 0
      %880 = vmatpush2.bf16.msra.mxu0 0
      %881 = vmatprep.subr.bf16.mxu0 0
      %882 = vmatpush2.bf16.msra.mxu0 0
      %883 = vmatprep.subr.bf16.mxu0 0
      %884 = vmatpush2.bf16.msra.mxu0 0
      %885 = vmatprep.subr.bf16.mxu0 0
      %886 = vmatpush2.bf16.msra.mxu0 0
      %887 = vmatprep.subr.bf16.mxu0 0
      %888 = vmatpush2.bf16.msra.mxu0 0
      %889 = vmatprep.mubr.bf16.mxu0 0
      %890 = vmatmul.mubr.bf16.gmra.mxu0 %v705
      %v891 = vpop.f32.mrf.mxu0
      %v892 = vadd.f32 %v843, %v891
      %v893 = vpop.f32.mrf.mxu0
      %v894 = vpop.f32.mrf.mxu0
      %v895 = vadd.f32 %v846, %v894
      %v896 = vpop.f32.mrf.mxu0
      %897 = vmatprep.mubr.bf16.mxu0 0
      %898 = vmatmul.mubr.bf16.gmra.mxu0 %v708
      %v899 = vpop.f32.mrf.mxu0
      %v900 = vadd.f32 %v851, %v899
      %v901 = vpop.f32.mrf.mxu0
      %v902 = vpop.f32.mrf.mxu0
      %v903 = vadd.f32 %v854, %v902
      %v904 = vpop.f32.mrf.mxu0
      %905 = vdwg.mxu0
      %v906 = vmax.f32 %v892, 0.0
      %v907 = vmax.f32 %v895, 0.0
      %v908 = vmax.f32 %v900, 0.0
      %v909 = vmax.f32 %v903, 0.0
      %910 = vst.msk [vmem:[%s175] sm:$0xff] %vm703, %v906
      %911 = vst.msk [vmem:[%s175 + $0x8] sm:$0xff] %vm703, %v907
      %912 = vst.msk [vmem:[%s175 + $0x10] sm:$0xff] %vm703, %v908
      %913 = vst.msk [vmem:[%s175 + $0x18] sm:$0xff] %vm703, %v909
      %s914 = smul.u32 4, %s14
      %p915 = scmp.lt.s32.totalorder %s914, 7
      %s916 = scalar_select %p915, %s914, 7
      %s917 = smul.addr %s916, 8
      %s918 = scalar_lea.vmem %s3, %s917
      // Predicated region
      $region33: #{alexnet_fc_forward.14} parent=31 // pred_check
        %p919 = pneg %p100
      $region34: #{alexnet_fc_forward.14} parent=31 // pred_check_branch
        %921 = sbr.rel (%p919) target = $region36
      $region35: #{alexnet_fc_forward.14} parent=31 // pred_region
        %s922 = smul.u32 4, %s14
      $region36: #{alexnet_fc_forward.14} parent=31 // pred_fallthru
        _
    $region32: #{alexnet_fc_forward.14} parent=5 // pred_fallthru
      _
    %p923 = scmp.le.s32.totalorder 2, %s9
    // Predicated region
    $region37: #{alexnet_fc_forward.14} parent=5 // pred_check
      %p924 = pneg %p923
    $region38: #{alexnet_fc_forward.14} parent=5 // pred_check_branch
      %926 = sbr.rel (%p924) target = $region40
    $region39: #{alexnet_fc_forward.14} parent=5 // pred_region
      %s927 = ssub.s32 %s9, 2
      // Predicated region
      $region41: #{alexnet_fc_forward.14} parent=39 // pred_check
        %p928 = pneg %p106
      $region42: #{alexnet_fc_forward.14} parent=39 // pred_check_branch
        %930 = sbr.rel (%p928) target = $region44
      $region43: #{alexnet_fc_forward.14} parent=39 // pred_region
        %s931 = smul.u32 4, %s15
        %p932 = scmp.lt.s32.totalorder %s931, 7
        %s933 = scalar_select %p932, %s931, 7
        %s934 = smul.addr %s933, 8
        %s935 = scalar_lea.vmem %s3, %s934
      $region44: #{alexnet_fc_forward.14} parent=39 // pred_fallthru
        _
    $region40: #{alexnet_fc_forward.14} parent=5 // pred_fallthru
      _
  $region6: #{alexnet_fc_forward.14} parent=0 // loop_footer
    %s13 = sadd.s32 1, %s9
  $region7: #{alexnet_fc_forward.14} parent=0 // loop_footer_branch
    %8 = sbr.rel target = $region3
  $region8: #{alexnet_fc_forward.14} parent=0 // loop_exit
    _

// kernel: alexnet_fc_forward.15
$region0: #{alexnet_fc_forward.15}
  #allocation0 [shape = 'u32[]', space=smem, size = 0x4, offset = 0x4, fixed_abs, tag = 'smem constant byte address 0x4 - core index']
  #allocation1 [shape = 'u32[144,128]{1,0:T(1,128)}', space=vmem, size = 0x12000, scoped, tag = 'internal scratch']
  %s0 = inlined_call_operand.vmem [shape: bf16[64,864], index: 0, kind: input, shape index: {}]
  %s1 = inlined_call_operand.vmem [shape: bf16[864,64], index: 1, kind: input, shape index: {}]
  %s2 = inlined_call_operand.vmem [shape: f32[1,64], index: 2, kind: input, shape index: {}]
  %s3 = inlined_call_operand.vmem [shape: f32[64,64], index: 3, kind: output, shape index: {}]
  %s4 = sld [smem:[#allocation0]]
  $region45: #{alexnet_fc_forward.15} parent=0
    _
  %s6 = ssub.s32 1, %s4
  %s7 = scalar_select 0, %s6, %s4
  loop: start=0, step=1, limit=4
  $region2: #{alexnet_fc_forward.15} parent=0 // loop_pre_header
    _
  $region3: #{alexnet_fc_forward.15} parent=0 // loop_header
    %s9 = sphi 0, %s13
    %p10 = scmp.ge.s32.totalorder %s9, 4
    %s19 = sphi 0, %s21
    %s22 = sphi 0, %s19
    %s23 = sphi 0, %s22
    %s39 = sphi 0, %s23
    %s43 = sphi 0, %s43
    %s45 = sphi 0, %s43
    %s46 = sphi 0, %s45
    %s60 = sphi 0, %s46
    %s64 = sphi 0, %s64
    %s66 = sphi 0, %s64
    %s67 = sphi 0, %s66
    %s81 = sphi 0, %s67
    %s87 = sphi 0, %s89
    %s90 = sphi 0, %s87
    %s91 = sphi 0, %s90
    %s107 = sphi 0, %s91
  $region4: #{alexnet_fc_forward.15} parent=0 // loop_header_branch
    %12 = sbr.rel (%p10) target = $region8
  $region5: #{alexnet_fc_forward.15} parent=0 // loop_body
    %s14 = ssub.s32 %s9, 1
    %s15 = ssub.s32 %s9, 2
    %s16 = sadd.s32 %s9, 1
    %s17 = ssub.s32 %s9, %s16
    %p18 = scmp.eq.s32.totalorder %s17, 0
    %s20 = sadd.s32 %s19, 1
    %s21 = scalar_select %p18, %s19, %s20
    %p24 = pneg %p18
    %p25 = scmp.eq.s32.totalorder %s9, 1
    %p26 = por %p24, %p25
    %p27 = scmp.ne.s32.totalorder %s19, %s22
    %p28 = scmp.eq.s32.totalorder %s9, 0
    %p29 = por %p27, %p28
    %p30 = scmp.ne.s32.totalorder %s19, %s22
    %p31 = scmp.eq.s32.totalorder %s14, 1
    %p32 = por %p30, %p31
    %p33 = scmp.ne.s32.totalorder %s22, %s23
    %p34 = scmp.eq.s32.totalorder %s14, 0
    %p35 = por %p33, %p34
    %p36 = scmp.ne.s32.totalorder %s22, %s23
    %p37 = scmp.eq.s32.totalorder %s15, 1
    %p38 = por %p36, %p37
    %p40 = scmp.ne.s32.totalorder %s23, %s39
    %p41 = scmp.eq.s32.totalorder %s15, 0
    %p42 = por %p40, %p41
    %s44 = sadd.s32 %s43, 1
    %p47 = scmp.eq.s32.totalorder %s9, 1
    %p48 = scmp.ne.s32.totalorder %s43, %s45
    %p49 = scmp.eq.s32.totalorder %s9, 0
    %p50 = por %p48, %p49
    %p51 = scmp.ne.s32.totalorder %s43, %s45
    %p52 = scmp.eq.s32.totalorder %s14, 1
    %p53 = por %p51, %p52
    %p54 = scmp.ne.s32.totalorder %s45, %s46
    %p55 = scmp.eq.s32.totalorder %s14, 0
    %p56 = por %p54, %p55
    %p57 = scmp.ne.s32.totalorder %s45, %s46
    %p58 = scmp.eq.s32.totalorder %s15, 1
    %p59 = por %p57, %p58
    %p61 = scmp.ne.s32.totalorder %s46, %s60
    %p62 = scmp.eq.s32.totalorder %s15, 0
    %p63 = por %p61, %p62
    %s65 = sadd.s32 %s64, 1
    %p68 = scmp.eq.s32.totalorder %s9, 1
    %p69 = scmp.ne.s32.totalorder %s64, %s66
    %p70 = scmp.eq.s32.totalorder %s9, 0
    %p71 = por %p69, %p70
    %p72 = scmp.ne.s32.totalorder %s64, %s66
    %p73 = scmp.eq.s32.totalorder %s14, 1
    %p74 = por %p72, %p73
    %p75 = scmp.ne.s32.totalorder %s66, %s67
    %p76 = scmp.eq.s32.totalorder %s14, 0
    %p77 = por %p75, %p76
    %p78 = scmp.ne.s32.totalorder %s66, %s67
    %p79 = scmp.eq.s32.totalorder %s15, 1
    %p80 = por %p78, %p79
    %p82 = scmp.ne.s32.totalorder %s67, %s81
    %p83 = scmp.eq.s32.totalorder %s15, 0
    %p84 = por %p82, %p83
    %s85 = ssub.s32 %s9, %s16
    %p86 = scmp.eq.s32.totalorder %s85, 0
    %s88 = sadd.s32 %s87, 1
    %s89 = scalar_select %p86, %s87, %s88
    %p92 = pneg %p86
    %p93 = scmp.eq.s32.totalorder %s9, 1
    %p94 = por %p92, %p93
    %p95 = scmp.ne.s32.totalorder %s87, %s90
    %p96 = scmp.eq.s32.totalorder %s9, 0
    %p97 = por %p95, %p96
    %p98 = scmp.ne.s32.totalorder %s87, %s90
    %p99 = scmp.eq.s32.totalorder %s14, 1
    %p100 = por %p98, %p99
    %p101 = scmp.ne.s32.totalorder %s90, %s91
    %p102 = scmp.eq.s32.totalorder %s14, 0
    %p103 = por %p101, %p102
    %p104 = scmp.ne.s32.totalorder %s90, %s91
    %p105 = scmp.eq.s32.totalorder %s15, 1
    %p106 = por %p104, %p105
    %p108 = scmp.ne.s32.totalorder %s91, %s107
    %p109 = scmp.eq.s32.totalorder %s15, 0
    %p110 = por %p108, %p109
    %p111 = scmp.le.s32.totalorder 1, %s9
    %p112 = scmp.lt.s32.totalorder %s9, 3
    %p113 = pnand %p111, %p112
    %p114 = pneg %p113
    // Predicated region
    $region9: #{alexnet_fc_forward.15} parent=5 // pred_check
      _
    $region10: #{alexnet_fc_forward.15} parent=5 // pred_check_branch
      %116 = sbr.rel (%p113) target = $region12
    $region11: #{alexnet_fc_forward.15} parent=5 // pred_region
      %s117 = ssub.s32 %s9, 1
      // Predicated region
      $region13: #{alexnet_fc_forward.15} parent=11 // pred_check
        %p118 = pneg %p56
      $region14: #{alexnet_fc_forward.15} parent=11 // pred_check_branch
        %120 = sbr.rel (%p118) target = $region16
      $region15: #{alexnet_fc_forward.15} parent=11 // pred_region
        _
      $region16: #{alexnet_fc_forward.15} parent=11 // pred_fallthru
        _
      // Predicated region
      $region17: #{alexnet_fc_forward.15} parent=11 // pred_check
        %p121 = pneg %p77
      $region18: #{alexnet_fc_forward.15} parent=11 // pred_check_branch
        %123 = sbr.rel (%p121) target = $region20
      $region19: #{alexnet_fc_forward.15} parent=11 // pred_region
        _
      $region20: #{alexnet_fc_forward.15} parent=11 // pred_fallthru
        _
    $region12: #{alexnet_fc_forward.15} parent=5 // pred_fallthru
      _
    %p124 = scmp.lt.s32.totalorder %s9, 2
    // Predicated region
    $region21: #{alexnet_fc_forward.15} parent=5 // pred_check
      %p125 = pneg %p124
    $region22: #{alexnet_fc_forward.15} parent=5 // pred_check_branch
      %127 = sbr.rel (%p125) target = $region24
    $region23: #{alexnet_fc_forward.15} parent=5 // pred_region
      // Predicated region
      $region25: #{alexnet_fc_forward.15} parent=23 // pred_check
        %p128 = pneg %p29
      $region26: #{alexnet_fc_forward.15} parent=23 // pred_check_branch
        %130 = sbr.rel (%p128) target = $region28
      $region27: #{alexnet_fc_forward.15} parent=23 // pred_region
        %s131 = smul.u32 4, %s9
        %p132 = scmp.lt.s32.totalorder %s131, 7
        %s133 = scalar_select %p132, %s131, 7
        %s134 = smul.addr %s133, 7
        %s135 = smul.addr %s134, 4
        %s136 = scalar_lea.vmem %s0, %s135
        %s137 = smul.u32 4, %s9
      $region28: #{alexnet_fc_forward.15} parent=23 // pred_fallthru
        _
    $region24: #{alexnet_fc_forward.15} parent=5 // pred_fallthru
      _
    %p138 = scmp.le.s32.totalorder 1, %s9
    %p139 = scmp.lt.s32.totalorder %s9, 3
    %p140 = pnand %p138, %p139
    %p141 = pneg %p140
    // Predicated region
    $region29: #{alexnet_fc_forward.15} parent=5 // pred_check
      _
    $region30: #{alexnet_fc_forward.15} parent=5 // pred_check_branch
      %143 = sbr.rel (%p140) target = $region32
    $region31: #{alexnet_fc_forward.15} parent=5 // pred_region
      %s144 = ssub.s32 %s9, 1
      %s145 = smul.u32 4, %s14
      %p146 = scmp.lt.s32.totalorder %s145, 7
      %s147 = scalar_select %p146, %s145, 7
      %s148 = smul.addr %s147, 7
      %s149 = smul.addr %s148, 4
      %s150 = scalar_lea.vmem %s0, %s149
      %p151 = pneg %p35
      %p152 = pneg %p32
      %p153 = pneg %p56
      %p154 = pneg %p53
      %p155 = pneg %p77
      %p156 = pneg %p74
      %p157 = pneg %p103
      %p158 = pneg %p100
      %s159 = smul.u32 4, %s14
      %p160 = scmp.lt.s32.totalorder %s159, 7
      %s161 = scalar_select %p160, %s159, 7
      %s162 = smul.addr %s161, 8
      %s163 = scalar_lea.vmem %s3, %s162
      %s164 = smul.u32 4, %s14
      %p165 = scmp.lt.s32.totalorder %s164, 7
      %s166 = scalar_select %p165, %s164, 7
      %s167 = smul.addr %s166, 7
      %s168 = smul.addr %s167, 4
      %s169 = scalar_lea.vmem %s0, %s168
      %s170 = smul.u32 4, %s14
      %s171 = smul.u32 4, %s14
      %p172 = scmp.lt.s32.totalorder %s171, 7
      %s173 = scalar_select %p172, %s171, 7
      %s174 = smul.addr %s173, 8
      %s175 = scalar_lea.vmem %s3, %s174
      %s176 = smul.u32 4, %s14
      %v178 = vld [vmem:[%s169] sm:$0xff]
      %v179 = vld [vmem:[%s169 + $0x8] sm:$0xff]
      %v180 = vld [vmem:[%s169 + $0x10] sm:$0xff]
      %v181 = vld [vmem:[%s169 + $0x18] sm:$0xf]
      %v182 = vld [vmem:[%s169 + $0x1c] sm:$0xff]
      %v183 = vld [vmem:[%s169 + $0x24] sm:$0xff]
      %v184 = vld [vmem:[%s169 + $0x2c] sm:$0xff]
      %v185 = vld [vmem:[%s169 + $0x34] sm:$0xf]
      %v186 = vld [vmem:[%s169 + $0x38] sm:$0xff]
      %v187 = vld [vmem:[%s169 + $0x40] sm:$0xff]
      %v188 = vld [vmem:[%s169 + $0x48] sm:$0xff]
      %v189 = vld [vmem:[%s169 + $0x50] sm:$0xf]
      %v190 = vld [vmem:[%s169 + $0x54] sm:$0xff]
      %v191 = vld [vmem:[%s169 + $0x5c] sm:$0xff]
      %v192 = vld [vmem:[%s169 + $0x64] sm:$0xff]
      %v193 = vld [vmem:[%s169 + $0x6c] sm:$0xf]
      %v194 = vld [vmem:[%s1] sm:$0xf]
      %v195 = vld [vmem:[%s1 + $0x4] sm:$0xf]
      %v196 = vld [vmem:[%s1 + $0x8] sm:$0xf]
      %v197 = vld [vmem:[%s1 + $0xc] sm:$0xf]
      %v198 = vld [vmem:[%s1 + $0x10] sm:$0xf]
      %v199 = vld [vmem:[%s1 + $0x14] sm:$0xf]
      %v200 = vld [vmem:[%s1 + $0x18] sm:$0xf]
      %v201 = vld [vmem:[%s1 + $0x1c] sm:$0xf]
      %v202 = vld [vmem:[%s1 + $0x20] sm:$0xf]
      %v203 = vld [vmem:[%s1 + $0x24] sm:$0xf]
      %v204 = vld [vmem:[%s1 + $0x28] sm:$0xf]
      %v205 = vld [vmem:[%s1 + $0x2c] sm:$0xf]
      %v206 = vld [vmem:[%s1 + $0x30] sm:$0xf]
      %v207 = vld [vmem:[%s1 + $0x34] sm:$0xf]
      %v208 = vld [vmem:[%s1 + $0x38] sm:$0xf]
      %v209 = vld [vmem:[%s1 + $0x3c] sm:$0xf]
      %v210 = vld [vmem:[%s1 + $0x40] sm:$0xf]
      %v211 = vld [vmem:[%s1 + $0x44] sm:$0xf]
      %v212 = vld [vmem:[%s1 + $0x48] sm:$0xf]
      %v213 = vld [vmem:[%s1 + $0x4c] sm:$0xf]
      %v214 = vld [vmem:[%s1 + $0x50] sm:$0xf]
      %v215 = vld [vmem:[%s1 + $0x54] sm:$0xf]
      %v216 = vld [vmem:[%s1 + $0x58] sm:$0xf]
      %v217 = vld [vmem:[%s1 + $0x5c] sm:$0xf]
      %v218 = vld [vmem:[%s1 + $0x60] sm:$0xf]
      %v219 = vld [vmem:[%s1 + $0x64] sm:$0xf]
      %v220 = vld [vmem:[%s1 + $0x68] sm:$0xf]
      %v221 = vld [vmem:[%s1 + $0x6c] sm:$0xf]
      %v222 = vld [vmem:[%s1 + $0x70] sm:$0xf]
      %v223 = vld [vmem:[%s1 + $0x74] sm:$0xf]
      %v224 = vld [vmem:[%s1 + $0x78] sm:$0xf]
      %v225 = vld [vmem:[%s1 + $0x7c] sm:$0xf]
      %v226 = vld [vmem:[%s1 + $0x80] sm:$0xf]
      %v227 = vld [vmem:[%s1 + $0x84] sm:$0xf]
      %v228 = vld [vmem:[%s1 + $0x88] sm:$0xf]
      %v229 = vld [vmem:[%s1 + $0x8c] sm:$0xf]
      %v230 = vld [vmem:[%s1 + $0x90] sm:$0xf]
      %v231 = vld [vmem:[%s1 + $0x94] sm:$0xf]
      %v232 = vld [vmem:[%s1 + $0x98] sm:$0xf]
      %v233 = vld [vmem:[%s1 + $0x9c] sm:$0xf]
      %v234 = vld [vmem:[%s1 + $0xa0] sm:$0xf]
      %v235 = vld [vmem:[%s1 + $0xa4] sm:$0xf]
      %v236 = vld [vmem:[%s1 + $0xa8] sm:$0xf]
      %v237 = vld [vmem:[%s1 + $0xac] sm:$0xf]
      %v238 = vld [vmem:[%s1 + $0xb0] sm:$0xf]
      %v239 = vld [vmem:[%s1 + $0xb4] sm:$0xf]
      %v240 = vld [vmem:[%s1 + $0xb8] sm:$0xf]
      %v241 = vld [vmem:[%s1 + $0xbc] sm:$0xf]
      %v242 = vld [vmem:[%s1 + $0xc0] sm:$0xf]
      %v243 = vld [vmem:[%s1 + $0xc4] sm:$0xf]
      %v244 = vld [vmem:[%s1 + $0xc8] sm:$0xf]
      %v245 = vld [vmem:[%s1 + $0xcc] sm:$0xf]
      %v246 = vld [vmem:[%s1 + $0xd0] sm:$0xf]
      %v247 = vld [vmem:[%s1 + $0xd4] sm:$0xf]
      %v248 = vld [vmem:[%s1 + $0xd8] sm:$0xf]
      %v249 = vld [vmem:[%s1 + $0xdc] sm:$0xf]
      %v250 = vld [vmem:[%s1 + $0xe0] sm:$0xf]
      %v251 = vld [vmem:[%s1 + $0xe4] sm:$0xf]
      %v252 = vld [vmem:[%s1 + $0xe8] sm:$0xf]
      %v253 = vld [vmem:[%s1 + $0xec] sm:$0xf]
      %v254 = vld [vmem:[%s1 + $0xf0] sm:$0xf]
      %v255 = vld [vmem:[%s1 + $0xf4] sm:$0xf]
      %v256 = vld [vmem:[%s1 + $0xf8] sm:$0xf]
      %v257 = vld [vmem:[%s1 + $0xfc] sm:$0xf]
      %v258 = vld [vmem:[%s1 + $0x100] sm:$0xf]
      %v259 = vld [vmem:[%s1 + $0x104] sm:$0xf]
      %v260 = vld [vmem:[%s1 + $0x108] sm:$0xf]
      %v261 = vld [vmem:[%s1 + $0x10c] sm:$0xf]
      %v262 = vld [vmem:[%s1 + $0x110] sm:$0xf]
      %v263 = vld [vmem:[%s1 + $0x114] sm:$0xf]
      %v264 = vld [vmem:[%s1 + $0x118] sm:$0xf]
      %v265 = vld [vmem:[%s1 + $0x11c] sm:$0xf]
      %v266 = vld [vmem:[%s1 + $0x120] sm:$0xf]
      %v267 = vld [vmem:[%s1 + $0x124] sm:$0xf]
      %v268 = vld [vmem:[%s1 + $0x128] sm:$0xf]
      %v269 = vld [vmem:[%s1 + $0x12c] sm:$0xf]
      %v270 = vld [vmem:[%s1 + $0x130] sm:$0xf]
      %v271 = vld [vmem:[%s1 + $0x134] sm:$0xf]
      %v272 = vld [vmem:[%s1 + $0x138] sm:$0xf]
      %v273 = vld [vmem:[%s1 + $0x13c] sm:$0xf]
      %v274 = vld [vmem:[%s1 + $0x140] sm:$0xf]
      %v275 = vld [vmem:[%s1 + $0x144] sm:$0xf]
      %v276 = vld [vmem:[%s1 + $0x148] sm:$0xf]
      %v277 = vld [vmem:[%s1 + $0x14c] sm:$0xf]
      %v278 = vld [vmem:[%s1 + $0x150] sm:$0xf]
      %v279 = vld [vmem:[%s1 + $0x154] sm:$0xf]
      %v280 = vld [vmem:[%s1 + $0x158] sm:$0xf]
      %v281 = vld [vmem:[%s1 + $0x15c] sm:$0xf]
      %v282 = vld [vmem:[%s1 + $0x160] sm:$0xf]
      %v283 = vld [vmem:[%s1 + $0x164] sm:$0xf]
      %v284 = vld [vmem:[%s1 + $0x168] sm:$0xf]
      %v285 = vld [vmem:[%s1 + $0x16c] sm:$0xf]
      %v286 = vld [vmem:[%s1 + $0x170] sm:$0xf]
      %v287 = vld [vmem:[%s1 + $0x174] sm:$0xf]
      %v288 = vld [vmem:[%s1 + $0x178] sm:$0xf]
      %v289 = vld [vmem:[%s1 + $0x17c] sm:$0xf]
      %v290 = vld [vmem:[%s1 + $0x180] sm:$0xf]
      %v291 = vld [vmem:[%s1 + $0x184] sm:$0xf]
      %v292 = vld [vmem:[%s1 + $0x188] sm:$0xf]
      %v293 = vld [vmem:[%s1 + $0x18c] sm:$0xf]
      %v294 = vld [vmem:[%s1 + $0x190] sm:$0xf]
      %v295 = vld [vmem:[%s1 + $0x194] sm:$0xf]
      %v296 = vld [vmem:[%s1 + $0x198] sm:$0xf]
      %v297 = vld [vmem:[%s1 + $0x19c] sm:$0xf]
      %v298 = vld [vmem:[%s1 + $0x1a0] sm:$0xf]
      %v299 = vld [vmem:[%s1 + $0x1a4] sm:$0xf]
      %v300 = vld [vmem:[%s1 + $0x1a8] sm:$0xf]
      %v301 = vld [vmem:[%s1 + $0x1ac] sm:$0xf]
      %v302 = vld [vmem:[%s2] sm:$0x1]
      %v304 = vlaneseq
      %v305 = vshrl.u32 %v304, 7
      %v306 = vsub.s32 0, %v305
      %v307 = vrot.slane %v302, %v306
      %v325 = vunpack.c.l.b16 %v178
      %v326 = vunpack.c.h.b16 %v178
      %v327 = vunpack.c.l.b16 %v179
      %v328 = vunpack.c.h.b16 %v179
      %v329 = vunpack.c.l.b16 %v180
      %v330 = vunpack.c.h.b16 %v180
      %v331 = vunpack.c.l.b16 %v181
      %v332 = vunpack.c.l.b16 %v182
      %v333 = vunpack.c.h.b16 %v182
      %v334 = vunpack.c.l.b16 %v183
      %v335 = vunpack.c.h.b16 %v183
      %v336 = vunpack.c.l.b16 %v184
      %v337 = vunpack.c.h.b16 %v184
      %v338 = vunpack.c.l.b16 %v185
      %v339 = vunpack.c.l.b16 %v186
      %v340 = vunpack.c.h.b16 %v186
      %v341 = vunpack.c.l.b16 %v187
      %v342 = vunpack.c.h.b16 %v187
      %v343 = vunpack.c.l.b16 %v188
      %v344 = vunpack.c.h.b16 %v188
      %v345 = vunpack.c.l.b16 %v189
      %v346 = vunpack.c.l.b16 %v190
      %v347 = vunpack.c.h.b16 %v190
      %v348 = vunpack.c.l.b16 %v191
      %v349 = vunpack.c.h.b16 %v191
      %v350 = vunpack.c.l.b16 %v192
      %v351 = vunpack.c.h.b16 %v192
      %v352 = vunpack.c.l.b16 %v193
      %v353 = vpack.c.b16 %v332, %v325
      %v354 = vpack.c.b16 %v333, %v326
      %v355 = vpack.c.b16 %v334, %v327
      %v356 = vpack.c.b16 %v335, %v328
      %v357 = vpack.c.b16 %v336, %v329
      %v358 = vpack.c.b16 %v337, %v330
      %v359 = vpack.c.b16 %v338, %v331
      %v360 = vpack.c.b16 %v346, %v339
      %v361 = vpack.c.b16 %v347, %v340
      %v362 = vpack.c.b16 %v348, %v341
      %v363 = vpack.c.b16 %v349, %v342
      %v364 = vpack.c.b16 %v350, %v343
      %v365 = vpack.c.b16 %v351, %v344
      %v366 = vpack.c.b16 %v352, %v345
      %v487 = vunpack.c.l.b16 %v194
      %v488 = vunpack.c.l.b16 %v195
      %v489 = vunpack.c.l.b16 %v196
      %v490 = vunpack.c.l.b16 %v197
      %v491 = vunpack.c.l.b16 %v198
      %v492 = vunpack.c.l.b16 %v199
      %v493 = vunpack.c.l.b16 %v200
      %v494 = vunpack.c.l.b16 %v201
      %v495 = vunpack.c.l.b16 %v202
      %v496 = vunpack.c.l.b16 %v203
      %v497 = vunpack.c.l.b16 %v204
      %v498 = vunpack.c.l.b16 %v205
      %v499 = vunpack.c.l.b16 %v206
      %v500 = vunpack.c.l.b16 %v207
      %v501 = vunpack.c.l.b16 %v208
      %v502 = vunpack.c.l.b16 %v209
      %v503 = vunpack.c.l.b16 %v210
      %v504 = vunpack.c.l.b16 %v211
      %v505 = vunpack.c.l.b16 %v212
      %v506 = vunpack.c.l.b16 %v213
      %v507 = vunpack.c.l.b16 %v214
      %v508 = vunpack.c.l.b16 %v215
      %v509 = vunpack.c.l.b16 %v216
      %v510 = vunpack.c.l.b16 %v217
      %v511 = vunpack.c.l.b16 %v218
      %v512 = vunpack.c.l.b16 %v219
      %v513 = vunpack.c.l.b16 %v220
      %v514 = vunpack.c.l.b16 %v221
      %v515 = vunpack.c.l.b16 %v222
      %v516 = vunpack.c.l.b16 %v223
      %v517 = vunpack.c.l.b16 %v224
      %v518 = vunpack.c.l.b16 %v225
      %v519 = vunpack.c.l.b16 %v226
      %v520 = vunpack.c.l.b16 %v227
      %v521 = vunpack.c.l.b16 %v228
      %v522 = vunpack.c.l.b16 %v229
      %v523 = vunpack.c.l.b16 %v230
      %v524 = vunpack.c.l.b16 %v231
      %v525 = vunpack.c.l.b16 %v232
      %v526 = vunpack.c.l.b16 %v233
      %v527 = vunpack.c.l.b16 %v234
      %v528 = vunpack.c.l.b16 %v235
      %v529 = vunpack.c.l.b16 %v236
      %v530 = vunpack.c.l.b16 %v237
      %v531 = vunpack.c.l.b16 %v238
      %v532 = vunpack.c.l.b16 %v239
      %v533 = vunpack.c.l.b16 %v240
      %v534 = vunpack.c.l.b16 %v241
      %v535 = vunpack.c.l.b16 %v242
      %v536 = vunpack.c.l.b16 %v243
      %v537 = vunpack.c.l.b16 %v244
      %v538 = vunpack.c.l.b16 %v245
      %v539 = vunpack.c.l.b16 %v246
      %v540 = vunpack.c.l.b16 %v247
      %v541 = vunpack.c.l.b16 %v248
      %v542 = vunpack.c.l.b16 %v249
      %v543 = vunpack.c.l.b16 %v250
      %v544 = vunpack.c.l.b16 %v251
      %v545 = vunpack.c.l.b16 %v252
      %v546 = vunpack.c.l.b16 %v253
      %v547 = vunpack.c.l.b16 %v254
      %v548 = vunpack.c.l.b16 %v255
      %v549 = vunpack.c.l.b16 %v256
      %v550 = vunpack.c.l.b16 %v257
      %v551 = vunpack.c.l.b16 %v258
      %v552 = vunpack.c.l.b16 %v259
      %v553 = vunpack.c.l.b16 %v260
      %v554 = vunpack.c.l.b16 %v261
      %v555 = vunpack.c.l.b16 %v262
      %v556 = vunpack.c.l.b16 %v263
      %v557 = vunpack.c.l.b16 %v264
      %v558 = vunpack.c.l.b16 %v265
      %v559 = vunpack.c.l.b16 %v266
      %v560 = vunpack.c.l.b16 %v267
      %v561 = vunpack.c.l.b16 %v268
      %v562 = vunpack.c.l.b16 %v269
      %v563 = vunpack.c.l.b16 %v270
      %v564 = vunpack.c.l.b16 %v271
      %v565 = vunpack.c.l.b16 %v272
      %v566 = vunpack.c.l.b16 %v273
      %v567 = vunpack.c.l.b16 %v274
      %v568 = vunpack.c.l.b16 %v275
      %v569 = vunpack.c.l.b16 %v276
      %v570 = vunpack.c.l.b16 %v277
      %v571 = vunpack.c.l.b16 %v278
      %v572 = vunpack.c.l.b16 %v279
      %v573 = vunpack.c.l.b16 %v280
      %v574 = vunpack.c.l.b16 %v281
      %v575 = vunpack.c.l.b16 %v282
      %v576 = vunpack.c.l.b16 %v283
      %v577 = vunpack.c.l.b16 %v284
      %v578 = vunpack.c.l.b16 %v285
      %v579 = vunpack.c.l.b16 %v286
      %v580 = vunpack.c.l.b16 %v287
      %v581 = vunpack.c.l.b16 %v288
      %v582 = vunpack.c.l.b16 %v289
      %v583 = vunpack.c.l.b16 %v290
      %v584 = vunpack.c.l.b16 %v291
      %v585 = vunpack.c.l.b16 %v292
      %v586 = vunpack.c.l.b16 %v293
      %v587 = vunpack.c.l.b16 %v294
      %v588 = vunpack.c.l.b16 %v295
      %v589 = vunpack.c.l.b16 %v296
      %v590 = vunpack.c.l.b16 %v297
      %v591 = vunpack.c.l.b16 %v298
      %v592 = vunpack.c.l.b16 %v299
      %v593 = vunpack.c.l.b16 %v300
      %v594 = vunpack.c.l.b16 %v301
      %v595 = vpack.c.b16 %v488, %v487
      %v596 = vpack.c.b16 %v490, %v489
      %v597 = vpack.c.b16 %v492, %v491
      %v598 = vpack.c.b16 %v494, %v493
      %v599 = vpack.c.b16 %v496, %v495
      %v600 = vpack.c.b16 %v498, %v497
      %v601 = vpack.c.b16 %v500, %v499
      %v602 = vpack.c.b16 %v502, %v501
      %v603 = vpack.c.b16 %v504, %v503
      %v604 = vpack.c.b16 %v506, %v505
      %v605 = vpack.c.b16 %v508, %v507
      %v606 = vpack.c.b16 %v510, %v509
      %v607 = vpack.c.b16 %v512, %v511
      %v608 = vpack.c.b16 %v514, %v513
      %v609 = vpack.c.b16 %v516, %v515
      %v610 = vpack.c.b16 %v518, %v517
      %v611 = vpack.c.b16 %v520, %v519
      %v612 = vpack.c.b16 %v522, %v521
      %v613 = vpack.c.b16 %v524, %v523
      %v614 = vpack.c.b16 %v526, %v525
      %v615 = vpack.c.b16 %v528, %v527
      %v616 = vpack.c.b16 %v530, %v529
      %v617 = vpack.c.b16 %v532, %v531
      %v618 = vpack.c.b16 %v534, %v533
      %v619 = vpack.c.b16 %v536, %v535
      %v620 = vpack.c.b16 %v538, %v537
      %v621 = vpack.c.b16 %v540, %v539
      %v622 = vpack.c.b16 %v542, %v541
      %v623 = vpack.c.b16 %v544, %v543
      %v624 = vpack.c.b16 %v546, %v545
      %v625 = vpack.c.b16 %v548, %v547
      %v626 = vpack.c.b16 %v550, %v549
      %v627 = vpack.c.b16 %v552, %v551
      %v628 = vpack.c.b16 %v554, %v553
      %v629 = vpack.c.b16 %v556, %v555
      %v630 = vpack.c.b16 %v558, %v557
      %v631 = vpack.c.b16 %v560, %v559
      %v632 = vpack.c.b16 %v562, %v561
      %v633 = vpack.c.b16 %v564, %v563
      %v634 = vpack.c.b16 %v566, %v565
      %v635 = vpack.c.b16 %v568, %v567
      %v636 = vpack.c.b16 %v570, %v569
      %v637 = vpack.c.b16 %v572, %v571
      %v638 = vpack.c.b16 %v574, %v573
      %v639 = vpack.c.b16 %v576, %v575
      %v640 = vpack.c.b16 %v578, %v577
      %v641 = vpack.c.b16 %v580, %v579
      %v642 = vpack.c.b16 %v582, %v581
      %v643 = vpack.c.b16 %v584, %v583
      %v644 = vpack.c.b16 %v586, %v585
      %v645 = vpack.c.b16 %v588, %v587
      %v646 = vpack.c.b16 %v590, %v589
      %v647 = vpack.c.b16 %v592, %v591
      %v648 = vpack.c.b16 %v594, %v593
      %vm703 = vcmask 785408
      %v705 = vsel %vm703, %v359, 0
      %v708 = vsel %vm703, %v366, 0
      %710 = vmatprep.subr.bf16.mxu0 0
      %711 = vmatpush1.bf16.msra.mxu0 %v602
      %712 = vmatprep.subr.bf16.mxu0 0
      %713 = vmatpush1.bf16.msra.mxu0 %v601
      %714 = vmatprep.subr.bf16.mxu0 0
      %715 = vmatpush1.bf16.msra.mxu0 %v600
      %716 = vmatprep.subr.bf16.mxu0 0
      %717 = vmatpush1.bf16.msra.mxu0 %v599
      %718 = vmatprep.subr.bf16.mxu0 0
      %719 = vmatpush1.bf16.msra.mxu0 %v598
      %720 = vmatprep.subr.bf16.mxu0 0
      %721 = vmatpush1.bf16.msra.mxu0 %v597
      %722 = vmatprep.subr.bf16.mxu0 0
      %723 = vmatpush1.bf16.msra.mxu0 %v596
      %724 = vmatprep.subr.bf16.mxu0 0
      %725 = vmatpush1.bf16.msra.mxu0 %v595
      %726 = vmatprep.subr.bf16.mxu0 0
      %727 = vmatpush2.bf16.msra.mxu0 %v610
      %728 = vmatprep.subr.bf16.mxu0 0
      %729 = vmatpush2.bf16.msra.mxu0 %v609
      %730 = vmatprep.subr.bf16.mxu0 0
      %731 = vmatpush2.bf16.msra.mxu0 %v608
      %732 = vmatprep.subr.bf16.mxu0 0
      %733 = vmatpush2.bf16.msra.mxu0 %v607
      %734 = vmatprep.subr.bf16.mxu0 0
      %735 = vmatpush2.bf16.msra.mxu0 %v606
      %736 = vmatprep.subr.bf16.mxu0 0
      %737 = vmatpush2.bf16.msra.mxu0 %v605
      %738 = vmatprep.subr.bf16.mxu0 0
      %739 = vmatpush2.bf16.msra.mxu0 %v604
      %740 = vmatprep.subr.bf16.mxu0 0
      %741 = vmatpush2.bf16.msra.mxu0 %v603
      %742 = vmatprep.mubr.bf16.mxu0 %v354
      %743 = vmatmul.mubr.bf16.gmra.mxu0 %v353
      %v744 = vpop.f32.mrf.mxu0
      %v745 = vadd.f32 %v307, %v744
      %v746 = vpop.f32.mrf.mxu0
      %v747 = vpop.f32.mrf.mxu0
      %v748 = vadd.f32 %v307, %v747
      %v749 = vpop.f32.mrf.mxu0
      %750 = vmatprep.mubr.bf16.mxu0 %v361
      %751 = vmatmul.mubr.bf16.gmra.mxu0 %v360
      %v752 = vpop.f32.mrf.mxu0
      %v753 = vadd.f32 %v307, %v752
      %v754 = vpop.f32.mrf.mxu0
      %v755 = vpop.f32.mrf.mxu0
      %v756 = vadd.f32 %v307, %v755
      %v757 = vpop.f32.mrf.mxu0
      %758 = vdwg.mxu0
      %759 = vmatprep.subr.bf16.mxu0 0
      %760 = vmatpush1.bf16.msra.mxu0 %v618
      %761 = vmatprep.subr.bf16.mxu0 0
      %762 = vmatpush1.bf16.msra.mxu0 %v617
      %763 = vmatprep.subr.bf16.mxu0 0
      %764 = vmatpush1.bf16.msra.mxu0 %v616
      %765 = vmatprep.subr.bf16.mxu0 0
      %766 = vmatpush1.bf16.msra.mxu0 %v615
      %767 = vmatprep.subr.bf16.mxu0 0
      %768 = vmatpush1.bf16.msra.mxu0 %v614
      %769 = vmatprep.subr.bf16.mxu0 0
      %770 = vmatpush1.bf16.msra.mxu0 %v613
      %771 = vmatprep.subr.bf16.mxu0 0
      %772 = vmatpush1.bf16.msra.mxu0 %v612
      %773 = vmatprep.subr.bf16.mxu0 0
      %774 = vmatpush1.bf16.msra.mxu0 %v611
      %775 = vmatprep.subr.bf16.mxu0 0
      %776 = vmatpush2.bf16.msra.mxu0 %v626
      %777 = vmatprep.subr.bf16.mxu0 0
      %778 = vmatpush2.bf16.msra.mxu0 %v625
      %779 = vmatprep.subr.bf16.mxu0 0
      %780 = vmatpush2.bf16.msra.mxu0 %v624
      %781 = vmatprep.subr.bf16.mxu0 0
      %782 = vmatpush2.bf16.msra.mxu0 %v623
      %783 = vmatprep.subr.bf16.mxu0 0
      %784 = vmatpush2.bf16.msra.mxu0 %v622
      %785 = vmatprep.subr.bf16.mxu0 0
      %786 = vmatpush2.bf16.msra.mxu0 %v621
      %787 = vmatprep.subr.bf16.mxu0 0
      %788 = vmatpush2.bf16.msra.mxu0 %v620
      %789 = vmatprep.subr.bf16.mxu0 0
      %790 = vmatpush2.bf16.msra.mxu0 %v619
      %791 = vmatprep.mubr.bf16.mxu0 %v356
      %792 = vmatmul.mubr.bf16.gmra.mxu0 %v355
      %v793 = vpop.f32.mrf.mxu0
      %v794 = vadd.f32 %v745, %v793
      %v795 = vpop.f32.mrf.mxu0
      %v796 = vpop.f32.mrf.mxu0
      %v797 = vadd.f32 %v748, %v796
      %v798 = vpop.f32.mrf.mxu0
      %799 = vmatprep.mubr.bf16.mxu0 %v363
      %800 = vmatmul.mubr.bf16.gmra.mxu0 %v362
      %v801 = vpop.f32.mrf.mxu0
      %v802 = vadd.f32 %v753, %v801
      %v803 = vpop.f32.mrf.mxu0
      %v804 = vpop.f32.mrf.mxu0
      %v805 = vadd.f32 %v756, %v804
      %v806 = vpop.f32.mrf.mxu0
      %807 = vdwg.mxu0
      %808 = vmatprep.subr.bf16.mxu0 0
      %809 = vmatpush1.bf16.msra.mxu0 %v634
      %810 = vmatprep.subr.bf16.mxu0 0
      %811 = vmatpush1.bf16.msra.mxu0 %v633
      %812 = vmatprep.subr.bf16.mxu0 0
      %813 = vmatpush1.bf16.msra.mxu0 %v632
      %814 = vmatprep.subr.bf16.mxu0 0
      %815 = vmatpush1.bf16.msra.mxu0 %v631
      %816 = vmatprep.subr.bf16.mxu0 0
      %817 = vmatpush1.bf16.msra.mxu0 %v630
      %818 = vmatprep.subr.bf16.mxu0 0
      %819 = vmatpush1.bf16.msra.mxu0 %v629
      %820 = vmatprep.subr.bf16.mxu0 0
      %821 = vmatpush1.bf16.msra.mxu0 %v628
      %822 = vmatprep.subr.bf16.mxu0 0
      %823 = vmatpush1.bf16.msra.mxu0 %v627
      %824 = vmatprep.subr.bf16.mxu0 0
      %825 = vmatpush2.bf16.msra.mxu0 %v642
      %826 = vmatprep.subr.bf16.mxu0 0
      %827 = vmatpush2.bf16.msra.mxu0 %v641
      %828 = vmatprep.subr.bf16.mxu0 0
      %829 = vmatpush2.bf16.msra.mxu0 %v640
      %830 = vmatprep.subr.bf16.mxu0 0
      %831 = vmatpush2.bf16.msra.mxu0 %v639
      %832 = vmatprep.subr.bf16.mxu0 0
      %833 = vmatpush2.bf16.msra.mxu0 %v638
      %834 = vmatprep.subr.bf16.mxu0 0
      %835 = vmatpush2.bf16.msra.mxu0 %v637
      %836 = vmatprep.subr.bf16.mxu0 0
      %837 = vmatpush2.bf16.msra.mxu0 %v636
      %838 = vmatprep.subr.bf16.mxu0 0
      %839 = vmatpush2.bf16.msra.mxu0 %v635
      %840 = vmatprep.mubr.bf16.mxu0 %v358
      %841 = vmatmul.mubr.bf16.gmra.mxu0 %v357
      %v842 = vpop.f32.mrf.mxu0
      %v843 = vadd.f32 %v794, %v842
      %v844 = vpop.f32.mrf.mxu0
      %v845 = vpop.f32.mrf.mxu0
      %v846 = vadd.f32 %v797, %v845
      %v847 = vpop.f32.mrf.mxu0
      %848 = vmatprep.mubr.bf16.mxu0 %v365
      %849 = vmatmul.mubr.bf16.gmra.mxu0 %v364
      %v850 = vpop.f32.mrf.mxu0
      %v851 = vadd.f32 %v802, %v850
      %v852 = vpop.f32.mrf.mxu0
      %v853 = vpop.f32.mrf.mxu0
      %v854 = vadd.f32 %v805, %v853
      %v855 = vpop.f32.mrf.mxu0
      %856 = vdwg.mxu0
      %857 = vmatprep.subr.bf16.mxu0 0
      %858 = vmatpush1.bf16.msra.mxu0 0
      %859 = vmatprep.subr.bf16.mxu0 0
      %860 = vmatpush1.bf16.msra.mxu0 0
      %861 = vmatprep.subr.bf16.mxu0 0
      %862 = vmatpush1.bf16.msra.mxu0 %v648
      %863 = vmatprep.subr.bf16.mxu0 0
      %864 = vmatpush1.bf16.msra.mxu0 %v647
      %865 = vmatprep.subr.bf16.mxu0 0
      %866 = vmatpush1.bf16.msra.mxu0 %v646
      %867 = vmatprep.subr.bf16.mxu0 0
      %868 = vmatpush1.bf16.msra.mxu0 %v645
      %869 = vmatprep.subr.bf16.mxu0 0
      %870 = vmatpush1.bf16.msra.mxu0 %v644
      %871 = vmatprep.subr.bf16.mxu0 0
      %872 = vmatpush1.bf16.msra.mxu0 %v643
      %873 = vmatprep.subr.bf16.mxu0 0
      %874 = vmatpush2.bf16.msra.mxu0 0
      %875 = vmatprep.subr.bf16.mxu0 0
      %876 = vmatpush2.bf16.msra.mxu0 0
      %877 = vmatprep.subr.bf16.mxu0 0
      %878 = vmatpush2.bf16.msra.mxu0 0
      %879 = vmatprep.subr.bf16.mxu0 0
      %880 = vmatpush2.bf16.msra.mxu0 0
      %881 = vmatprep.subr.bf16.mxu0 0
      %882 = vmatpush2.bf16.msra.mxu0 0
      %883 = vmatprep.subr.bf16.mxu0 0
      %884 = vmatpush2.bf16.msra.mxu0 0
      %885 = vmatprep.subr.bf16.mxu0 0
      %886 = vmatpush2.bf16.msra.mxu0 0
      %887 = vmatprep.subr.bf16.mxu0 0
      %888 = vmatpush2.bf16.msra.mxu0 0
      %889 = vmatprep.mubr.bf16.mxu0 0
      %890 = vmatmul.mubr.bf16.gmra.mxu0 %v705
      %v891 = vpop.f32.mrf.mxu0
      %v892 = vadd.f32 %v843, %v891
      %v893 = vpop.f32.mrf.mxu0
      %v894 = vpop.f32.mrf.mxu0
      %v895 = vadd.f32 %v846, %v894
      %v896 = vpop.f32.mrf.mxu0
      %897 = vmatprep.mubr.bf16.mxu0 0
      %898 = vmatmul.mubr.bf16.gmra.mxu0 %v708
      %v899 = vpop.f32.mrf.mxu0
      %v900 = vadd.f32 %v851, %v899
      %v901 = vpop.f32.mrf.mxu0
      %v902 = vpop.f32.mrf.mxu0
      %v903 = vadd.f32 %v854, %v902
      %v904 = vpop.f32.mrf.mxu0
      %905 = vdwg.mxu0
      %v906 = vmax.f32 %v892, 0.0
      %v907 = vmax.f32 %v895, 0.0
      %v908 = vmax.f32 %v900, 0.0
      %v909 = vmax.f32 %v903, 0.0
      %vm910 = vcmask 523264
      %911 = vst.msk [vmem:[%s175] sm:$0xff] %vm910, %v906
      %912 = vst.msk [vmem:[%s175 + $0x8] sm:$0xff] %vm910, %v907
      %913 = vst.msk [vmem:[%s175 + $0x10] sm:$0xff] %vm910, %v908
      %914 = vst.msk [vmem:[%s175 + $0x18] sm:$0xff] %vm910, %v909
      %s915 = smul.u32 4, %s14
      %p916 = scmp.lt.s32.totalorder %s915, 7
      %s917 = scalar_select %p916, %s915, 7
      %s918 = smul.addr %s917, 8
      %s919 = scalar_lea.vmem %s3, %s918
      // Predicated region
      $region33: #{alexnet_fc_forward.15} parent=31 // pred_check
        %p920 = pneg %p100
      $region34: #{alexnet_fc_forward.15} parent=31 // pred_check_branch
        %922 = sbr.rel (%p920) target = $region36
      $region35: #{alexnet_fc_forward.15} parent=31 // pred_region
        %s923 = smul.u32 4, %s14
      $region36: #{alexnet_fc_forward.15} parent=31 // pred_fallthru
        _
    $region32: #{alexnet_fc_forward.15} parent=5 // pred_fallthru
      _
    %p924 = scmp.le.s32.totalorder 2, %s9
    // Predicated region
    $region37: #{alexnet_fc_forward.15} parent=5 // pred_check
      %p925 = pneg %p924
    $region38: #{alexnet_fc_forward.15} parent=5 // pred_check_branch
      %927 = sbr.rel (%p925) target = $region40
    $region39: #{alexnet_fc_forward.15} parent=5 // pred_region
      %s928 = ssub.s32 %s9, 2
      // Predicated region
      $region41: #{alexnet_fc_forward.15} parent=39 // pred_check
        %p929 = pneg %p106
      $region42: #{alexnet_fc_forward.15} parent=39 // pred_check_branch
        %931 = sbr.rel (%p929) target = $region44
      $region43: #{alexnet_fc_forward.15} parent=39 // pred_region
        %s932 = smul.u32 4, %s15
        %p933 = scmp.lt.s32.totalorder %s932, 7
        %s934 = scalar_select %p933, %s932, 7
        %s935 = smul.addr %s934, 8
        %s936 = scalar_lea.vmem %s3, %s935
      $region44: #{alexnet_fc_forward.15} parent=39 // pred_fallthru
        _
    $region40: #{alexnet_fc_forward.15} parent=5 // pred_fallthru
      _
  $region6: #{alexnet_fc_forward.15} parent=0 // loop_footer
    %s13 = sadd.s32 1, %s9
  $region7: #{alexnet_fc_forward.15} parent=0 // loop_footer_branch
    %8 = sbr.rel target = $region3
  $region8: #{alexnet_fc_forward.15} parent=0 // loop_exit
    _

// kernel: alexnet_fc_forward.16
$region0: #{alexnet_fc_forward.16}
  #allocation0 [shape = 'u32[]', space=smem, size = 0x4, offset = 0x4, fixed_abs, tag = 'smem constant byte address 0x4 - core index']
  #allocation1 [shape = 'u32[144,128]{1,0:T(1,128)}', space=vmem, size = 0x12000, scoped, tag = 'internal scratch']
  %s0 = inlined_call_operand.vmem [shape: f32[2,5,5,64], index: 0, kind: input, shape index: {}]
  %s1 = inlined_call_operand.vmem [shape: f32[2,3,3,64], index: 1, kind: output, shape index: {}]
  %s2 = sld [smem:[#allocation0]]
  $region37: #{alexnet_fc_forward.16} parent=0
    _
  %s4 = ssub.s32 1, %s2
  %s5 = scalar_select 0, %s4, %s2
  loop: start=0, step=1, limit=4
  $region2: #{alexnet_fc_forward.16} parent=0 // loop_pre_header
    _
  $region3: #{alexnet_fc_forward.16} parent=0 // loop_header
    %s7 = sphi 0, %s11
    %p8 = scmp.ge.s32.totalorder %s7, 4
    %s17 = sphi 0, %s19
    %s20 = sphi 0, %s17
    %s21 = sphi 0, %s20
    %s37 = sphi 0, %s21
    %s43 = sphi 0, %s45
    %s46 = sphi 0, %s43
    %s47 = sphi 0, %s46
    %s63 = sphi 0, %s47
  $region4: #{alexnet_fc_forward.16} parent=0 // loop_header_branch
    %10 = sbr.rel (%p8) target = $region8
  $region5: #{alexnet_fc_forward.16} parent=0 // loop_body
    %s12 = ssub.s32 %s7, 1
    %s13 = ssub.s32 %s7, 2
    %s14 = sadd.s32 %s7, 1
    %s15 = ssub.s32 %s7, %s14
    %p16 = scmp.eq.s32.totalorder %s15, 0
    %s18 = sadd.s32 %s17, 1
    %s19 = scalar_select %p16, %s17, %s18
    %p22 = pneg %p16
    %p23 = scmp.eq.s32.totalorder %s7, 1
    %p24 = por %p22, %p23
    %p25 = scmp.ne.s32.totalorder %s17, %s20
    %p26 = scmp.eq.s32.totalorder %s7, 0
    %p27 = por %p25, %p26
    %p28 = scmp.ne.s32.totalorder %s17, %s20
    %p29 = scmp.eq.s32.totalorder %s12, 1
    %p30 = por %p28, %p29
    %p31 = scmp.ne.s32.totalorder %s20, %s21
    %p32 = scmp.eq.s32.totalorder %s12, 0
    %p33 = por %p31, %p32
    %p34 = scmp.ne.s32.totalorder %s20, %s21
    %p35 = scmp.eq.s32.totalorder %s13, 1
    %p36 = por %p34, %p35
    %p38 = scmp.ne.s32.totalorder %s21, %s37
    %p39 = scmp.eq.s32.totalorder %s13, 0
    %p40 = por %p38, %p39
    %s41 = ssub.s32 %s7, %s14
    %p42 = scmp.eq.s32.totalorder %s41, 0
    %s44 = sadd.s32 %s43, 1
    %s45 = scalar_select %p42, %s43, %s44
    %p48 = pneg %p42
    %p49 = scmp.eq.s32.totalorder %s7, 1
    %p50 = por %p48, %p49
    %p51 = scmp.ne.s32.totalorder %s43, %s46
    %p52 = scmp.eq.s32.totalorder %s7, 0
    %p53 = por %p51, %p52
    %p54 = scmp.ne.s32.totalorder %s43, %s46
    %p55 = scmp.eq.s32.totalorder %s12, 1
    %p56 = por %p54, %p55
    %p57 = scmp.ne.s32.totalorder %s46, %s47
    %p58 = scmp.eq.s32.totalorder %s12, 0
    %p59 = por %p57, %p58
    %p60 = scmp.ne.s32.totalorder %s46, %s47
    %p61 = scmp.eq.s32.totalorder %s13, 1
    %p62 = por %p60, %p61
    %p64 = scmp.ne.s32.totalorder %s47, %s63
    %p65 = scmp.eq.s32.totalorder %s13, 0
    %p66 = por %p64, %p65
    %p67 = scmp.le.s32.totalorder 1, %s7
    %p68 = scmp.lt.s32.totalorder %s7, 3
    %p69 = pnand %p67, %p68
    %p70 = pneg %p69
    // Predicated region
    $region9: #{alexnet_fc_forward.16} parent=5 // pred_check
      _
    $region10: #{alexnet_fc_forward.16} parent=5 // pred_check_branch
      %72 = sbr.rel (%p69) target = $region12
    $region11: #{alexnet_fc_forward.16} parent=5 // pred_region
      %s73 = ssub.s32 %s7, 1
    $region12: #{alexnet_fc_forward.16} parent=5 // pred_fallthru
      _
    %p74 = scmp.lt.s32.totalorder %s7, 2
    // Predicated region
    $region13: #{alexnet_fc_forward.16} parent=5 // pred_check
      %p75 = pneg %p74
    $region14: #{alexnet_fc_forward.16} parent=5 // pred_check_branch
      %77 = sbr.rel (%p75) target = $region16
    $region15: #{alexnet_fc_forward.16} parent=5 // pred_region
      // Predicated region
      $region17: #{alexnet_fc_forward.16} parent=15 // pred_check
        %p78 = pneg %p27
      $region18: #{alexnet_fc_forward.16} parent=15 // pred_check_branch
        %80 = sbr.rel (%p78) target = $region20
      $region19: #{alexnet_fc_forward.16} parent=15 // pred_region
        %p81 = scmp.lt.s32.totalorder %s7, 1
        %s82 = scalar_select %p81, %s7, 1
        %s83 = smul.addr %s82, 5
        %s84 = smul.addr %s83, 8
        %s85 = scalar_lea.vmem %s0, %s84
      $region20: #{alexnet_fc_forward.16} parent=15 // pred_fallthru
        _
    $region16: #{alexnet_fc_forward.16} parent=5 // pred_fallthru
      _
    %p86 = scmp.le.s32.totalorder 1, %s7
    %p87 = scmp.lt.s32.totalorder %s7, 3
    %p88 = pnand %p86, %p87
    %p89 = pneg %p88
    // Predicated region
    $region21: #{alexnet_fc_forward.16} parent=5 // pred_check
      _
    $region22: #{alexnet_fc_forward.16} parent=5 // pred_check_branch
      %91 = sbr.rel (%p88) target = $region24
    $region23: #{alexnet_fc_forward.16} parent=5 // pred_region
      %s92 = ssub.s32 %s7, 1
      %p93 = scmp.lt.s32.totalorder %s12, 1
      %s94 = scalar_select %p93, %s12, 1
      %s95 = smul.addr %s94, 5
      %s96 = smul.addr %s95, 8
      %s97 = scalar_lea.vmem %s0, %s96
      %p98 = pneg %p33
      %p99 = pneg %p30
      %p100 = pneg %p59
      %p101 = pneg %p56
      %p102 = scmp.lt.s32.totalorder %s12, 1
      %s103 = scalar_select %p102, %s12, 1
      %s104 = smul.addr %s103, 3
      %s105 = smul.addr %s104, 4
      %s106 = scalar_lea.vmem %s1, %s105
      %p107 = scmp.lt.s32.totalorder %s12, 1
      %s108 = scalar_select %p107, %s12, 1
      %s109 = smul.addr %s108, 5
      %s110 = smul.addr %s109, 8
      %s111 = scalar_lea.vmem %s0, %s110
      %p112 = scmp.lt.s32.totalorder %s12, 1
      %s113 = scalar_select %p112, %s12, 1
      %s114 = smul.addr %s113, 3
      %s115 = smul.addr %s114, 4
      %s116 = scalar_lea.vmem %s1, %s115
      %v117 = vld [vmem:[%s111] sm:$0x1f]
      %v118 = vld [vmem:[%s111 + $0x8] sm:$0x1f]
      %v119 = vld [vmem:[%s111 + $0x10] sm:$0x1f]
      %v120 = vld [vmem:[%s111 + $0x18] sm:$0x1f]
      %v121 = vld [vmem:[%s111 + $0x20] sm:$0x1f]
      %v122 = vmax.f32 %v117, %v118
      %v123 = vmax.f32 %v118, %v119
      %v124 = vmax.f32 %v119, %v120
      %v125 = vmax.f32 %v122, %v119
      %v126 = vmax.f32 %v123, %v120
      %v127 = vmax.f32 %v124, %v121
      %v131 = vrot.slane %v125, 1
      %v132 = vrot.slane %v126, 1
      %v133 = vrot.slane %v127, 1
      %v137 = vmax.f32 %v125, %v131
      %v138 = vmax.f32 %v126, %v132
      %v139 = vmax.f32 %v127, %v133
      %v140 = vrot.slane %v125, 2
      %v141 = vrot.slane %v126, 2
      %v142 = vrot.slane %v127, 2
      %v146 = vmax.f32 %v137, %v140
      %v147 = vmax.f32 %v138, %v141
      %v148 = vmax.f32 %v139, %v142
      %vm149 = vcmask 518144
      %150 = vst.msk [vmem:[%s116] sm:$0x7] %vm149, %v146
      %151 = vst.msk [vmem:[%s116 + $0x4] sm:$0x7] %vm149, %v147
      %152 = vst.msk [vmem:[%s116 + $0x8] sm:$0x7] %vm149, %v148
      %p153 = scmp.lt.s32.totalorder %s12, 1
      %s154 = scalar_select %p153, %s12, 1
      %s155 = smul.addr %s154, 3
      %s156 = smul.addr %s155, 4
      %s157 = scalar_lea.vmem %s1, %s156
      // Predicated region
      $region25: #{alexnet_fc_forward.16} parent=23 // pred_check
        %p158 = pneg %p56
      $region26: #{alexnet_fc_forward.16} parent=23 // pred_check_branch
        %160 = sbr.rel (%p158) target = $region28
      $region27: #{alexnet_fc_forward.16} parent=23 // pred_region
        _
      $region28: #{alexnet_fc_forward.16} parent=23 // pred_fallthru
        _
    $region24: #{alexnet_fc_forward.16} parent=5 // pred_fallthru
      _
    %p161 = scmp.le.s32.totalorder 2, %s7
    // Predicated region
    $region29: #{alexnet_fc_forward.16} parent=5 // pred_check
      %p162 = pneg %p161
    $region30: #{alexnet_fc_forward.16} parent=5 // pred_check_branch
      %164 = sbr.rel (%p162) target = $region32
    $region31: #{alexnet_fc_forward.16} parent=5 // pred_region
      %s165 = ssub.s32 %s7, 2
      // Predicated region
      $region33: #{alexnet_fc_forward.16} parent=31 // pred_check
        %p166 = pneg %p62
      $region34: #{alexnet_fc_forward.16} parent=31 // pred_check_branch
        %168 = sbr.rel (%p166) target = $region36
      $region35: #{alexnet_fc_forward.16} parent=31 // pred_region
        %p169 = scmp.lt.s32.totalorder %s13, 1
        %s170 = scalar_select %p169, %s13, 1
        %s171 = smul.addr %s170, 3
        %s172 = smul.addr %s171, 4
        %s173 = scalar_lea.vmem %s1, %s172
      $region36: #{alexnet_fc_forward.16} parent=31 // pred_fallthru
        _
    $region32: #{alexnet_fc_forward.16} parent=5 // pred_fallthru
      _
  $region6: #{alexnet_fc_forward.16} parent=0 // loop_footer
    %s11 = sadd.s32 1, %s7
  $region7: #{alexnet_fc_forward.16} parent=0 // loop_footer_branch
    %6 = sbr.rel target = $region3
  $region8: #{alexnet_fc_forward.16} parent=0 // loop_exit
    _

// kernel: alexnet_fc_forward.17
$region0: #{alexnet_fc_forward.17}
  #allocation0 [shape = 'u32[]', space=smem, size = 0x4, offset = 0x4, fixed_abs, tag = 'smem constant byte address 0x4 - core index']
  #allocation1 [shape = 'u32[144,128]{1,0:T(1,128)}', space=vmem, size = 0x12000, scoped, tag = 'internal scratch']
  %s0 = inlined_call_operand.vmem [shape: f32[8,256], index: 0, kind: input, shape index: {}]
  %s1 = inlined_call_operand.vmem [shape: f32[256,128], index: 1, kind: input, shape index: {}]
  %s2 = inlined_call_operand.vmem [shape: f32[1,128], index: 2, kind: input, shape index: {}]
  %s3 = inlined_call_operand.vmem [shape: f32[128,128], index: 3, kind: input, shape index: {}]
  %s4 = inlined_call_operand.vmem [shape: f32[1,128], index: 4, kind: input, shape index: {}]
  %s5 = inlined_call_operand.vmem [shape: f32[128,32], index: 5, kind: input, shape index: {}]
  %s6 = inlined_call_operand.vmem [shape: f32[1,32], index: 6, kind: input, shape index: {}]
  %s7 = inlined_call_operand.vmem [shape: f32[32,10], index: 7, kind: input, shape index: {}]
  %s8 = inlined_call_operand.vmem [shape: f32[1,10], index: 8, kind: input, shape index: {}]
  %s9 = inlined_call_operand.vmem [shape: f32[8,32], index: 9, kind: output, shape index: {0}]
  %s10 = inlined_call_operand.vmem [shape: f32[8,10], index: 10, kind: output, shape index: {1}]
  %11 = xla_tuple %s9, %s10
  %s12 = sld [smem:[#allocation0]]
  $region54: #{alexnet_fc_forward.17} parent=0
    _
  %s14 = ssub.s32 1, %s12
  %s15 = scalar_select 0, %s14, %s12
  // Predicated region
  $region2: #{alexnet_fc_forward.17} parent=0 // pred_check
    _
  $region3: #{alexnet_fc_forward.17} parent=0 // pred_check_branch
    %17 = sbr.rel (0) target = $region5
  $region4: #{alexnet_fc_forward.17} parent=0 // pred_region
    _
  $region5: #{alexnet_fc_forward.17} parent=0 // pred_fallthru
    _
  // Predicated region
  $region6: #{alexnet_fc_forward.17} parent=0 // pred_check
    _
  $region7: #{alexnet_fc_forward.17} parent=0 // pred_check_branch
    %19 = sbr.rel (0) target = $region9
  $region8: #{alexnet_fc_forward.17} parent=0 // pred_region
    _
  $region9: #{alexnet_fc_forward.17} parent=0 // pred_fallthru
    _
  // Predicated region
  $region10: #{alexnet_fc_forward.17} parent=0 // pred_check
    _
  $region11: #{alexnet_fc_forward.17} parent=0 // pred_check_branch
    %21 = sbr.rel (0) target = $region13
  $region12: #{alexnet_fc_forward.17} parent=0 // pred_region
    _
  $region13: #{alexnet_fc_forward.17} parent=0 // pred_fallthru
    _
  // Predicated region
  $region14: #{alexnet_fc_forward.17} parent=0 // pred_check
    _
  $region15: #{alexnet_fc_forward.17} parent=0 // pred_check_branch
    %23 = sbr.rel (0) target = $region17
  $region16: #{alexnet_fc_forward.17} parent=0 // pred_region
    _
  $region17: #{alexnet_fc_forward.17} parent=0 // pred_fallthru
    _
  // Predicated region
  $region18: #{alexnet_fc_forward.17} parent=0 // pred_check
    _
  $region19: #{alexnet_fc_forward.17} parent=0 // pred_check_branch
    %25 = sbr.rel (0) target = $region21
  $region20: #{alexnet_fc_forward.17} parent=0 // pred_region
    _
  $region21: #{alexnet_fc_forward.17} parent=0 // pred_fallthru
    _
  // Predicated region
  $region22: #{alexnet_fc_forward.17} parent=0 // pred_check
    _
  $region23: #{alexnet_fc_forward.17} parent=0 // pred_check_branch
    %27 = sbr.rel (0) target = $region25
  $region24: #{alexnet_fc_forward.17} parent=0 // pred_region
    _
  $region25: #{alexnet_fc_forward.17} parent=0 // pred_fallthru
    _
  // Predicated region
  $region26: #{alexnet_fc_forward.17} parent=0 // pred_check
    _
  $region27: #{alexnet_fc_forward.17} parent=0 // pred_check_branch
    %29 = sbr.rel (0) target = $region29
  $region28: #{alexnet_fc_forward.17} parent=0 // pred_region
    _
  $region29: #{alexnet_fc_forward.17} parent=0 // pred_fallthru
    _
  // Predicated region
  $region30: #{alexnet_fc_forward.17} parent=0 // pred_check
    _
  $region31: #{alexnet_fc_forward.17} parent=0 // pred_check_branch
    %31 = sbr.rel (0) target = $region33
  $region32: #{alexnet_fc_forward.17} parent=0 // pred_region
    _
  $region33: #{alexnet_fc_forward.17} parent=0 // pred_fallthru
    _
  // Predicated region
  $region34: #{alexnet_fc_forward.17} parent=0 // pred_check
    _
  $region35: #{alexnet_fc_forward.17} parent=0 // pred_check_branch
    %33 = sbr.rel (0) target = $region37
  $region36: #{alexnet_fc_forward.17} parent=0 // pred_region
    _
  $region37: #{alexnet_fc_forward.17} parent=0 // pred_fallthru
    _
  %v34 = vld [vmem:[%s0] sm:$0xff]
  %v35 = vld [vmem:[%s0 + $0x8] sm:$0xff]
  %v36 = vld [vmem:[%s1] sm:$0xff]
  %v37 = vld [vmem:[%s1 + $0x8] sm:$0xff]
  %v38 = vld [vmem:[%s1 + $0x10] sm:$0xff]
  %v39 = vld [vmem:[%s1 + $0x18] sm:$0xff]
  %v40 = vld [vmem:[%s1 + $0x20] sm:$0xff]
  %v41 = vld [vmem:[%s1 + $0x28] sm:$0xff]
  %v42 = vld [vmem:[%s1 + $0x30] sm:$0xff]
  %v43 = vld [vmem:[%s1 + $0x38] sm:$0xff]
  %v44 = vld [vmem:[%s1 + $0x40] sm:$0xff]
  %v45 = vld [vmem:[%s1 + $0x48] sm:$0xff]
  %v46 = vld [vmem:[%s1 + $0x50] sm:$0xff]
  %v47 = vld [vmem:[%s1 + $0x58] sm:$0xff]
  %v48 = vld [vmem:[%s1 + $0x60] sm:$0xff]
  %v49 = vld [vmem:[%s1 + $0x68] sm:$0xff]
  %v50 = vld [vmem:[%s1 + $0x70] sm:$0xff]
  %v51 = vld [vmem:[%s1 + $0x78] sm:$0xff]
  %v52 = vld [vmem:[%s1 + $0x80] sm:$0xff]
  %v53 = vld [vmem:[%s1 + $0x88] sm:$0xff]
  %v54 = vld [vmem:[%s1 + $0x90] sm:$0xff]
  %v55 = vld [vmem:[%s1 + $0x98] sm:$0xff]
  %v56 = vld [vmem:[%s1 + $0xa0] sm:$0xff]
  %v57 = vld [vmem:[%s1 + $0xa8] sm:$0xff]
  %v58 = vld [vmem:[%s1 + $0xb0] sm:$0xff]
  %v59 = vld [vmem:[%s1 + $0xb8] sm:$0xff]
  %v60 = vld [vmem:[%s1 + $0xc0] sm:$0xff]
  %v61 = vld [vmem:[%s1 + $0xc8] sm:$0xff]
  %v62 = vld [vmem:[%s1 + $0xd0] sm:$0xff]
  %v63 = vld [vmem:[%s1 + $0xd8] sm:$0xff]
  %v64 = vld [vmem:[%s1 + $0xe0] sm:$0xff]
  %v65 = vld [vmem:[%s1 + $0xe8] sm:$0xff]
  %v66 = vld [vmem:[%s1 + $0xf0] sm:$0xff]
  %v67 = vld [vmem:[%s1 + $0xf8] sm:$0xff]
  %v68 = vld [vmem:[%s2] sm:$0x1]
  %v70 = vlaneseq
  %v71 = vshrl.u32 %v70, 7
  %v72 = vsub.s32 0, %v71
  %v73 = vrot.slane %v68, %v72
  %75 = vmatprep.subr.mxu0 0.0
  %76 = vmatpush1.msra.mxu0 %v51
  %77 = vmatprep.subr.mxu0 0.0
  %78 = vmatpush1.msra.mxu0 %v50
  %79 = vmatprep.subr.mxu0 0.0
  %80 = vmatpush1.msra.mxu0 %v49
  %81 = vmatprep.subr.mxu0 0.0
  %82 = vmatpush1.msra.mxu0 %v48
  %83 = vmatprep.subr.mxu0 0.0
  %84 = vmatpush1.msra.mxu0 %v47
  %85 = vmatprep.subr.mxu0 0.0
  %86 = vmatpush1.msra.mxu0 %v46
  %87 = vmatprep.subr.mxu0 0.0
  %88 = vmatpush1.msra.mxu0 %v45
  %89 = vmatprep.subr.mxu0 0.0
  %90 = vmatpush1.msra.mxu0 %v44
  %91 = vmatprep.subr.mxu0 0.0
  %92 = vmatpush1.msra.mxu0 %v43
  %93 = vmatprep.subr.mxu0 0.0
  %94 = vmatpush1.msra.mxu0 %v42
  %95 = vmatprep.subr.mxu0 0.0
  %96 = vmatpush1.msra.mxu0 %v41
  %97 = vmatprep.subr.mxu0 0.0
  %98 = vmatpush1.msra.mxu0 %v40
  %99 = vmatprep.subr.mxu0 0.0
  %100 = vmatpush1.msra.mxu0 %v39
  %101 = vmatprep.subr.mxu0 0.0
  %102 = vmatpush1.msra.mxu0 %v38
  %103 = vmatprep.subr.mxu0 0.0
  %104 = vmatpush1.msra.mxu0 %v37
  %105 = vmatprep.subr.mxu0 0.0
  %106 = vmatpush1.msra.mxu0 %v36
  %107 = vmatprep.subr.mxu0 0.0
  %108 = vmatpush2.msra.mxu0 %v67
  %109 = vmatprep.subr.mxu0 0.0
  %110 = vmatpush2.msra.mxu0 %v66
  %111 = vmatprep.subr.mxu0 0.0
  %112 = vmatpush2.msra.mxu0 %v65
  %113 = vmatprep.subr.mxu0 0.0
  %114 = vmatpush2.msra.mxu0 %v64
  %115 = vmatprep.subr.mxu0 0.0
  %116 = vmatpush2.msra.mxu0 %v63
  %117 = vmatprep.subr.mxu0 0.0
  %118 = vmatpush2.msra.mxu0 %v62
  %119 = vmatprep.subr.mxu0 0.0
  %120 = vmatpush2.msra.mxu0 %v61
  %121 = vmatprep.subr.mxu0 0.0
  %122 = vmatpush2.msra.mxu0 %v60
  %123 = vmatprep.subr.mxu0 0.0
  %124 = vmatpush2.msra.mxu0 %v59
  %125 = vmatprep.subr.mxu0 0.0
  %126 = vmatpush2.msra.mxu0 %v58
  %127 = vmatprep.subr.mxu0 0.0
  %128 = vmatpush2.msra.mxu0 %v57
  %129 = vmatprep.subr.mxu0 0.0
  %130 = vmatpush2.msra.mxu0 %v56
  %131 = vmatprep.subr.mxu0 0.0
  %132 = vmatpush2.msra.mxu0 %v55
  %133 = vmatprep.subr.mxu0 0.0
  %134 = vmatpush2.msra.mxu0 %v54
  %135 = vmatprep.subr.mxu0 0.0
  %136 = vmatpush2.msra.mxu0 %v53
  %137 = vmatprep.subr.mxu0 0.0
  %138 = vmatpush2.msra.mxu0 %v52
  %139 = vmatprep.mubr.f32.mxu0 %v35
  %140 = vmatmul.mubr.f32.gmra.mxu0 %v34
  %v141 = vpop.f32.mrf.mxu0
  %v142 = vadd.f32 %v73, %v141
  %v143 = vpop.f32.mrf.mxu0
  %144 = vdwg.mxu0
  %v145 = vmax.f32 %v142, 0.0
  %v146 = vld [vmem:[%s3] sm:$0xff]
  %v147 = vld [vmem:[%s3 + $0x8] sm:$0xff]
  %v148 = vld [vmem:[%s3 + $0x10] sm:$0xff]
  %v149 = vld [vmem:[%s3 + $0x18] sm:$0xff]
  %v150 = vld [vmem:[%s3 + $0x20] sm:$0xff]
  %v151 = vld [vmem:[%s3 + $0x28] sm:$0xff]
  %v152 = vld [vmem:[%s3 + $0x30] sm:$0xff]
  %v153 = vld [vmem:[%s3 + $0x38] sm:$0xff]
  %v154 = vld [vmem:[%s3 + $0x40] sm:$0xff]
  %v155 = vld [vmem:[%s3 + $0x48] sm:$0xff]
  %v156 = vld [vmem:[%s3 + $0x50] sm:$0xff]
  %v157 = vld [vmem:[%s3 + $0x58] sm:$0xff]
  %v158 = vld [vmem:[%s3 + $0x60] sm:$0xff]
  %v159 = vld [vmem:[%s3 + $0x68] sm:$0xff]
  %v160 = vld [vmem:[%s3 + $0x70] sm:$0xff]
  %v161 = vld [vmem:[%s3 + $0x78] sm:$0xff]
  %v162 = vld [vmem:[%s4] sm:$0x1]
  %v164 = vlaneseq
  %v165 = vshrl.u32 %v164, 7
  %v166 = vsub.s32 0, %v165
  %v167 = vrot.slane %v162, %v166
  %169 = vmatprep.subr.mxu0 0.0
  %170 = vmatpush1.msra.mxu0 %v161
  %171 = vmatprep.subr.mxu0 0.0
  %172 = vmatpush1.msra.mxu0 %v160
  %173 = vmatprep.subr.mxu0 0.0
  %174 = vmatpush1.msra.mxu0 %v159
  %175 = vmatprep.subr.mxu0 0.0
  %176 = vmatpush1.msra.mxu0 %v158
  %177 = vmatprep.subr.mxu0 0.0
  %178 = vmatpush1.msra.mxu0 %v157
  %179 = vmatprep.subr.mxu0 0.0
  %180 = vmatpush1.msra.mxu0 %v156
  %181 = vmatprep.subr.mxu0 0.0
  %182 = vmatpush1.msra.mxu0 %v155
  %183 = vmatprep.subr.mxu0 0.0
  %184 = vmatpush1.msra.mxu0 %v154
  %185 = vmatprep.subr.mxu0 0.0
  %186 = vmatpush1.msra.mxu0 %v153
  %187 = vmatprep.subr.mxu0 0.0
  %188 = vmatpush1.msra.mxu0 %v152
  %189 = vmatprep.subr.mxu0 0.0
  %190 = vmatpush1.msra.mxu0 %v151
  %191 = vmatprep.subr.mxu0 0.0
  %192 = vmatpush1.msra.mxu0 %v150
  %193 = vmatprep.subr.mxu0 0.0
  %194 = vmatpush1.msra.mxu0 %v149
  %195 = vmatprep.subr.mxu0 0.0
  %196 = vmatpush1.msra.mxu0 %v148
  %197 = vmatprep.subr.mxu0 0.0
  %198 = vmatpush1.msra.mxu0 %v147
  %199 = vmatprep.subr.mxu0 0.0
  %200 = vmatpush1.msra.mxu0 %v146
  %201 = vmatprep.subr.mxu0 0.0
  %202 = vmatpush2.msra.mxu0 0.0
  %203 = vmatprep.subr.mxu0 0.0
  %204 = vmatpush2.msra.mxu0 0.0
  %205 = vmatprep.subr.mxu0 0.0
  %206 = vmatpush2.msra.mxu0 0.0
  %207 = vmatprep.subr.mxu0 0.0
  %208 = vmatpush2.msra.mxu0 0.0
  %209 = vmatprep.subr.mxu0 0.0
  %210 = vmatpush2.msra.mxu0 0.0
  %211 = vmatprep.subr.mxu0 0.0
  %212 = vmatpush2.msra.mxu0 0.0
  %213 = vmatprep.subr.mxu0 0.0
  %214 = vmatpush2.msra.mxu0 0.0
  %215 = vmatprep.subr.mxu0 0.0
  %216 = vmatpush2.msra.mxu0 0.0
  %217 = vmatprep.subr.mxu0 0.0
  %218 = vmatpush2.msra.mxu0 0.0
  %219 = vmatprep.subr.mxu0 0.0
  %220 = vmatpush2.msra.mxu0 0.0
  %221 = vmatprep.subr.mxu0 0.0
  %222 = vmatpush2.msra.mxu0 0.0
  %223 = vmatprep.subr.mxu0 0.0
  %224 = vmatpush2.msra.mxu0 0.0
  %225 = vmatprep.subr.mxu0 0.0
  %226 = vmatpush2.msra.mxu0 0.0
  %227 = vmatprep.subr.mxu0 0.0
  %228 = vmatpush2.msra.mxu0 0.0
  %229 = vmatprep.subr.mxu0 0.0
  %230 = vmatpush2.msra.mxu0 0.0
  %231 = vmatprep.subr.mxu0 0.0
  %232 = vmatpush2.msra.mxu0 0.0
  %233 = vmatprep.mubr.f32.mxu0 0.0
  %234 = vmatmul.mubr.f32.gmra.mxu0 %v145
  %v235 = vpop.f32.mrf.mxu0
  %v236 = vadd.f32 %v167, %v235
  %v237 = vpop.f32.mrf.mxu0
  %238 = vdwg.mxu0
  %v239 = vmax.f32 %v236, 0.0
  %v240 = vld [vmem:[%s5] sm:$0xff]
  %v241 = vld [vmem:[%s5 + $0x8] sm:$0xff]
  %v242 = vld [vmem:[%s5 + $0x10] sm:$0xff]
  %v243 = vld [vmem:[%s5 + $0x18] sm:$0xff]
  %v244 = vld [vmem:[%s5 + $0x20] sm:$0xff]
  %v245 = vld [vmem:[%s5 + $0x28] sm:$0xff]
  %v246 = vld [vmem:[%s5 + $0x30] sm:$0xff]
  %v247 = vld [vmem:[%s5 + $0x38] sm:$0xff]
  %v248 = vld [vmem:[%s5 + $0x40] sm:$0xff]
  %v249 = vld [vmem:[%s5 + $0x48] sm:$0xff]
  %v250 = vld [vmem:[%s5 + $0x50] sm:$0xff]
  %v251 = vld [vmem:[%s5 + $0x58] sm:$0xff]
  %v252 = vld [vmem:[%s5 + $0x60] sm:$0xff]
  %v253 = vld [vmem:[%s5 + $0x68] sm:$0xff]
  %v254 = vld [vmem:[%s5 + $0x70] sm:$0xff]
  %v255 = vld [vmem:[%s5 + $0x78] sm:$0xff]
  %v256 = vld [vmem:[%s6] sm:$0x1]
  %v258 = vlaneseq
  %v259 = vshrl.u32 %v258, 7
  %v260 = vsub.s32 0, %v259
  %v261 = vrot.slane %v256, %v260
  %263 = vmatprep.subr.mxu0 0.0
  %264 = vmatpush1.msra.mxu0 %v255
  %265 = vmatprep.subr.mxu0 0.0
  %266 = vmatpush1.msra.mxu0 %v254
  %267 = vmatprep.subr.mxu0 0.0
  %268 = vmatpush1.msra.mxu0 %v253
  %269 = vmatprep.subr.mxu0 0.0
  %270 = vmatpush1.msra.mxu0 %v252
  %271 = vmatprep.subr.mxu0 0.0
  %272 = vmatpush1.msra.mxu0 %v251
  %273 = vmatprep.subr.mxu0 0.0
  %274 = vmatpush1.msra.mxu0 %v250
  %275 = vmatprep.subr.mxu0 0.0
  %276 = vmatpush1.msra.mxu0 %v249
  %277 = vmatprep.subr.mxu0 0.0
  %278 = vmatpush1.msra.mxu0 %v248
  %279 = vmatprep.subr.mxu0 0.0
  %280 = vmatpush1.msra.mxu0 %v247
  %281 = vmatprep.subr.mxu0 0.0
  %282 = vmatpush1.msra.mxu0 %v246
  %283 = vmatprep.subr.mxu0 0.0
  %284 = vmatpush1.msra.mxu0 %v245
  %285 = vmatprep.subr.mxu0 0.0
  %286 = vmatpush1.msra.mxu0 %v244
  %287 = vmatprep.subr.mxu0 0.0
  %288 = vmatpush1.msra.mxu0 %v243
  %289 = vmatprep.subr.mxu0 0.0
  %290 = vmatpush1.msra.mxu0 %v242
  %291 = vmatprep.subr.mxu0 0.0
  %292 = vmatpush1.msra.mxu0 %v241
  %293 = vmatprep.subr.mxu0 0.0
  %294 = vmatpush1.msra.mxu0 %v240
  %295 = vmatprep.subr.mxu0 0.0
  %296 = vmatpush2.msra.mxu0 0.0
  %297 = vmatprep.subr.mxu0 0.0
  %298 = vmatpush2.msra.mxu0 0.0
  %299 = vmatprep.subr.mxu0 0.0
  %300 = vmatpush2.msra.mxu0 0.0
  %301 = vmatprep.subr.mxu0 0.0
  %302 = vmatpush2.msra.mxu0 0.0
  %303 = vmatprep.subr.mxu0 0.0
  %304 = vmatpush2.msra.mxu0 0.0
  %305 = vmatprep.subr.mxu0 0.0
  %306 = vmatpush2.msra.mxu0 0.0
  %307 = vmatprep.subr.mxu0 0.0
  %308 = vmatpush2.msra.mxu0 0.0
  %309 = vmatprep.subr.mxu0 0.0
  %310 = vmatpush2.msra.mxu0 0.0
  %311 = vmatprep.subr.mxu0 0.0
  %312 = vmatpush2.msra.mxu0 0.0
  %313 = vmatprep.subr.mxu0 0.0
  %314 = vmatpush2.msra.mxu0 0.0
  %315 = vmatprep.subr.mxu0 0.0
  %316 = vmatpush2.msra.mxu0 0.0
  %317 = vmatprep.subr.mxu0 0.0
  %318 = vmatpush2.msra.mxu0 0.0
  %319 = vmatprep.subr.mxu0 0.0
  %320 = vmatpush2.msra.mxu0 0.0
  %321 = vmatprep.subr.mxu0 0.0
  %322 = vmatpush2.msra.mxu0 0.0
  %323 = vmatprep.subr.mxu0 0.0
  %324 = vmatpush2.msra.mxu0 0.0
  %325 = vmatprep.subr.mxu0 0.0
  %326 = vmatpush2.msra.mxu0 0.0
  %327 = vmatprep.mubr.f32.mxu0 0.0
  %328 = vmatmul.mubr.f32.gmra.mxu0 %v239
  %v329 = vpop.f32.mrf.mxu0
  %v330 = vadd.f32 %v261, %v329
  %v331 = vpop.f32.mrf.mxu0
  %332 = vdwg.mxu0
  %v333 = vld [vmem:[%s7] sm:$0xff]
  %v334 = vld [vmem:[%s7 + $0x8] sm:$0xff]
  %v335 = vld [vmem:[%s7 + $0x10] sm:$0xff]
  %v336 = vld [vmem:[%s7 + $0x18] sm:$0xff]
  %v337 = vld [vmem:[%s8] sm:$0x1]
  %v339 = vlaneseq
  %v340 = vshrl.u32 %v339, 7
  %v341 = vsub.s32 0, %v340
  %v342 = vrot.slane %v337, %v341
  %vm344 = vcmask 261120
  %v346 = vsel %vm344, %v330, 0
  %348 = vmatprep.subr.mxu0 0.0
  %349 = vmatpush1.msra.mxu0 0.0
  %350 = vmatprep.subr.mxu0 0.0
  %351 = vmatpush1.msra.mxu0 0.0
  %352 = vmatprep.subr.mxu0 0.0
  %353 = vmatpush1.msra.mxu0 0.0
  %354 = vmatprep.subr.mxu0 0.0
  %355 = vmatpush1.msra.mxu0 0.0
  %356 = vmatprep.subr.mxu0 0.0
  %357 = vmatpush1.msra.mxu0 0.0
  %358 = vmatprep.subr.mxu0 0.0
  %359 = vmatpush1.msra.mxu0 0.0
  %360 = vmatprep.subr.mxu0 0.0
  %361 = vmatpush1.msra.mxu0 0.0
  %362 = vmatprep.subr.mxu0 0.0
  %363 = vmatpush1.msra.mxu0 0.0
  %364 = vmatprep.subr.mxu0 0.0
  %365 = vmatpush1.msra.mxu0 0.0
  %366 = vmatprep.subr.mxu0 0.0
  %367 = vmatpush1.msra.mxu0 0.0
  %368 = vmatprep.subr.mxu0 0.0
  %369 = vmatpush1.msra.mxu0 0.0
  %370 = vmatprep.subr.mxu0 0.0
  %371 = vmatpush1.msra.mxu0 0.0
  %372 = vmatprep.subr.mxu0 0.0
  %373 = vmatpush1.msra.mxu0 %v336
  %374 = vmatprep.subr.mxu0 0.0
  %375 = vmatpush1.msra.mxu0 %v335
  %376 = vmatprep.subr.mxu0 0.0
  %377 = vmatpush1.msra.mxu0 %v334
  %378 = vmatprep.subr.mxu0 0.0
  %379 = vmatpush1.msra.mxu0 %v333
  %380 = vmatprep.subr.mxu0 0.0
  %381 = vmatpush2.msra.mxu0 0.0
  %382 = vmatprep.subr.mxu0 0.0
  %383 = vmatpush2.msra.mxu0 0.0
  %384 = vmatprep.subr.mxu0 0.0
  %385 = vmatpush2.msra.mxu0 0.0
  %386 = vmatprep.subr.mxu0 0.0
  %387 = vmatpush2.msra.mxu0 0.0
  %388 = vmatprep.subr.mxu0 0.0
  %389 = vmatpush2.msra.mxu0 0.0
  %390 = vmatprep.subr.mxu0 0.0
  %391 = vmatpush2.msra.mxu0 0.0
  %392 = vmatprep.subr.mxu0 0.0
  %393 = vmatpush2.msra.mxu0 0.0
  %394 = vmatprep.subr.mxu0 0.0
  %395 = vmatpush2.msra.mxu0 0.0
  %396 = vmatprep.subr.mxu0 0.0
  %397 = vmatpush2.msra.mxu0 0.0
  %398 = vmatprep.subr.mxu0 0.0
  %399 = vmatpush2.msra.mxu0 0.0
  %400 = vmatprep.subr.mxu0 0.0
  %401 = vmatpush2.msra.mxu0 0.0
  %402 = vmatprep.subr.mxu0 0.0
  %403 = vmatpush2.msra.mxu0 0.0
  %404 = vmatprep.subr.mxu0 0.0
  %405 = vmatpush2.msra.mxu0 0.0
  %406 = vmatprep.subr.mxu0 0.0
  %407 = vmatpush2.msra.mxu0 0.0
  %408 = vmatprep.subr.mxu0 0.0
  %409 = vmatpush2.msra.mxu0 0.0
  %410 = vmatprep.subr.mxu0 0.0
  %411 = vmatpush2.msra.mxu0 0.0
  %412 = vmatprep.mubr.f32.mxu0 0.0
  %413 = vmatmul.mubr.f32.gmra.mxu0 %v346
  %v414 = vpop.f32.mrf.mxu0
  %v415 = vadd.f32 %v342, %v414
  %v416 = vpop.f32.mrf.mxu0
  %417 = vdwg.mxu0
  %418 = vst.msk [vmem:[%s9] sm:$0xff] %vm344, %v330
  %vm419 = vcmask 80896
  %420 = vst.msk [vmem:[%s10] sm:$0xff] %vm419, %v415
  // Predicated region
  $region38: #{alexnet_fc_forward.17} parent=0 // pred_check
    _
  $region39: #{alexnet_fc_forward.17} parent=0 // pred_check_branch
    %422 = sbr.rel (0) target = $region41
  $region40: #{alexnet_fc_forward.17} parent=0 // pred_region
    _
  $region41: #{alexnet_fc_forward.17} parent=0 // pred_fallthru
    _
  // Predicated region
  $region42: #{alexnet_fc_forward.17} parent=0 // pred_check
    _
  $region43: #{alexnet_fc_forward.17} parent=0 // pred_check_branch
    %424 = sbr.rel (0) target = $region45
  $region44: #{alexnet_fc_forward.17} parent=0 // pred_region
    _
  $region45: #{alexnet_fc_forward.17} parent=0 // pred_fallthru
    _
  // Predicated region
  $region46: #{alexnet_fc_forward.17} parent=0 // pred_check
    _
  $region47: #{alexnet_fc_forward.17} parent=0 // pred_check_branch
    %426 = sbr.rel (0) target = $region49
  $region48: #{alexnet_fc_forward.17} parent=0 // pred_region
    _
  $region49: #{alexnet_fc_forward.17} parent=0 // pred_fallthru
    _
  // Predicated region
  $region50: #{alexnet_fc_forward.17} parent=0 // pred_check
    _
  $region51: #{alexnet_fc_forward.17} parent=0 // pred_check_branch
    %428 = sbr.rel (0) target = $region53
  $region52: #{alexnet_fc_forward.17} parent=0 // pred_region
    _
  $region53: #{alexnet_fc_forward.17} parent=0 // pred_fallthru
    _

</llo_original>
